<compile_context>
chip_gen: v7x
topology: tpu7x:2x2x1
jax: 0.10.0
libtpu: 0.0.40
codegen_flags: <defaults>
</compile_context>

<pallas_src>
import functools
import math

import jax
import jax.numpy as jnp
from jax import lax
from jax.experimental import pallas as pl
from jax.experimental.pallas import tpu as pltpu

LN_EPS = 1e-5


def _layernorm(x, gamma, beta):
    # x: (N, D), gamma/beta: (1, D)
    mu = jnp.mean(x, axis=-1, keepdims=True)
    var = jnp.mean((x - mu) ** 2, axis=-1, keepdims=True)
    return (x - mu) * lax.rsqrt(var + LN_EPS) * gamma + beta


# ---------------------------------------------------------------------------
# Single fused kernel: bi-LSTM + pos-embed + depth x SA blocks + final proj.
# ---------------------------------------------------------------------------
def fused_text_encoder_kernel(
        x_ref, wih_ref, bih_ref, whh_f_ref, whh_b_ref, pos_ref,
        ln1_g_ref, ln1_b_ref, wqkv_ref, bqkv_ref, wo_ref, bo_ref,
        ln2_g_ref, ln2_b_ref, w1_ref, b1_ref, w2_ref, b2_ref,
        pln_g_ref, pln_b_ref, pw_ref, pb_ref,
        out_ref, lstm_ref, *, heads, depth):
    B, T, D = x_ref.shape
    H = D // 2
    hd = D // heads
    scale = 1.0 / math.sqrt(hd)

    x2d = x_ref[...].astype(jnp.float32).reshape(B * T, D)

    # ------------------------------------------------------------------
    # Bidirectional LSTM (PyTorch gate order i, f, g, o).
    # Input projection for BOTH directions hoisted out of the recurrence:
    # one (B*T, D) x (D, 8H) bf16 matmul with a 128-lane-dense result.
    # ------------------------------------------------------------------
    gx = (jnp.dot(x2d.astype(jnp.bfloat16), wih_ref[...],
                  preferred_element_type=jnp.float32)
          + bih_ref[...])                                   # (B*T, 8H)
    gx = gx.reshape(B, T, 8 * H)
    gx_f = gx[:, :, 0:4 * H]
    gx_b = gx[:, :, 4 * H:8 * H]

    def run_direction(gates_x, whh_t, reverse, out_lo):
        # gates_x: (B, T, 4H) precomputed input gates; whh_t: (H, 4H).
        # Unrolled over the fixed T so the LLO scheduler sees the whole
        # (strictly serial) recurrence; h written straight into VMEM scratch.
        h = jnp.zeros((B, H), jnp.float32)
        c = jnp.zeros((B, H), jnp.float32)
        for step in range(T):
            t = (T - 1 - step) if reverse else step
            gates = gates_x[:, t, :] + jnp.dot(
                h, whh_t, preferred_element_type=jnp.float32)        # (B, 4H)
            i_g = jax.nn.sigmoid(gates[:, 0 * H:1 * H])
            f_g = jax.nn.sigmoid(gates[:, 1 * H:2 * H])
            g_g = jnp.tanh(gates[:, 2 * H:3 * H])
            o_g = jax.nn.sigmoid(gates[:, 3 * H:4 * H])
            c = f_g * c + i_g * g_g
            h = o_g * jnp.tanh(c)
            lstm_ref[:, t, out_lo:out_lo + H] = h

    run_direction(gx_f, whh_f_ref[...], reverse=False, out_lo=0)
    run_direction(gx_b, whh_b_ref[...], reverse=True, out_lo=H)

    # pos-embed add fused with the LSTM output read; flatten to (B*T, D).
    x2d = (lstm_ref[...] + pos_ref[...][None, :, :]).reshape(B * T, D)

    # ------------------------------------------------------------------
    # depth x SelfAttention (pre-norm transformer) blocks; per-layer weights
    # stacked on a leading `depth` axis and resident in VMEM.
    # ------------------------------------------------------------------
    for l in range(depth):
        xn = _layernorm(x2d, ln1_g_ref[l], ln1_b_ref[l])
        qkv = (jnp.dot(xn.astype(jnp.bfloat16), wqkv_ref[l],
                       preferred_element_type=jnp.float32)
               + bqkv_ref[l])                               # (B*T, 3D)
        q = qkv[:, 0:D].reshape(B, T, D)
        k = qkv[:, D:2 * D].reshape(B, T, D)
        v = qkv[:, 2 * D:3 * D].reshape(B, T, D)

        ctx_heads = []
        for hh in range(heads):                 # heads is small & static; each
            lo = hh * hd                        # einsum is batched over B.
            qh = q[:, :, lo:lo + hd]
            kh = k[:, :, lo:lo + hd]
            vh = v[:, :, lo:lo + hd]
            s = jnp.einsum('bqd,bkd->bqk', qh, kh,
                           preferred_element_type=jnp.float32) * scale
            s = s - jnp.max(s, axis=-1, keepdims=True)
            p = jnp.exp(s)
            p = p * pl.reciprocal(jnp.sum(p, axis=-1, keepdims=True), approx=True)
            ctx_heads.append(jnp.einsum('bqk,bkd->bqd', p, vh,
                                        preferred_element_type=jnp.float32))
        ctx = jnp.concatenate(ctx_heads, axis=-1).reshape(B * T, D)

        attn = (jnp.dot(ctx.astype(jnp.bfloat16), wo_ref[l],
                        preferred_element_type=jnp.float32)
                + bo_ref[l])
        x2d = x2d + attn                        # dropout / drop_path = identity

        yn = _layernorm(x2d, ln2_g_ref[l], ln2_b_ref[l])
        hmid = (jnp.dot(yn.astype(jnp.bfloat16), w1_ref[l],
                        preferred_element_type=jnp.float32)
                + b1_ref[l])
        # TODO(synk): PyTorch nn.GELU defaults to the exact erf form; tanh
        # approximation used here (erf has no guaranteed Mosaic lowering).
        hmid = jax.nn.gelu(hmid, approximate=True)
        y = (jnp.dot(hmid.astype(jnp.bfloat16), w2_ref[l],
                     preferred_element_type=jnp.float32)
             + b2_ref[l])
        x2d = x2d + y

    # ------------------------------------------------------------------
    # Final projection: nn.Sequential(LayerNorm(D), Linear(D, O)).
    # ------------------------------------------------------------------
    xn = _layernorm(x2d, pln_g_ref[...], pln_b_ref[...])
    out = (jnp.dot(xn.astype(jnp.bfloat16), pw_ref[...],
                   preferred_element_type=jnp.float32)
           + pb_ref[...])                                   # (B*T, O)
    O = pw_ref.shape[1]
    out_ref[...] = out.reshape(B, T, O)


# ---------------------------------------------------------------------------
# Wrapper / parameter construction (weights pre-transposed, matmul weights bf16).
# ---------------------------------------------------------------------------
def init_params(key, cfg):
    T = cfg["TOKENS"]
    D = cfg["INPUT_DIM"]
    O = cfg["OUTPUT_DIM"]
    depth = cfg["DEPTH"]
    H = D // 2                       # bidirectional LSTM hidden size
    M = 4 * D                        # MLP hidden

    keys = iter(jax.random.split(key, 128))

    def unif(shape, bound):
        return jax.random.uniform(next(keys), shape, jnp.float32, -bound, bound)

    def normal(shape, std=0.02):
        return jax.random.normal(next(keys), shape, jnp.float32) * std

    def stack(make):
        return jnp.stack([make() for _ in range(depth)], axis=0)

    kb = 1.0 / math.sqrt(H)
    # PyTorch LSTM layout: weight_ih (4H, D), weight_hh (4H, H), gate order i,f,g,o.
    wih_f = unif((4 * H, D), kb); whh_f = unif((4 * H, H), kb)
    wih_b = unif((4 * H, D), kb); whh_b = unif((4 * H, H), kb)
    b_f = unif((1, 4 * H), kb) + unif((1, 4 * H), kb)       # b_ih + b_hh
    b_b = unif((1, 4 * H), kb) + unif((1, 4 * H), kb)

    params = {
        # both directions' input weights concatenated on the lane axis -> (D, 8H)
        "wih": jnp.concatenate([wih_f.T, wih_b.T], axis=1).astype(jnp.bfloat16),
        "bih": jnp.concatenate([b_f, b_b], axis=1),          # (1, 8H) f32
        "whh_f": whh_f.T,                                    # (H, 4H) f32 (recurrent stays f32)
        "whh_b": whh_b.T,
        "pos_embed": jax.random.truncated_normal(
            next(keys), -2.0, 2.0, (T, D), jnp.float32) * 0.02,
        # per-layer block weights stacked along depth, pre-transposed, bf16 matmul inputs
        "ln1_g": jnp.ones((depth, 1, D), jnp.float32),
        "ln1_b": jnp.zeros((depth, 1, D), jnp.float32),
        "wqkv": stack(lambda: normal((D, 3 * D))).astype(jnp.bfloat16),
        "bqkv": jnp.zeros((depth, 1, 3 * D), jnp.float32),
        "wo": stack(lambda: normal((D, D))).astype(jnp.bfloat16),
        "bo": jnp.zeros((depth, 1, D), jnp.float32),
        "ln2_g": jnp.ones((depth, 1, D), jnp.float32),
        "ln2_b": jnp.zeros((depth, 1, D), jnp.float32),
        "w1": stack(lambda: normal((D, M))).astype(jnp.bfloat16),
        "b1": jnp.zeros((depth, 1, M), jnp.float32),
        "w2": stack(lambda: normal((M, D))).astype(jnp.bfloat16),
        "b2": jnp.zeros((depth, 1, D), jnp.float32),
        # final proj
        "pln_g": jnp.ones((1, D), jnp.float32),
        "pln_b": jnp.zeros((1, D), jnp.float32),
        "pw": normal((D, O)).astype(jnp.bfloat16),
        "pb": jnp.zeros((1, O), jnp.float32),
    }
    return params


def text_encoder_forward(params, x, cfg):
    # Only NUM_LAYERS == 1 RNN supported; flatten_parameters() is a no-op.
    B, T, D = x.shape
    heads = cfg["HEADS"]
    depth = cfg["DEPTH"]
    O = cfg["OUTPUT_DIM"]

    args = (
        x,
        params["wih"], params["bih"], params["whh_f"], params["whh_b"],
        params["pos_embed"],
        params["ln1_g"], params["ln1_b"], params["wqkv"], params["bqkv"],
        params["wo"], params["bo"], params["ln2_g"], params["ln2_b"],
        params["w1"], params["b1"], params["w2"], params["b2"],
        params["pln_g"], params["pln_b"], params["pw"], params["pb"],
    )

    # Single fused call, no grid: everything (activations + all weights) is VMEM
    # resident.  TODO(synk): if T/D/DEPTH scale up, add a depth grid axis with
    # BlockSpec index_maps over the stacked weights (and a parallel batch axis
    # for v7x's second TensorCore) instead of keeping all layers resident.
    return pl.pallas_call(
        functools.partial(fused_text_encoder_kernel, heads=heads, depth=depth),
        out_shape=jax.ShapeDtypeStruct((B, T, O), jnp.float32),
        in_specs=[pl.BlockSpec(memory_space=pltpu.MemorySpace.VMEM)] * len(args),
        out_specs=pl.BlockSpec(memory_space=pltpu.MemorySpace.VMEM),
        scratch_shapes=[pltpu.VMEM((B, T, D), jnp.float32)],   # LSTM output buffer
    )(*args)


if __name__ == "__main__":
    cfg = {
        "TOKENS": 8,
        "INPUT_DIM": 32,
        "OUTPUT_DIM": 48,
        "DEPTH": 2,
        "HEADS": 4,
        "DROPOUT": 0.0,
        "DROPPATH": 0.0,
        "RNN": {"NAME": "LSTM", "BIDIRECTIONAL": True, "NUM_LAYERS": 1},
    }
    B = 2

    key = jax.random.PRNGKey(0)
    pkey, xkey = jax.random.split(key)
    params = init_params(pkey, cfg)
    x = jax.random.normal(xkey, (B, cfg["TOKENS"], cfg["INPUT_DIM"]), jnp.float32)

    y = text_encoder_forward(params, x, cfg)
    jax.block_until_ready(y)
    assert y.shape == (B, cfg["TOKENS"], cfg["OUTPUT_DIM"]), y.shape
    assert bool(jnp.all(jnp.isfinite(y)))
    print("KERNEL_OK")
</pallas_src>

<mosaic_0001>
module attributes {stable_mosaic.version = 11 : i64} {
  func.func @fused_text_encoder_kernel(%arg0: memref<2x8x32xf32, #tpu.memory_space<vmem>>, %arg1: memref<32x128xbf16, #tpu.memory_space<vmem>>, %arg2: memref<1x128xf32, #tpu.memory_space<vmem>>, %arg3: memref<16x64xf32, #tpu.memory_space<vmem>>, %arg4: memref<16x64xf32, #tpu.memory_space<vmem>>, %arg5: memref<8x32xf32, #tpu.memory_space<vmem>>, %arg6: memref<2x1x32xf32, #tpu.memory_space<vmem>>, %arg7: memref<2x1x32xf32, #tpu.memory_space<vmem>>, %arg8: memref<2x32x96xbf16, #tpu.memory_space<vmem>>, %arg9: memref<2x1x96xf32, #tpu.memory_space<vmem>>, %arg10: memref<2x32x32xbf16, #tpu.memory_space<vmem>>, %arg11: memref<2x1x32xf32, #tpu.memory_space<vmem>>, %arg12: memref<2x1x32xf32, #tpu.memory_space<vmem>>, %arg13: memref<2x1x32xf32, #tpu.memory_space<vmem>>, %arg14: memref<2x32x128xbf16, #tpu.memory_space<vmem>>, %arg15: memref<2x1x128xf32, #tpu.memory_space<vmem>>, %arg16: memref<2x128x32xbf16, #tpu.memory_space<vmem>>, %arg17: memref<2x1x32xf32, #tpu.memory_space<vmem>>, %arg18: memref<1x32xf32, #tpu.memory_space<vmem>>, %arg19: memref<1x32xf32, #tpu.memory_space<vmem>>, %arg20: memref<32x48xbf16, #tpu.memory_space<vmem>>, %arg21: memref<1x48xf32, #tpu.memory_space<vmem>>, %arg22: memref<2x8x48xf32, #tpu.memory_space<vmem>>, %arg23: memref<2x8x32xf32, #tpu.memory_space<vmem>>) attributes {dimension_semantics = [], scalar_prefetch = 0 : i64, scratch_operands = 1 : i64, tpu.core_type = #tpu.core_type<tc>} {
    %c0 = arith.constant 0 : index
    %c0_0 = arith.constant 0 : index
    %c0_1 = arith.constant 0 : index
    %0 = vector.load %arg0[%c0, %c0_0, %c0_1] : memref<2x8x32xf32, #tpu.memory_space<vmem>>, vector<2x8x32xf32>
    %1 = vector.shape_cast %0 : vector<2x8x32xf32> to vector<16x32xf32>
    %2 = arith.truncf %1 : vector<16x32xf32> to vector<16x32xbf16>
    %c0_2 = arith.constant 0 : index
    %c0_3 = arith.constant 0 : index
    %3 = vector.load %arg1[%c0_2, %c0_3] : memref<32x128xbf16, #tpu.memory_space<vmem>>, vector<32x128xbf16>
    %cst = arith.constant dense<0.000000e+00> : vector<16x128xf32>
    %4 = tpu.matmul %2, %3, %cst {dimension_numbers = #tpu.dot_dimension_numbers<[1], [0], [0], [1], [0, 0, 1, 1], [], []>} : vector<16x32xbf16>, vector<32x128xbf16>, vector<16x128xf32> -> vector<16x128xf32>
    %c0_4 = arith.constant 0 : index
    %c0_5 = arith.constant 0 : index
    %5 = vector.load %arg2[%c0_4, %c0_5] : memref<1x128xf32, #tpu.memory_space<vmem>>, vector<1x128xf32>
    %6 = vector.broadcast %5 : vector<1x128xf32> to vector<16x128xf32>
    %7 = arith.addf %4, %6 : vector<16x128xf32>
    %8 = vector.shape_cast %7 : vector<16x128xf32> to vector<2x8x128xf32>
    %9 = vector.extract_strided_slice %8 {offsets = [0, 0, 0], sizes = [2, 8, 64], strides = [1, 1, 1]} : vector<2x8x128xf32> to vector<2x8x64xf32>
    %10 = vector.extract_strided_slice %8 {offsets = [0, 0, 64], sizes = [2, 8, 64], strides = [1, 1, 1]} : vector<2x8x128xf32> to vector<2x8x64xf32>
    %c0_6 = arith.constant 0 : index
    %c0_7 = arith.constant 0 : index
    %11 = vector.load %arg3[%c0_6, %c0_7] : memref<16x64xf32, #tpu.memory_space<vmem>>, vector<16x64xf32>
    %cst_8 = arith.constant 0.000000e+00 : f32
    %12 = vector.broadcast %cst_8 : f32 to vector<2x16xf32>
    %cst_9 = arith.constant 0.000000e+00 : f32
    %13 = vector.broadcast %cst_9 : f32 to vector<2x16xf32>
    %14 = vector.extract_strided_slice %9 {offsets = [0, 0, 0], sizes = [2, 1, 64], strides = [1, 1, 1]} : vector<2x8x64xf32> to vector<2x1x64xf32>
    %15 = vector.shape_cast %14 : vector<2x1x64xf32> to vector<2x64xf32>
    %cst_10 = arith.constant dense<0.000000e+00> : vector<2x64xf32>
    %16 = tpu.matmul %12, %11, %cst_10 {dimension_numbers = #tpu.dot_dimension_numbers<[1], [0], [0], [1], [0, 0, 1, 1], [], []>} : vector<2x16xf32>, vector<16x64xf32>, vector<2x64xf32> -> vector<2x64xf32>
    %17 = arith.addf %15, %16 : vector<2x64xf32>
    %18 = vector.extract_strided_slice %17 {offsets = [0, 0], sizes = [2, 16], strides = [1, 1]} : vector<2x64xf32> to vector<2x16xf32>
    %19 = arith.negf %18 : vector<2x16xf32>
    %20 = math.exp %19 : vector<2x16xf32>
    %cst_11 = arith.constant 1.000000e+00 : f32
    %21 = vector.broadcast %cst_11 : f32 to vector<2x16xf32>
    %22 = arith.addf %21, %20 : vector<2x16xf32>
    %23 = arith.divf %21, %22 : vector<2x16xf32>
    %24 = vector.extract_strided_slice %17 {offsets = [0, 16], sizes = [2, 16], strides = [1, 1]} : vector<2x64xf32> to vector<2x16xf32>
    %25 = arith.negf %24 : vector<2x16xf32>
    %26 = math.exp %25 : vector<2x16xf32>
    %cst_12 = arith.constant 1.000000e+00 : f32
    %27 = vector.broadcast %cst_12 : f32 to vector<2x16xf32>
    %28 = arith.addf %27, %26 : vector<2x16xf32>
    %29 = arith.divf %27, %28 : vector<2x16xf32>
    %30 = vector.extract_strided_slice %17 {offsets = [0, 32], sizes = [2, 16], strides = [1, 1]} : vector<2x64xf32> to vector<2x16xf32>
    %31 = math.tanh %30 : vector<2x16xf32>
    %32 = vector.extract_strided_slice %17 {offsets = [0, 48], sizes = [2, 16], strides = [1, 1]} : vector<2x64xf32> to vector<2x16xf32>
    %33 = arith.negf %32 : vector<2x16xf32>
    %34 = math.exp %33 : vector<2x16xf32>
    %cst_13 = arith.constant 1.000000e+00 : f32
    %35 = vector.broadcast %cst_13 : f32 to vector<2x16xf32>
    %36 = arith.addf %35, %34 : vector<2x16xf32>
    %37 = arith.divf %35, %36 : vector<2x16xf32>
    %38 = arith.mulf %29, %13 : vector<2x16xf32>
    %39 = arith.mulf %23, %31 : vector<2x16xf32>
    %40 = arith.addf %38, %39 : vector<2x16xf32>
    %41 = math.tanh %40 : vector<2x16xf32>
    %42 = arith.mulf %37, %41 : vector<2x16xf32>
    %c0_14 = arith.constant 0 : index
    %c0_15 = arith.constant 0 : index
    %c0_16 = arith.constant 0 : index
    %43 = vector.load %arg23[%c0_14, %c0_15, %c0_16] : memref<2x8x32xf32, #tpu.memory_space<vmem>>, vector<2x1x16xf32>
    %44 = vector.shape_cast %43 : vector<2x1x16xf32> to vector<2x16xf32>
    %45 = vector.shape_cast %42 : vector<2x16xf32> to vector<2x1x16xf32>
    tpu.vector_store %arg23[%c0_14, %c0_15, %c0_16], %45 {strides = array<i32>} : memref<2x8x32xf32, #tpu.memory_space<vmem>>, vector<2x1x16xf32>,
    %46 = vector.extract_strided_slice %9 {offsets = [0, 1, 0], sizes = [2, 1, 64], strides = [1, 1, 1]} : vector<2x8x64xf32> to vector<2x1x64xf32>
    %47 = vector.shape_cast %46 : vector<2x1x64xf32> to vector<2x64xf32>
    %cst_17 = arith.constant dense<0.000000e+00> : vector<2x64xf32>
    %48 = tpu.matmul %42, %11, %cst_17 {dimension_numbers = #tpu.dot_dimension_numbers<[1], [0], [0], [1], [0, 0, 1, 1], [], []>} : vector<2x16xf32>, vector<16x64xf32>, vector<2x64xf32> -> vector<2x64xf32>
    %49 = arith.addf %47, %48 : vector<2x64xf32>
    %50 = vector.extract_strided_slice %49 {offsets = [0, 0], sizes = [2, 16], strides = [1, 1]} : vector<2x64xf32> to vector<2x16xf32>
    %51 = arith.negf %50 : vector<2x16xf32>
    %52 = math.exp %51 : vector<2x16xf32>
    %cst_18 = arith.constant 1.000000e+00 : f32
    %53 = vector.broadcast %cst_18 : f32 to vector<2x16xf32>
    %54 = arith.addf %53, %52 : vector<2x16xf32>
    %55 = arith.divf %53, %54 : vector<2x16xf32>
    %56 = vector.extract_strided_slice %49 {offsets = [0, 16], sizes = [2, 16], strides = [1, 1]} : vector<2x64xf32> to vector<2x16xf32>
    %57 = arith.negf %56 : vector<2x16xf32>
    %58 = math.exp %57 : vector<2x16xf32>
    %cst_19 = arith.constant 1.000000e+00 : f32
    %59 = vector.broadcast %cst_19 : f32 to vector<2x16xf32>
    %60 = arith.addf %59, %58 : vector<2x16xf32>
    %61 = arith.divf %59, %60 : vector<2x16xf32>
    %62 = vector.extract_strided_slice %49 {offsets = [0, 32], sizes = [2, 16], strides = [1, 1]} : vector<2x64xf32> to vector<2x16xf32>
    %63 = math.tanh %62 : vector<2x16xf32>
    %64 = vector.extract_strided_slice %49 {offsets = [0, 48], sizes = [2, 16], strides = [1, 1]} : vector<2x64xf32> to vector<2x16xf32>
    %65 = arith.negf %64 : vector<2x16xf32>
    %66 = math.exp %65 : vector<2x16xf32>
    %cst_20 = arith.constant 1.000000e+00 : f32
    %67 = vector.broadcast %cst_20 : f32 to vector<2x16xf32>
    %68 = arith.addf %67, %66 : vector<2x16xf32>
    %69 = arith.divf %67, %68 : vector<2x16xf32>
    %70 = arith.mulf %61, %40 : vector<2x16xf32>
    %71 = arith.mulf %55, %63 : vector<2x16xf32>
    %72 = arith.addf %70, %71 : vector<2x16xf32>
    %73 = math.tanh %72 : vector<2x16xf32>
    %74 = arith.mulf %69, %73 : vector<2x16xf32>
    %c0_21 = arith.constant 0 : index
    %c1 = arith.constant 1 : index
    %c0_22 = arith.constant 0 : index
    %75 = vector.load %arg23[%c0_21, %c1, %c0_22] : memref<2x8x32xf32, #tpu.memory_space<vmem>>, vector<2x1x16xf32>
    %76 = vector.shape_cast %75 : vector<2x1x16xf32> to vector<2x16xf32>
    %77 = vector.shape_cast %74 : vector<2x16xf32> to vector<2x1x16xf32>
    tpu.vector_store %arg23[%c0_21, %c1, %c0_22], %77 {strides = array<i32>} : memref<2x8x32xf32, #tpu.memory_space<vmem>>, vector<2x1x16xf32>,
    %78 = vector.extract_strided_slice %9 {offsets = [0, 2, 0], sizes = [2, 1, 64], strides = [1, 1, 1]} : vector<2x8x64xf32> to vector<2x1x64xf32>
    %79 = vector.shape_cast %78 : vector<2x1x64xf32> to vector<2x64xf32>
    %cst_23 = arith.constant dense<0.000000e+00> : vector<2x64xf32>
    %80 = tpu.matmul %74, %11, %cst_23 {dimension_numbers = #tpu.dot_dimension_numbers<[1], [0], [0], [1], [0, 0, 1, 1], [], []>} : vector<2x16xf32>, vector<16x64xf32>, vector<2x64xf32> -> vector<2x64xf32>
    %81 = arith.addf %79, %80 : vector<2x64xf32>
    %82 = vector.extract_strided_slice %81 {offsets = [0, 0], sizes = [2, 16], strides = [1, 1]} : vector<2x64xf32> to vector<2x16xf32>
    %83 = arith.negf %82 : vector<2x16xf32>
    %84 = math.exp %83 : vector<2x16xf32>
    %cst_24 = arith.constant 1.000000e+00 : f32
    %85 = vector.broadcast %cst_24 : f32 to vector<2x16xf32>
    %86 = arith.addf %85, %84 : vector<2x16xf32>
    %87 = arith.divf %85, %86 : vector<2x16xf32>
    %88 = vector.extract_strided_slice %81 {offsets = [0, 16], sizes = [2, 16], strides = [1, 1]} : vector<2x64xf32> to vector<2x16xf32>
    %89 = arith.negf %88 : vector<2x16xf32>
    %90 = math.exp %89 : vector<2x16xf32>
    %cst_25 = arith.constant 1.000000e+00 : f32
    %91 = vector.broadcast %cst_25 : f32 to vector<2x16xf32>
    %92 = arith.addf %91, %90 : vector<2x16xf32>
    %93 = arith.divf %91, %92 : vector<2x16xf32>
    %94 = vector.extract_strided_slice %81 {offsets = [0, 32], sizes = [2, 16], strides = [1, 1]} : vector<2x64xf32> to vector<2x16xf32>
    %95 = math.tanh %94 : vector<2x16xf32>
    %96 = vector.extract_strided_slice %81 {offsets = [0, 48], sizes = [2, 16], strides = [1, 1]} : vector<2x64xf32> to vector<2x16xf32>
    %97 = arith.negf %96 : vector<2x16xf32>
    %98 = math.exp %97 : vector<2x16xf32>
    %cst_26 = arith.constant 1.000000e+00 : f32
    %99 = vector.broadcast %cst_26 : f32 to vector<2x16xf32>
    %100 = arith.addf %99, %98 : vector<2x16xf32>
    %101 = arith.divf %99, %100 : vector<2x16xf32>
    %102 = arith.mulf %93, %72 : vector<2x16xf32>
    %103 = arith.mulf %87, %95 : vector<2x16xf32>
    %104 = arith.addf %102, %103 : vector<2x16xf32>
    %105 = math.tanh %104 : vector<2x16xf32>
    %106 = arith.mulf %101, %105 : vector<2x16xf32>
    %c0_27 = arith.constant 0 : index
    %c2 = arith.constant 2 : index
    %c0_28 = arith.constant 0 : index
    %107 = vector.load %arg23[%c0_27, %c2, %c0_28] : memref<2x8x32xf32, #tpu.memory_space<vmem>>, vector<2x1x16xf32>
    %108 = vector.shape_cast %107 : vector<2x1x16xf32> to vector<2x16xf32>
    %109 = vector.shape_cast %106 : vector<2x16xf32> to vector<2x1x16xf32>
    tpu.vector_store %arg23[%c0_27, %c2, %c0_28], %109 {strides = array<i32>} : memref<2x8x32xf32, #tpu.memory_space<vmem>>, vector<2x1x16xf32>,
    %110 = vector.extract_strided_slice %9 {offsets = [0, 3, 0], sizes = [2, 1, 64], strides = [1, 1, 1]} : vector<2x8x64xf32> to vector<2x1x64xf32>
    %111 = vector.shape_cast %110 : vector<2x1x64xf32> to vector<2x64xf32>
    %cst_29 = arith.constant dense<0.000000e+00> : vector<2x64xf32>
    %112 = tpu.matmul %106, %11, %cst_29 {dimension_numbers = #tpu.dot_dimension_numbers<[1], [0], [0], [1], [0, 0, 1, 1], [], []>} : vector<2x16xf32>, vector<16x64xf32>, vector<2x64xf32> -> vector<2x64xf32>
    %113 = arith.addf %111, %112 : vector<2x64xf32>
    %114 = vector.extract_strided_slice %113 {offsets = [0, 0], sizes = [2, 16], strides = [1, 1]} : vector<2x64xf32> to vector<2x16xf32>
    %115 = arith.negf %114 : vector<2x16xf32>
    %116 = math.exp %115 : vector<2x16xf32>
    %cst_30 = arith.constant 1.000000e+00 : f32
    %117 = vector.broadcast %cst_30 : f32 to vector<2x16xf32>
    %118 = arith.addf %117, %116 : vector<2x16xf32>
    %119 = arith.divf %117, %118 : vector<2x16xf32>
    %120 = vector.extract_strided_slice %113 {offsets = [0, 16], sizes = [2, 16], strides = [1, 1]} : vector<2x64xf32> to vector<2x16xf32>
    %121 = arith.negf %120 : vector<2x16xf32>
    %122 = math.exp %121 : vector<2x16xf32>
    %cst_31 = arith.constant 1.000000e+00 : f32
    %123 = vector.broadcast %cst_31 : f32 to vector<2x16xf32>
    %124 = arith.addf %123, %122 : vector<2x16xf32>
    %125 = arith.divf %123, %124 : vector<2x16xf32>
    %126 = vector.extract_strided_slice %113 {offsets = [0, 32], sizes = [2, 16], strides = [1, 1]} : vector<2x64xf32> to vector<2x16xf32>
    %127 = math.tanh %126 : vector<2x16xf32>
    %128 = vector.extract_strided_slice %113 {offsets = [0, 48], sizes = [2, 16], strides = [1, 1]} : vector<2x64xf32> to vector<2x16xf32>
    %129 = arith.negf %128 : vector<2x16xf32>
    %130 = math.exp %129 : vector<2x16xf32>
    %cst_32 = arith.constant 1.000000e+00 : f32
    %131 = vector.broadcast %cst_32 : f32 to vector<2x16xf32>
    %132 = arith.addf %131, %130 : vector<2x16xf32>
    %133 = arith.divf %131, %132 : vector<2x16xf32>
    %134 = arith.mulf %125, %104 : vector<2x16xf32>
    %135 = arith.mulf %119, %127 : vector<2x16xf32>
    %136 = arith.addf %134, %135 : vector<2x16xf32>
    %137 = math.tanh %136 : vector<2x16xf32>
    %138 = arith.mulf %133, %137 : vector<2x16xf32>
    %c0_33 = arith.constant 0 : index
    %c3 = arith.constant 3 : index
    %c0_34 = arith.constant 0 : index
    %139 = vector.load %arg23[%c0_33, %c3, %c0_34] : memref<2x8x32xf32, #tpu.memory_space<vmem>>, vector<2x1x16xf32>
    %140 = vector.shape_cast %139 : vector<2x1x16xf32> to vector<2x16xf32>
    %141 = vector.shape_cast %138 : vector<2x16xf32> to vector<2x1x16xf32>
    tpu.vector_store %arg23[%c0_33, %c3, %c0_34], %141 {strides = array<i32>} : memref<2x8x32xf32, #tpu.memory_space<vmem>>, vector<2x1x16xf32>,
    %142 = vector.extract_strided_slice %9 {offsets = [0, 4, 0], sizes = [2, 1, 64], strides = [1, 1, 1]} : vector<2x8x64xf32> to vector<2x1x64xf32>
    %143 = vector.shape_cast %142 : vector<2x1x64xf32> to vector<2x64xf32>
    %cst_35 = arith.constant dense<0.000000e+00> : vector<2x64xf32>
    %144 = tpu.matmul %138, %11, %cst_35 {dimension_numbers = #tpu.dot_dimension_numbers<[1], [0], [0], [1], [0, 0, 1, 1], [], []>} : vector<2x16xf32>, vector<16x64xf32>, vector<2x64xf32> -> vector<2x64xf32>
    %145 = arith.addf %143, %144 : vector<2x64xf32>
    %146 = vector.extract_strided_slice %145 {offsets = [0, 0], sizes = [2, 16], strides = [1, 1]} : vector<2x64xf32> to vector<2x16xf32>
    %147 = arith.negf %146 : vector<2x16xf32>
    %148 = math.exp %147 : vector<2x16xf32>
    %cst_36 = arith.constant 1.000000e+00 : f32
    %149 = vector.broadcast %cst_36 : f32 to vector<2x16xf32>
    %150 = arith.addf %149, %148 : vector<2x16xf32>
    %151 = arith.divf %149, %150 : vector<2x16xf32>
    %152 = vector.extract_strided_slice %145 {offsets = [0, 16], sizes = [2, 16], strides = [1, 1]} : vector<2x64xf32> to vector<2x16xf32>
    %153 = arith.negf %152 : vector<2x16xf32>
    %154 = math.exp %153 : vector<2x16xf32>
    %cst_37 = arith.constant 1.000000e+00 : f32
    %155 = vector.broadcast %cst_37 : f32 to vector<2x16xf32>
    %156 = arith.addf %155, %154 : vector<2x16xf32>
    %157 = arith.divf %155, %156 : vector<2x16xf32>
    %158 = vector.extract_strided_slice %145 {offsets = [0, 32], sizes = [2, 16], strides = [1, 1]} : vector<2x64xf32> to vector<2x16xf32>
    %159 = math.tanh %158 : vector<2x16xf32>
    %160 = vector.extract_strided_slice %145 {offsets = [0, 48], sizes = [2, 16], strides = [1, 1]} : vector<2x64xf32> to vector<2x16xf32>
    %161 = arith.negf %160 : vector<2x16xf32>
    %162 = math.exp %161 : vector<2x16xf32>
    %cst_38 = arith.constant 1.000000e+00 : f32
    %163 = vector.broadcast %cst_38 : f32 to vector<2x16xf32>
    %164 = arith.addf %163, %162 : vector<2x16xf32>
    %165 = arith.divf %163, %164 : vector<2x16xf32>
    %166 = arith.mulf %157, %136 : vector<2x16xf32>
    %167 = arith.mulf %151, %159 : vector<2x16xf32>
    %168 = arith.addf %166, %167 : vector<2x16xf32>
    %169 = math.tanh %168 : vector<2x16xf32>
    %170 = arith.mulf %165, %169 : vector<2x16xf32>
    %c0_39 = arith.constant 0 : index
    %c4 = arith.constant 4 : index
    %c0_40 = arith.constant 0 : index
    %171 = vector.load %arg23[%c0_39, %c4, %c0_40] : memref<2x8x32xf32, #tpu.memory_space<vmem>>, vector<2x1x16xf32>
    %172 = vector.shape_cast %171 : vector<2x1x16xf32> to vector<2x16xf32>
    %173 = vector.shape_cast %170 : vector<2x16xf32> to vector<2x1x16xf32>
    tpu.vector_store %arg23[%c0_39, %c4, %c0_40], %173 {strides = array<i32>} : memref<2x8x32xf32, #tpu.memory_space<vmem>>, vector<2x1x16xf32>,
    %174 = vector.extract_strided_slice %9 {offsets = [0, 5, 0], sizes = [2, 1, 64], strides = [1, 1, 1]} : vector<2x8x64xf32> to vector<2x1x64xf32>
    %175 = vector.shape_cast %174 : vector<2x1x64xf32> to vector<2x64xf32>
    %cst_41 = arith.constant dense<0.000000e+00> : vector<2x64xf32>
    %176 = tpu.matmul %170, %11, %cst_41 {dimension_numbers = #tpu.dot_dimension_numbers<[1], [0], [0], [1], [0, 0, 1, 1], [], []>} : vector<2x16xf32>, vector<16x64xf32>, vector<2x64xf32> -> vector<2x64xf32>
    %177 = arith.addf %175, %176 : vector<2x64xf32>
    %178 = vector.extract_strided_slice %177 {offsets = [0, 0], sizes = [2, 16], strides = [1, 1]} : vector<2x64xf32> to vector<2x16xf32>
    %179 = arith.negf %178 : vector<2x16xf32>
    %180 = math.exp %179 : vector<2x16xf32>
    %cst_42 = arith.constant 1.000000e+00 : f32
    %181 = vector.broadcast %cst_42 : f32 to vector<2x16xf32>
    %182 = arith.addf %181, %180 : vector<2x16xf32>
    %183 = arith.divf %181, %182 : vector<2x16xf32>
    %184 = vector.extract_strided_slice %177 {offsets = [0, 16], sizes = [2, 16], strides = [1, 1]} : vector<2x64xf32> to vector<2x16xf32>
    %185 = arith.negf %184 : vector<2x16xf32>
    %186 = math.exp %185 : vector<2x16xf32>
    %cst_43 = arith.constant 1.000000e+00 : f32
    %187 = vector.broadcast %cst_43 : f32 to vector<2x16xf32>
    %188 = arith.addf %187, %186 : vector<2x16xf32>
    %189 = arith.divf %187, %188 : vector<2x16xf32>
    %190 = vector.extract_strided_slice %177 {offsets = [0, 32], sizes = [2, 16], strides = [1, 1]} : vector<2x64xf32> to vector<2x16xf32>
    %191 = math.tanh %190 : vector<2x16xf32>
    %192 = vector.extract_strided_slice %177 {offsets = [0, 48], sizes = [2, 16], strides = [1, 1]} : vector<2x64xf32> to vector<2x16xf32>
    %193 = arith.negf %192 : vector<2x16xf32>
    %194 = math.exp %193 : vector<2x16xf32>
    %cst_44 = arith.constant 1.000000e+00 : f32
    %195 = vector.broadcast %cst_44 : f32 to vector<2x16xf32>
    %196 = arith.addf %195, %194 : vector<2x16xf32>
    %197 = arith.divf %195, %196 : vector<2x16xf32>
    %198 = arith.mulf %189, %168 : vector<2x16xf32>
    %199 = arith.mulf %183, %191 : vector<2x16xf32>
    %200 = arith.addf %198, %199 : vector<2x16xf32>
    %201 = math.tanh %200 : vector<2x16xf32>
    %202 = arith.mulf %197, %201 : vector<2x16xf32>
    %c0_45 = arith.constant 0 : index
    %c5 = arith.constant 5 : index
    %c0_46 = arith.constant 0 : index
    %203 = vector.load %arg23[%c0_45, %c5, %c0_46] : memref<2x8x32xf32, #tpu.memory_space<vmem>>, vector<2x1x16xf32>
    %204 = vector.shape_cast %203 : vector<2x1x16xf32> to vector<2x16xf32>
    %205 = vector.shape_cast %202 : vector<2x16xf32> to vector<2x1x16xf32>
    tpu.vector_store %arg23[%c0_45, %c5, %c0_46], %205 {strides = array<i32>} : memref<2x8x32xf32, #tpu.memory_space<vmem>>, vector<2x1x16xf32>,
    %206 = vector.extract_strided_slice %9 {offsets = [0, 6, 0], sizes = [2, 1, 64], strides = [1, 1, 1]} : vector<2x8x64xf32> to vector<2x1x64xf32>
    %207 = vector.shape_cast %206 : vector<2x1x64xf32> to vector<2x64xf32>
    %cst_47 = arith.constant dense<0.000000e+00> : vector<2x64xf32>
    %208 = tpu.matmul %202, %11, %cst_47 {dimension_numbers = #tpu.dot_dimension_numbers<[1], [0], [0], [1], [0, 0, 1, 1], [], []>} : vector<2x16xf32>, vector<16x64xf32>, vector<2x64xf32> -> vector<2x64xf32>
    %209 = arith.addf %207, %208 : vector<2x64xf32>
    %210 = vector.extract_strided_slice %209 {offsets = [0, 0], sizes = [2, 16], strides = [1, 1]} : vector<2x64xf32> to vector<2x16xf32>
    %211 = arith.negf %210 : vector<2x16xf32>
    %212 = math.exp %211 : vector<2x16xf32>
    %cst_48 = arith.constant 1.000000e+00 : f32
    %213 = vector.broadcast %cst_48 : f32 to vector<2x16xf32>
    %214 = arith.addf %213, %212 : vector<2x16xf32>
    %215 = arith.divf %213, %214 : vector<2x16xf32>
    %216 = vector.extract_strided_slice %209 {offsets = [0, 16], sizes = [2, 16], strides = [1, 1]} : vector<2x64xf32> to vector<2x16xf32>
    %217 = arith.negf %216 : vector<2x16xf32>
    %218 = math.exp %217 : vector<2x16xf32>
    %cst_49 = arith.constant 1.000000e+00 : f32
    %219 = vector.broadcast %cst_49 : f32 to vector<2x16xf32>
    %220 = arith.addf %219, %218 : vector<2x16xf32>
    %221 = arith.divf %219, %220 : vector<2x16xf32>
    %222 = vector.extract_strided_slice %209 {offsets = [0, 32], sizes = [2, 16], strides = [1, 1]} : vector<2x64xf32> to vector<2x16xf32>
    %223 = math.tanh %222 : vector<2x16xf32>
    %224 = vector.extract_strided_slice %209 {offsets = [0, 48], sizes = [2, 16], strides = [1, 1]} : vector<2x64xf32> to vector<2x16xf32>
    %225 = arith.negf %224 : vector<2x16xf32>
    %226 = math.exp %225 : vector<2x16xf32>
    %cst_50 = arith.constant 1.000000e+00 : f32
    %227 = vector.broadcast %cst_50 : f32 to vector<2x16xf32>
    %228 = arith.addf %227, %226 : vector<2x16xf32>
    %229 = arith.divf %227, %228 : vector<2x16xf32>
    %230 = arith.mulf %221, %200 : vector<2x16xf32>
    %231 = arith.mulf %215, %223 : vector<2x16xf32>
    %232 = arith.addf %230, %231 : vector<2x16xf32>
    %233 = math.tanh %232 : vector<2x16xf32>
    %234 = arith.mulf %229, %233 : vector<2x16xf32>
    %c0_51 = arith.constant 0 : index
    %c6 = arith.constant 6 : index
    %c0_52 = arith.constant 0 : index
    %235 = vector.load %arg23[%c0_51, %c6, %c0_52] : memref<2x8x32xf32, #tpu.memory_space<vmem>>, vector<2x1x16xf32>
    %236 = vector.shape_cast %235 : vector<2x1x16xf32> to vector<2x16xf32>
    %237 = vector.shape_cast %234 : vector<2x16xf32> to vector<2x1x16xf32>
    tpu.vector_store %arg23[%c0_51, %c6, %c0_52], %237 {strides = array<i32>} : memref<2x8x32xf32, #tpu.memory_space<vmem>>, vector<2x1x16xf32>,
    %238 = vector.extract_strided_slice %9 {offsets = [0, 7, 0], sizes = [2, 1, 64], strides = [1, 1, 1]} : vector<2x8x64xf32> to vector<2x1x64xf32>
    %239 = vector.shape_cast %238 : vector<2x1x64xf32> to vector<2x64xf32>
    %cst_53 = arith.constant dense<0.000000e+00> : vector<2x64xf32>
    %240 = tpu.matmul %234, %11, %cst_53 {dimension_numbers = #tpu.dot_dimension_numbers<[1], [0], [0], [1], [0, 0, 1, 1], [], []>} : vector<2x16xf32>, vector<16x64xf32>, vector<2x64xf32> -> vector<2x64xf32>
    %241 = arith.addf %239, %240 : vector<2x64xf32>
    %242 = vector.extract_strided_slice %241 {offsets = [0, 0], sizes = [2, 16], strides = [1, 1]} : vector<2x64xf32> to vector<2x16xf32>
    %243 = arith.negf %242 : vector<2x16xf32>
    %244 = math.exp %243 : vector<2x16xf32>
    %cst_54 = arith.constant 1.000000e+00 : f32
    %245 = vector.broadcast %cst_54 : f32 to vector<2x16xf32>
    %246 = arith.addf %245, %244 : vector<2x16xf32>
    %247 = arith.divf %245, %246 : vector<2x16xf32>
    %248 = vector.extract_strided_slice %241 {offsets = [0, 16], sizes = [2, 16], strides = [1, 1]} : vector<2x64xf32> to vector<2x16xf32>
    %249 = arith.negf %248 : vector<2x16xf32>
    %250 = math.exp %249 : vector<2x16xf32>
    %cst_55 = arith.constant 1.000000e+00 : f32
    %251 = vector.broadcast %cst_55 : f32 to vector<2x16xf32>
    %252 = arith.addf %251, %250 : vector<2x16xf32>
    %253 = arith.divf %251, %252 : vector<2x16xf32>
    %254 = vector.extract_strided_slice %241 {offsets = [0, 32], sizes = [2, 16], strides = [1, 1]} : vector<2x64xf32> to vector<2x16xf32>
    %255 = math.tanh %254 : vector<2x16xf32>
    %256 = vector.extract_strided_slice %241 {offsets = [0, 48], sizes = [2, 16], strides = [1, 1]} : vector<2x64xf32> to vector<2x16xf32>
    %257 = arith.negf %256 : vector<2x16xf32>
    %258 = math.exp %257 : vector<2x16xf32>
    %cst_56 = arith.constant 1.000000e+00 : f32
    %259 = vector.broadcast %cst_56 : f32 to vector<2x16xf32>
    %260 = arith.addf %259, %258 : vector<2x16xf32>
    %261 = arith.divf %259, %260 : vector<2x16xf32>
    %262 = arith.mulf %253, %232 : vector<2x16xf32>
    %263 = arith.mulf %247, %255 : vector<2x16xf32>
    %264 = arith.addf %262, %263 : vector<2x16xf32>
    %265 = math.tanh %264 : vector<2x16xf32>
    %266 = arith.mulf %261, %265 : vector<2x16xf32>
    %c0_57 = arith.constant 0 : index
    %c7 = arith.constant 7 : index
    %c0_58 = arith.constant 0 : index
    %267 = vector.load %arg23[%c0_57, %c7, %c0_58] : memref<2x8x32xf32, #tpu.memory_space<vmem>>, vector<2x1x16xf32>
    %268 = vector.shape_cast %267 : vector<2x1x16xf32> to vector<2x16xf32>
    %269 = vector.shape_cast %266 : vector<2x16xf32> to vector<2x1x16xf32>
    tpu.vector_store %arg23[%c0_57, %c7, %c0_58], %269 {strides = array<i32>} : memref<2x8x32xf32, #tpu.memory_space<vmem>>, vector<2x1x16xf32>,
    %c0_59 = arith.constant 0 : index
    %c0_60 = arith.constant 0 : index
    %270 = vector.load %arg4[%c0_59, %c0_60] : memref<16x64xf32, #tpu.memory_space<vmem>>, vector<16x64xf32>
    %cst_61 = arith.constant 0.000000e+00 : f32
    %271 = vector.broadcast %cst_61 : f32 to vector<2x16xf32>
    %cst_62 = arith.constant 0.000000e+00 : f32
    %272 = vector.broadcast %cst_62 : f32 to vector<2x16xf32>
    %273 = vector.extract_strided_slice %10 {offsets = [0, 7, 0], sizes = [2, 1, 64], strides = [1, 1, 1]} : vector<2x8x64xf32> to vector<2x1x64xf32>
    %274 = vector.shape_cast %273 : vector<2x1x64xf32> to vector<2x64xf32>
    %cst_63 = arith.constant dense<0.000000e+00> : vector<2x64xf32>
    %275 = tpu.matmul %271, %270, %cst_63 {dimension_numbers = #tpu.dot_dimension_numbers<[1], [0], [0], [1], [0, 0, 1, 1], [], []>} : vector<2x16xf32>, vector<16x64xf32>, vector<2x64xf32> -> vector<2x64xf32>
    %276 = arith.addf %274, %275 : vector<2x64xf32>
    %277 = vector.extract_strided_slice %276 {offsets = [0, 0], sizes = [2, 16], strides = [1, 1]} : vector<2x64xf32> to vector<2x16xf32>
    %278 = arith.negf %277 : vector<2x16xf32>
    %279 = math.exp %278 : vector<2x16xf32>
    %cst_64 = arith.constant 1.000000e+00 : f32
    %280 = vector.broadcast %cst_64 : f32 to vector<2x16xf32>
    %281 = arith.addf %280, %279 : vector<2x16xf32>
    %282 = arith.divf %280, %281 : vector<2x16xf32>
    %283 = vector.extract_strided_slice %276 {offsets = [0, 16], sizes = [2, 16], strides = [1, 1]} : vector<2x64xf32> to vector<2x16xf32>
    %284 = arith.negf %283 : vector<2x16xf32>
    %285 = math.exp %284 : vector<2x16xf32>
    %cst_65 = arith.constant 1.000000e+00 : f32
    %286 = vector.broadcast %cst_65 : f32 to vector<2x16xf32>
    %287 = arith.addf %286, %285 : vector<2x16xf32>
    %288 = arith.divf %286, %287 : vector<2x16xf32>
    %289 = vector.extract_strided_slice %276 {offsets = [0, 32], sizes = [2, 16], strides = [1, 1]} : vector<2x64xf32> to vector<2x16xf32>
    %290 = math.tanh %289 : vector<2x16xf32>
    %291 = vector.extract_strided_slice %276 {offsets = [0, 48], sizes = [2, 16], strides = [1, 1]} : vector<2x64xf32> to vector<2x16xf32>
    %292 = arith.negf %291 : vector<2x16xf32>
    %293 = math.exp %292 : vector<2x16xf32>
    %cst_66 = arith.constant 1.000000e+00 : f32
    %294 = vector.broadcast %cst_66 : f32 to vector<2x16xf32>
    %295 = arith.addf %294, %293 : vector<2x16xf32>
    %296 = arith.divf %294, %295 : vector<2x16xf32>
    %297 = arith.mulf %288, %272 : vector<2x16xf32>
    %298 = arith.mulf %282, %290 : vector<2x16xf32>
    %299 = arith.addf %297, %298 : vector<2x16xf32>
    %300 = math.tanh %299 : vector<2x16xf32>
    %301 = arith.mulf %296, %300 : vector<2x16xf32>
    %c0_67 = arith.constant 0 : index
    %c7_68 = arith.constant 7 : index
    %c16 = arith.constant 16 : index
    %302 = vector.load %arg23[%c0_67, %c7_68, %c16] : memref<2x8x32xf32, #tpu.memory_space<vmem>>, vector<2x1x16xf32>
    %303 = vector.shape_cast %302 : vector<2x1x16xf32> to vector<2x16xf32>
    %304 = vector.shape_cast %301 : vector<2x16xf32> to vector<2x1x16xf32>
    tpu.vector_store %arg23[%c0_67, %c7_68, %c16], %304 {strides = array<i32>} : memref<2x8x32xf32, #tpu.memory_space<vmem>>, vector<2x1x16xf32>,
    %305 = vector.extract_strided_slice %10 {offsets = [0, 6, 0], sizes = [2, 1, 64], strides = [1, 1, 1]} : vector<2x8x64xf32> to vector<2x1x64xf32>
    %306 = vector.shape_cast %305 : vector<2x1x64xf32> to vector<2x64xf32>
    %cst_69 = arith.constant dense<0.000000e+00> : vector<2x64xf32>
    %307 = tpu.matmul %301, %270, %cst_69 {dimension_numbers = #tpu.dot_dimension_numbers<[1], [0], [0], [1], [0, 0, 1, 1], [], []>} : vector<2x16xf32>, vector<16x64xf32>, vector<2x64xf32> -> vector<2x64xf32>
    %308 = arith.addf %306, %307 : vector<2x64xf32>
    %309 = vector.extract_strided_slice %308 {offsets = [0, 0], sizes = [2, 16], strides = [1, 1]} : vector<2x64xf32> to vector<2x16xf32>
    %310 = arith.negf %309 : vector<2x16xf32>
    %311 = math.exp %310 : vector<2x16xf32>
    %cst_70 = arith.constant 1.000000e+00 : f32
    %312 = vector.broadcast %cst_70 : f32 to vector<2x16xf32>
    %313 = arith.addf %312, %311 : vector<2x16xf32>
    %314 = arith.divf %312, %313 : vector<2x16xf32>
    %315 = vector.extract_strided_slice %308 {offsets = [0, 16], sizes = [2, 16], strides = [1, 1]} : vector<2x64xf32> to vector<2x16xf32>
    %316 = arith.negf %315 : vector<2x16xf32>
    %317 = math.exp %316 : vector<2x16xf32>
    %cst_71 = arith.constant 1.000000e+00 : f32
    %318 = vector.broadcast %cst_71 : f32 to vector<2x16xf32>
    %319 = arith.addf %318, %317 : vector<2x16xf32>
    %320 = arith.divf %318, %319 : vector<2x16xf32>
    %321 = vector.extract_strided_slice %308 {offsets = [0, 32], sizes = [2, 16], strides = [1, 1]} : vector<2x64xf32> to vector<2x16xf32>
    %322 = math.tanh %321 : vector<2x16xf32>
    %323 = vector.extract_strided_slice %308 {offsets = [0, 48], sizes = [2, 16], strides = [1, 1]} : vector<2x64xf32> to vector<2x16xf32>
    %324 = arith.negf %323 : vector<2x16xf32>
    %325 = math.exp %324 : vector<2x16xf32>
    %cst_72 = arith.constant 1.000000e+00 : f32
    %326 = vector.broadcast %cst_72 : f32 to vector<2x16xf32>
    %327 = arith.addf %326, %325 : vector<2x16xf32>
    %328 = arith.divf %326, %327 : vector<2x16xf32>
    %329 = arith.mulf %320, %299 : vector<2x16xf32>
    %330 = arith.mulf %314, %322 : vector<2x16xf32>
    %331 = arith.addf %329, %330 : vector<2x16xf32>
    %332 = math.tanh %331 : vector<2x16xf32>
    %333 = arith.mulf %328, %332 : vector<2x16xf32>
    %c0_73 = arith.constant 0 : index
    %c6_74 = arith.constant 6 : index
    %c16_75 = arith.constant 16 : index
    %334 = vector.load %arg23[%c0_73, %c6_74, %c16_75] : memref<2x8x32xf32, #tpu.memory_space<vmem>>, vector<2x1x16xf32>
    %335 = vector.shape_cast %334 : vector<2x1x16xf32> to vector<2x16xf32>
    %336 = vector.shape_cast %333 : vector<2x16xf32> to vector<2x1x16xf32>
    tpu.vector_store %arg23[%c0_73, %c6_74, %c16_75], %336 {strides = array<i32>} : memref<2x8x32xf32, #tpu.memory_space<vmem>>, vector<2x1x16xf32>,
    %337 = vector.extract_strided_slice %10 {offsets = [0, 5, 0], sizes = [2, 1, 64], strides = [1, 1, 1]} : vector<2x8x64xf32> to vector<2x1x64xf32>
    %338 = vector.shape_cast %337 : vector<2x1x64xf32> to vector<2x64xf32>
    %cst_76 = arith.constant dense<0.000000e+00> : vector<2x64xf32>
    %339 = tpu.matmul %333, %270, %cst_76 {dimension_numbers = #tpu.dot_dimension_numbers<[1], [0], [0], [1], [0, 0, 1, 1], [], []>} : vector<2x16xf32>, vector<16x64xf32>, vector<2x64xf32> -> vector<2x64xf32>
    %340 = arith.addf %338, %339 : vector<2x64xf32>
    %341 = vector.extract_strided_slice %340 {offsets = [0, 0], sizes = [2, 16], strides = [1, 1]} : vector<2x64xf32> to vector<2x16xf32>
    %342 = arith.negf %341 : vector<2x16xf32>
    %343 = math.exp %342 : vector<2x16xf32>
    %cst_77 = arith.constant 1.000000e+00 : f32
    %344 = vector.broadcast %cst_77 : f32 to vector<2x16xf32>
    %345 = arith.addf %344, %343 : vector<2x16xf32>
    %346 = arith.divf %344, %345 : vector<2x16xf32>
    %347 = vector.extract_strided_slice %340 {offsets = [0, 16], sizes = [2, 16], strides = [1, 1]} : vector<2x64xf32> to vector<2x16xf32>
    %348 = arith.negf %347 : vector<2x16xf32>
    %349 = math.exp %348 : vector<2x16xf32>
    %cst_78 = arith.constant 1.000000e+00 : f32
    %350 = vector.broadcast %cst_78 : f32 to vector<2x16xf32>
    %351 = arith.addf %350, %349 : vector<2x16xf32>
    %352 = arith.divf %350, %351 : vector<2x16xf32>
    %353 = vector.extract_strided_slice %340 {offsets = [0, 32], sizes = [2, 16], strides = [1, 1]} : vector<2x64xf32> to vector<2x16xf32>
    %354 = math.tanh %353 : vector<2x16xf32>
    %355 = vector.extract_strided_slice %340 {offsets = [0, 48], sizes = [2, 16], strides = [1, 1]} : vector<2x64xf32> to vector<2x16xf32>
    %356 = arith.negf %355 : vector<2x16xf32>
    %357 = math.exp %356 : vector<2x16xf32>
    %cst_79 = arith.constant 1.000000e+00 : f32
    %358 = vector.broadcast %cst_79 : f32 to vector<2x16xf32>
    %359 = arith.addf %358, %357 : vector<2x16xf32>
    %360 = arith.divf %358, %359 : vector<2x16xf32>
    %361 = arith.mulf %352, %331 : vector<2x16xf32>
    %362 = arith.mulf %346, %354 : vector<2x16xf32>
    %363 = arith.addf %361, %362 : vector<2x16xf32>
    %364 = math.tanh %363 : vector<2x16xf32>
    %365 = arith.mulf %360, %364 : vector<2x16xf32>
    %c0_80 = arith.constant 0 : index
    %c5_81 = arith.constant 5 : index
    %c16_82 = arith.constant 16 : index
    %366 = vector.load %arg23[%c0_80, %c5_81, %c16_82] : memref<2x8x32xf32, #tpu.memory_space<vmem>>, vector<2x1x16xf32>
    %367 = vector.shape_cast %366 : vector<2x1x16xf32> to vector<2x16xf32>
    %368 = vector.shape_cast %365 : vector<2x16xf32> to vector<2x1x16xf32>
    tpu.vector_store %arg23[%c0_80, %c5_81, %c16_82], %368 {strides = array<i32>} : memref<2x8x32xf32, #tpu.memory_space<vmem>>, vector<2x1x16xf32>,
    %369 = vector.extract_strided_slice %10 {offsets = [0, 4, 0], sizes = [2, 1, 64], strides = [1, 1, 1]} : vector<2x8x64xf32> to vector<2x1x64xf32>
    %370 = vector.shape_cast %369 : vector<2x1x64xf32> to vector<2x64xf32>
    %cst_83 = arith.constant dense<0.000000e+00> : vector<2x64xf32>
    %371 = tpu.matmul %365, %270, %cst_83 {dimension_numbers = #tpu.dot_dimension_numbers<[1], [0], [0], [1], [0, 0, 1, 1], [], []>} : vector<2x16xf32>, vector<16x64xf32>, vector<2x64xf32> -> vector<2x64xf32>
    %372 = arith.addf %370, %371 : vector<2x64xf32>
    %373 = vector.extract_strided_slice %372 {offsets = [0, 0], sizes = [2, 16], strides = [1, 1]} : vector<2x64xf32> to vector<2x16xf32>
    %374 = arith.negf %373 : vector<2x16xf32>
    %375 = math.exp %374 : vector<2x16xf32>
    %cst_84 = arith.constant 1.000000e+00 : f32
    %376 = vector.broadcast %cst_84 : f32 to vector<2x16xf32>
    %377 = arith.addf %376, %375 : vector<2x16xf32>
    %378 = arith.divf %376, %377 : vector<2x16xf32>
    %379 = vector.extract_strided_slice %372 {offsets = [0, 16], sizes = [2, 16], strides = [1, 1]} : vector<2x64xf32> to vector<2x16xf32>
    %380 = arith.negf %379 : vector<2x16xf32>
    %381 = math.exp %380 : vector<2x16xf32>
    %cst_85 = arith.constant 1.000000e+00 : f32
    %382 = vector.broadcast %cst_85 : f32 to vector<2x16xf32>
    %383 = arith.addf %382, %381 : vector<2x16xf32>
    %384 = arith.divf %382, %383 : vector<2x16xf32>
    %385 = vector.extract_strided_slice %372 {offsets = [0, 32], sizes = [2, 16], strides = [1, 1]} : vector<2x64xf32> to vector<2x16xf32>
    %386 = math.tanh %385 : vector<2x16xf32>
    %387 = vector.extract_strided_slice %372 {offsets = [0, 48], sizes = [2, 16], strides = [1, 1]} : vector<2x64xf32> to vector<2x16xf32>
    %388 = arith.negf %387 : vector<2x16xf32>
    %389 = math.exp %388 : vector<2x16xf32>
    %cst_86 = arith.constant 1.000000e+00 : f32
    %390 = vector.broadcast %cst_86 : f32 to vector<2x16xf32>
    %391 = arith.addf %390, %389 : vector<2x16xf32>
    %392 = arith.divf %390, %391 : vector<2x16xf32>
    %393 = arith.mulf %384, %363 : vector<2x16xf32>
    %394 = arith.mulf %378, %386 : vector<2x16xf32>
    %395 = arith.addf %393, %394 : vector<2x16xf32>
    %396 = math.tanh %395 : vector<2x16xf32>
    %397 = arith.mulf %392, %396 : vector<2x16xf32>
    %c0_87 = arith.constant 0 : index
    %c4_88 = arith.constant 4 : index
    %c16_89 = arith.constant 16 : index
    %398 = vector.load %arg23[%c0_87, %c4_88, %c16_89] : memref<2x8x32xf32, #tpu.memory_space<vmem>>, vector<2x1x16xf32>
    %399 = vector.shape_cast %398 : vector<2x1x16xf32> to vector<2x16xf32>
    %400 = vector.shape_cast %397 : vector<2x16xf32> to vector<2x1x16xf32>
    tpu.vector_store %arg23[%c0_87, %c4_88, %c16_89], %400 {strides = array<i32>} : memref<2x8x32xf32, #tpu.memory_space<vmem>>, vector<2x1x16xf32>,
    %401 = vector.extract_strided_slice %10 {offsets = [0, 3, 0], sizes = [2, 1, 64], strides = [1, 1, 1]} : vector<2x8x64xf32> to vector<2x1x64xf32>
    %402 = vector.shape_cast %401 : vector<2x1x64xf32> to vector<2x64xf32>
    %cst_90 = arith.constant dense<0.000000e+00> : vector<2x64xf32>
    %403 = tpu.matmul %397, %270, %cst_90 {dimension_numbers = #tpu.dot_dimension_numbers<[1], [0], [0], [1], [0, 0, 1, 1], [], []>} : vector<2x16xf32>, vector<16x64xf32>, vector<2x64xf32> -> vector<2x64xf32>
    %404 = arith.addf %402, %403 : vector<2x64xf32>
    %405 = vector.extract_strided_slice %404 {offsets = [0, 0], sizes = [2, 16], strides = [1, 1]} : vector<2x64xf32> to vector<2x16xf32>
    %406 = arith.negf %405 : vector<2x16xf32>
    %407 = math.exp %406 : vector<2x16xf32>
    %cst_91 = arith.constant 1.000000e+00 : f32
    %408 = vector.broadcast %cst_91 : f32 to vector<2x16xf32>
    %409 = arith.addf %408, %407 : vector<2x16xf32>
    %410 = arith.divf %408, %409 : vector<2x16xf32>
    %411 = vector.extract_strided_slice %404 {offsets = [0, 16], sizes = [2, 16], strides = [1, 1]} : vector<2x64xf32> to vector<2x16xf32>
    %412 = arith.negf %411 : vector<2x16xf32>
    %413 = math.exp %412 : vector<2x16xf32>
    %cst_92 = arith.constant 1.000000e+00 : f32
    %414 = vector.broadcast %cst_92 : f32 to vector<2x16xf32>
    %415 = arith.addf %414, %413 : vector<2x16xf32>
    %416 = arith.divf %414, %415 : vector<2x16xf32>
    %417 = vector.extract_strided_slice %404 {offsets = [0, 32], sizes = [2, 16], strides = [1, 1]} : vector<2x64xf32> to vector<2x16xf32>
    %418 = math.tanh %417 : vector<2x16xf32>
    %419 = vector.extract_strided_slice %404 {offsets = [0, 48], sizes = [2, 16], strides = [1, 1]} : vector<2x64xf32> to vector<2x16xf32>
    %420 = arith.negf %419 : vector<2x16xf32>
    %421 = math.exp %420 : vector<2x16xf32>
    %cst_93 = arith.constant 1.000000e+00 : f32
    %422 = vector.broadcast %cst_93 : f32 to vector<2x16xf32>
    %423 = arith.addf %422, %421 : vector<2x16xf32>
    %424 = arith.divf %422, %423 : vector<2x16xf32>
    %425 = arith.mulf %416, %395 : vector<2x16xf32>
    %426 = arith.mulf %410, %418 : vector<2x16xf32>
    %427 = arith.addf %425, %426 : vector<2x16xf32>
    %428 = math.tanh %427 : vector<2x16xf32>
    %429 = arith.mulf %424, %428 : vector<2x16xf32>
    %c0_94 = arith.constant 0 : index
    %c3_95 = arith.constant 3 : index
    %c16_96 = arith.constant 16 : index
    %430 = vector.load %arg23[%c0_94, %c3_95, %c16_96] : memref<2x8x32xf32, #tpu.memory_space<vmem>>, vector<2x1x16xf32>
    %431 = vector.shape_cast %430 : vector<2x1x16xf32> to vector<2x16xf32>
    %432 = vector.shape_cast %429 : vector<2x16xf32> to vector<2x1x16xf32>
    tpu.vector_store %arg23[%c0_94, %c3_95, %c16_96], %432 {strides = array<i32>} : memref<2x8x32xf32, #tpu.memory_space<vmem>>, vector<2x1x16xf32>,
    %433 = vector.extract_strided_slice %10 {offsets = [0, 2, 0], sizes = [2, 1, 64], strides = [1, 1, 1]} : vector<2x8x64xf32> to vector<2x1x64xf32>
    %434 = vector.shape_cast %433 : vector<2x1x64xf32> to vector<2x64xf32>
    %cst_97 = arith.constant dense<0.000000e+00> : vector<2x64xf32>
    %435 = tpu.matmul %429, %270, %cst_97 {dimension_numbers = #tpu.dot_dimension_numbers<[1], [0], [0], [1], [0, 0, 1, 1], [], []>} : vector<2x16xf32>, vector<16x64xf32>, vector<2x64xf32> -> vector<2x64xf32>
    %436 = arith.addf %434, %435 : vector<2x64xf32>
    %437 = vector.extract_strided_slice %436 {offsets = [0, 0], sizes = [2, 16], strides = [1, 1]} : vector<2x64xf32> to vector<2x16xf32>
    %438 = arith.negf %437 : vector<2x16xf32>
    %439 = math.exp %438 : vector<2x16xf32>
    %cst_98 = arith.constant 1.000000e+00 : f32
    %440 = vector.broadcast %cst_98 : f32 to vector<2x16xf32>
    %441 = arith.addf %440, %439 : vector<2x16xf32>
    %442 = arith.divf %440, %441 : vector<2x16xf32>
    %443 = vector.extract_strided_slice %436 {offsets = [0, 16], sizes = [2, 16], strides = [1, 1]} : vector<2x64xf32> to vector<2x16xf32>
    %444 = arith.negf %443 : vector<2x16xf32>
    %445 = math.exp %444 : vector<2x16xf32>
    %cst_99 = arith.constant 1.000000e+00 : f32
    %446 = vector.broadcast %cst_99 : f32 to vector<2x16xf32>
    %447 = arith.addf %446, %445 : vector<2x16xf32>
    %448 = arith.divf %446, %447 : vector<2x16xf32>
    %449 = vector.extract_strided_slice %436 {offsets = [0, 32], sizes = [2, 16], strides = [1, 1]} : vector<2x64xf32> to vector<2x16xf32>
    %450 = math.tanh %449 : vector<2x16xf32>
    %451 = vector.extract_strided_slice %436 {offsets = [0, 48], sizes = [2, 16], strides = [1, 1]} : vector<2x64xf32> to vector<2x16xf32>
    %452 = arith.negf %451 : vector<2x16xf32>
    %453 = math.exp %452 : vector<2x16xf32>
    %cst_100 = arith.constant 1.000000e+00 : f32
    %454 = vector.broadcast %cst_100 : f32 to vector<2x16xf32>
    %455 = arith.addf %454, %453 : vector<2x16xf32>
    %456 = arith.divf %454, %455 : vector<2x16xf32>
    %457 = arith.mulf %448, %427 : vector<2x16xf32>
    %458 = arith.mulf %442, %450 : vector<2x16xf32>
    %459 = arith.addf %457, %458 : vector<2x16xf32>
    %460 = math.tanh %459 : vector<2x16xf32>
    %461 = arith.mulf %456, %460 : vector<2x16xf32>
    %c0_101 = arith.constant 0 : index
    %c2_102 = arith.constant 2 : index
    %c16_103 = arith.constant 16 : index
    %462 = vector.load %arg23[%c0_101, %c2_102, %c16_103] : memref<2x8x32xf32, #tpu.memory_space<vmem>>, vector<2x1x16xf32>
    %463 = vector.shape_cast %462 : vector<2x1x16xf32> to vector<2x16xf32>
    %464 = vector.shape_cast %461 : vector<2x16xf32> to vector<2x1x16xf32>
    tpu.vector_store %arg23[%c0_101, %c2_102, %c16_103], %464 {strides = array<i32>} : memref<2x8x32xf32, #tpu.memory_space<vmem>>, vector<2x1x16xf32>,
    %465 = vector.extract_strided_slice %10 {offsets = [0, 1, 0], sizes = [2, 1, 64], strides = [1, 1, 1]} : vector<2x8x64xf32> to vector<2x1x64xf32>
    %466 = vector.shape_cast %465 : vector<2x1x64xf32> to vector<2x64xf32>
    %cst_104 = arith.constant dense<0.000000e+00> : vector<2x64xf32>
    %467 = tpu.matmul %461, %270, %cst_104 {dimension_numbers = #tpu.dot_dimension_numbers<[1], [0], [0], [1], [0, 0, 1, 1], [], []>} : vector<2x16xf32>, vector<16x64xf32>, vector<2x64xf32> -> vector<2x64xf32>
    %468 = arith.addf %466, %467 : vector<2x64xf32>
    %469 = vector.extract_strided_slice %468 {offsets = [0, 0], sizes = [2, 16], strides = [1, 1]} : vector<2x64xf32> to vector<2x16xf32>
    %470 = arith.negf %469 : vector<2x16xf32>
    %471 = math.exp %470 : vector<2x16xf32>
    %cst_105 = arith.constant 1.000000e+00 : f32
    %472 = vector.broadcast %cst_105 : f32 to vector<2x16xf32>
    %473 = arith.addf %472, %471 : vector<2x16xf32>
    %474 = arith.divf %472, %473 : vector<2x16xf32>
    %475 = vector.extract_strided_slice %468 {offsets = [0, 16], sizes = [2, 16], strides = [1, 1]} : vector<2x64xf32> to vector<2x16xf32>
    %476 = arith.negf %475 : vector<2x16xf32>
    %477 = math.exp %476 : vector<2x16xf32>
    %cst_106 = arith.constant 1.000000e+00 : f32
    %478 = vector.broadcast %cst_106 : f32 to vector<2x16xf32>
    %479 = arith.addf %478, %477 : vector<2x16xf32>
    %480 = arith.divf %478, %479 : vector<2x16xf32>
    %481 = vector.extract_strided_slice %468 {offsets = [0, 32], sizes = [2, 16], strides = [1, 1]} : vector<2x64xf32> to vector<2x16xf32>
    %482 = math.tanh %481 : vector<2x16xf32>
    %483 = vector.extract_strided_slice %468 {offsets = [0, 48], sizes = [2, 16], strides = [1, 1]} : vector<2x64xf32> to vector<2x16xf32>
    %484 = arith.negf %483 : vector<2x16xf32>
    %485 = math.exp %484 : vector<2x16xf32>
    %cst_107 = arith.constant 1.000000e+00 : f32
    %486 = vector.broadcast %cst_107 : f32 to vector<2x16xf32>
    %487 = arith.addf %486, %485 : vector<2x16xf32>
    %488 = arith.divf %486, %487 : vector<2x16xf32>
    %489 = arith.mulf %480, %459 : vector<2x16xf32>
    %490 = arith.mulf %474, %482 : vector<2x16xf32>
    %491 = arith.addf %489, %490 : vector<2x16xf32>
    %492 = math.tanh %491 : vector<2x16xf32>
    %493 = arith.mulf %488, %492 : vector<2x16xf32>
    %c0_108 = arith.constant 0 : index
    %c1_109 = arith.constant 1 : index
    %c16_110 = arith.constant 16 : index
    %494 = vector.load %arg23[%c0_108, %c1_109, %c16_110] : memref<2x8x32xf32, #tpu.memory_space<vmem>>, vector<2x1x16xf32>
    %495 = vector.shape_cast %494 : vector<2x1x16xf32> to vector<2x16xf32>
    %496 = vector.shape_cast %493 : vector<2x16xf32> to vector<2x1x16xf32>
    tpu.vector_store %arg23[%c0_108, %c1_109, %c16_110], %496 {strides = array<i32>} : memref<2x8x32xf32, #tpu.memory_space<vmem>>, vector<2x1x16xf32>,
    %497 = vector.extract_strided_slice %10 {offsets = [0, 0, 0], sizes = [2, 1, 64], strides = [1, 1, 1]} : vector<2x8x64xf32> to vector<2x1x64xf32>
    %498 = vector.shape_cast %497 : vector<2x1x64xf32> to vector<2x64xf32>
    %cst_111 = arith.constant dense<0.000000e+00> : vector<2x64xf32>
    %499 = tpu.matmul %493, %270, %cst_111 {dimension_numbers = #tpu.dot_dimension_numbers<[1], [0], [0], [1], [0, 0, 1, 1], [], []>} : vector<2x16xf32>, vector<16x64xf32>, vector<2x64xf32> -> vector<2x64xf32>
    %500 = arith.addf %498, %499 : vector<2x64xf32>
    %501 = vector.extract_strided_slice %500 {offsets = [0, 0], sizes = [2, 16], strides = [1, 1]} : vector<2x64xf32> to vector<2x16xf32>
    %502 = arith.negf %501 : vector<2x16xf32>
    %503 = math.exp %502 : vector<2x16xf32>
    %cst_112 = arith.constant 1.000000e+00 : f32
    %504 = vector.broadcast %cst_112 : f32 to vector<2x16xf32>
    %505 = arith.addf %504, %503 : vector<2x16xf32>
    %506 = arith.divf %504, %505 : vector<2x16xf32>
    %507 = vector.extract_strided_slice %500 {offsets = [0, 16], sizes = [2, 16], strides = [1, 1]} : vector<2x64xf32> to vector<2x16xf32>
    %508 = arith.negf %507 : vector<2x16xf32>
    %509 = math.exp %508 : vector<2x16xf32>
    %cst_113 = arith.constant 1.000000e+00 : f32
    %510 = vector.broadcast %cst_113 : f32 to vector<2x16xf32>
    %511 = arith.addf %510, %509 : vector<2x16xf32>
    %512 = arith.divf %510, %511 : vector<2x16xf32>
    %513 = vector.extract_strided_slice %500 {offsets = [0, 32], sizes = [2, 16], strides = [1, 1]} : vector<2x64xf32> to vector<2x16xf32>
    %514 = math.tanh %513 : vector<2x16xf32>
    %515 = vector.extract_strided_slice %500 {offsets = [0, 48], sizes = [2, 16], strides = [1, 1]} : vector<2x64xf32> to vector<2x16xf32>
    %516 = arith.negf %515 : vector<2x16xf32>
    %517 = math.exp %516 : vector<2x16xf32>
    %cst_114 = arith.constant 1.000000e+00 : f32
    %518 = vector.broadcast %cst_114 : f32 to vector<2x16xf32>
    %519 = arith.addf %518, %517 : vector<2x16xf32>
    %520 = arith.divf %518, %519 : vector<2x16xf32>
    %521 = arith.mulf %512, %491 : vector<2x16xf32>
    %522 = arith.mulf %506, %514 : vector<2x16xf32>
    %523 = arith.addf %521, %522 : vector<2x16xf32>
    %524 = math.tanh %523 : vector<2x16xf32>
    %525 = arith.mulf %520, %524 : vector<2x16xf32>
    %c0_115 = arith.constant 0 : index
    %c0_116 = arith.constant 0 : index
    %c16_117 = arith.constant 16 : index
    %526 = vector.load %arg23[%c0_115, %c0_116, %c16_117] : memref<2x8x32xf32, #tpu.memory_space<vmem>>, vector<2x1x16xf32>
    %527 = vector.shape_cast %526 : vector<2x1x16xf32> to vector<2x16xf32>
    %528 = vector.shape_cast %525 : vector<2x16xf32> to vector<2x1x16xf32>
    tpu.vector_store %arg23[%c0_115, %c0_116, %c16_117], %528 {strides = array<i32>} : memref<2x8x32xf32, #tpu.memory_space<vmem>>, vector<2x1x16xf32>,
    %c0_118 = arith.constant 0 : index
    %c0_119 = arith.constant 0 : index
    %c0_120 = arith.constant 0 : index
    %529 = vector.load %arg23[%c0_118, %c0_119, %c0_120] : memref<2x8x32xf32, #tpu.memory_space<vmem>>, vector<2x8x32xf32>
    %c0_121 = arith.constant 0 : index
    %c0_122 = arith.constant 0 : index
    %530 = vector.load %arg5[%c0_121, %c0_122] : memref<8x32xf32, #tpu.memory_space<vmem>>, vector<8x32xf32>
    %531 = vector.shape_cast %530 : vector<8x32xf32> to vector<1x8x32xf32>
    %532 = vector.broadcast %531 : vector<1x8x32xf32> to vector<2x8x32xf32>
    %533 = arith.addf %529, %532 : vector<2x8x32xf32>
    %534 = vector.shape_cast %533 : vector<2x8x32xf32> to vector<16x32xf32>
    %c0_123 = arith.constant 0 : index
    %c0_124 = arith.constant 0 : index
    %c0_125 = arith.constant 0 : index
    %535 = vector.load %arg6[%c0_123, %c0_124, %c0_125] : memref<2x1x32xf32, #tpu.memory_space<vmem>>, vector<1x1x32xf32>
    %536 = vector.shape_cast %535 : vector<1x1x32xf32> to vector<1x32xf32>
    %c0_126 = arith.constant 0 : index
    %c0_127 = arith.constant 0 : index
    %c0_128 = arith.constant 0 : index
    %537 = vector.load %arg7[%c0_126, %c0_127, %c0_128] : memref<2x1x32xf32, #tpu.memory_space<vmem>>, vector<1x1x32xf32>
    %538 = vector.shape_cast %537 : vector<1x1x32xf32> to vector<1x32xf32>
    %cst_129 = arith.constant dense<0.000000e+00> : vector<16xf32>
    %539 = vector.multi_reduction <add>, %534, %cst_129 [1] : vector<16x32xf32> to vector<16xf32>
    %540 = vector.shape_cast %539 : vector<16xf32> to vector<16x1xf32>
    %cst_130 = arith.constant 3.200000e+01 : f32
    %541 = vector.broadcast %cst_130 : f32 to vector<16x1xf32>
    %542 = arith.divf %540, %541 : vector<16x1xf32>
    %543 = vector.broadcast %542 : vector<16x1xf32> to vector<16x32xf32>
    %544 = arith.subf %534, %543 : vector<16x32xf32>
    %545 = arith.mulf %544, %544 : vector<16x32xf32>
    %cst_131 = arith.constant dense<0.000000e+00> : vector<16xf32>
    %546 = vector.multi_reduction <add>, %545, %cst_131 [1] : vector<16x32xf32> to vector<16xf32>
    %547 = vector.shape_cast %546 : vector<16xf32> to vector<16x1xf32>
    %cst_132 = arith.constant 3.200000e+01 : f32
    %548 = vector.broadcast %cst_132 : f32 to vector<16x1xf32>
    %549 = arith.divf %547, %548 : vector<16x1xf32>
    %550 = vector.broadcast %542 : vector<16x1xf32> to vector<16x32xf32>
    %551 = arith.subf %534, %550 : vector<16x32xf32>
    %cst_133 = arith.constant 9.99999974E-6 : f32
    %552 = vector.broadcast %cst_133 : f32 to vector<16x1xf32>
    %553 = arith.addf %549, %552 : vector<16x1xf32>
    %554 = math.rsqrt %553 : vector<16x1xf32>
    %555 = vector.broadcast %554 : vector<16x1xf32> to vector<16x32xf32>
    %556 = arith.mulf %551, %555 : vector<16x32xf32>
    %557 = vector.broadcast %536 : vector<1x32xf32> to vector<16x32xf32>
    %558 = arith.mulf %556, %557 : vector<16x32xf32>
    %559 = vector.broadcast %538 : vector<1x32xf32> to vector<16x32xf32>
    %560 = arith.addf %558, %559 : vector<16x32xf32>
    %561 = arith.truncf %560 : vector<16x32xf32> to vector<16x32xbf16>
    %c0_134 = arith.constant 0 : index
    %c0_135 = arith.constant 0 : index
    %c0_136 = arith.constant 0 : index
    %562 = vector.load %arg8[%c0_134, %c0_135, %c0_136] : memref<2x32x96xbf16, #tpu.memory_space<vmem>>, vector<1x32x96xbf16>
    %563 = vector.shape_cast %562 : vector<1x32x96xbf16> to vector<32x96xbf16>
    %cst_137 = arith.constant dense<0.000000e+00> : vector<16x96xf32>
    %564 = tpu.matmul %561, %563, %cst_137 {dimension_numbers = #tpu.dot_dimension_numbers<[1], [0], [0], [1], [0, 0, 1, 1], [], []>} : vector<16x32xbf16>, vector<32x96xbf16>, vector<16x96xf32> -> vector<16x96xf32>
    %c0_138 = arith.constant 0 : index
    %c0_139 = arith.constant 0 : index
    %c0_140 = arith.constant 0 : index
    %565 = vector.load %arg9[%c0_138, %c0_139, %c0_140] : memref<2x1x96xf32, #tpu.memory_space<vmem>>, vector<1x1x96xf32>
    %566 = vector.shape_cast %565 : vector<1x1x96xf32> to vector<1x96xf32>
    %567 = vector.broadcast %566 : vector<1x96xf32> to vector<16x96xf32>
    %568 = arith.addf %564, %567 : vector<16x96xf32>
    %569 = vector.extract_strided_slice %568 {offsets = [0, 0], sizes = [16, 32], strides = [1, 1]} : vector<16x96xf32> to vector<16x32xf32>
    %570 = vector.shape_cast %569 : vector<16x32xf32> to vector<2x8x32xf32>
    %571 = vector.extract_strided_slice %568 {offsets = [0, 32], sizes = [16, 32], strides = [1, 1]} : vector<16x96xf32> to vector<16x32xf32>
    %572 = vector.shape_cast %571 : vector<16x32xf32> to vector<2x8x32xf32>
    %573 = vector.extract_strided_slice %568 {offsets = [0, 64], sizes = [16, 32], strides = [1, 1]} : vector<16x96xf32> to vector<16x32xf32>
    %574 = vector.shape_cast %573 : vector<16x32xf32> to vector<2x8x32xf32>
    %575 = vector.extract_strided_slice %570 {offsets = [0, 0, 0], sizes = [2, 8, 8], strides = [1, 1, 1]} : vector<2x8x32xf32> to vector<2x8x8xf32>
    %576 = vector.extract_strided_slice %572 {offsets = [0, 0, 0], sizes = [2, 8, 8], strides = [1, 1, 1]} : vector<2x8x32xf32> to vector<2x8x8xf32>
    %577 = vector.extract_strided_slice %574 {offsets = [0, 0, 0], sizes = [2, 8, 8], strides = [1, 1, 1]} : vector<2x8x32xf32> to vector<2x8x8xf32>
    "tpu.trace_start"() <{level = 10 : i32, message = "bqd,bkd->bqk"}> : () -> ()
    %cst_141 = arith.constant dense<0.000000e+00> : vector<2x8x8xf32>
    %578 = tpu.matmul %575, %576, %cst_141 {dimension_numbers = #tpu.dot_dimension_numbers<[2], [2], [1], [1], [0, 0, 0, 1, 1, 1], [0], [0]>} : vector<2x8x8xf32>, vector<2x8x8xf32>, vector<2x8x8xf32> -> vector<2x8x8xf32>
    "tpu.trace_stop"() : () -> ()
    %cst_142 = arith.constant 0.353553385 : f32
    %579 = vector.broadcast %cst_142 : f32 to vector<2x8x8xf32>
    %580 = arith.mulf %578, %579 : vector<2x8x8xf32>
    %cst_143 = arith.constant dense<0xFF800000> : vector<2x8xf32>
    %581 = vector.multi_reduction <maximumf>, %580, %cst_143 [2] : vector<2x8x8xf32> to vector<2x8xf32>
    %582 = vector.shape_cast %581 : vector<2x8xf32> to vector<2x8x1xf32>
    %583 = vector.broadcast %582 : vector<2x8x1xf32> to vector<2x8x8xf32>
    %584 = arith.subf %580, %583 : vector<2x8x8xf32>
    %585 = math.exp %584 : vector<2x8x8xf32>
    %cst_144 = arith.constant dense<0.000000e+00> : vector<2x8xf32>
    %586 = vector.multi_reduction <add>, %585, %cst_144 [2] : vector<2x8x8xf32> to vector<2x8xf32>
    %587 = vector.shape_cast %586 : vector<2x8xf32> to vector<2x8x1xf32>
    %588 = tpu.reciprocal %587 {approx = true} : vector<2x8x1xf32> -> vector<2x8x1xf32>
    %589 = vector.broadcast %588 : vector<2x8x1xf32> to vector<2x8x8xf32>
    %590 = arith.mulf %585, %589 : vector<2x8x8xf32>
    "tpu.trace_start"() <{level = 10 : i32, message = "bqk,bkd->bqd"}> : () -> ()
    %cst_145 = arith.constant dense<0.000000e+00> : vector<2x8x8xf32>
    %591 = tpu.matmul %590, %577, %cst_145 {dimension_numbers = #tpu.dot_dimension_numbers<[2], [1], [1], [2], [0, 0, 0, 1, 1, 2], [0], [0]>} : vector<2x8x8xf32>, vector<2x8x8xf32>, vector<2x8x8xf32> -> vector<2x8x8xf32>
    "tpu.trace_stop"() : () -> ()
    %592 = vector.extract_strided_slice %570 {offsets = [0, 0, 8], sizes = [2, 8, 8], strides = [1, 1, 1]} : vector<2x8x32xf32> to vector<2x8x8xf32>
    %593 = vector.extract_strided_slice %572 {offsets = [0, 0, 8], sizes = [2, 8, 8], strides = [1, 1, 1]} : vector<2x8x32xf32> to vector<2x8x8xf32>
    %594 = vector.extract_strided_slice %574 {offsets = [0, 0, 8], sizes = [2, 8, 8], strides = [1, 1, 1]} : vector<2x8x32xf32> to vector<2x8x8xf32>
    "tpu.trace_start"() <{level = 10 : i32, message = "bqd,bkd->bqk"}> : () -> ()
    %cst_146 = arith.constant dense<0.000000e+00> : vector<2x8x8xf32>
    %595 = tpu.matmul %592, %593, %cst_146 {dimension_numbers = #tpu.dot_dimension_numbers<[2], [2], [1], [1], [0, 0, 0, 1, 1, 1], [0], [0]>} : vector<2x8x8xf32>, vector<2x8x8xf32>, vector<2x8x8xf32> -> vector<2x8x8xf32>
    "tpu.trace_stop"() : () -> ()
    %cst_147 = arith.constant 0.353553385 : f32
    %596 = vector.broadcast %cst_147 : f32 to vector<2x8x8xf32>
    %597 = arith.mulf %595, %596 : vector<2x8x8xf32>
    %cst_148 = arith.constant dense<0xFF800000> : vector<2x8xf32>
    %598 = vector.multi_reduction <maximumf>, %597, %cst_148 [2] : vector<2x8x8xf32> to vector<2x8xf32>
    %599 = vector.shape_cast %598 : vector<2x8xf32> to vector<2x8x1xf32>
    %600 = vector.broadcast %599 : vector<2x8x1xf32> to vector<2x8x8xf32>
    %601 = arith.subf %597, %600 : vector<2x8x8xf32>
    %602 = math.exp %601 : vector<2x8x8xf32>
    %cst_149 = arith.constant dense<0.000000e+00> : vector<2x8xf32>
    %603 = vector.multi_reduction <add>, %602, %cst_149 [2] : vector<2x8x8xf32> to vector<2x8xf32>
    %604 = vector.shape_cast %603 : vector<2x8xf32> to vector<2x8x1xf32>
    %605 = tpu.reciprocal %604 {approx = true} : vector<2x8x1xf32> -> vector<2x8x1xf32>
    %606 = vector.broadcast %605 : vector<2x8x1xf32> to vector<2x8x8xf32>
    %607 = arith.mulf %602, %606 : vector<2x8x8xf32>
    "tpu.trace_start"() <{level = 10 : i32, message = "bqk,bkd->bqd"}> : () -> ()
    %cst_150 = arith.constant dense<0.000000e+00> : vector<2x8x8xf32>
    %608 = tpu.matmul %607, %594, %cst_150 {dimension_numbers = #tpu.dot_dimension_numbers<[2], [1], [1], [2], [0, 0, 0, 1, 1, 2], [0], [0]>} : vector<2x8x8xf32>, vector<2x8x8xf32>, vector<2x8x8xf32> -> vector<2x8x8xf32>
    "tpu.trace_stop"() : () -> ()
    %609 = vector.extract_strided_slice %570 {offsets = [0, 0, 16], sizes = [2, 8, 8], strides = [1, 1, 1]} : vector<2x8x32xf32> to vector<2x8x8xf32>
    %610 = vector.extract_strided_slice %572 {offsets = [0, 0, 16], sizes = [2, 8, 8], strides = [1, 1, 1]} : vector<2x8x32xf32> to vector<2x8x8xf32>
    %611 = vector.extract_strided_slice %574 {offsets = [0, 0, 16], sizes = [2, 8, 8], strides = [1, 1, 1]} : vector<2x8x32xf32> to vector<2x8x8xf32>
    "tpu.trace_start"() <{level = 10 : i32, message = "bqd,bkd->bqk"}> : () -> ()
    %cst_151 = arith.constant dense<0.000000e+00> : vector<2x8x8xf32>
    %612 = tpu.matmul %609, %610, %cst_151 {dimension_numbers = #tpu.dot_dimension_numbers<[2], [2], [1], [1], [0, 0, 0, 1, 1, 1], [0], [0]>} : vector<2x8x8xf32>, vector<2x8x8xf32>, vector<2x8x8xf32> -> vector<2x8x8xf32>
    "tpu.trace_stop"() : () -> ()
    %cst_152 = arith.constant 0.353553385 : f32
    %613 = vector.broadcast %cst_152 : f32 to vector<2x8x8xf32>
    %614 = arith.mulf %612, %613 : vector<2x8x8xf32>
    %cst_153 = arith.constant dense<0xFF800000> : vector<2x8xf32>
    %615 = vector.multi_reduction <maximumf>, %614, %cst_153 [2] : vector<2x8x8xf32> to vector<2x8xf32>
    %616 = vector.shape_cast %615 : vector<2x8xf32> to vector<2x8x1xf32>
    %617 = vector.broadcast %616 : vector<2x8x1xf32> to vector<2x8x8xf32>
    %618 = arith.subf %614, %617 : vector<2x8x8xf32>
    %619 = math.exp %618 : vector<2x8x8xf32>
    %cst_154 = arith.constant dense<0.000000e+00> : vector<2x8xf32>
    %620 = vector.multi_reduction <add>, %619, %cst_154 [2] : vector<2x8x8xf32> to vector<2x8xf32>
    %621 = vector.shape_cast %620 : vector<2x8xf32> to vector<2x8x1xf32>
    %622 = tpu.reciprocal %621 {approx = true} : vector<2x8x1xf32> -> vector<2x8x1xf32>
    %623 = vector.broadcast %622 : vector<2x8x1xf32> to vector<2x8x8xf32>
    %624 = arith.mulf %619, %623 : vector<2x8x8xf32>
    "tpu.trace_start"() <{level = 10 : i32, message = "bqk,bkd->bqd"}> : () -> ()
    %cst_155 = arith.constant dense<0.000000e+00> : vector<2x8x8xf32>
    %625 = tpu.matmul %624, %611, %cst_155 {dimension_numbers = #tpu.dot_dimension_numbers<[2], [1], [1], [2], [0, 0, 0, 1, 1, 2], [0], [0]>} : vector<2x8x8xf32>, vector<2x8x8xf32>, vector<2x8x8xf32> -> vector<2x8x8xf32>
    "tpu.trace_stop"() : () -> ()
    %626 = vector.extract_strided_slice %570 {offsets = [0, 0, 24], sizes = [2, 8, 8], strides = [1, 1, 1]} : vector<2x8x32xf32> to vector<2x8x8xf32>
    %627 = vector.extract_strided_slice %572 {offsets = [0, 0, 24], sizes = [2, 8, 8], strides = [1, 1, 1]} : vector<2x8x32xf32> to vector<2x8x8xf32>
    %628 = vector.extract_strided_slice %574 {offsets = [0, 0, 24], sizes = [2, 8, 8], strides = [1, 1, 1]} : vector<2x8x32xf32> to vector<2x8x8xf32>
    "tpu.trace_start"() <{level = 10 : i32, message = "bqd,bkd->bqk"}> : () -> ()
    %cst_156 = arith.constant dense<0.000000e+00> : vector<2x8x8xf32>
    %629 = tpu.matmul %626, %627, %cst_156 {dimension_numbers = #tpu.dot_dimension_numbers<[2], [2], [1], [1], [0, 0, 0, 1, 1, 1], [0], [0]>} : vector<2x8x8xf32>, vector<2x8x8xf32>, vector<2x8x8xf32> -> vector<2x8x8xf32>
    "tpu.trace_stop"() : () -> ()
    %cst_157 = arith.constant 0.353553385 : f32
    %630 = vector.broadcast %cst_157 : f32 to vector<2x8x8xf32>
    %631 = arith.mulf %629, %630 : vector<2x8x8xf32>
    %cst_158 = arith.constant dense<0xFF800000> : vector<2x8xf32>
    %632 = vector.multi_reduction <maximumf>, %631, %cst_158 [2] : vector<2x8x8xf32> to vector<2x8xf32>
    %633 = vector.shape_cast %632 : vector<2x8xf32> to vector<2x8x1xf32>
    %634 = vector.broadcast %633 : vector<2x8x1xf32> to vector<2x8x8xf32>
    %635 = arith.subf %631, %634 : vector<2x8x8xf32>
    %636 = math.exp %635 : vector<2x8x8xf32>
    %cst_159 = arith.constant dense<0.000000e+00> : vector<2x8xf32>
    %637 = vector.multi_reduction <add>, %636, %cst_159 [2] : vector<2x8x8xf32> to vector<2x8xf32>
    %638 = vector.shape_cast %637 : vector<2x8xf32> to vector<2x8x1xf32>
    %639 = tpu.reciprocal %638 {approx = true} : vector<2x8x1xf32> -> vector<2x8x1xf32>
    %640 = vector.broadcast %639 : vector<2x8x1xf32> to vector<2x8x8xf32>
    %641 = arith.mulf %636, %640 : vector<2x8x8xf32>
    "tpu.trace_start"() <{level = 10 : i32, message = "bqk,bkd->bqd"}> : () -> ()
    %cst_160 = arith.constant dense<0.000000e+00> : vector<2x8x8xf32>
    %642 = tpu.matmul %641, %628, %cst_160 {dimension_numbers = #tpu.dot_dimension_numbers<[2], [1], [1], [2], [0, 0, 0, 1, 1, 2], [0], [0]>} : vector<2x8x8xf32>, vector<2x8x8xf32>, vector<2x8x8xf32> -> vector<2x8x8xf32>
    "tpu.trace_stop"() : () -> ()
    %643 = tpu.concatenate %591, %608, %625, %642 in 2 : vector<2x8x8xf32>, vector<2x8x8xf32>, vector<2x8x8xf32>, vector<2x8x8xf32> -> vector<2x8x32xf32>
    %644 = vector.shape_cast %643 : vector<2x8x32xf32> to vector<16x32xf32>
    %645 = arith.truncf %644 : vector<16x32xf32> to vector<16x32xbf16>
    %c0_161 = arith.constant 0 : index
    %c0_162 = arith.constant 0 : index
    %c0_163 = arith.constant 0 : index
    %646 = vector.load %arg10[%c0_161, %c0_162, %c0_163] : memref<2x32x32xbf16, #tpu.memory_space<vmem>>, vector<1x32x32xbf16>
    %647 = vector.shape_cast %646 : vector<1x32x32xbf16> to vector<32x32xbf16>
    %cst_164 = arith.constant dense<0.000000e+00> : vector<16x32xf32>
    %648 = tpu.matmul %645, %647, %cst_164 {dimension_numbers = #tpu.dot_dimension_numbers<[1], [0], [0], [1], [0, 0, 1, 1], [], []>} : vector<16x32xbf16>, vector<32x32xbf16>, vector<16x32xf32> -> vector<16x32xf32>
    %c0_165 = arith.constant 0 : index
    %c0_166 = arith.constant 0 : index
    %c0_167 = arith.constant 0 : index
    %649 = vector.load %arg11[%c0_165, %c0_166, %c0_167] : memref<2x1x32xf32, #tpu.memory_space<vmem>>, vector<1x1x32xf32>
    %650 = vector.shape_cast %649 : vector<1x1x32xf32> to vector<1x32xf32>
    %651 = vector.broadcast %650 : vector<1x32xf32> to vector<16x32xf32>
    %652 = arith.addf %648, %651 : vector<16x32xf32>
    %653 = arith.addf %534, %652 : vector<16x32xf32>
    %c0_168 = arith.constant 0 : index
    %c0_169 = arith.constant 0 : index
    %c0_170 = arith.constant 0 : index
    %654 = vector.load %arg12[%c0_168, %c0_169, %c0_170] : memref<2x1x32xf32, #tpu.memory_space<vmem>>, vector<1x1x32xf32>
    %655 = vector.shape_cast %654 : vector<1x1x32xf32> to vector<1x32xf32>
    %c0_171 = arith.constant 0 : index
    %c0_172 = arith.constant 0 : index
    %c0_173 = arith.constant 0 : index
    %656 = vector.load %arg13[%c0_171, %c0_172, %c0_173] : memref<2x1x32xf32, #tpu.memory_space<vmem>>, vector<1x1x32xf32>
    %657 = vector.shape_cast %656 : vector<1x1x32xf32> to vector<1x32xf32>
    %cst_174 = arith.constant dense<0.000000e+00> : vector<16xf32>
    %658 = vector.multi_reduction <add>, %653, %cst_174 [1] : vector<16x32xf32> to vector<16xf32>
    %659 = vector.shape_cast %658 : vector<16xf32> to vector<16x1xf32>
    %cst_175 = arith.constant 3.200000e+01 : f32
    %660 = vector.broadcast %cst_175 : f32 to vector<16x1xf32>
    %661 = arith.divf %659, %660 : vector<16x1xf32>
    %662 = vector.broadcast %661 : vector<16x1xf32> to vector<16x32xf32>
    %663 = arith.subf %653, %662 : vector<16x32xf32>
    %664 = arith.mulf %663, %663 : vector<16x32xf32>
    %cst_176 = arith.constant dense<0.000000e+00> : vector<16xf32>
    %665 = vector.multi_reduction <add>, %664, %cst_176 [1] : vector<16x32xf32> to vector<16xf32>
    %666 = vector.shape_cast %665 : vector<16xf32> to vector<16x1xf32>
    %cst_177 = arith.constant 3.200000e+01 : f32
    %667 = vector.broadcast %cst_177 : f32 to vector<16x1xf32>
    %668 = arith.divf %666, %667 : vector<16x1xf32>
    %669 = vector.broadcast %661 : vector<16x1xf32> to vector<16x32xf32>
    %670 = arith.subf %653, %669 : vector<16x32xf32>
    %cst_178 = arith.constant 9.99999974E-6 : f32
    %671 = vector.broadcast %cst_178 : f32 to vector<16x1xf32>
    %672 = arith.addf %668, %671 : vector<16x1xf32>
    %673 = math.rsqrt %672 : vector<16x1xf32>
    %674 = vector.broadcast %673 : vector<16x1xf32> to vector<16x32xf32>
    %675 = arith.mulf %670, %674 : vector<16x32xf32>
    %676 = vector.broadcast %655 : vector<1x32xf32> to vector<16x32xf32>
    %677 = arith.mulf %675, %676 : vector<16x32xf32>
    %678 = vector.broadcast %657 : vector<1x32xf32> to vector<16x32xf32>
    %679 = arith.addf %677, %678 : vector<16x32xf32>
    %680 = arith.truncf %679 : vector<16x32xf32> to vector<16x32xbf16>
    %c0_179 = arith.constant 0 : index
    %c0_180 = arith.constant 0 : index
    %c0_181 = arith.constant 0 : index
    %681 = vector.load %arg14[%c0_179, %c0_180, %c0_181] : memref<2x32x128xbf16, #tpu.memory_space<vmem>>, vector<1x32x128xbf16>
    %682 = vector.shape_cast %681 : vector<1x32x128xbf16> to vector<32x128xbf16>
    %cst_182 = arith.constant dense<0.000000e+00> : vector<16x128xf32>
    %683 = tpu.matmul %680, %682, %cst_182 {dimension_numbers = #tpu.dot_dimension_numbers<[1], [0], [0], [1], [0, 0, 1, 1], [], []>} : vector<16x32xbf16>, vector<32x128xbf16>, vector<16x128xf32> -> vector<16x128xf32>
    %c0_183 = arith.constant 0 : index
    %c0_184 = arith.constant 0 : index
    %c0_185 = arith.constant 0 : index
    %684 = vector.load %arg15[%c0_183, %c0_184, %c0_185] : memref<2x1x128xf32, #tpu.memory_space<vmem>>, vector<1x1x128xf32>
    %685 = vector.shape_cast %684 : vector<1x1x128xf32> to vector<1x128xf32>
    %686 = vector.broadcast %685 : vector<1x128xf32> to vector<16x128xf32>
    %687 = arith.addf %683, %686 : vector<16x128xf32>
    %688 = arith.mulf %687, %687 : vector<16x128xf32>
    %689 = arith.mulf %687, %688 : vector<16x128xf32>
    %cst_186 = arith.constant 4.471500e-02 : f32
    %690 = vector.broadcast %cst_186 : f32 to vector<16x128xf32>
    %691 = arith.mulf %690, %689 : vector<16x128xf32>
    %692 = arith.addf %687, %691 : vector<16x128xf32>
    %cst_187 = arith.constant 0.797884583 : f32
    %693 = vector.broadcast %cst_187 : f32 to vector<16x128xf32>
    %694 = arith.mulf %693, %692 : vector<16x128xf32>
    %695 = math.tanh %694 : vector<16x128xf32>
    %cst_188 = arith.constant 1.000000e+00 : f32
    %696 = vector.broadcast %cst_188 : f32 to vector<16x128xf32>
    %697 = arith.addf %696, %695 : vector<16x128xf32>
    %cst_189 = arith.constant 5.000000e-01 : f32
    %698 = vector.broadcast %cst_189 : f32 to vector<16x128xf32>
    %699 = arith.mulf %698, %697 : vector<16x128xf32>
    %700 = arith.mulf %687, %699 : vector<16x128xf32>
    %701 = arith.truncf %700 : vector<16x128xf32> to vector<16x128xbf16>
    %c0_190 = arith.constant 0 : index
    %c0_191 = arith.constant 0 : index
    %c0_192 = arith.constant 0 : index
    %702 = vector.load %arg16[%c0_190, %c0_191, %c0_192] : memref<2x128x32xbf16, #tpu.memory_space<vmem>>, vector<1x128x32xbf16>
    %703 = vector.shape_cast %702 : vector<1x128x32xbf16> to vector<128x32xbf16>
    %cst_193 = arith.constant dense<0.000000e+00> : vector<16x32xf32>
    %704 = tpu.matmul %701, %703, %cst_193 {dimension_numbers = #tpu.dot_dimension_numbers<[1], [0], [0], [1], [0, 0, 1, 1], [], []>} : vector<16x128xbf16>, vector<128x32xbf16>, vector<16x32xf32> -> vector<16x32xf32>
    %c0_194 = arith.constant 0 : index
    %c0_195 = arith.constant 0 : index
    %c0_196 = arith.constant 0 : index
    %705 = vector.load %arg17[%c0_194, %c0_195, %c0_196] : memref<2x1x32xf32, #tpu.memory_space<vmem>>, vector<1x1x32xf32>
    %706 = vector.shape_cast %705 : vector<1x1x32xf32> to vector<1x32xf32>
    %707 = vector.broadcast %706 : vector<1x32xf32> to vector<16x32xf32>
    %708 = arith.addf %704, %707 : vector<16x32xf32>
    %709 = arith.addf %653, %708 : vector<16x32xf32>
    %c1_197 = arith.constant 1 : index
    %c0_198 = arith.constant 0 : index
    %c0_199 = arith.constant 0 : index
    %710 = vector.load %arg6[%c1_197, %c0_198, %c0_199] : memref<2x1x32xf32, #tpu.memory_space<vmem>>, vector<1x1x32xf32>
    %711 = vector.shape_cast %710 : vector<1x1x32xf32> to vector<1x32xf32>
    %c1_200 = arith.constant 1 : index
    %c0_201 = arith.constant 0 : index
    %c0_202 = arith.constant 0 : index
    %712 = vector.load %arg7[%c1_200, %c0_201, %c0_202] : memref<2x1x32xf32, #tpu.memory_space<vmem>>, vector<1x1x32xf32>
    %713 = vector.shape_cast %712 : vector<1x1x32xf32> to vector<1x32xf32>
    %cst_203 = arith.constant dense<0.000000e+00> : vector<16xf32>
    %714 = vector.multi_reduction <add>, %709, %cst_203 [1] : vector<16x32xf32> to vector<16xf32>
    %715 = vector.shape_cast %714 : vector<16xf32> to vector<16x1xf32>
    %cst_204 = arith.constant 3.200000e+01 : f32
    %716 = vector.broadcast %cst_204 : f32 to vector<16x1xf32>
    %717 = arith.divf %715, %716 : vector<16x1xf32>
    %718 = vector.broadcast %717 : vector<16x1xf32> to vector<16x32xf32>
    %719 = arith.subf %709, %718 : vector<16x32xf32>
    %720 = arith.mulf %719, %719 : vector<16x32xf32>
    %cst_205 = arith.constant dense<0.000000e+00> : vector<16xf32>
    %721 = vector.multi_reduction <add>, %720, %cst_205 [1] : vector<16x32xf32> to vector<16xf32>
    %722 = vector.shape_cast %721 : vector<16xf32> to vector<16x1xf32>
    %cst_206 = arith.constant 3.200000e+01 : f32
    %723 = vector.broadcast %cst_206 : f32 to vector<16x1xf32>
    %724 = arith.divf %722, %723 : vector<16x1xf32>
    %725 = vector.broadcast %717 : vector<16x1xf32> to vector<16x32xf32>
    %726 = arith.subf %709, %725 : vector<16x32xf32>
    %cst_207 = arith.constant 9.99999974E-6 : f32
    %727 = vector.broadcast %cst_207 : f32 to vector<16x1xf32>
    %728 = arith.addf %724, %727 : vector<16x1xf32>
    %729 = math.rsqrt %728 : vector<16x1xf32>
    %730 = vector.broadcast %729 : vector<16x1xf32> to vector<16x32xf32>
    %731 = arith.mulf %726, %730 : vector<16x32xf32>
    %732 = vector.broadcast %711 : vector<1x32xf32> to vector<16x32xf32>
    %733 = arith.mulf %731, %732 : vector<16x32xf32>
    %734 = vector.broadcast %713 : vector<1x32xf32> to vector<16x32xf32>
    %735 = arith.addf %733, %734 : vector<16x32xf32>
    %736 = arith.truncf %735 : vector<16x32xf32> to vector<16x32xbf16>
    %c1_208 = arith.constant 1 : index
    %c0_209 = arith.constant 0 : index
    %c0_210 = arith.constant 0 : index
    %737 = vector.load %arg8[%c1_208, %c0_209, %c0_210] : memref<2x32x96xbf16, #tpu.memory_space<vmem>>, vector<1x32x96xbf16>
    %738 = vector.shape_cast %737 : vector<1x32x96xbf16> to vector<32x96xbf16>
    %cst_211 = arith.constant dense<0.000000e+00> : vector<16x96xf32>
    %739 = tpu.matmul %736, %738, %cst_211 {dimension_numbers = #tpu.dot_dimension_numbers<[1], [0], [0], [1], [0, 0, 1, 1], [], []>} : vector<16x32xbf16>, vector<32x96xbf16>, vector<16x96xf32> -> vector<16x96xf32>
    %c1_212 = arith.constant 1 : index
    %c0_213 = arith.constant 0 : index
    %c0_214 = arith.constant 0 : index
    %740 = vector.load %arg9[%c1_212, %c0_213, %c0_214] : memref<2x1x96xf32, #tpu.memory_space<vmem>>, vector<1x1x96xf32>
    %741 = vector.shape_cast %740 : vector<1x1x96xf32> to vector<1x96xf32>
    %742 = vector.broadcast %741 : vector<1x96xf32> to vector<16x96xf32>
    %743 = arith.addf %739, %742 : vector<16x96xf32>
    %744 = vector.extract_strided_slice %743 {offsets = [0, 0], sizes = [16, 32], strides = [1, 1]} : vector<16x96xf32> to vector<16x32xf32>
    %745 = vector.shape_cast %744 : vector<16x32xf32> to vector<2x8x32xf32>
    %746 = vector.extract_strided_slice %743 {offsets = [0, 32], sizes = [16, 32], strides = [1, 1]} : vector<16x96xf32> to vector<16x32xf32>
    %747 = vector.shape_cast %746 : vector<16x32xf32> to vector<2x8x32xf32>
    %748 = vector.extract_strided_slice %743 {offsets = [0, 64], sizes = [16, 32], strides = [1, 1]} : vector<16x96xf32> to vector<16x32xf32>
    %749 = vector.shape_cast %748 : vector<16x32xf32> to vector<2x8x32xf32>
    %750 = vector.extract_strided_slice %745 {offsets = [0, 0, 0], sizes = [2, 8, 8], strides = [1, 1, 1]} : vector<2x8x32xf32> to vector<2x8x8xf32>
    %751 = vector.extract_strided_slice %747 {offsets = [0, 0, 0], sizes = [2, 8, 8], strides = [1, 1, 1]} : vector<2x8x32xf32> to vector<2x8x8xf32>
    %752 = vector.extract_strided_slice %749 {offsets = [0, 0, 0], sizes = [2, 8, 8], strides = [1, 1, 1]} : vector<2x8x32xf32> to vector<2x8x8xf32>
    "tpu.trace_start"() <{level = 10 : i32, message = "bqd,bkd->bqk"}> : () -> ()
    %cst_215 = arith.constant dense<0.000000e+00> : vector<2x8x8xf32>
    %753 = tpu.matmul %750, %751, %cst_215 {dimension_numbers = #tpu.dot_dimension_numbers<[2], [2], [1], [1], [0, 0, 0, 1, 1, 1], [0], [0]>} : vector<2x8x8xf32>, vector<2x8x8xf32>, vector<2x8x8xf32> -> vector<2x8x8xf32>
    "tpu.trace_stop"() : () -> ()
    %cst_216 = arith.constant 0.353553385 : f32
    %754 = vector.broadcast %cst_216 : f32 to vector<2x8x8xf32>
    %755 = arith.mulf %753, %754 : vector<2x8x8xf32>
    %cst_217 = arith.constant dense<0xFF800000> : vector<2x8xf32>
    %756 = vector.multi_reduction <maximumf>, %755, %cst_217 [2] : vector<2x8x8xf32> to vector<2x8xf32>
    %757 = vector.shape_cast %756 : vector<2x8xf32> to vector<2x8x1xf32>
    %758 = vector.broadcast %757 : vector<2x8x1xf32> to vector<2x8x8xf32>
    %759 = arith.subf %755, %758 : vector<2x8x8xf32>
    %760 = math.exp %759 : vector<2x8x8xf32>
    %cst_218 = arith.constant dense<0.000000e+00> : vector<2x8xf32>
    %761 = vector.multi_reduction <add>, %760, %cst_218 [2] : vector<2x8x8xf32> to vector<2x8xf32>
    %762 = vector.shape_cast %761 : vector<2x8xf32> to vector<2x8x1xf32>
    %763 = tpu.reciprocal %762 {approx = true} : vector<2x8x1xf32> -> vector<2x8x1xf32>
    %764 = vector.broadcast %763 : vector<2x8x1xf32> to vector<2x8x8xf32>
    %765 = arith.mulf %760, %764 : vector<2x8x8xf32>
    "tpu.trace_start"() <{level = 10 : i32, message = "bqk,bkd->bqd"}> : () -> ()
    %cst_219 = arith.constant dense<0.000000e+00> : vector<2x8x8xf32>
    %766 = tpu.matmul %765, %752, %cst_219 {dimension_numbers = #tpu.dot_dimension_numbers<[2], [1], [1], [2], [0, 0, 0, 1, 1, 2], [0], [0]>} : vector<2x8x8xf32>, vector<2x8x8xf32>, vector<2x8x8xf32> -> vector<2x8x8xf32>
    "tpu.trace_stop"() : () -> ()
    %767 = vector.extract_strided_slice %745 {offsets = [0, 0, 8], sizes = [2, 8, 8], strides = [1, 1, 1]} : vector<2x8x32xf32> to vector<2x8x8xf32>
    %768 = vector.extract_strided_slice %747 {offsets = [0, 0, 8], sizes = [2, 8, 8], strides = [1, 1, 1]} : vector<2x8x32xf32> to vector<2x8x8xf32>
    %769 = vector.extract_strided_slice %749 {offsets = [0, 0, 8], sizes = [2, 8, 8], strides = [1, 1, 1]} : vector<2x8x32xf32> to vector<2x8x8xf32>
    "tpu.trace_start"() <{level = 10 : i32, message = "bqd,bkd->bqk"}> : () -> ()
    %cst_220 = arith.constant dense<0.000000e+00> : vector<2x8x8xf32>
    %770 = tpu.matmul %767, %768, %cst_220 {dimension_numbers = #tpu.dot_dimension_numbers<[2], [2], [1], [1], [0, 0, 0, 1, 1, 1], [0], [0]>} : vector<2x8x8xf32>, vector<2x8x8xf32>, vector<2x8x8xf32> -> vector<2x8x8xf32>
    "tpu.trace_stop"() : () -> ()
    %cst_221 = arith.constant 0.353553385 : f32
    %771 = vector.broadcast %cst_221 : f32 to vector<2x8x8xf32>
    %772 = arith.mulf %770, %771 : vector<2x8x8xf32>
    %cst_222 = arith.constant dense<0xFF800000> : vector<2x8xf32>
    %773 = vector.multi_reduction <maximumf>, %772, %cst_222 [2] : vector<2x8x8xf32> to vector<2x8xf32>
    %774 = vector.shape_cast %773 : vector<2x8xf32> to vector<2x8x1xf32>
    %775 = vector.broadcast %774 : vector<2x8x1xf32> to vector<2x8x8xf32>
    %776 = arith.subf %772, %775 : vector<2x8x8xf32>
    %777 = math.exp %776 : vector<2x8x8xf32>
    %cst_223 = arith.constant dense<0.000000e+00> : vector<2x8xf32>
    %778 = vector.multi_reduction <add>, %777, %cst_223 [2] : vector<2x8x8xf32> to vector<2x8xf32>
    %779 = vector.shape_cast %778 : vector<2x8xf32> to vector<2x8x1xf32>
    %780 = tpu.reciprocal %779 {approx = true} : vector<2x8x1xf32> -> vector<2x8x1xf32>
    %781 = vector.broadcast %780 : vector<2x8x1xf32> to vector<2x8x8xf32>
    %782 = arith.mulf %777, %781 : vector<2x8x8xf32>
    "tpu.trace_start"() <{level = 10 : i32, message = "bqk,bkd->bqd"}> : () -> ()
    %cst_224 = arith.constant dense<0.000000e+00> : vector<2x8x8xf32>
    %783 = tpu.matmul %782, %769, %cst_224 {dimension_numbers = #tpu.dot_dimension_numbers<[2], [1], [1], [2], [0, 0, 0, 1, 1, 2], [0], [0]>} : vector<2x8x8xf32>, vector<2x8x8xf32>, vector<2x8x8xf32> -> vector<2x8x8xf32>
    "tpu.trace_stop"() : () -> ()
    %784 = vector.extract_strided_slice %745 {offsets = [0, 0, 16], sizes = [2, 8, 8], strides = [1, 1, 1]} : vector<2x8x32xf32> to vector<2x8x8xf32>
    %785 = vector.extract_strided_slice %747 {offsets = [0, 0, 16], sizes = [2, 8, 8], strides = [1, 1, 1]} : vector<2x8x32xf32> to vector<2x8x8xf32>
    %786 = vector.extract_strided_slice %749 {offsets = [0, 0, 16], sizes = [2, 8, 8], strides = [1, 1, 1]} : vector<2x8x32xf32> to vector<2x8x8xf32>
    "tpu.trace_start"() <{level = 10 : i32, message = "bqd,bkd->bqk"}> : () -> ()
    %cst_225 = arith.constant dense<0.000000e+00> : vector<2x8x8xf32>
    %787 = tpu.matmul %784, %785, %cst_225 {dimension_numbers = #tpu.dot_dimension_numbers<[2], [2], [1], [1], [0, 0, 0, 1, 1, 1], [0], [0]>} : vector<2x8x8xf32>, vector<2x8x8xf32>, vector<2x8x8xf32> -> vector<2x8x8xf32>
    "tpu.trace_stop"() : () -> ()
    %cst_226 = arith.constant 0.353553385 : f32
    %788 = vector.broadcast %cst_226 : f32 to vector<2x8x8xf32>
    %789 = arith.mulf %787, %788 : vector<2x8x8xf32>
    %cst_227 = arith.constant dense<0xFF800000> : vector<2x8xf32>
    %790 = vector.multi_reduction <maximumf>, %789, %cst_227 [2] : vector<2x8x8xf32> to vector<2x8xf32>
    %791 = vector.shape_cast %790 : vector<2x8xf32> to vector<2x8x1xf32>
    %792 = vector.broadcast %791 : vector<2x8x1xf32> to vector<2x8x8xf32>
    %793 = arith.subf %789, %792 : vector<2x8x8xf32>
    %794 = math.exp %793 : vector<2x8x8xf32>
    %cst_228 = arith.constant dense<0.000000e+00> : vector<2x8xf32>
    %795 = vector.multi_reduction <add>, %794, %cst_228 [2] : vector<2x8x8xf32> to vector<2x8xf32>
    %796 = vector.shape_cast %795 : vector<2x8xf32> to vector<2x8x1xf32>
    %797 = tpu.reciprocal %796 {approx = true} : vector<2x8x1xf32> -> vector<2x8x1xf32>
    %798 = vector.broadcast %797 : vector<2x8x1xf32> to vector<2x8x8xf32>
    %799 = arith.mulf %794, %798 : vector<2x8x8xf32>
    "tpu.trace_start"() <{level = 10 : i32, message = "bqk,bkd->bqd"}> : () -> ()
    %cst_229 = arith.constant dense<0.000000e+00> : vector<2x8x8xf32>
    %800 = tpu.matmul %799, %786, %cst_229 {dimension_numbers = #tpu.dot_dimension_numbers<[2], [1], [1], [2], [0, 0, 0, 1, 1, 2], [0], [0]>} : vector<2x8x8xf32>, vector<2x8x8xf32>, vector<2x8x8xf32> -> vector<2x8x8xf32>
    "tpu.trace_stop"() : () -> ()
    %801 = vector.extract_strided_slice %745 {offsets = [0, 0, 24], sizes = [2, 8, 8], strides = [1, 1, 1]} : vector<2x8x32xf32> to vector<2x8x8xf32>
    %802 = vector.extract_strided_slice %747 {offsets = [0, 0, 24], sizes = [2, 8, 8], strides = [1, 1, 1]} : vector<2x8x32xf32> to vector<2x8x8xf32>
    %803 = vector.extract_strided_slice %749 {offsets = [0, 0, 24], sizes = [2, 8, 8], strides = [1, 1, 1]} : vector<2x8x32xf32> to vector<2x8x8xf32>
    "tpu.trace_start"() <{level = 10 : i32, message = "bqd,bkd->bqk"}> : () -> ()
    %cst_230 = arith.constant dense<0.000000e+00> : vector<2x8x8xf32>
    %804 = tpu.matmul %801, %802, %cst_230 {dimension_numbers = #tpu.dot_dimension_numbers<[2], [2], [1], [1], [0, 0, 0, 1, 1, 1], [0], [0]>} : vector<2x8x8xf32>, vector<2x8x8xf32>, vector<2x8x8xf32> -> vector<2x8x8xf32>
    "tpu.trace_stop"() : () -> ()
    %cst_231 = arith.constant 0.353553385 : f32
    %805 = vector.broadcast %cst_231 : f32 to vector<2x8x8xf32>
    %806 = arith.mulf %804, %805 : vector<2x8x8xf32>
    %cst_232 = arith.constant dense<0xFF800000> : vector<2x8xf32>
    %807 = vector.multi_reduction <maximumf>, %806, %cst_232 [2] : vector<2x8x8xf32> to vector<2x8xf32>
    %808 = vector.shape_cast %807 : vector<2x8xf32> to vector<2x8x1xf32>
    %809 = vector.broadcast %808 : vector<2x8x1xf32> to vector<2x8x8xf32>
    %810 = arith.subf %806, %809 : vector<2x8x8xf32>
    %811 = math.exp %810 : vector<2x8x8xf32>
    %cst_233 = arith.constant dense<0.000000e+00> : vector<2x8xf32>
    %812 = vector.multi_reduction <add>, %811, %cst_233 [2] : vector<2x8x8xf32> to vector<2x8xf32>
    %813 = vector.shape_cast %812 : vector<2x8xf32> to vector<2x8x1xf32>
    %814 = tpu.reciprocal %813 {approx = true} : vector<2x8x1xf32> -> vector<2x8x1xf32>
    %815 = vector.broadcast %814 : vector<2x8x1xf32> to vector<2x8x8xf32>
    %816 = arith.mulf %811, %815 : vector<2x8x8xf32>
    "tpu.trace_start"() <{level = 10 : i32, message = "bqk,bkd->bqd"}> : () -> ()
    %cst_234 = arith.constant dense<0.000000e+00> : vector<2x8x8xf32>
    %817 = tpu.matmul %816, %803, %cst_234 {dimension_numbers = #tpu.dot_dimension_numbers<[2], [1], [1], [2], [0, 0, 0, 1, 1, 2], [0], [0]>} : vector<2x8x8xf32>, vector<2x8x8xf32>, vector<2x8x8xf32> -> vector<2x8x8xf32>
    "tpu.trace_stop"() : () -> ()
    %818 = tpu.concatenate %766, %783, %800, %817 in 2 : vector<2x8x8xf32>, vector<2x8x8xf32>, vector<2x8x8xf32>, vector<2x8x8xf32> -> vector<2x8x32xf32>
    %819 = vector.shape_cast %818 : vector<2x8x32xf32> to vector<16x32xf32>
    %820 = arith.truncf %819 : vector<16x32xf32> to vector<16x32xbf16>
    %c1_235 = arith.constant 1 : index
    %c0_236 = arith.constant 0 : index
    %c0_237 = arith.constant 0 : index
    %821 = vector.load %arg10[%c1_235, %c0_236, %c0_237] : memref<2x32x32xbf16, #tpu.memory_space<vmem>>, vector<1x32x32xbf16>
    %822 = vector.shape_cast %821 : vector<1x32x32xbf16> to vector<32x32xbf16>
    %cst_238 = arith.constant dense<0.000000e+00> : vector<16x32xf32>
    %823 = tpu.matmul %820, %822, %cst_238 {dimension_numbers = #tpu.dot_dimension_numbers<[1], [0], [0], [1], [0, 0, 1, 1], [], []>} : vector<16x32xbf16>, vector<32x32xbf16>, vector<16x32xf32> -> vector<16x32xf32>
    %c1_239 = arith.constant 1 : index
    %c0_240 = arith.constant 0 : index
    %c0_241 = arith.constant 0 : index
    %824 = vector.load %arg11[%c1_239, %c0_240, %c0_241] : memref<2x1x32xf32, #tpu.memory_space<vmem>>, vector<1x1x32xf32>
    %825 = vector.shape_cast %824 : vector<1x1x32xf32> to vector<1x32xf32>
    %826 = vector.broadcast %825 : vector<1x32xf32> to vector<16x32xf32>
    %827 = arith.addf %823, %826 : vector<16x32xf32>
    %828 = arith.addf %709, %827 : vector<16x32xf32>
    %c1_242 = arith.constant 1 : index
    %c0_243 = arith.constant 0 : index
    %c0_244 = arith.constant 0 : index
    %829 = vector.load %arg12[%c1_242, %c0_243, %c0_244] : memref<2x1x32xf32, #tpu.memory_space<vmem>>, vector<1x1x32xf32>
    %830 = vector.shape_cast %829 : vector<1x1x32xf32> to vector<1x32xf32>
    %c1_245 = arith.constant 1 : index
    %c0_246 = arith.constant 0 : index
    %c0_247 = arith.constant 0 : index
    %831 = vector.load %arg13[%c1_245, %c0_246, %c0_247] : memref<2x1x32xf32, #tpu.memory_space<vmem>>, vector<1x1x32xf32>
    %832 = vector.shape_cast %831 : vector<1x1x32xf32> to vector<1x32xf32>
    %cst_248 = arith.constant dense<0.000000e+00> : vector<16xf32>
    %833 = vector.multi_reduction <add>, %828, %cst_248 [1] : vector<16x32xf32> to vector<16xf32>
    %834 = vector.shape_cast %833 : vector<16xf32> to vector<16x1xf32>
    %cst_249 = arith.constant 3.200000e+01 : f32
    %835 = vector.broadcast %cst_249 : f32 to vector<16x1xf32>
    %836 = arith.divf %834, %835 : vector<16x1xf32>
    %837 = vector.broadcast %836 : vector<16x1xf32> to vector<16x32xf32>
    %838 = arith.subf %828, %837 : vector<16x32xf32>
    %839 = arith.mulf %838, %838 : vector<16x32xf32>
    %cst_250 = arith.constant dense<0.000000e+00> : vector<16xf32>
    %840 = vector.multi_reduction <add>, %839, %cst_250 [1] : vector<16x32xf32> to vector<16xf32>
    %841 = vector.shape_cast %840 : vector<16xf32> to vector<16x1xf32>
    %cst_251 = arith.constant 3.200000e+01 : f32
    %842 = vector.broadcast %cst_251 : f32 to vector<16x1xf32>
    %843 = arith.divf %841, %842 : vector<16x1xf32>
    %844 = vector.broadcast %836 : vector<16x1xf32> to vector<16x32xf32>
    %845 = arith.subf %828, %844 : vector<16x32xf32>
    %cst_252 = arith.constant 9.99999974E-6 : f32
    %846 = vector.broadcast %cst_252 : f32 to vector<16x1xf32>
    %847 = arith.addf %843, %846 : vector<16x1xf32>
    %848 = math.rsqrt %847 : vector<16x1xf32>
    %849 = vector.broadcast %848 : vector<16x1xf32> to vector<16x32xf32>
    %850 = arith.mulf %845, %849 : vector<16x32xf32>
    %851 = vector.broadcast %830 : vector<1x32xf32> to vector<16x32xf32>
    %852 = arith.mulf %850, %851 : vector<16x32xf32>
    %853 = vector.broadcast %832 : vector<1x32xf32> to vector<16x32xf32>
    %854 = arith.addf %852, %853 : vector<16x32xf32>
    %855 = arith.truncf %854 : vector<16x32xf32> to vector<16x32xbf16>
    %c1_253 = arith.constant 1 : index
    %c0_254 = arith.constant 0 : index
    %c0_255 = arith.constant 0 : index
    %856 = vector.load %arg14[%c1_253, %c0_254, %c0_255] : memref<2x32x128xbf16, #tpu.memory_space<vmem>>, vector<1x32x128xbf16>
    %857 = vector.shape_cast %856 : vector<1x32x128xbf16> to vector<32x128xbf16>
    %cst_256 = arith.constant dense<0.000000e+00> : vector<16x128xf32>
    %858 = tpu.matmul %855, %857, %cst_256 {dimension_numbers = #tpu.dot_dimension_numbers<[1], [0], [0], [1], [0, 0, 1, 1], [], []>} : vector<16x32xbf16>, vector<32x128xbf16>, vector<16x128xf32> -> vector<16x128xf32>
    %c1_257 = arith.constant 1 : index
    %c0_258 = arith.constant 0 : index
    %c0_259 = arith.constant 0 : index
    %859 = vector.load %arg15[%c1_257, %c0_258, %c0_259] : memref<2x1x128xf32, #tpu.memory_space<vmem>>, vector<1x1x128xf32>
    %860 = vector.shape_cast %859 : vector<1x1x128xf32> to vector<1x128xf32>
    %861 = vector.broadcast %860 : vector<1x128xf32> to vector<16x128xf32>
    %862 = arith.addf %858, %861 : vector<16x128xf32>
    %863 = arith.mulf %862, %862 : vector<16x128xf32>
    %864 = arith.mulf %862, %863 : vector<16x128xf32>
    %cst_260 = arith.constant 4.471500e-02 : f32
    %865 = vector.broadcast %cst_260 : f32 to vector<16x128xf32>
    %866 = arith.mulf %865, %864 : vector<16x128xf32>
    %867 = arith.addf %862, %866 : vector<16x128xf32>
    %cst_261 = arith.constant 0.797884583 : f32
    %868 = vector.broadcast %cst_261 : f32 to vector<16x128xf32>
    %869 = arith.mulf %868, %867 : vector<16x128xf32>
    %870 = math.tanh %869 : vector<16x128xf32>
    %cst_262 = arith.constant 1.000000e+00 : f32
    %871 = vector.broadcast %cst_262 : f32 to vector<16x128xf32>
    %872 = arith.addf %871, %870 : vector<16x128xf32>
    %cst_263 = arith.constant 5.000000e-01 : f32
    %873 = vector.broadcast %cst_263 : f32 to vector<16x128xf32>
    %874 = arith.mulf %873, %872 : vector<16x128xf32>
    %875 = arith.mulf %862, %874 : vector<16x128xf32>
    %876 = arith.truncf %875 : vector<16x128xf32> to vector<16x128xbf16>
    %c1_264 = arith.constant 1 : index
    %c0_265 = arith.constant 0 : index
    %c0_266 = arith.constant 0 : index
    %877 = vector.load %arg16[%c1_264, %c0_265, %c0_266] : memref<2x128x32xbf16, #tpu.memory_space<vmem>>, vector<1x128x32xbf16>
    %878 = vector.shape_cast %877 : vector<1x128x32xbf16> to vector<128x32xbf16>
    %cst_267 = arith.constant dense<0.000000e+00> : vector<16x32xf32>
    %879 = tpu.matmul %876, %878, %cst_267 {dimension_numbers = #tpu.dot_dimension_numbers<[1], [0], [0], [1], [0, 0, 1, 1], [], []>} : vector<16x128xbf16>, vector<128x32xbf16>, vector<16x32xf32> -> vector<16x32xf32>
    %c1_268 = arith.constant 1 : index
    %c0_269 = arith.constant 0 : index
    %c0_270 = arith.constant 0 : index
    %880 = vector.load %arg17[%c1_268, %c0_269, %c0_270] : memref<2x1x32xf32, #tpu.memory_space<vmem>>, vector<1x1x32xf32>
    %881 = vector.shape_cast %880 : vector<1x1x32xf32> to vector<1x32xf32>
    %882 = vector.broadcast %881 : vector<1x32xf32> to vector<16x32xf32>
    %883 = arith.addf %879, %882 : vector<16x32xf32>
    %884 = arith.addf %828, %883 : vector<16x32xf32>
    %c0_271 = arith.constant 0 : index
    %c0_272 = arith.constant 0 : index
    %885 = vector.load %arg18[%c0_271, %c0_272] : memref<1x32xf32, #tpu.memory_space<vmem>>, vector<1x32xf32>
    %c0_273 = arith.constant 0 : index
    %c0_274 = arith.constant 0 : index
    %886 = vector.load %arg19[%c0_273, %c0_274] : memref<1x32xf32, #tpu.memory_space<vmem>>, vector<1x32xf32>
    %cst_275 = arith.constant dense<0.000000e+00> : vector<16xf32>
    %887 = vector.multi_reduction <add>, %884, %cst_275 [1] : vector<16x32xf32> to vector<16xf32>
    %888 = vector.shape_cast %887 : vector<16xf32> to vector<16x1xf32>
    %cst_276 = arith.constant 3.200000e+01 : f32
    %889 = vector.broadcast %cst_276 : f32 to vector<16x1xf32>
    %890 = arith.divf %888, %889 : vector<16x1xf32>
    %891 = vector.broadcast %890 : vector<16x1xf32> to vector<16x32xf32>
    %892 = arith.subf %884, %891 : vector<16x32xf32>
    %893 = arith.mulf %892, %892 : vector<16x32xf32>
    %cst_277 = arith.constant dense<0.000000e+00> : vector<16xf32>
    %894 = vector.multi_reduction <add>, %893, %cst_277 [1] : vector<16x32xf32> to vector<16xf32>
    %895 = vector.shape_cast %894 : vector<16xf32> to vector<16x1xf32>
    %cst_278 = arith.constant 3.200000e+01 : f32
    %896 = vector.broadcast %cst_278 : f32 to vector<16x1xf32>
    %897 = arith.divf %895, %896 : vector<16x1xf32>
    %898 = vector.broadcast %890 : vector<16x1xf32> to vector<16x32xf32>
    %899 = arith.subf %884, %898 : vector<16x32xf32>
    %cst_279 = arith.constant 9.99999974E-6 : f32
    %900 = vector.broadcast %cst_279 : f32 to vector<16x1xf32>
    %901 = arith.addf %897, %900 : vector<16x1xf32>
    %902 = math.rsqrt %901 : vector<16x1xf32>
    %903 = vector.broadcast %902 : vector<16x1xf32> to vector<16x32xf32>
    %904 = arith.mulf %899, %903 : vector<16x32xf32>
    %905 = vector.broadcast %885 : vector<1x32xf32> to vector<16x32xf32>
    %906 = arith.mulf %904, %905 : vector<16x32xf32>
    %907 = vector.broadcast %886 : vector<1x32xf32> to vector<16x32xf32>
    %908 = arith.addf %906, %907 : vector<16x32xf32>
    %909 = arith.truncf %908 : vector<16x32xf32> to vector<16x32xbf16>
    %c0_280 = arith.constant 0 : index
    %c0_281 = arith.constant 0 : index
    %910 = vector.load %arg20[%c0_280, %c0_281] : memref<32x48xbf16, #tpu.memory_space<vmem>>, vector<32x48xbf16>
    %cst_282 = arith.constant dense<0.000000e+00> : vector<16x48xf32>
    %911 = tpu.matmul %909, %910, %cst_282 {dimension_numbers = #tpu.dot_dimension_numbers<[1], [0], [0], [1], [0, 0, 1, 1], [], []>} : vector<16x32xbf16>, vector<32x48xbf16>, vector<16x48xf32> -> vector<16x48xf32>
    %c0_283 = arith.constant 0 : index
    %c0_284 = arith.constant 0 : index
    %912 = vector.load %arg21[%c0_283, %c0_284] : memref<1x48xf32, #tpu.memory_space<vmem>>, vector<1x48xf32>
    %913 = vector.broadcast %912 : vector<1x48xf32> to vector<16x48xf32>
    %914 = arith.addf %911, %913 : vector<16x48xf32>
    %915 = vector.shape_cast %914 : vector<16x48xf32> to vector<2x8x48xf32>
    %c0_285 = arith.constant 0 : index
    %c0_286 = arith.constant 0 : index
    %c0_287 = arith.constant 0 : index
    %916 = vector.load %arg22[%c0_285, %c0_286, %c0_287] : memref<2x8x48xf32, #tpu.memory_space<vmem>>, vector<2x8x48xf32>
    tpu.vector_store %arg22[%c0_285, %c0_286, %c0_287], %915 {strides = array<i32>} : memref<2x8x48xf32, #tpu.memory_space<vmem>>, vector<2x8x48xf32>,
    return
  }
}

</mosaic_0001>

<llo_original>
// kernel: tpu_custom_call.1
$region0: #{tpu_custom_call.1}
  #allocation0 [shape = 'u32[]', space=smem, size = 0x4, offset = 0x4, fixed_abs, tag = 'smem constant byte address 0x4 - core index']
  #allocation1 [shape = 'u32[144,128]{1,0:T(1,128)}', space=vmem, size = 0x12000, scoped, tag = 'internal scratch']
  #allocation2 [shape = 'f32[2,8,32]{2,1,0:T(8,128)}', space=vmem, size = 0x2000, scoped, tag = 'scratch operand']
  %s0 = inlined_call_operand.vmem [shape: f32[2,8,32], index: 0, kind: input, shape index: {}]
  %s1 = inlined_call_operand.vmem [shape: bf16[32,128], index: 1, kind: input, shape index: {}]
  %s2 = inlined_call_operand.hbm [shape: f32[1,128], index: 2, kind: input, shape index: {}]
  %s3 = inlined_call_operand.vmem [shape: f32[16,64], index: 3, kind: input, shape index: {}]
  %s4 = inlined_call_operand.vmem [shape: f32[16,64], index: 4, kind: input, shape index: {}]
  %s5 = inlined_call_operand.hbm [shape: f32[8,32], index: 5, kind: input, shape index: {}]
  %s6 = inlined_call_operand.vmem [shape: f32[2,1,32], index: 6, kind: input, shape index: {}]
  %s7 = inlined_call_operand.vmem [shape: f32[2,1,32], index: 7, kind: input, shape index: {}]
  %s8 = inlined_call_operand.vmem [shape: bf16[2,32,96], index: 8, kind: input, shape index: {}]
  %s9 = inlined_call_operand.vmem [shape: f32[2,1,96], index: 9, kind: input, shape index: {}]
  %s10 = inlined_call_operand.vmem [shape: bf16[2,32,32], index: 10, kind: input, shape index: {}]
  %s11 = inlined_call_operand.vmem [shape: f32[2,1,32], index: 11, kind: input, shape index: {}]
  %s12 = inlined_call_operand.vmem [shape: f32[2,1,32], index: 12, kind: input, shape index: {}]
  %s13 = inlined_call_operand.vmem [shape: f32[2,1,32], index: 13, kind: input, shape index: {}]
  %s14 = inlined_call_operand.vmem [shape: bf16[2,32,128], index: 14, kind: input, shape index: {}]
  %s15 = inlined_call_operand.hbm [shape: f32[2,1,128], index: 15, kind: input, shape index: {}]
  %s16 = inlined_call_operand.vmem [shape: bf16[2,128,32], index: 16, kind: input, shape index: {}]
  %s17 = inlined_call_operand.vmem [shape: f32[2,1,32], index: 17, kind: input, shape index: {}]
  %s18 = inlined_call_operand.vmem [shape: f32[1,32], index: 18, kind: input, shape index: {}]
  %s19 = inlined_call_operand.vmem [shape: f32[1,32], index: 19, kind: input, shape index: {}]
  %s20 = inlined_call_operand.vmem [shape: bf16[32,48], index: 20, kind: input, shape index: {}]
  %s21 = inlined_call_operand.vmem [shape: f32[1,48], index: 21, kind: input, shape index: {}]
  %s22 = inlined_call_operand.hbm [shape: f32[2,8,48], index: 22, kind: output, shape index: {}]
  %s23 = sld [smem:[#allocation0]]
  $region110: #{tpu_custom_call.1} parent=0
    _
  %s25 = ssub.s32 1, %s23
  %s26 = scalar_select 0, %s25, %s23
  $region1: #{tpu_custom_call.1} parent=0
    #allocation3 [shape = 'u8[512]{0}', space=vmem, size = 0x400, scoped, tag = 'input window, operand 2, single buffered']
    #allocation4 [shape = 's32[1]{0}', space=sflag, size = 0x4, scoped, tag = 'scoped memory for tpu_custom_call.1']
    #allocation5 [shape = 's32[1]{0}', space=sflag, size = 0x4, scoped, tag = 'scoped memory for tpu_custom_call.1']
    #allocation6 [shape = 'u8[4096]{0}', space=vmem, size = 0x1000, scoped, tag = 'input window, operand 5, single buffered']
    #allocation7 [shape = 's32[1]{0}', space=sflag, size = 0x4, scoped, tag = 'scoped memory for tpu_custom_call.1']
    #allocation8 [shape = 'u8[1024]{0}', space=vmem, size = 0x400, scoped, tag = 'input window, operand 15, single buffered']
    #allocation9 [shape = 'u8[8192]{0}', space=vmem, size = 0x2000, scoped, tag = 'output window, operand 0, single buffered']
    %27 = vsyncpa [#allocation4], 0
    %28 = vsyncpa [#allocation7], 0
    %29 = vsyncpa [#allocation5], 0
    // Predicated region
    $region2: #{tpu_custom_call.1} parent=1 // pred_check
      _
    $region3: #{tpu_custom_call.1} parent=1 // pred_check_branch
      %31 = sbr.rel (0) target = $region5
    $region4: #{tpu_custom_call.1} parent=1 // pred_region
      _
    $region5: #{tpu_custom_call.1} parent=1 // pred_fallthru
      _
    // Predicated region
    $region6: #{tpu_custom_call.1} parent=1 // pred_check
      _
    $region7: #{tpu_custom_call.1} parent=1 // pred_check_branch
      %33 = sbr.rel (0) target = $region9
    $region8: #{tpu_custom_call.1} parent=1 // pred_region
      _
    $region9: #{tpu_custom_call.1} parent=1 // pred_fallthru
      _
    // Predicated region
    $region10: #{tpu_custom_call.1} parent=1 // pred_check
      _
    $region11: #{tpu_custom_call.1} parent=1 // pred_check_branch
      %35 = sbr.rel (0) target = $region13
    $region12: #{tpu_custom_call.1} parent=1 // pred_region
      %s37 = ssub.s32 16, 16
      %38 = vsyncadd [#allocation4], %s37
      %s40 = sshll.u32 [#allocation3], 4
      %s41 = int_to_ptr.vmem [resolvable:$true] %s40
      %43 = dma.hbm_to_vmem [thread:$0]  %s2, 16, %s41, [#allocation4]
    $region13: #{tpu_custom_call.1} parent=1 // pred_fallthru
      _
    // Predicated region
    $region14: #{tpu_custom_call.1} parent=1 // pred_check
      _
    $region15: #{tpu_custom_call.1} parent=1 // pred_check_branch
      %45 = sbr.rel (0) target = $region17
    $region16: #{tpu_custom_call.1} parent=1 // pred_region
      _
    $region17: #{tpu_custom_call.1} parent=1 // pred_fallthru
      _
    // Predicated region
    $region18: #{tpu_custom_call.1} parent=1 // pred_check
      _
    $region19: #{tpu_custom_call.1} parent=1 // pred_check_branch
      %47 = sbr.rel (0) target = $region21
    $region20: #{tpu_custom_call.1} parent=1 // pred_region
      _
    $region21: #{tpu_custom_call.1} parent=1 // pred_fallthru
      _
    // Predicated region
    $region22: #{tpu_custom_call.1} parent=1 // pred_check
      _
    $region23: #{tpu_custom_call.1} parent=1 // pred_check_branch
      %49 = sbr.rel (0) target = $region25
    $region24: #{tpu_custom_call.1} parent=1 // pred_region
      %s51 = ssub.s32 128, 128
      %52 = vsyncadd [#allocation7], %s51
      %s54 = sshll.u32 [#allocation6], 4
      %s55 = int_to_ptr.vmem [resolvable:$true] %s54
      %57 = dma.hbm_to_vmem [thread:$0]  %s5, 128, %s55, [#allocation7]
    $region25: #{tpu_custom_call.1} parent=1 // pred_fallthru
      _
    // Predicated region
    $region26: #{tpu_custom_call.1} parent=1 // pred_check
      _
    $region27: #{tpu_custom_call.1} parent=1 // pred_check_branch
      %59 = sbr.rel (0) target = $region29
    $region28: #{tpu_custom_call.1} parent=1 // pred_region
      _
    $region29: #{tpu_custom_call.1} parent=1 // pred_fallthru
      _
    // Predicated region
    $region30: #{tpu_custom_call.1} parent=1 // pred_check
      _
    $region31: #{tpu_custom_call.1} parent=1 // pred_check_branch
      %61 = sbr.rel (0) target = $region33
    $region32: #{tpu_custom_call.1} parent=1 // pred_region
      _
    $region33: #{tpu_custom_call.1} parent=1 // pred_fallthru
      _
    // Predicated region
    $region34: #{tpu_custom_call.1} parent=1 // pred_check
      _
    $region35: #{tpu_custom_call.1} parent=1 // pred_check_branch
      %63 = sbr.rel (0) target = $region37
    $region36: #{tpu_custom_call.1} parent=1 // pred_region
      _
    $region37: #{tpu_custom_call.1} parent=1 // pred_fallthru
      _
    // Predicated region
    $region38: #{tpu_custom_call.1} parent=1 // pred_check
      _
    $region39: #{tpu_custom_call.1} parent=1 // pred_check_branch
      %65 = sbr.rel (0) target = $region41
    $region40: #{tpu_custom_call.1} parent=1 // pred_region
      _
    $region41: #{tpu_custom_call.1} parent=1 // pred_fallthru
      _
    // Predicated region
    $region42: #{tpu_custom_call.1} parent=1 // pred_check
      _
    $region43: #{tpu_custom_call.1} parent=1 // pred_check_branch
      %67 = sbr.rel (0) target = $region45
    $region44: #{tpu_custom_call.1} parent=1 // pred_region
      _
    $region45: #{tpu_custom_call.1} parent=1 // pred_fallthru
      _
    // Predicated region
    $region46: #{tpu_custom_call.1} parent=1 // pred_check
      _
    $region47: #{tpu_custom_call.1} parent=1 // pred_check_branch
      %69 = sbr.rel (0) target = $region49
    $region48: #{tpu_custom_call.1} parent=1 // pred_region
      _
    $region49: #{tpu_custom_call.1} parent=1 // pred_fallthru
      _
    // Predicated region
    $region50: #{tpu_custom_call.1} parent=1 // pred_check
      _
    $region51: #{tpu_custom_call.1} parent=1 // pred_check_branch
      %71 = sbr.rel (0) target = $region53
    $region52: #{tpu_custom_call.1} parent=1 // pred_region
      _
    $region53: #{tpu_custom_call.1} parent=1 // pred_fallthru
      _
    // Predicated region
    $region54: #{tpu_custom_call.1} parent=1 // pred_check
      _
    $region55: #{tpu_custom_call.1} parent=1 // pred_check_branch
      %73 = sbr.rel (0) target = $region57
    $region56: #{tpu_custom_call.1} parent=1 // pred_region
      _
    $region57: #{tpu_custom_call.1} parent=1 // pred_fallthru
      _
    // Predicated region
    $region58: #{tpu_custom_call.1} parent=1 // pred_check
      _
    $region59: #{tpu_custom_call.1} parent=1 // pred_check_branch
      %75 = sbr.rel (0) target = $region61
    $region60: #{tpu_custom_call.1} parent=1 // pred_region
      _
    $region61: #{tpu_custom_call.1} parent=1 // pred_fallthru
      _
    // Predicated region
    $region62: #{tpu_custom_call.1} parent=1 // pred_check
      _
    $region63: #{tpu_custom_call.1} parent=1 // pred_check_branch
      %77 = sbr.rel (0) target = $region65
    $region64: #{tpu_custom_call.1} parent=1 // pred_region
      %s79 = ssub.s32 32, 32
      %80 = vsyncadd [#allocation7], %s79
      %s81 = sshll.u32 [#allocation8], 4
      %s82 = int_to_ptr.vmem [resolvable:$true] %s81
      %87 = dma.hbm_to_vmem [thread:$0]  %s15, 32, %s82, [#allocation7], 16, 16, 1
    $region65: #{tpu_custom_call.1} parent=1 // pred_fallthru
      _
    // Predicated region
    $region66: #{tpu_custom_call.1} parent=1 // pred_check
      _
    $region67: #{tpu_custom_call.1} parent=1 // pred_check_branch
      %89 = sbr.rel (0) target = $region69
    $region68: #{tpu_custom_call.1} parent=1 // pred_region
      _
    $region69: #{tpu_custom_call.1} parent=1 // pred_fallthru
      _
    // Predicated region
    $region70: #{tpu_custom_call.1} parent=1 // pred_check
      _
    $region71: #{tpu_custom_call.1} parent=1 // pred_check_branch
      %91 = sbr.rel (0) target = $region73
    $region72: #{tpu_custom_call.1} parent=1 // pred_region
      _
    $region73: #{tpu_custom_call.1} parent=1 // pred_fallthru
      _
    // Predicated region
    $region74: #{tpu_custom_call.1} parent=1 // pred_check
      _
    $region75: #{tpu_custom_call.1} parent=1 // pred_check_branch
      %93 = sbr.rel (0) target = $region77
    $region76: #{tpu_custom_call.1} parent=1 // pred_region
      _
    $region77: #{tpu_custom_call.1} parent=1 // pred_fallthru
      _
    // Predicated region
    $region78: #{tpu_custom_call.1} parent=1 // pred_check
      _
    $region79: #{tpu_custom_call.1} parent=1 // pred_check_branch
      %95 = sbr.rel (0) target = $region81
    $region80: #{tpu_custom_call.1} parent=1 // pred_region
      _
    $region81: #{tpu_custom_call.1} parent=1 // pred_fallthru
      _
    // Predicated region
    $region82: #{tpu_custom_call.1} parent=1 // pred_check
      _
    $region83: #{tpu_custom_call.1} parent=1 // pred_check_branch
      %97 = sbr.rel (0) target = $region85
    $region84: #{tpu_custom_call.1} parent=1 // pred_region
      _
    $region85: #{tpu_custom_call.1} parent=1 // pred_fallthru
      _
    // Predicated region
    $region86: #{tpu_custom_call.1} parent=1 // pred_check
      _
    $region87: #{tpu_custom_call.1} parent=1 // pred_check_branch
      %99 = sbr.rel (0) target = $region89
    $region88: #{tpu_custom_call.1} parent=1 // pred_region
      _
    $region89: #{tpu_custom_call.1} parent=1 // pred_fallthru
      _
    // Predicated region
    $region90: #{tpu_custom_call.1} parent=1 // pred_check
      _
    $region91: #{tpu_custom_call.1} parent=1 // pred_check_branch
      %101 = sbr.rel (0) target = $region93
    $region92: #{tpu_custom_call.1} parent=1 // pred_region
      %102 = dma.done [#allocation4], 16
    $region93: #{tpu_custom_call.1} parent=1 // pred_fallthru
      _
    // Predicated region
    $region94: #{tpu_custom_call.1} parent=1 // pred_check
      _
    $region95: #{tpu_custom_call.1} parent=1 // pred_check_branch
      %104 = sbr.rel (0) target = $region97
    $region96: #{tpu_custom_call.1} parent=1 // pred_region
      %105 = dma.done [#allocation7], 128
    $region97: #{tpu_custom_call.1} parent=1 // pred_fallthru
      _
    // Predicated region
    $region98: #{tpu_custom_call.1} parent=1 // pred_check
      _
    $region99: #{tpu_custom_call.1} parent=1 // pred_check_branch
      %107 = sbr.rel (0) target = $region101
    $region100: #{tpu_custom_call.1} parent=1 // pred_region
      %108 = dma.done [#allocation7], 32
    $region101: #{tpu_custom_call.1} parent=1 // pred_fallthru
      _
    %v110 = vld [vmem:[%s0] sm:$0xff]
    %v111 = vld [vmem:[%s0 + $0x8] sm:$0xff]
    %v112 = vpack.c.bf16 %v111, %v110
    %v113 = vld [vmem:[%s1] sm:$0xf]
    %v114 = vld [vmem:[%s1 + $0x4] sm:$0xf]
    %v115 = vld [vmem:[%s1 + $0x8] sm:$0xf]
    %v116 = vld [vmem:[%s1 + $0xc] sm:$0xf]
    %v117 = vld [vmem:[#allocation3] sm:$0x1]
    %v119 = vlaneseq
    %v120 = vshrl.u32 %v119, 7
    %v121 = vsub.s32 0, %v120
    %v122 = vrot.slane %v117, %v121
    %v128 = vunpack.c.l.b16 %v113
    %v129 = vunpack.c.l.b16 %v114
    %v130 = vunpack.c.l.b16 %v115
    %v131 = vunpack.c.l.b16 %v116
    %v132 = vpack.c.b16 %v129, %v128
    %v133 = vpack.c.b16 %v131, %v130
    %vm136 = vcmask 261120
    %v138 = vsel %vm136, %v112, 0
    %140 = vmatprep.subr.bf16.mxu0 0
    %141 = vmatpush1.bf16.msra.mxu0 %v132
    %142 = vmatprep.subr.bf16.mxu0 0
    %143 = vmatpush1.bf16.msra.mxu0 %v133
    %144 = vmatprep.subr.bf16.mxu0 0
    %145 = vmatpush1.bf16.msra.mxu0 0
    %146 = vmatprep.subr.bf16.mxu0 0
    %147 = vmatpush1.bf16.msra.mxu0 0
    %148 = vmatprep.subr.bf16.mxu0 0
    %149 = vmatpush1.bf16.msra.mxu0 0
    %150 = vmatprep.subr.bf16.mxu0 0
    %151 = vmatpush1.bf16.msra.mxu0 0
    %152 = vmatprep.subr.bf16.mxu0 0
    %153 = vmatpush1.bf16.msra.mxu0 0
    %154 = vmatprep.subr.bf16.mxu0 0
    %155 = vmatpush1.bf16.msra.mxu0 0
    %156 = vmatprep.subr.bf16.mxu0 0
    %157 = vmatpush1.bf16.msra.mxu0 0
    %158 = vmatprep.subr.bf16.mxu0 0
    %159 = vmatpush1.bf16.msra.mxu0 0
    %160 = vmatprep.subr.bf16.mxu0 0
    %161 = vmatpush1.bf16.msra.mxu0 0
    %162 = vmatprep.subr.bf16.mxu0 0
    %163 = vmatpush1.bf16.msra.mxu0 0
    %164 = vmatprep.subr.bf16.mxu0 0
    %165 = vmatpush1.bf16.msra.mxu0 0
    %166 = vmatprep.subr.bf16.mxu0 0
    %167 = vmatpush1.bf16.msra.mxu0 0
    %168 = vmatprep.subr.bf16.mxu0 0
    %169 = vmatpush1.bf16.msra.mxu0 0
    %170 = vmatprep.subr.bf16.mxu0 0
    %171 = vmatpush1.bf16.msra.mxu0 0
    %172 = vmatprep.mubr.bf16.mxu0 0
    %173 = vmatmul.mubr.bf16.gmra.mrb[0].mxu0 %v138
    %v174 = vpop.f32.mrb[0].mxu0
    %v175 = vadd.f32 %v122, %v174
    %v176 = vpop.f32.mrb[0].mxu0
    %v177 = vpop.f32.mrb[0].mxu0
    %v178 = vadd.f32 %v122, %v177
    %v179 = vpop.f32.mrb[0].mxu0
    %180 = vdwg.mxu0
    %v181 = vld [vmem:[%s3] sm:$0xff]
    %v182 = vld [vmem:[%s3 + $0x8] sm:$0xff]
    %vm183 = vcmask 130048
    %v185 = vsel %vm183, 0.0, 0
    %187 = vmatprep.subr.mxu0 0.0
    %188 = vmatpush1.msra.mxu0 %v181
    %189 = vmatprep.subr.mxu0 0.0
    %190 = vmatpush1.msra.mxu0 %v182
    %191 = vmatprep.subr.mxu0 0.0
    %192 = vmatpush1.msra.mxu0 0.0
    %193 = vmatprep.subr.mxu0 0.0
    %194 = vmatpush1.msra.mxu0 0.0
    %195 = vmatprep.subr.mxu0 0.0
    %196 = vmatpush1.msra.mxu0 0.0
    %197 = vmatprep.subr.mxu0 0.0
    %198 = vmatpush1.msra.mxu0 0.0
    %199 = vmatprep.subr.mxu0 0.0
    %200 = vmatpush1.msra.mxu0 0.0
    %201 = vmatprep.subr.mxu0 0.0
    %202 = vmatpush1.msra.mxu0 0.0
    %203 = vmatprep.subr.mxu0 0.0
    %204 = vmatpush1.msra.mxu0 0.0
    %205 = vmatprep.subr.mxu0 0.0
    %206 = vmatpush1.msra.mxu0 0.0
    %207 = vmatprep.subr.mxu0 0.0
    %208 = vmatpush1.msra.mxu0 0.0
    %209 = vmatprep.subr.mxu0 0.0
    %210 = vmatpush1.msra.mxu0 0.0
    %211 = vmatprep.subr.mxu0 0.0
    %212 = vmatpush1.msra.mxu0 0.0
    %213 = vmatprep.subr.mxu0 0.0
    %214 = vmatpush1.msra.mxu0 0.0
    %215 = vmatprep.subr.mxu0 0.0
    %216 = vmatpush1.msra.mxu0 0.0
    %217 = vmatprep.subr.mxu0 0.0
    %218 = vmatpush1.msra.mxu0 0.0
    %219 = vmatprep.subr.mxu0 0.0
    %220 = vmatpush1.msra.mxu0 0.0
    %221 = vmatprep.subr.mxu0 0.0
    %222 = vmatpush1.msra.mxu0 0.0
    %223 = vmatprep.subr.mxu0 0.0
    %224 = vmatpush1.msra.mxu0 0.0
    %225 = vmatprep.subr.mxu0 0.0
    %226 = vmatpush1.msra.mxu0 0.0
    %227 = vmatprep.subr.mxu0 0.0
    %228 = vmatpush1.msra.mxu0 0.0
    %229 = vmatprep.subr.mxu0 0.0
    %230 = vmatpush1.msra.mxu0 0.0
    %231 = vmatprep.subr.mxu0 0.0
    %232 = vmatpush1.msra.mxu0 0.0
    %233 = vmatprep.subr.mxu0 0.0
    %234 = vmatpush1.msra.mxu0 0.0
    %235 = vmatprep.subr.mxu0 0.0
    %236 = vmatpush1.msra.mxu0 0.0
    %237 = vmatprep.subr.mxu0 0.0
    %238 = vmatpush1.msra.mxu0 0.0
    %239 = vmatprep.subr.mxu0 0.0
    %240 = vmatpush1.msra.mxu0 0.0
    %241 = vmatprep.subr.mxu0 0.0
    %242 = vmatpush1.msra.mxu0 0.0
    %243 = vmatprep.subr.mxu0 0.0
    %244 = vmatpush1.msra.mxu0 0.0
    %245 = vmatprep.subr.mxu0 0.0
    %246 = vmatpush1.msra.mxu0 0.0
    %247 = vmatprep.subr.mxu0 0.0
    %248 = vmatpush1.msra.mxu0 0.0
    %249 = vmatprep.subr.mxu0 0.0
    %250 = vmatpush1.msra.mxu0 0.0
    %251 = vmatprep.mubr.f32.mxu0 0.0
    %252 = vmatmul.mubr.f32.gmra.mrb[0].mxu0 %v185
    %v253 = vpop.f32.mrb[0].mxu0
    %v254 = vadd.f32 0.0, %v253
    %v255 = vpop.f32.mrb[0].mxu0
    %256 = vdwg.mxu0
    %v258 = vrot.slane %v254, 1
    %v261 = vadd.f32 %v175, %v254
    %v262 = vadd.f32 %v178, %v258
    %v263 = vxor.u32 %v261, 2147483648
    %v264 = vxor.u32 %v262, 2147483648
    %v265 = vmul.f32 %v263, 1.442695
    %v266 = vpow.pop %v265
    %v267 = vmul.f32 %v264, 1.442695
    %v268 = vpow.pop %v267
    %v269 = vadd.f32 %v266, 1.0
    %v270 = vadd.f32 %v268, 1.0
    %v271 = vrcp.pop %v269
    %v272 = vmul.f32 1.0, %v271
    %v273 = vrcp.pop %v270
    %v274 = vmul.f32 1.0, %v273
    %v275 = vtanh.pop %v261
    %v276 = vtanh.pop %v262
    %v277 = vmul.f32 %v272, 0.0
    %v278 = vmul.f32 %v274, 0.0
    %281 = vrot.lane.b32.xlu0 %v275, 96
    %v282 = vpop.permute.xlu0 %281
    %283 = vrot.lane.b32.xlu0 %v276, 96
    %v284 = vpop.permute.xlu0 %283
    %v287 = vmul.f32 %v272, %v282
    %v288 = vmul.f32 %v274, %v284
    %291 = vrot.lane.b32.xlu0 %v287, 16
    %v292 = vpop.permute.xlu0 %291
    %293 = vrot.lane.b32.xlu0 %v288, 16
    %v294 = vpop.permute.xlu0 %293
    %v297 = vadd.f32 %v277, %v292
    %v298 = vadd.f32 %v278, %v294
    %v299 = vtanh.pop %v297
    %v300 = vtanh.pop %v298
    %303 = vrot.lane.b32.xlu0 %v299, 32
    %v304 = vpop.permute.xlu0 %303
    %305 = vrot.lane.b32.xlu0 %v300, 32
    %v306 = vpop.permute.xlu0 %305
    %v309 = vmul.f32 %v272, %v304
    %v310 = vmul.f32 %v274, %v306
    %313 = vrot.lane.b32.xlu0 %v309, 80
    %v314 = vpop.permute.xlu0 %313
    %315 = vrot.lane.b32.xlu0 %v310, 80
    %v316 = vpop.permute.xlu0 %315
    %vm319 = vcmask 122880
    %320 = vst.msk [vmem:[#allocation2] sm:$0x1] %vm319, %v314
    %321 = vst.msk [vmem:[#allocation2 + $0x8] sm:$0x1] %vm319, %v316
    %v322 = vrot.slane %v310, 7
    %vm323 = vcmask 1041409
    %v324 = vsel %vm323, %v322, %v309
    %325 = vrot.lane.b32.xlu0 %v324, 80
    %v326 = vpop.permute.xlu0 %325
    %v327 = vsel %vm183, %v326, 0
    %329 = vmatprep.subr.mxu0 0.0
    %330 = vmatpush1.msra.mxu0 %v181
    %331 = vmatprep.subr.mxu0 0.0
    %332 = vmatpush1.msra.mxu0 %v182
    %333 = vmatprep.subr.mxu0 0.0
    %334 = vmatpush1.msra.mxu0 0.0
    %335 = vmatprep.subr.mxu0 0.0
    %336 = vmatpush1.msra.mxu0 0.0
    %337 = vmatprep.subr.mxu0 0.0
    %338 = vmatpush1.msra.mxu0 0.0
    %339 = vmatprep.subr.mxu0 0.0
    %340 = vmatpush1.msra.mxu0 0.0
    %341 = vmatprep.subr.mxu0 0.0
    %342 = vmatpush1.msra.mxu0 0.0
    %343 = vmatprep.subr.mxu0 0.0
    %344 = vmatpush1.msra.mxu0 0.0
    %345 = vmatprep.subr.mxu0 0.0
    %346 = vmatpush1.msra.mxu0 0.0
    %347 = vmatprep.subr.mxu0 0.0
    %348 = vmatpush1.msra.mxu0 0.0
    %349 = vmatprep.subr.mxu0 0.0
    %350 = vmatpush1.msra.mxu0 0.0
    %351 = vmatprep.subr.mxu0 0.0
    %352 = vmatpush1.msra.mxu0 0.0
    %353 = vmatprep.subr.mxu0 0.0
    %354 = vmatpush1.msra.mxu0 0.0
    %355 = vmatprep.subr.mxu0 0.0
    %356 = vmatpush1.msra.mxu0 0.0
    %357 = vmatprep.subr.mxu0 0.0
    %358 = vmatpush1.msra.mxu0 0.0
    %359 = vmatprep.subr.mxu0 0.0
    %360 = vmatpush1.msra.mxu0 0.0
    %361 = vmatprep.subr.mxu0 0.0
    %362 = vmatpush1.msra.mxu0 0.0
    %363 = vmatprep.subr.mxu0 0.0
    %364 = vmatpush1.msra.mxu0 0.0
    %365 = vmatprep.subr.mxu0 0.0
    %366 = vmatpush1.msra.mxu0 0.0
    %367 = vmatprep.subr.mxu0 0.0
    %368 = vmatpush1.msra.mxu0 0.0
    %369 = vmatprep.subr.mxu0 0.0
    %370 = vmatpush1.msra.mxu0 0.0
    %371 = vmatprep.subr.mxu0 0.0
    %372 = vmatpush1.msra.mxu0 0.0
    %373 = vmatprep.subr.mxu0 0.0
    %374 = vmatpush1.msra.mxu0 0.0
    %375 = vmatprep.subr.mxu0 0.0
    %376 = vmatpush1.msra.mxu0 0.0
    %377 = vmatprep.subr.mxu0 0.0
    %378 = vmatpush1.msra.mxu0 0.0
    %379 = vmatprep.subr.mxu0 0.0
    %380 = vmatpush1.msra.mxu0 0.0
    %381 = vmatprep.subr.mxu0 0.0
    %382 = vmatpush1.msra.mxu0 0.0
    %383 = vmatprep.subr.mxu0 0.0
    %384 = vmatpush1.msra.mxu0 0.0
    %385 = vmatprep.subr.mxu0 0.0
    %386 = vmatpush1.msra.mxu0 0.0
    %387 = vmatprep.subr.mxu0 0.0
    %388 = vmatpush1.msra.mxu0 0.0
    %389 = vmatprep.subr.mxu0 0.0
    %390 = vmatpush1.msra.mxu0 0.0
    %391 = vmatprep.subr.mxu0 0.0
    %392 = vmatpush1.msra.mxu0 0.0
    %393 = vmatprep.mubr.f32.mxu0 0.0
    %394 = vmatmul.mubr.f32.gmra.mrb[0].mxu0 %v327
    %v395 = vpop.f32.mrb[0].mxu0
    %v396 = vadd.f32 0.0, %v395
    %v397 = vpop.f32.mrb[0].mxu0
    %398 = vdwg.mxu0
    %v400 = vrot.slane %v396, 7
    %v403 = vadd.f32 %v175, %v400
    %v404 = vadd.f32 %v178, %v396
    %v405 = vxor.u32 %v403, 2147483648
    %v406 = vxor.u32 %v404, 2147483648
    %v407 = vmul.f32 %v405, 1.442695
    %v408 = vpow.pop %v407
    %v409 = vmul.f32 %v406, 1.442695
    %v410 = vpow.pop %v409
    %v411 = vadd.f32 %v408, 1.0
    %v412 = vadd.f32 %v410, 1.0
    %v413 = vrcp.pop %v411
    %v414 = vmul.f32 1.0, %v413
    %v415 = vrcp.pop %v412
    %v416 = vmul.f32 1.0, %v415
    %v417 = vtanh.pop %v403
    %v418 = vtanh.pop %v404
    %v421 = vrot.slane %v297, 7
    %v422 = vrot.slane %v298, 7
    %v425 = vmul.f32 %v414, %v421
    %v426 = vmul.f32 %v416, %v422
    %429 = vrot.lane.b32.xlu0 %v417, 96
    %v430 = vpop.permute.xlu0 %429
    %431 = vrot.lane.b32.xlu0 %v418, 96
    %v432 = vpop.permute.xlu0 %431
    %v435 = vmul.f32 %v414, %v430
    %v436 = vmul.f32 %v416, %v432
    %439 = vrot.lane.b32.xlu0 %v435, 16
    %v440 = vpop.permute.xlu0 %439
    %441 = vrot.lane.b32.xlu0 %v436, 16
    %v442 = vpop.permute.xlu0 %441
    %v445 = vadd.f32 %v425, %v440
    %v446 = vadd.f32 %v426, %v442
    %v447 = vtanh.pop %v445
    %v448 = vtanh.pop %v446
    %451 = vrot.lane.b32.xlu0 %v447, 32
    %v452 = vpop.permute.xlu0 %451
    %453 = vrot.lane.b32.xlu0 %v448, 32
    %v454 = vpop.permute.xlu0 %453
    %v457 = vmul.f32 %v414, %v452
    %v458 = vmul.f32 %v416, %v454
    %461 = vrot.lane.b32.xlu0 %v457, 80
    %v462 = vpop.permute.xlu0 %461
    %463 = vrot.lane.b32.xlu0 %v458, 80
    %v464 = vpop.permute.xlu0 %463
    %vm467 = vcmask 123905
    %468 = vst.msk [vmem:[#allocation2] sm:$0x2] %vm467, %v462
    %469 = vst.msk [vmem:[#allocation2 + $0x8] sm:$0x2] %vm467, %v464
    %v470 = vrot.slane %v457, 1
    %v471 = vsel %vm323, %v458, %v470
    %472 = vrot.lane.b32.xlu0 %v471, 80
    %v473 = vpop.permute.xlu0 %472
    %v474 = vsel %vm183, %v473, 0
    %476 = vmatprep.subr.mxu0 0.0
    %477 = vmatpush1.msra.mxu0 %v181
    %478 = vmatprep.subr.mxu0 0.0
    %479 = vmatpush1.msra.mxu0 %v182
    %480 = vmatprep.subr.mxu0 0.0
    %481 = vmatpush1.msra.mxu0 0.0
    %482 = vmatprep.subr.mxu0 0.0
    %483 = vmatpush1.msra.mxu0 0.0
    %484 = vmatprep.subr.mxu0 0.0
    %485 = vmatpush1.msra.mxu0 0.0
    %486 = vmatprep.subr.mxu0 0.0
    %487 = vmatpush1.msra.mxu0 0.0
    %488 = vmatprep.subr.mxu0 0.0
    %489 = vmatpush1.msra.mxu0 0.0
    %490 = vmatprep.subr.mxu0 0.0
    %491 = vmatpush1.msra.mxu0 0.0
    %492 = vmatprep.subr.mxu0 0.0
    %493 = vmatpush1.msra.mxu0 0.0
    %494 = vmatprep.subr.mxu0 0.0
    %495 = vmatpush1.msra.mxu0 0.0
    %496 = vmatprep.subr.mxu0 0.0
    %497 = vmatpush1.msra.mxu0 0.0
    %498 = vmatprep.subr.mxu0 0.0
    %499 = vmatpush1.msra.mxu0 0.0
    %500 = vmatprep.subr.mxu0 0.0
    %501 = vmatpush1.msra.mxu0 0.0
    %502 = vmatprep.subr.mxu0 0.0
    %503 = vmatpush1.msra.mxu0 0.0
    %504 = vmatprep.subr.mxu0 0.0
    %505 = vmatpush1.msra.mxu0 0.0
    %506 = vmatprep.subr.mxu0 0.0
    %507 = vmatpush1.msra.mxu0 0.0
    %508 = vmatprep.subr.mxu0 0.0
    %509 = vmatpush1.msra.mxu0 0.0
    %510 = vmatprep.subr.mxu0 0.0
    %511 = vmatpush1.msra.mxu0 0.0
    %512 = vmatprep.subr.mxu0 0.0
    %513 = vmatpush1.msra.mxu0 0.0
    %514 = vmatprep.subr.mxu0 0.0
    %515 = vmatpush1.msra.mxu0 0.0
    %516 = vmatprep.subr.mxu0 0.0
    %517 = vmatpush1.msra.mxu0 0.0
    %518 = vmatprep.subr.mxu0 0.0
    %519 = vmatpush1.msra.mxu0 0.0
    %520 = vmatprep.subr.mxu0 0.0
    %521 = vmatpush1.msra.mxu0 0.0
    %522 = vmatprep.subr.mxu0 0.0
    %523 = vmatpush1.msra.mxu0 0.0
    %524 = vmatprep.subr.mxu0 0.0
    %525 = vmatpush1.msra.mxu0 0.0
    %526 = vmatprep.subr.mxu0 0.0
    %527 = vmatpush1.msra.mxu0 0.0
    %528 = vmatprep.subr.mxu0 0.0
    %529 = vmatpush1.msra.mxu0 0.0
    %530 = vmatprep.subr.mxu0 0.0
    %531 = vmatpush1.msra.mxu0 0.0
    %532 = vmatprep.subr.mxu0 0.0
    %533 = vmatpush1.msra.mxu0 0.0
    %534 = vmatprep.subr.mxu0 0.0
    %535 = vmatpush1.msra.mxu0 0.0
    %536 = vmatprep.subr.mxu0 0.0
    %537 = vmatpush1.msra.mxu0 0.0
    %538 = vmatprep.subr.mxu0 0.0
    %539 = vmatpush1.msra.mxu0 0.0
    %540 = vmatprep.mubr.f32.mxu0 0.0
    %541 = vmatmul.mubr.f32.gmra.mrb[0].mxu0 %v474
    %v542 = vpop.f32.mrb[0].mxu0
    %v543 = vadd.f32 0.0, %v542
    %v544 = vpop.f32.mrb[0].mxu0
    %545 = vdwg.mxu0
    %v547 = vrot.slane %v543, 6
    %v548 = vrot.slane %v543, 7
    %v551 = vadd.f32 %v175, %v547
    %v552 = vadd.f32 %v178, %v548
    %v553 = vxor.u32 %v551, 2147483648
    %v554 = vxor.u32 %v552, 2147483648
    %v555 = vmul.f32 %v553, 1.442695
    %v556 = vpow.pop %v555
    %v557 = vmul.f32 %v554, 1.442695
    %v558 = vpow.pop %v557
    %v559 = vadd.f32 %v556, 1.0
    %v560 = vadd.f32 %v558, 1.0
    %v561 = vrcp.pop %v559
    %v562 = vmul.f32 1.0, %v561
    %v563 = vrcp.pop %v560
    %v564 = vmul.f32 1.0, %v563
    %v565 = vtanh.pop %v551
    %v566 = vtanh.pop %v552
    %v569 = vrot.slane %v445, 7
    %v570 = vrot.slane %v446, 7
    %v573 = vmul.f32 %v562, %v569
    %v574 = vmul.f32 %v564, %v570
    %577 = vrot.lane.b32.xlu0 %v565, 96
    %v578 = vpop.permute.xlu0 %577
    %579 = vrot.lane.b32.xlu0 %v566, 96
    %v580 = vpop.permute.xlu0 %579
    %v583 = vmul.f32 %v562, %v578
    %v584 = vmul.f32 %v564, %v580
    %587 = vrot.lane.b32.xlu0 %v583, 16
    %v588 = vpop.permute.xlu0 %587
    %589 = vrot.lane.b32.xlu0 %v584, 16
    %v590 = vpop.permute.xlu0 %589
    %v593 = vadd.f32 %v573, %v588
    %v594 = vadd.f32 %v574, %v590
    %v595 = vtanh.pop %v593
    %v596 = vtanh.pop %v594
    %599 = vrot.lane.b32.xlu0 %v595, 32
    %v600 = vpop.permute.xlu0 %599
    %601 = vrot.lane.b32.xlu0 %v596, 32
    %v602 = vpop.permute.xlu0 %601
    %v605 = vmul.f32 %v562, %v600
    %v606 = vmul.f32 %v564, %v602
    %609 = vrot.lane.b32.xlu0 %v605, 80
    %v610 = vpop.permute.xlu0 %609
    %611 = vrot.lane.b32.xlu0 %v606, 80
    %v612 = vpop.permute.xlu0 %611
    %vm615 = vcmask 124930
    %616 = vst.msk [vmem:[#allocation2] sm:$0x4] %vm615, %v610
    %617 = vst.msk [vmem:[#allocation2 + $0x8] sm:$0x4] %vm615, %v612
    %v618 = vrot.slane %v605, 2
    %v619 = vrot.slane %v606, 1
    %v620 = vsel %vm323, %v619, %v618
    %621 = vrot.lane.b32.xlu0 %v620, 80
    %v622 = vpop.permute.xlu0 %621
    %v623 = vsel %vm183, %v622, 0
    %625 = vmatprep.subr.mxu0 0.0
    %626 = vmatpush1.msra.mxu0 %v181
    %627 = vmatprep.subr.mxu0 0.0
    %628 = vmatpush1.msra.mxu0 %v182
    %629 = vmatprep.subr.mxu0 0.0
    %630 = vmatpush1.msra.mxu0 0.0
    %631 = vmatprep.subr.mxu0 0.0
    %632 = vmatpush1.msra.mxu0 0.0
    %633 = vmatprep.subr.mxu0 0.0
    %634 = vmatpush1.msra.mxu0 0.0
    %635 = vmatprep.subr.mxu0 0.0
    %636 = vmatpush1.msra.mxu0 0.0
    %637 = vmatprep.subr.mxu0 0.0
    %638 = vmatpush1.msra.mxu0 0.0
    %639 = vmatprep.subr.mxu0 0.0
    %640 = vmatpush1.msra.mxu0 0.0
    %641 = vmatprep.subr.mxu0 0.0
    %642 = vmatpush1.msra.mxu0 0.0
    %643 = vmatprep.subr.mxu0 0.0
    %644 = vmatpush1.msra.mxu0 0.0
    %645 = vmatprep.subr.mxu0 0.0
    %646 = vmatpush1.msra.mxu0 0.0
    %647 = vmatprep.subr.mxu0 0.0
    %648 = vmatpush1.msra.mxu0 0.0
    %649 = vmatprep.subr.mxu0 0.0
    %650 = vmatpush1.msra.mxu0 0.0
    %651 = vmatprep.subr.mxu0 0.0
    %652 = vmatpush1.msra.mxu0 0.0
    %653 = vmatprep.subr.mxu0 0.0
    %654 = vmatpush1.msra.mxu0 0.0
    %655 = vmatprep.subr.mxu0 0.0
    %656 = vmatpush1.msra.mxu0 0.0
    %657 = vmatprep.subr.mxu0 0.0
    %658 = vmatpush1.msra.mxu0 0.0
    %659 = vmatprep.subr.mxu0 0.0
    %660 = vmatpush1.msra.mxu0 0.0
    %661 = vmatprep.subr.mxu0 0.0
    %662 = vmatpush1.msra.mxu0 0.0
    %663 = vmatprep.subr.mxu0 0.0
    %664 = vmatpush1.msra.mxu0 0.0
    %665 = vmatprep.subr.mxu0 0.0
    %666 = vmatpush1.msra.mxu0 0.0
    %667 = vmatprep.subr.mxu0 0.0
    %668 = vmatpush1.msra.mxu0 0.0
    %669 = vmatprep.subr.mxu0 0.0
    %670 = vmatpush1.msra.mxu0 0.0
    %671 = vmatprep.subr.mxu0 0.0
    %672 = vmatpush1.msra.mxu0 0.0
    %673 = vmatprep.subr.mxu0 0.0
    %674 = vmatpush1.msra.mxu0 0.0
    %675 = vmatprep.subr.mxu0 0.0
    %676 = vmatpush1.msra.mxu0 0.0
    %677 = vmatprep.subr.mxu0 0.0
    %678 = vmatpush1.msra.mxu0 0.0
    %679 = vmatprep.subr.mxu0 0.0
    %680 = vmatpush1.msra.mxu0 0.0
    %681 = vmatprep.subr.mxu0 0.0
    %682 = vmatpush1.msra.mxu0 0.0
    %683 = vmatprep.subr.mxu0 0.0
    %684 = vmatpush1.msra.mxu0 0.0
    %685 = vmatprep.subr.mxu0 0.0
    %686 = vmatpush1.msra.mxu0 0.0
    %687 = vmatprep.subr.mxu0 0.0
    %688 = vmatpush1.msra.mxu0 0.0
    %689 = vmatprep.mubr.f32.mxu0 0.0
    %690 = vmatmul.mubr.f32.gmra.mrb[0].mxu0 %v623
    %v691 = vpop.f32.mrb[0].mxu0
    %v692 = vadd.f32 0.0, %v691
    %v693 = vpop.f32.mrb[0].mxu0
    %694 = vdwg.mxu0
    %v696 = vrot.slane %v692, 5
    %v697 = vrot.slane %v692, 6
    %v700 = vadd.f32 %v175, %v696
    %v701 = vadd.f32 %v178, %v697
    %v702 = vxor.u32 %v700, 2147483648
    %v703 = vxor.u32 %v701, 2147483648
    %v704 = vmul.f32 %v702, 1.442695
    %v705 = vpow.pop %v704
    %v706 = vmul.f32 %v703, 1.442695
    %v707 = vpow.pop %v706
    %v708 = vadd.f32 %v705, 1.0
    %v709 = vadd.f32 %v707, 1.0
    %v710 = vrcp.pop %v708
    %v711 = vmul.f32 1.0, %v710
    %v712 = vrcp.pop %v709
    %v713 = vmul.f32 1.0, %v712
    %v714 = vtanh.pop %v700
    %v715 = vtanh.pop %v701
    %v718 = vrot.slane %v593, 7
    %v719 = vrot.slane %v594, 7
    %v722 = vmul.f32 %v711, %v718
    %v723 = vmul.f32 %v713, %v719
    %726 = vrot.lane.b32.xlu0 %v714, 96
    %v727 = vpop.permute.xlu0 %726
    %728 = vrot.lane.b32.xlu0 %v715, 96
    %v729 = vpop.permute.xlu0 %728
    %v732 = vmul.f32 %v711, %v727
    %v733 = vmul.f32 %v713, %v729
    %736 = vrot.lane.b32.xlu0 %v732, 16
    %v737 = vpop.permute.xlu0 %736
    %738 = vrot.lane.b32.xlu0 %v733, 16
    %v739 = vpop.permute.xlu0 %738
    %v742 = vadd.f32 %v722, %v737
    %v743 = vadd.f32 %v723, %v739
    %v744 = vtanh.pop %v742
    %v745 = vtanh.pop %v743
    %748 = vrot.lane.b32.xlu0 %v744, 32
    %v749 = vpop.permute.xlu0 %748
    %750 = vrot.lane.b32.xlu0 %v745, 32
    %v751 = vpop.permute.xlu0 %750
    %v754 = vmul.f32 %v711, %v749
    %v755 = vmul.f32 %v713, %v751
    %758 = vrot.lane.b32.xlu0 %v754, 80
    %v759 = vpop.permute.xlu0 %758
    %760 = vrot.lane.b32.xlu0 %v755, 80
    %v761 = vpop.permute.xlu0 %760
    %vm764 = vcmask 125955
    %765 = vst.msk [vmem:[#allocation2] sm:$0x8] %vm764, %v759
    %766 = vst.msk [vmem:[#allocation2 + $0x8] sm:$0x8] %vm764, %v761
    %v767 = vrot.slane %v754, 3
    %v768 = vrot.slane %v755, 2
    %v769 = vsel %vm323, %v768, %v767
    %770 = vrot.lane.b32.xlu0 %v769, 80
    %v771 = vpop.permute.xlu0 %770
    %v772 = vsel %vm183, %v771, 0
    %774 = vmatprep.subr.mxu0 0.0
    %775 = vmatpush1.msra.mxu0 %v181
    %776 = vmatprep.subr.mxu0 0.0
    %777 = vmatpush1.msra.mxu0 %v182
    %778 = vmatprep.subr.mxu0 0.0
    %779 = vmatpush1.msra.mxu0 0.0
    %780 = vmatprep.subr.mxu0 0.0
    %781 = vmatpush1.msra.mxu0 0.0
    %782 = vmatprep.subr.mxu0 0.0
    %783 = vmatpush1.msra.mxu0 0.0
    %784 = vmatprep.subr.mxu0 0.0
    %785 = vmatpush1.msra.mxu0 0.0
    %786 = vmatprep.subr.mxu0 0.0
    %787 = vmatpush1.msra.mxu0 0.0
    %788 = vmatprep.subr.mxu0 0.0
    %789 = vmatpush1.msra.mxu0 0.0
    %790 = vmatprep.subr.mxu0 0.0
    %791 = vmatpush1.msra.mxu0 0.0
    %792 = vmatprep.subr.mxu0 0.0
    %793 = vmatpush1.msra.mxu0 0.0
    %794 = vmatprep.subr.mxu0 0.0
    %795 = vmatpush1.msra.mxu0 0.0
    %796 = vmatprep.subr.mxu0 0.0
    %797 = vmatpush1.msra.mxu0 0.0
    %798 = vmatprep.subr.mxu0 0.0
    %799 = vmatpush1.msra.mxu0 0.0
    %800 = vmatprep.subr.mxu0 0.0
    %801 = vmatpush1.msra.mxu0 0.0
    %802 = vmatprep.subr.mxu0 0.0
    %803 = vmatpush1.msra.mxu0 0.0
    %804 = vmatprep.subr.mxu0 0.0
    %805 = vmatpush1.msra.mxu0 0.0
    %806 = vmatprep.subr.mxu0 0.0
    %807 = vmatpush1.msra.mxu0 0.0
    %808 = vmatprep.subr.mxu0 0.0
    %809 = vmatpush1.msra.mxu0 0.0
    %810 = vmatprep.subr.mxu0 0.0
    %811 = vmatpush1.msra.mxu0 0.0
    %812 = vmatprep.subr.mxu0 0.0
    %813 = vmatpush1.msra.mxu0 0.0
    %814 = vmatprep.subr.mxu0 0.0
    %815 = vmatpush1.msra.mxu0 0.0
    %816 = vmatprep.subr.mxu0 0.0
    %817 = vmatpush1.msra.mxu0 0.0
    %818 = vmatprep.subr.mxu0 0.0
    %819 = vmatpush1.msra.mxu0 0.0
    %820 = vmatprep.subr.mxu0 0.0
    %821 = vmatpush1.msra.mxu0 0.0
    %822 = vmatprep.subr.mxu0 0.0
    %823 = vmatpush1.msra.mxu0 0.0
    %824 = vmatprep.subr.mxu0 0.0
    %825 = vmatpush1.msra.mxu0 0.0
    %826 = vmatprep.subr.mxu0 0.0
    %827 = vmatpush1.msra.mxu0 0.0
    %828 = vmatprep.subr.mxu0 0.0
    %829 = vmatpush1.msra.mxu0 0.0
    %830 = vmatprep.subr.mxu0 0.0
    %831 = vmatpush1.msra.mxu0 0.0
    %832 = vmatprep.subr.mxu0 0.0
    %833 = vmatpush1.msra.mxu0 0.0
    %834 = vmatprep.subr.mxu0 0.0
    %835 = vmatpush1.msra.mxu0 0.0
    %836 = vmatprep.subr.mxu0 0.0
    %837 = vmatpush1.msra.mxu0 0.0
    %838 = vmatprep.mubr.f32.mxu0 0.0
    %839 = vmatmul.mubr.f32.gmra.mrb[0].mxu0 %v772
    %v840 = vpop.f32.mrb[0].mxu0
    %v841 = vadd.f32 0.0, %v840
    %v842 = vpop.f32.mrb[0].mxu0
    %843 = vdwg.mxu0
    %v845 = vrot.slane %v841, 4
    %v846 = vrot.slane %v841, 5
    %v849 = vadd.f32 %v175, %v845
    %v850 = vadd.f32 %v178, %v846
    %v851 = vxor.u32 %v849, 2147483648
    %v852 = vxor.u32 %v850, 2147483648
    %v853 = vmul.f32 %v851, 1.442695
    %v854 = vpow.pop %v853
    %v855 = vmul.f32 %v852, 1.442695
    %v856 = vpow.pop %v855
    %v857 = vadd.f32 %v854, 1.0
    %v858 = vadd.f32 %v856, 1.0
    %v859 = vrcp.pop %v857
    %v860 = vmul.f32 1.0, %v859
    %v861 = vrcp.pop %v858
    %v862 = vmul.f32 1.0, %v861
    %v863 = vtanh.pop %v849
    %v864 = vtanh.pop %v850
    %v867 = vrot.slane %v742, 7
    %v868 = vrot.slane %v743, 7
    %v871 = vmul.f32 %v860, %v867
    %v872 = vmul.f32 %v862, %v868
    %875 = vrot.lane.b32.xlu0 %v863, 96
    %v876 = vpop.permute.xlu0 %875
    %877 = vrot.lane.b32.xlu0 %v864, 96
    %v878 = vpop.permute.xlu0 %877
    %v881 = vmul.f32 %v860, %v876
    %v882 = vmul.f32 %v862, %v878
    %885 = vrot.lane.b32.xlu0 %v881, 16
    %v886 = vpop.permute.xlu0 %885
    %887 = vrot.lane.b32.xlu0 %v882, 16
    %v888 = vpop.permute.xlu0 %887
    %v891 = vadd.f32 %v871, %v886
    %v892 = vadd.f32 %v872, %v888
    %v893 = vtanh.pop %v891
    %v894 = vtanh.pop %v892
    %897 = vrot.lane.b32.xlu0 %v893, 32
    %v898 = vpop.permute.xlu0 %897
    %899 = vrot.lane.b32.xlu0 %v894, 32
    %v900 = vpop.permute.xlu0 %899
    %v903 = vmul.f32 %v860, %v898
    %v904 = vmul.f32 %v862, %v900
    %907 = vrot.lane.b32.xlu0 %v903, 80
    %v908 = vpop.permute.xlu0 %907
    %909 = vrot.lane.b32.xlu0 %v904, 80
    %v910 = vpop.permute.xlu0 %909
    %vm913 = vcmask 126980
    %914 = vst.msk [vmem:[#allocation2] sm:$0x10] %vm913, %v908
    %915 = vst.msk [vmem:[#allocation2 + $0x8] sm:$0x10] %vm913, %v910
    %v916 = vrot.slane %v903, 4
    %v917 = vrot.slane %v904, 3
    %v918 = vsel %vm323, %v917, %v916
    %919 = vrot.lane.b32.xlu0 %v918, 80
    %v920 = vpop.permute.xlu0 %919
    %v921 = vsel %vm183, %v920, 0
    %923 = vmatprep.subr.mxu0 0.0
    %924 = vmatpush1.msra.mxu0 %v181
    %925 = vmatprep.subr.mxu0 0.0
    %926 = vmatpush1.msra.mxu0 %v182
    %927 = vmatprep.subr.mxu0 0.0
    %928 = vmatpush1.msra.mxu0 0.0
    %929 = vmatprep.subr.mxu0 0.0
    %930 = vmatpush1.msra.mxu0 0.0
    %931 = vmatprep.subr.mxu0 0.0
    %932 = vmatpush1.msra.mxu0 0.0
    %933 = vmatprep.subr.mxu0 0.0
    %934 = vmatpush1.msra.mxu0 0.0
    %935 = vmatprep.subr.mxu0 0.0
    %936 = vmatpush1.msra.mxu0 0.0
    %937 = vmatprep.subr.mxu0 0.0
    %938 = vmatpush1.msra.mxu0 0.0
    %939 = vmatprep.subr.mxu0 0.0
    %940 = vmatpush1.msra.mxu0 0.0
    %941 = vmatprep.subr.mxu0 0.0
    %942 = vmatpush1.msra.mxu0 0.0
    %943 = vmatprep.subr.mxu0 0.0
    %944 = vmatpush1.msra.mxu0 0.0
    %945 = vmatprep.subr.mxu0 0.0
    %946 = vmatpush1.msra.mxu0 0.0
    %947 = vmatprep.subr.mxu0 0.0
    %948 = vmatpush1.msra.mxu0 0.0
    %949 = vmatprep.subr.mxu0 0.0
    %950 = vmatpush1.msra.mxu0 0.0
    %951 = vmatprep.subr.mxu0 0.0
    %952 = vmatpush1.msra.mxu0 0.0
    %953 = vmatprep.subr.mxu0 0.0
    %954 = vmatpush1.msra.mxu0 0.0
    %955 = vmatprep.subr.mxu0 0.0
    %956 = vmatpush1.msra.mxu0 0.0
    %957 = vmatprep.subr.mxu0 0.0
    %958 = vmatpush1.msra.mxu0 0.0
    %959 = vmatprep.subr.mxu0 0.0
    %960 = vmatpush1.msra.mxu0 0.0
    %961 = vmatprep.subr.mxu0 0.0
    %962 = vmatpush1.msra.mxu0 0.0
    %963 = vmatprep.subr.mxu0 0.0
    %964 = vmatpush1.msra.mxu0 0.0
    %965 = vmatprep.subr.mxu0 0.0
    %966 = vmatpush1.msra.mxu0 0.0
    %967 = vmatprep.subr.mxu0 0.0
    %968 = vmatpush1.msra.mxu0 0.0
    %969 = vmatprep.subr.mxu0 0.0
    %970 = vmatpush1.msra.mxu0 0.0
    %971 = vmatprep.subr.mxu0 0.0
    %972 = vmatpush1.msra.mxu0 0.0
    %973 = vmatprep.subr.mxu0 0.0
    %974 = vmatpush1.msra.mxu0 0.0
    %975 = vmatprep.subr.mxu0 0.0
    %976 = vmatpush1.msra.mxu0 0.0
    %977 = vmatprep.subr.mxu0 0.0
    %978 = vmatpush1.msra.mxu0 0.0
    %979 = vmatprep.subr.mxu0 0.0
    %980 = vmatpush1.msra.mxu0 0.0
    %981 = vmatprep.subr.mxu0 0.0
    %982 = vmatpush1.msra.mxu0 0.0
    %983 = vmatprep.subr.mxu0 0.0
    %984 = vmatpush1.msra.mxu0 0.0
    %985 = vmatprep.subr.mxu0 0.0
    %986 = vmatpush1.msra.mxu0 0.0
    %987 = vmatprep.mubr.f32.mxu0 0.0
    %988 = vmatmul.mubr.f32.gmra.mrb[0].mxu0 %v921
    %v989 = vpop.f32.mrb[0].mxu0
    %v990 = vadd.f32 0.0, %v989
    %v991 = vpop.f32.mrb[0].mxu0
    %992 = vdwg.mxu0
    %v994 = vrot.slane %v990, 3
    %v995 = vrot.slane %v990, 4
    %v998 = vadd.f32 %v175, %v994
    %v999 = vadd.f32 %v178, %v995
    %v1000 = vxor.u32 %v998, 2147483648
    %v1001 = vxor.u32 %v999, 2147483648
    %v1002 = vmul.f32 %v1000, 1.442695
    %v1003 = vpow.pop %v1002
    %v1004 = vmul.f32 %v1001, 1.442695
    %v1005 = vpow.pop %v1004
    %v1006 = vadd.f32 %v1003, 1.0
    %v1007 = vadd.f32 %v1005, 1.0
    %v1008 = vrcp.pop %v1006
    %v1009 = vmul.f32 1.0, %v1008
    %v1010 = vrcp.pop %v1007
    %v1011 = vmul.f32 1.0, %v1010
    %v1012 = vtanh.pop %v998
    %v1013 = vtanh.pop %v999
    %v1016 = vrot.slane %v891, 7
    %v1017 = vrot.slane %v892, 7
    %v1020 = vmul.f32 %v1009, %v1016
    %v1021 = vmul.f32 %v1011, %v1017
    %1024 = vrot.lane.b32.xlu0 %v1012, 96
    %v1025 = vpop.permute.xlu0 %1024
    %1026 = vrot.lane.b32.xlu0 %v1013, 96
    %v1027 = vpop.permute.xlu0 %1026
    %v1030 = vmul.f32 %v1009, %v1025
    %v1031 = vmul.f32 %v1011, %v1027
    %1034 = vrot.lane.b32.xlu0 %v1030, 16
    %v1035 = vpop.permute.xlu0 %1034
    %1036 = vrot.lane.b32.xlu0 %v1031, 16
    %v1037 = vpop.permute.xlu0 %1036
    %v1040 = vadd.f32 %v1020, %v1035
    %v1041 = vadd.f32 %v1021, %v1037
    %v1042 = vtanh.pop %v1040
    %v1043 = vtanh.pop %v1041
    %1046 = vrot.lane.b32.xlu0 %v1042, 32
    %v1047 = vpop.permute.xlu0 %1046
    %1048 = vrot.lane.b32.xlu0 %v1043, 32
    %v1049 = vpop.permute.xlu0 %1048
    %v1052 = vmul.f32 %v1009, %v1047
    %v1053 = vmul.f32 %v1011, %v1049
    %1056 = vrot.lane.b32.xlu0 %v1052, 80
    %v1057 = vpop.permute.xlu0 %1056
    %1058 = vrot.lane.b32.xlu0 %v1053, 80
    %v1059 = vpop.permute.xlu0 %1058
    %vm1062 = vcmask 128005
    %1063 = vst.msk [vmem:[#allocation2] sm:$0x20] %vm1062, %v1057
    %1064 = vst.msk [vmem:[#allocation2 + $0x8] sm:$0x20] %vm1062, %v1059
    %v1065 = vrot.slane %v1052, 5
    %v1066 = vrot.slane %v1053, 4
    %v1067 = vsel %vm323, %v1066, %v1065
    %1068 = vrot.lane.b32.xlu0 %v1067, 80
    %v1069 = vpop.permute.xlu0 %1068
    %v1070 = vsel %vm183, %v1069, 0
    %1072 = vmatprep.subr.mxu0 0.0
    %1073 = vmatpush1.msra.mxu0 %v181
    %1074 = vmatprep.subr.mxu0 0.0
    %1075 = vmatpush1.msra.mxu0 %v182
    %1076 = vmatprep.subr.mxu0 0.0
    %1077 = vmatpush1.msra.mxu0 0.0
    %1078 = vmatprep.subr.mxu0 0.0
    %1079 = vmatpush1.msra.mxu0 0.0
    %1080 = vmatprep.subr.mxu0 0.0
    %1081 = vmatpush1.msra.mxu0 0.0
    %1082 = vmatprep.subr.mxu0 0.0
    %1083 = vmatpush1.msra.mxu0 0.0
    %1084 = vmatprep.subr.mxu0 0.0
    %1085 = vmatpush1.msra.mxu0 0.0
    %1086 = vmatprep.subr.mxu0 0.0
    %1087 = vmatpush1.msra.mxu0 0.0
    %1088 = vmatprep.subr.mxu0 0.0
    %1089 = vmatpush1.msra.mxu0 0.0
    %1090 = vmatprep.subr.mxu0 0.0
    %1091 = vmatpush1.msra.mxu0 0.0
    %1092 = vmatprep.subr.mxu0 0.0
    %1093 = vmatpush1.msra.mxu0 0.0
    %1094 = vmatprep.subr.mxu0 0.0
    %1095 = vmatpush1.msra.mxu0 0.0
    %1096 = vmatprep.subr.mxu0 0.0
    %1097 = vmatpush1.msra.mxu0 0.0
    %1098 = vmatprep.subr.mxu0 0.0
    %1099 = vmatpush1.msra.mxu0 0.0
    %1100 = vmatprep.subr.mxu0 0.0
    %1101 = vmatpush1.msra.mxu0 0.0
    %1102 = vmatprep.subr.mxu0 0.0
    %1103 = vmatpush1.msra.mxu0 0.0
    %1104 = vmatprep.subr.mxu0 0.0
    %1105 = vmatpush1.msra.mxu0 0.0
    %1106 = vmatprep.subr.mxu0 0.0
    %1107 = vmatpush1.msra.mxu0 0.0
    %1108 = vmatprep.subr.mxu0 0.0
    %1109 = vmatpush1.msra.mxu0 0.0
    %1110 = vmatprep.subr.mxu0 0.0
    %1111 = vmatpush1.msra.mxu0 0.0
    %1112 = vmatprep.subr.mxu0 0.0
    %1113 = vmatpush1.msra.mxu0 0.0
    %1114 = vmatprep.subr.mxu0 0.0
    %1115 = vmatpush1.msra.mxu0 0.0
    %1116 = vmatprep.subr.mxu0 0.0
    %1117 = vmatpush1.msra.mxu0 0.0
    %1118 = vmatprep.subr.mxu0 0.0
    %1119 = vmatpush1.msra.mxu0 0.0
    %1120 = vmatprep.subr.mxu0 0.0
    %1121 = vmatpush1.msra.mxu0 0.0
    %1122 = vmatprep.subr.mxu0 0.0
    %1123 = vmatpush1.msra.mxu0 0.0
    %1124 = vmatprep.subr.mxu0 0.0
    %1125 = vmatpush1.msra.mxu0 0.0
    %1126 = vmatprep.subr.mxu0 0.0
    %1127 = vmatpush1.msra.mxu0 0.0
    %1128 = vmatprep.subr.mxu0 0.0
    %1129 = vmatpush1.msra.mxu0 0.0
    %1130 = vmatprep.subr.mxu0 0.0
    %1131 = vmatpush1.msra.mxu0 0.0
    %1132 = vmatprep.subr.mxu0 0.0
    %1133 = vmatpush1.msra.mxu0 0.0
    %1134 = vmatprep.subr.mxu0 0.0
    %1135 = vmatpush1.msra.mxu0 0.0
    %1136 = vmatprep.mubr.f32.mxu0 0.0
    %1137 = vmatmul.mubr.f32.gmra.mrb[0].mxu0 %v1070
    %v1138 = vpop.f32.mrb[0].mxu0
    %v1139 = vadd.f32 0.0, %v1138
    %v1140 = vpop.f32.mrb[0].mxu0
    %1141 = vdwg.mxu0
    %v1143 = vrot.slane %v1139, 2
    %v1144 = vrot.slane %v1139, 3
    %v1147 = vadd.f32 %v175, %v1143
    %v1148 = vadd.f32 %v178, %v1144
    %v1149 = vxor.u32 %v1147, 2147483648
    %v1150 = vxor.u32 %v1148, 2147483648
    %v1151 = vmul.f32 %v1149, 1.442695
    %v1152 = vpow.pop %v1151
    %v1153 = vmul.f32 %v1150, 1.442695
    %v1154 = vpow.pop %v1153
    %v1155 = vadd.f32 %v1152, 1.0
    %v1156 = vadd.f32 %v1154, 1.0
    %v1157 = vrcp.pop %v1155
    %v1158 = vmul.f32 1.0, %v1157
    %v1159 = vrcp.pop %v1156
    %v1160 = vmul.f32 1.0, %v1159
    %v1161 = vtanh.pop %v1147
    %v1162 = vtanh.pop %v1148
    %v1165 = vrot.slane %v1040, 7
    %v1166 = vrot.slane %v1041, 7
    %v1169 = vmul.f32 %v1158, %v1165
    %v1170 = vmul.f32 %v1160, %v1166
    %1173 = vrot.lane.b32.xlu0 %v1161, 96
    %v1174 = vpop.permute.xlu0 %1173
    %1175 = vrot.lane.b32.xlu0 %v1162, 96
    %v1176 = vpop.permute.xlu0 %1175
    %v1179 = vmul.f32 %v1158, %v1174
    %v1180 = vmul.f32 %v1160, %v1176
    %1183 = vrot.lane.b32.xlu0 %v1179, 16
    %v1184 = vpop.permute.xlu0 %1183
    %1185 = vrot.lane.b32.xlu0 %v1180, 16
    %v1186 = vpop.permute.xlu0 %1185
    %v1189 = vadd.f32 %v1169, %v1184
    %v1190 = vadd.f32 %v1170, %v1186
    %v1191 = vtanh.pop %v1189
    %v1192 = vtanh.pop %v1190
    %1195 = vrot.lane.b32.xlu0 %v1191, 32
    %v1196 = vpop.permute.xlu0 %1195
    %1197 = vrot.lane.b32.xlu0 %v1192, 32
    %v1198 = vpop.permute.xlu0 %1197
    %v1201 = vmul.f32 %v1158, %v1196
    %v1202 = vmul.f32 %v1160, %v1198
    %1205 = vrot.lane.b32.xlu0 %v1201, 80
    %v1206 = vpop.permute.xlu0 %1205
    %1207 = vrot.lane.b32.xlu0 %v1202, 80
    %v1208 = vpop.permute.xlu0 %1207
    %vm1211 = vcmask 129030
    %1212 = vst.msk [vmem:[#allocation2] sm:$0x40] %vm1211, %v1206
    %1213 = vst.msk [vmem:[#allocation2 + $0x8] sm:$0x40] %vm1211, %v1208
    %v1214 = vrot.slane %v1201, 6
    %v1215 = vrot.slane %v1202, 5
    %v1216 = vsel %vm323, %v1215, %v1214
    %1217 = vrot.lane.b32.xlu0 %v1216, 80
    %v1218 = vpop.permute.xlu0 %1217
    %v1219 = vsel %vm183, %v1218, 0
    %1221 = vmatprep.subr.mxu0 0.0
    %1222 = vmatpush1.msra.mxu0 %v181
    %1223 = vmatprep.subr.mxu0 0.0
    %1224 = vmatpush1.msra.mxu0 %v182
    %1225 = vmatprep.subr.mxu0 0.0
    %1226 = vmatpush1.msra.mxu0 0.0
    %1227 = vmatprep.subr.mxu0 0.0
    %1228 = vmatpush1.msra.mxu0 0.0
    %1229 = vmatprep.subr.mxu0 0.0
    %1230 = vmatpush1.msra.mxu0 0.0
    %1231 = vmatprep.subr.mxu0 0.0
    %1232 = vmatpush1.msra.mxu0 0.0
    %1233 = vmatprep.subr.mxu0 0.0
    %1234 = vmatpush1.msra.mxu0 0.0
    %1235 = vmatprep.subr.mxu0 0.0
    %1236 = vmatpush1.msra.mxu0 0.0
    %1237 = vmatprep.subr.mxu0 0.0
    %1238 = vmatpush1.msra.mxu0 0.0
    %1239 = vmatprep.subr.mxu0 0.0
    %1240 = vmatpush1.msra.mxu0 0.0
    %1241 = vmatprep.subr.mxu0 0.0
    %1242 = vmatpush1.msra.mxu0 0.0
    %1243 = vmatprep.subr.mxu0 0.0
    %1244 = vmatpush1.msra.mxu0 0.0
    %1245 = vmatprep.subr.mxu0 0.0
    %1246 = vmatpush1.msra.mxu0 0.0
    %1247 = vmatprep.subr.mxu0 0.0
    %1248 = vmatpush1.msra.mxu0 0.0
    %1249 = vmatprep.subr.mxu0 0.0
    %1250 = vmatpush1.msra.mxu0 0.0
    %1251 = vmatprep.subr.mxu0 0.0
    %1252 = vmatpush1.msra.mxu0 0.0
    %1253 = vmatprep.subr.mxu0 0.0
    %1254 = vmatpush1.msra.mxu0 0.0
    %1255 = vmatprep.subr.mxu0 0.0
    %1256 = vmatpush1.msra.mxu0 0.0
    %1257 = vmatprep.subr.mxu0 0.0
    %1258 = vmatpush1.msra.mxu0 0.0
    %1259 = vmatprep.subr.mxu0 0.0
    %1260 = vmatpush1.msra.mxu0 0.0
    %1261 = vmatprep.subr.mxu0 0.0
    %1262 = vmatpush1.msra.mxu0 0.0
    %1263 = vmatprep.subr.mxu0 0.0
    %1264 = vmatpush1.msra.mxu0 0.0
    %1265 = vmatprep.subr.mxu0 0.0
    %1266 = vmatpush1.msra.mxu0 0.0
    %1267 = vmatprep.subr.mxu0 0.0
    %1268 = vmatpush1.msra.mxu0 0.0
    %1269 = vmatprep.subr.mxu0 0.0
    %1270 = vmatpush1.msra.mxu0 0.0
    %1271 = vmatprep.subr.mxu0 0.0
    %1272 = vmatpush1.msra.mxu0 0.0
    %1273 = vmatprep.subr.mxu0 0.0
    %1274 = vmatpush1.msra.mxu0 0.0
    %1275 = vmatprep.subr.mxu0 0.0
    %1276 = vmatpush1.msra.mxu0 0.0
    %1277 = vmatprep.subr.mxu0 0.0
    %1278 = vmatpush1.msra.mxu0 0.0
    %1279 = vmatprep.subr.mxu0 0.0
    %1280 = vmatpush1.msra.mxu0 0.0
    %1281 = vmatprep.subr.mxu0 0.0
    %1282 = vmatpush1.msra.mxu0 0.0
    %1283 = vmatprep.subr.mxu0 0.0
    %1284 = vmatpush1.msra.mxu0 0.0
    %1285 = vmatprep.mubr.f32.mxu0 0.0
    %1286 = vmatmul.mubr.f32.gmra.mrb[0].mxu0 %v1219
    %v1287 = vpop.f32.mrb[0].mxu0
    %v1288 = vadd.f32 0.0, %v1287
    %v1289 = vpop.f32.mrb[0].mxu0
    %1290 = vdwg.mxu0
    %v1292 = vrot.slane %v1288, 1
    %v1293 = vrot.slane %v1288, 2
    %v1296 = vadd.f32 %v175, %v1292
    %v1297 = vadd.f32 %v178, %v1293
    %v1298 = vxor.u32 %v1296, 2147483648
    %v1299 = vxor.u32 %v1297, 2147483648
    %v1300 = vmul.f32 %v1298, 1.442695
    %v1301 = vpow.pop %v1300
    %v1302 = vmul.f32 %v1299, 1.442695
    %v1303 = vpow.pop %v1302
    %v1304 = vadd.f32 %v1301, 1.0
    %v1305 = vadd.f32 %v1303, 1.0
    %v1306 = vrcp.pop %v1304
    %v1307 = vmul.f32 1.0, %v1306
    %v1308 = vrcp.pop %v1305
    %v1309 = vmul.f32 1.0, %v1308
    %v1310 = vtanh.pop %v1296
    %v1311 = vtanh.pop %v1297
    %v1314 = vrot.slane %v1189, 7
    %v1315 = vrot.slane %v1190, 7
    %v1318 = vmul.f32 %v1307, %v1314
    %v1319 = vmul.f32 %v1309, %v1315
    %1322 = vrot.lane.b32.xlu0 %v1310, 96
    %v1323 = vpop.permute.xlu0 %1322
    %1324 = vrot.lane.b32.xlu0 %v1311, 96
    %v1325 = vpop.permute.xlu0 %1324
    %v1328 = vmul.f32 %v1307, %v1323
    %v1329 = vmul.f32 %v1309, %v1325
    %1332 = vrot.lane.b32.xlu0 %v1328, 16
    %v1333 = vpop.permute.xlu0 %1332
    %1334 = vrot.lane.b32.xlu0 %v1329, 16
    %v1335 = vpop.permute.xlu0 %1334
    %v1338 = vadd.f32 %v1318, %v1333
    %v1339 = vadd.f32 %v1319, %v1335
    %v1340 = vtanh.pop %v1338
    %v1341 = vtanh.pop %v1339
    %1344 = vrot.lane.b32.xlu0 %v1340, 32
    %v1345 = vpop.permute.xlu0 %1344
    %1346 = vrot.lane.b32.xlu0 %v1341, 32
    %v1347 = vpop.permute.xlu0 %1346
    %v1350 = vmul.f32 %v1307, %v1345
    %v1351 = vmul.f32 %v1309, %v1347
    %1354 = vrot.lane.b32.xlu0 %v1350, 80
    %v1355 = vpop.permute.xlu0 %1354
    %1356 = vrot.lane.b32.xlu0 %v1351, 80
    %v1357 = vpop.permute.xlu0 %1356
    %vm1360 = vcmask 130055
    %1361 = vst.msk [vmem:[#allocation2] sm:$0x80] %vm1360, %v1355
    %1362 = vst.msk [vmem:[#allocation2 + $0x8] sm:$0x80] %vm1360, %v1357
    %v1363 = vld [vmem:[%s4] sm:$0xff]
    %v1364 = vld [vmem:[%s4 + $0x8] sm:$0xff]
    %1365 = vmatprep.subr.mxu0 0.0
    %1366 = vmatpush1.msra.mxu0 %v1363
    %1367 = vmatprep.subr.mxu0 0.0
    %1368 = vmatpush1.msra.mxu0 %v1364
    %1369 = vmatprep.subr.mxu0 0.0
    %1370 = vmatpush1.msra.mxu0 0.0
    %1371 = vmatprep.subr.mxu0 0.0
    %1372 = vmatpush1.msra.mxu0 0.0
    %1373 = vmatprep.subr.mxu0 0.0
    %1374 = vmatpush1.msra.mxu0 0.0
    %1375 = vmatprep.subr.mxu0 0.0
    %1376 = vmatpush1.msra.mxu0 0.0
    %1377 = vmatprep.subr.mxu0 0.0
    %1378 = vmatpush1.msra.mxu0 0.0
    %1379 = vmatprep.subr.mxu0 0.0
    %1380 = vmatpush1.msra.mxu0 0.0
    %1381 = vmatprep.subr.mxu0 0.0
    %1382 = vmatpush1.msra.mxu0 0.0
    %1383 = vmatprep.subr.mxu0 0.0
    %1384 = vmatpush1.msra.mxu0 0.0
    %1385 = vmatprep.subr.mxu0 0.0
    %1386 = vmatpush1.msra.mxu0 0.0
    %1387 = vmatprep.subr.mxu0 0.0
    %1388 = vmatpush1.msra.mxu0 0.0
    %1389 = vmatprep.subr.mxu0 0.0
    %1390 = vmatpush1.msra.mxu0 0.0
    %1391 = vmatprep.subr.mxu0 0.0
    %1392 = vmatpush1.msra.mxu0 0.0
    %1393 = vmatprep.subr.mxu0 0.0
    %1394 = vmatpush1.msra.mxu0 0.0
    %1395 = vmatprep.subr.mxu0 0.0
    %1396 = vmatpush1.msra.mxu0 0.0
    %1397 = vmatprep.subr.mxu0 0.0
    %1398 = vmatpush1.msra.mxu0 0.0
    %1399 = vmatprep.subr.mxu0 0.0
    %1400 = vmatpush1.msra.mxu0 0.0
    %1401 = vmatprep.subr.mxu0 0.0
    %1402 = vmatpush1.msra.mxu0 0.0
    %1403 = vmatprep.subr.mxu0 0.0
    %1404 = vmatpush1.msra.mxu0 0.0
    %1405 = vmatprep.subr.mxu0 0.0
    %1406 = vmatpush1.msra.mxu0 0.0
    %1407 = vmatprep.subr.mxu0 0.0
    %1408 = vmatpush1.msra.mxu0 0.0
    %1409 = vmatprep.subr.mxu0 0.0
    %1410 = vmatpush1.msra.mxu0 0.0
    %1411 = vmatprep.subr.mxu0 0.0
    %1412 = vmatpush1.msra.mxu0 0.0
    %1413 = vmatprep.subr.mxu0 0.0
    %1414 = vmatpush1.msra.mxu0 0.0
    %1415 = vmatprep.subr.mxu0 0.0
    %1416 = vmatpush1.msra.mxu0 0.0
    %1417 = vmatprep.subr.mxu0 0.0
    %1418 = vmatpush1.msra.mxu0 0.0
    %1419 = vmatprep.subr.mxu0 0.0
    %1420 = vmatpush1.msra.mxu0 0.0
    %1421 = vmatprep.subr.mxu0 0.0
    %1422 = vmatpush1.msra.mxu0 0.0
    %1423 = vmatprep.subr.mxu0 0.0
    %1424 = vmatpush1.msra.mxu0 0.0
    %1425 = vmatprep.subr.mxu0 0.0
    %1426 = vmatpush1.msra.mxu0 0.0
    %1427 = vmatprep.subr.mxu0 0.0
    %1428 = vmatpush1.msra.mxu0 0.0
    %1429 = vmatprep.mubr.f32.mxu0 0.0
    %1430 = vmatmul.mubr.f32.gmra.mrb[0].mxu0 %v185
    %v1431 = vpop.f32.mrb[0].mxu0
    %v1432 = vadd.f32 0.0, %v1431
    %v1433 = vpop.f32.mrb[0].mxu0
    %1434 = vdwg.mxu0
    %v1436 = vrot.slane %v1432, 1
    %v1437 = vrot.slane %v1432, 2
    %1438 = vrot.lane.b32.xlu0 %v1436, 64
    %v1439 = vpop.permute.xlu0 %1438
    %1440 = vrot.lane.b32.xlu0 %v1437, 64
    %v1441 = vpop.permute.xlu0 %1440
    %v1444 = vadd.f32 %v175, %v1439
    %v1445 = vadd.f32 %v178, %v1441
    %v1446 = vxor.u32 %v1444, 2147483648
    %v1447 = vxor.u32 %v1445, 2147483648
    %v1448 = vmul.f32 %v1446, 1.442695
    %v1449 = vpow.pop %v1448
    %v1450 = vmul.f32 %v1447, 1.442695
    %v1451 = vpow.pop %v1450
    %v1452 = vadd.f32 %v1449, 1.0
    %v1453 = vadd.f32 %v1451, 1.0
    %v1454 = vrcp.pop %v1452
    %v1455 = vmul.f32 1.0, %v1454
    %v1456 = vrcp.pop %v1453
    %v1457 = vmul.f32 1.0, %v1456
    %v1458 = vtanh.pop %v1444
    %v1459 = vtanh.pop %v1445
    %v1460 = vmul.f32 %v1455, 0.0
    %v1461 = vmul.f32 %v1457, 0.0
    %1464 = vrot.lane.b32.xlu0 %v1458, 96
    %v1465 = vpop.permute.xlu0 %1464
    %1466 = vrot.lane.b32.xlu0 %v1459, 96
    %v1467 = vpop.permute.xlu0 %1466
    %v1470 = vmul.f32 %v1455, %v1465
    %v1471 = vmul.f32 %v1457, %v1467
    %1474 = vrot.lane.b32.xlu0 %v1470, 16
    %v1475 = vpop.permute.xlu0 %1474
    %1476 = vrot.lane.b32.xlu0 %v1471, 16
    %v1477 = vpop.permute.xlu0 %1476
    %v1480 = vadd.f32 %v1460, %v1475
    %v1481 = vadd.f32 %v1461, %v1477
    %v1482 = vtanh.pop %v1480
    %v1483 = vtanh.pop %v1481
    %1486 = vrot.lane.b32.xlu0 %v1482, 32
    %v1487 = vpop.permute.xlu0 %1486
    %1488 = vrot.lane.b32.xlu0 %v1483, 32
    %v1489 = vpop.permute.xlu0 %1488
    %v1492 = vmul.f32 %v1455, %v1487
    %v1493 = vmul.f32 %v1457, %v1489
    %1496 = vrot.lane.b32.xlu0 %v1492, 32
    %v1497 = vpop.permute.xlu0 %1496
    %1498 = vrot.lane.b32.xlu0 %v1493, 32
    %v1499 = vpop.permute.xlu0 %1498
    %vm1502 = vcmask 261255
    %1503 = vst.msk [vmem:[#allocation2] sm:$0x80] %vm1502, %v1497
    %1504 = vst.msk [vmem:[#allocation2 + $0x8] sm:$0x80] %vm1502, %v1499
    %v1505 = vrot.slane %v1492, 7
    %v1506 = vrot.slane %v1493, 6
    %v1507 = vsel %vm323, %v1506, %v1505
    %1508 = vrot.lane.b32.xlu0 %v1507, 16
    %v1509 = vpop.permute.xlu0 %1508
    %v1510 = vsel %vm183, %v1509, 0
    %1512 = vmatprep.subr.mxu0 0.0
    %1513 = vmatpush1.msra.mxu0 %v1363
    %1514 = vmatprep.subr.mxu0 0.0
    %1515 = vmatpush1.msra.mxu0 %v1364
    %1516 = vmatprep.subr.mxu0 0.0
    %1517 = vmatpush1.msra.mxu0 0.0
    %1518 = vmatprep.subr.mxu0 0.0
    %1519 = vmatpush1.msra.mxu0 0.0
    %1520 = vmatprep.subr.mxu0 0.0
    %1521 = vmatpush1.msra.mxu0 0.0
    %1522 = vmatprep.subr.mxu0 0.0
    %1523 = vmatpush1.msra.mxu0 0.0
    %1524 = vmatprep.subr.mxu0 0.0
    %1525 = vmatpush1.msra.mxu0 0.0
    %1526 = vmatprep.subr.mxu0 0.0
    %1527 = vmatpush1.msra.mxu0 0.0
    %1528 = vmatprep.subr.mxu0 0.0
    %1529 = vmatpush1.msra.mxu0 0.0
    %1530 = vmatprep.subr.mxu0 0.0
    %1531 = vmatpush1.msra.mxu0 0.0
    %1532 = vmatprep.subr.mxu0 0.0
    %1533 = vmatpush1.msra.mxu0 0.0
    %1534 = vmatprep.subr.mxu0 0.0
    %1535 = vmatpush1.msra.mxu0 0.0
    %1536 = vmatprep.subr.mxu0 0.0
    %1537 = vmatpush1.msra.mxu0 0.0
    %1538 = vmatprep.subr.mxu0 0.0
    %1539 = vmatpush1.msra.mxu0 0.0
    %1540 = vmatprep.subr.mxu0 0.0
    %1541 = vmatpush1.msra.mxu0 0.0
    %1542 = vmatprep.subr.mxu0 0.0
    %1543 = vmatpush1.msra.mxu0 0.0
    %1544 = vmatprep.subr.mxu0 0.0
    %1545 = vmatpush1.msra.mxu0 0.0
    %1546 = vmatprep.subr.mxu0 0.0
    %1547 = vmatpush1.msra.mxu0 0.0
    %1548 = vmatprep.subr.mxu0 0.0
    %1549 = vmatpush1.msra.mxu0 0.0
    %1550 = vmatprep.subr.mxu0 0.0
    %1551 = vmatpush1.msra.mxu0 0.0
    %1552 = vmatprep.subr.mxu0 0.0
    %1553 = vmatpush1.msra.mxu0 0.0
    %1554 = vmatprep.subr.mxu0 0.0
    %1555 = vmatpush1.msra.mxu0 0.0
    %1556 = vmatprep.subr.mxu0 0.0
    %1557 = vmatpush1.msra.mxu0 0.0
    %1558 = vmatprep.subr.mxu0 0.0
    %1559 = vmatpush1.msra.mxu0 0.0
    %1560 = vmatprep.subr.mxu0 0.0
    %1561 = vmatpush1.msra.mxu0 0.0
    %1562 = vmatprep.subr.mxu0 0.0
    %1563 = vmatpush1.msra.mxu0 0.0
    %1564 = vmatprep.subr.mxu0 0.0
    %1565 = vmatpush1.msra.mxu0 0.0
    %1566 = vmatprep.subr.mxu0 0.0
    %1567 = vmatpush1.msra.mxu0 0.0
    %1568 = vmatprep.subr.mxu0 0.0
    %1569 = vmatpush1.msra.mxu0 0.0
    %1570 = vmatprep.subr.mxu0 0.0
    %1571 = vmatpush1.msra.mxu0 0.0
    %1572 = vmatprep.subr.mxu0 0.0
    %1573 = vmatpush1.msra.mxu0 0.0
    %1574 = vmatprep.subr.mxu0 0.0
    %1575 = vmatpush1.msra.mxu0 0.0
    %1576 = vmatprep.mubr.f32.mxu0 0.0
    %1577 = vmatmul.mubr.f32.gmra.mrb[0].mxu0 %v1510
    %v1578 = vpop.f32.mrb[0].mxu0
    %v1579 = vadd.f32 0.0, %v1578
    %v1580 = vpop.f32.mrb[0].mxu0
    %1581 = vdwg.mxu0
    %v1583 = vrot.slane %v1579, 2
    %v1584 = vrot.slane %v1579, 3
    %1585 = vrot.lane.b32.xlu0 %v1583, 64
    %v1586 = vpop.permute.xlu0 %1585
    %1587 = vrot.lane.b32.xlu0 %v1584, 64
    %v1588 = vpop.permute.xlu0 %1587
    %v1591 = vadd.f32 %v175, %v1586
    %v1592 = vadd.f32 %v178, %v1588
    %v1593 = vxor.u32 %v1591, 2147483648
    %v1594 = vxor.u32 %v1592, 2147483648
    %v1595 = vmul.f32 %v1593, 1.442695
    %v1596 = vpow.pop %v1595
    %v1597 = vmul.f32 %v1594, 1.442695
    %v1598 = vpow.pop %v1597
    %v1599 = vadd.f32 %v1596, 1.0
    %v1600 = vadd.f32 %v1598, 1.0
    %v1601 = vrcp.pop %v1599
    %v1602 = vmul.f32 1.0, %v1601
    %v1603 = vrcp.pop %v1600
    %v1604 = vmul.f32 1.0, %v1603
    %v1605 = vtanh.pop %v1591
    %v1606 = vtanh.pop %v1592
    %v1609 = vrot.slane %v1480, 1
    %v1610 = vrot.slane %v1481, 1
    %v1613 = vmul.f32 %v1602, %v1609
    %v1614 = vmul.f32 %v1604, %v1610
    %1617 = vrot.lane.b32.xlu0 %v1605, 96
    %v1618 = vpop.permute.xlu0 %1617
    %1619 = vrot.lane.b32.xlu0 %v1606, 96
    %v1620 = vpop.permute.xlu0 %1619
    %v1623 = vmul.f32 %v1602, %v1618
    %v1624 = vmul.f32 %v1604, %v1620
    %1627 = vrot.lane.b32.xlu0 %v1623, 16
    %v1628 = vpop.permute.xlu0 %1627
    %1629 = vrot.lane.b32.xlu0 %v1624, 16
    %v1630 = vpop.permute.xlu0 %1629
    %v1633 = vadd.f32 %v1613, %v1628
    %v1634 = vadd.f32 %v1614, %v1630
    %v1635 = vtanh.pop %v1633
    %v1636 = vtanh.pop %v1634
    %1639 = vrot.lane.b32.xlu0 %v1635, 32
    %v1640 = vpop.permute.xlu0 %1639
    %1641 = vrot.lane.b32.xlu0 %v1636, 32
    %v1642 = vpop.permute.xlu0 %1641
    %v1645 = vmul.f32 %v1602, %v1640
    %v1646 = vmul.f32 %v1604, %v1642
    %1649 = vrot.lane.b32.xlu0 %v1645, 32
    %v1650 = vpop.permute.xlu0 %1649
    %1651 = vrot.lane.b32.xlu0 %v1646, 32
    %v1652 = vpop.permute.xlu0 %1651
    %vm1655 = vcmask 260230
    %1656 = vst.msk [vmem:[#allocation2] sm:$0x40] %vm1655, %v1650
    %1657 = vst.msk [vmem:[#allocation2 + $0x8] sm:$0x40] %vm1655, %v1652
    %v1658 = vrot.slane %v1645, 6
    %v1659 = vrot.slane %v1646, 5
    %v1660 = vsel %vm323, %v1659, %v1658
    %1661 = vrot.lane.b32.xlu0 %v1660, 16
    %v1662 = vpop.permute.xlu0 %1661
    %v1663 = vsel %vm183, %v1662, 0
    %1665 = vmatprep.subr.mxu0 0.0
    %1666 = vmatpush1.msra.mxu0 %v1363
    %1667 = vmatprep.subr.mxu0 0.0
    %1668 = vmatpush1.msra.mxu0 %v1364
    %1669 = vmatprep.subr.mxu0 0.0
    %1670 = vmatpush1.msra.mxu0 0.0
    %1671 = vmatprep.subr.mxu0 0.0
    %1672 = vmatpush1.msra.mxu0 0.0
    %1673 = vmatprep.subr.mxu0 0.0
    %1674 = vmatpush1.msra.mxu0 0.0
    %1675 = vmatprep.subr.mxu0 0.0
    %1676 = vmatpush1.msra.mxu0 0.0
    %1677 = vmatprep.subr.mxu0 0.0
    %1678 = vmatpush1.msra.mxu0 0.0
    %1679 = vmatprep.subr.mxu0 0.0
    %1680 = vmatpush1.msra.mxu0 0.0
    %1681 = vmatprep.subr.mxu0 0.0
    %1682 = vmatpush1.msra.mxu0 0.0
    %1683 = vmatprep.subr.mxu0 0.0
    %1684 = vmatpush1.msra.mxu0 0.0
    %1685 = vmatprep.subr.mxu0 0.0
    %1686 = vmatpush1.msra.mxu0 0.0
    %1687 = vmatprep.subr.mxu0 0.0
    %1688 = vmatpush1.msra.mxu0 0.0
    %1689 = vmatprep.subr.mxu0 0.0
    %1690 = vmatpush1.msra.mxu0 0.0
    %1691 = vmatprep.subr.mxu0 0.0
    %1692 = vmatpush1.msra.mxu0 0.0
    %1693 = vmatprep.subr.mxu0 0.0
    %1694 = vmatpush1.msra.mxu0 0.0
    %1695 = vmatprep.subr.mxu0 0.0
    %1696 = vmatpush1.msra.mxu0 0.0
    %1697 = vmatprep.subr.mxu0 0.0
    %1698 = vmatpush1.msra.mxu0 0.0
    %1699 = vmatprep.subr.mxu0 0.0
    %1700 = vmatpush1.msra.mxu0 0.0
    %1701 = vmatprep.subr.mxu0 0.0
    %1702 = vmatpush1.msra.mxu0 0.0
    %1703 = vmatprep.subr.mxu0 0.0
    %1704 = vmatpush1.msra.mxu0 0.0
    %1705 = vmatprep.subr.mxu0 0.0
    %1706 = vmatpush1.msra.mxu0 0.0
    %1707 = vmatprep.subr.mxu0 0.0
    %1708 = vmatpush1.msra.mxu0 0.0
    %1709 = vmatprep.subr.mxu0 0.0
    %1710 = vmatpush1.msra.mxu0 0.0
    %1711 = vmatprep.subr.mxu0 0.0
    %1712 = vmatpush1.msra.mxu0 0.0
    %1713 = vmatprep.subr.mxu0 0.0
    %1714 = vmatpush1.msra.mxu0 0.0
    %1715 = vmatprep.subr.mxu0 0.0
    %1716 = vmatpush1.msra.mxu0 0.0
    %1717 = vmatprep.subr.mxu0 0.0
    %1718 = vmatpush1.msra.mxu0 0.0
    %1719 = vmatprep.subr.mxu0 0.0
    %1720 = vmatpush1.msra.mxu0 0.0
    %1721 = vmatprep.subr.mxu0 0.0
    %1722 = vmatpush1.msra.mxu0 0.0
    %1723 = vmatprep.subr.mxu0 0.0
    %1724 = vmatpush1.msra.mxu0 0.0
    %1725 = vmatprep.subr.mxu0 0.0
    %1726 = vmatpush1.msra.mxu0 0.0
    %1727 = vmatprep.subr.mxu0 0.0
    %1728 = vmatpush1.msra.mxu0 0.0
    %1729 = vmatprep.mubr.f32.mxu0 0.0
    %1730 = vmatmul.mubr.f32.gmra.mrb[0].mxu0 %v1663
    %v1731 = vpop.f32.mrb[0].mxu0
    %v1732 = vadd.f32 0.0, %v1731
    %v1733 = vpop.f32.mrb[0].mxu0
    %1734 = vdwg.mxu0
    %v1736 = vrot.slane %v1732, 3
    %v1737 = vrot.slane %v1732, 4
    %1738 = vrot.lane.b32.xlu0 %v1736, 64
    %v1739 = vpop.permute.xlu0 %1738
    %1740 = vrot.lane.b32.xlu0 %v1737, 64
    %v1741 = vpop.permute.xlu0 %1740
    %v1744 = vadd.f32 %v175, %v1739
    %v1745 = vadd.f32 %v178, %v1741
    %v1746 = vxor.u32 %v1744, 2147483648
    %v1747 = vxor.u32 %v1745, 2147483648
    %v1748 = vmul.f32 %v1746, 1.442695
    %v1749 = vpow.pop %v1748
    %v1750 = vmul.f32 %v1747, 1.442695
    %v1751 = vpow.pop %v1750
    %v1752 = vadd.f32 %v1749, 1.0
    %v1753 = vadd.f32 %v1751, 1.0
    %v1754 = vrcp.pop %v1752
    %v1755 = vmul.f32 1.0, %v1754
    %v1756 = vrcp.pop %v1753
    %v1757 = vmul.f32 1.0, %v1756
    %v1758 = vtanh.pop %v1744
    %v1759 = vtanh.pop %v1745
    %v1762 = vrot.slane %v1633, 1
    %v1763 = vrot.slane %v1634, 1
    %v1766 = vmul.f32 %v1755, %v1762
    %v1767 = vmul.f32 %v1757, %v1763
    %1770 = vrot.lane.b32.xlu0 %v1758, 96
    %v1771 = vpop.permute.xlu0 %1770
    %1772 = vrot.lane.b32.xlu0 %v1759, 96
    %v1773 = vpop.permute.xlu0 %1772
    %v1776 = vmul.f32 %v1755, %v1771
    %v1777 = vmul.f32 %v1757, %v1773
    %1780 = vrot.lane.b32.xlu0 %v1776, 16
    %v1781 = vpop.permute.xlu0 %1780
    %1782 = vrot.lane.b32.xlu0 %v1777, 16
    %v1783 = vpop.permute.xlu0 %1782
    %v1786 = vadd.f32 %v1766, %v1781
    %v1787 = vadd.f32 %v1767, %v1783
    %v1788 = vtanh.pop %v1786
    %v1789 = vtanh.pop %v1787
    %1792 = vrot.lane.b32.xlu0 %v1788, 32
    %v1793 = vpop.permute.xlu0 %1792
    %1794 = vrot.lane.b32.xlu0 %v1789, 32
    %v1795 = vpop.permute.xlu0 %1794
    %v1798 = vmul.f32 %v1755, %v1793
    %v1799 = vmul.f32 %v1757, %v1795
    %1802 = vrot.lane.b32.xlu0 %v1798, 32
    %v1803 = vpop.permute.xlu0 %1802
    %1804 = vrot.lane.b32.xlu0 %v1799, 32
    %v1805 = vpop.permute.xlu0 %1804
    %vm1808 = vcmask 259205
    %1809 = vst.msk [vmem:[#allocation2] sm:$0x20] %vm1808, %v1803
    %1810 = vst.msk [vmem:[#allocation2 + $0x8] sm:$0x20] %vm1808, %v1805
    %v1811 = vrot.slane %v1798, 5
    %v1812 = vrot.slane %v1799, 4
    %v1813 = vsel %vm323, %v1812, %v1811
    %1814 = vrot.lane.b32.xlu0 %v1813, 16
    %v1815 = vpop.permute.xlu0 %1814
    %v1816 = vsel %vm183, %v1815, 0
    %1818 = vmatprep.subr.mxu0 0.0
    %1819 = vmatpush1.msra.mxu0 %v1363
    %1820 = vmatprep.subr.mxu0 0.0
    %1821 = vmatpush1.msra.mxu0 %v1364
    %1822 = vmatprep.subr.mxu0 0.0
    %1823 = vmatpush1.msra.mxu0 0.0
    %1824 = vmatprep.subr.mxu0 0.0
    %1825 = vmatpush1.msra.mxu0 0.0
    %1826 = vmatprep.subr.mxu0 0.0
    %1827 = vmatpush1.msra.mxu0 0.0
    %1828 = vmatprep.subr.mxu0 0.0
    %1829 = vmatpush1.msra.mxu0 0.0
    %1830 = vmatprep.subr.mxu0 0.0
    %1831 = vmatpush1.msra.mxu0 0.0
    %1832 = vmatprep.subr.mxu0 0.0
    %1833 = vmatpush1.msra.mxu0 0.0
    %1834 = vmatprep.subr.mxu0 0.0
    %1835 = vmatpush1.msra.mxu0 0.0
    %1836 = vmatprep.subr.mxu0 0.0
    %1837 = vmatpush1.msra.mxu0 0.0
    %1838 = vmatprep.subr.mxu0 0.0
    %1839 = vmatpush1.msra.mxu0 0.0
    %1840 = vmatprep.subr.mxu0 0.0
    %1841 = vmatpush1.msra.mxu0 0.0
    %1842 = vmatprep.subr.mxu0 0.0
    %1843 = vmatpush1.msra.mxu0 0.0
    %1844 = vmatprep.subr.mxu0 0.0
    %1845 = vmatpush1.msra.mxu0 0.0
    %1846 = vmatprep.subr.mxu0 0.0
    %1847 = vmatpush1.msra.mxu0 0.0
    %1848 = vmatprep.subr.mxu0 0.0
    %1849 = vmatpush1.msra.mxu0 0.0
    %1850 = vmatprep.subr.mxu0 0.0
    %1851 = vmatpush1.msra.mxu0 0.0
    %1852 = vmatprep.subr.mxu0 0.0
    %1853 = vmatpush1.msra.mxu0 0.0
    %1854 = vmatprep.subr.mxu0 0.0
    %1855 = vmatpush1.msra.mxu0 0.0
    %1856 = vmatprep.subr.mxu0 0.0
    %1857 = vmatpush1.msra.mxu0 0.0
    %1858 = vmatprep.subr.mxu0 0.0
    %1859 = vmatpush1.msra.mxu0 0.0
    %1860 = vmatprep.subr.mxu0 0.0
    %1861 = vmatpush1.msra.mxu0 0.0
    %1862 = vmatprep.subr.mxu0 0.0
    %1863 = vmatpush1.msra.mxu0 0.0
    %1864 = vmatprep.subr.mxu0 0.0
    %1865 = vmatpush1.msra.mxu0 0.0
    %1866 = vmatprep.subr.mxu0 0.0
    %1867 = vmatpush1.msra.mxu0 0.0
    %1868 = vmatprep.subr.mxu0 0.0
    %1869 = vmatpush1.msra.mxu0 0.0
    %1870 = vmatprep.subr.mxu0 0.0
    %1871 = vmatpush1.msra.mxu0 0.0
    %1872 = vmatprep.subr.mxu0 0.0
    %1873 = vmatpush1.msra.mxu0 0.0
    %1874 = vmatprep.subr.mxu0 0.0
    %1875 = vmatpush1.msra.mxu0 0.0
    %1876 = vmatprep.subr.mxu0 0.0
    %1877 = vmatpush1.msra.mxu0 0.0
    %1878 = vmatprep.subr.mxu0 0.0
    %1879 = vmatpush1.msra.mxu0 0.0
    %1880 = vmatprep.subr.mxu0 0.0
    %1881 = vmatpush1.msra.mxu0 0.0
    %1882 = vmatprep.mubr.f32.mxu0 0.0
    %1883 = vmatmul.mubr.f32.gmra.mrb[0].mxu0 %v1816
    %v1884 = vpop.f32.mrb[0].mxu0
    %v1885 = vadd.f32 0.0, %v1884
    %v1886 = vpop.f32.mrb[0].mxu0
    %1887 = vdwg.mxu0
    %v1889 = vrot.slane %v1885, 4
    %v1890 = vrot.slane %v1885, 5
    %1891 = vrot.lane.b32.xlu0 %v1889, 64
    %v1892 = vpop.permute.xlu0 %1891
    %1893 = vrot.lane.b32.xlu0 %v1890, 64
    %v1894 = vpop.permute.xlu0 %1893
    %v1897 = vadd.f32 %v175, %v1892
    %v1898 = vadd.f32 %v178, %v1894
    %v1899 = vxor.u32 %v1897, 2147483648
    %v1900 = vxor.u32 %v1898, 2147483648
    %v1901 = vmul.f32 %v1899, 1.442695
    %v1902 = vpow.pop %v1901
    %v1903 = vmul.f32 %v1900, 1.442695
    %v1904 = vpow.pop %v1903
    %v1905 = vadd.f32 %v1902, 1.0
    %v1906 = vadd.f32 %v1904, 1.0
    %v1907 = vrcp.pop %v1905
    %v1908 = vmul.f32 1.0, %v1907
    %v1909 = vrcp.pop %v1906
    %v1910 = vmul.f32 1.0, %v1909
    %v1911 = vtanh.pop %v1897
    %v1912 = vtanh.pop %v1898
    %v1915 = vrot.slane %v1786, 1
    %v1916 = vrot.slane %v1787, 1
    %v1919 = vmul.f32 %v1908, %v1915
    %v1920 = vmul.f32 %v1910, %v1916
    %1923 = vrot.lane.b32.xlu0 %v1911, 96
    %v1924 = vpop.permute.xlu0 %1923
    %1925 = vrot.lane.b32.xlu0 %v1912, 96
    %v1926 = vpop.permute.xlu0 %1925
    %v1929 = vmul.f32 %v1908, %v1924
    %v1930 = vmul.f32 %v1910, %v1926
    %1933 = vrot.lane.b32.xlu0 %v1929, 16
    %v1934 = vpop.permute.xlu0 %1933
    %1935 = vrot.lane.b32.xlu0 %v1930, 16
    %v1936 = vpop.permute.xlu0 %1935
    %v1939 = vadd.f32 %v1919, %v1934
    %v1940 = vadd.f32 %v1920, %v1936
    %v1941 = vtanh.pop %v1939
    %v1942 = vtanh.pop %v1940
    %1945 = vrot.lane.b32.xlu0 %v1941, 32
    %v1946 = vpop.permute.xlu0 %1945
    %1947 = vrot.lane.b32.xlu0 %v1942, 32
    %v1948 = vpop.permute.xlu0 %1947
    %v1951 = vmul.f32 %v1908, %v1946
    %v1952 = vmul.f32 %v1910, %v1948
    %1955 = vrot.lane.b32.xlu0 %v1951, 32
    %v1956 = vpop.permute.xlu0 %1955
    %1957 = vrot.lane.b32.xlu0 %v1952, 32
    %v1958 = vpop.permute.xlu0 %1957
    %vm1961 = vcmask 258180
    %1962 = vst.msk [vmem:[#allocation2] sm:$0x10] %vm1961, %v1956
    %1963 = vst.msk [vmem:[#allocation2 + $0x8] sm:$0x10] %vm1961, %v1958
    %v1964 = vrot.slane %v1951, 4
    %v1965 = vrot.slane %v1952, 3
    %v1966 = vsel %vm323, %v1965, %v1964
    %1967 = vrot.lane.b32.xlu0 %v1966, 16
    %v1968 = vpop.permute.xlu0 %1967
    %v1969 = vsel %vm183, %v1968, 0
    %1971 = vmatprep.subr.mxu0 0.0
    %1972 = vmatpush1.msra.mxu0 %v1363
    %1973 = vmatprep.subr.mxu0 0.0
    %1974 = vmatpush1.msra.mxu0 %v1364
    %1975 = vmatprep.subr.mxu0 0.0
    %1976 = vmatpush1.msra.mxu0 0.0
    %1977 = vmatprep.subr.mxu0 0.0
    %1978 = vmatpush1.msra.mxu0 0.0
    %1979 = vmatprep.subr.mxu0 0.0
    %1980 = vmatpush1.msra.mxu0 0.0
    %1981 = vmatprep.subr.mxu0 0.0
    %1982 = vmatpush1.msra.mxu0 0.0
    %1983 = vmatprep.subr.mxu0 0.0
    %1984 = vmatpush1.msra.mxu0 0.0
    %1985 = vmatprep.subr.mxu0 0.0
    %1986 = vmatpush1.msra.mxu0 0.0
    %1987 = vmatprep.subr.mxu0 0.0
    %1988 = vmatpush1.msra.mxu0 0.0
    %1989 = vmatprep.subr.mxu0 0.0
    %1990 = vmatpush1.msra.mxu0 0.0
    %1991 = vmatprep.subr.mxu0 0.0
    %1992 = vmatpush1.msra.mxu0 0.0
    %1993 = vmatprep.subr.mxu0 0.0
    %1994 = vmatpush1.msra.mxu0 0.0
    %1995 = vmatprep.subr.mxu0 0.0
    %1996 = vmatpush1.msra.mxu0 0.0
    %1997 = vmatprep.subr.mxu0 0.0
    %1998 = vmatpush1.msra.mxu0 0.0
    %1999 = vmatprep.subr.mxu0 0.0
    %2000 = vmatpush1.msra.mxu0 0.0
    %2001 = vmatprep.subr.mxu0 0.0
    %2002 = vmatpush1.msra.mxu0 0.0
    %2003 = vmatprep.subr.mxu0 0.0
    %2004 = vmatpush1.msra.mxu0 0.0
    %2005 = vmatprep.subr.mxu0 0.0
    %2006 = vmatpush1.msra.mxu0 0.0
    %2007 = vmatprep.subr.mxu0 0.0
    %2008 = vmatpush1.msra.mxu0 0.0
    %2009 = vmatprep.subr.mxu0 0.0
    %2010 = vmatpush1.msra.mxu0 0.0
    %2011 = vmatprep.subr.mxu0 0.0
    %2012 = vmatpush1.msra.mxu0 0.0
    %2013 = vmatprep.subr.mxu0 0.0
    %2014 = vmatpush1.msra.mxu0 0.0
    %2015 = vmatprep.subr.mxu0 0.0
    %2016 = vmatpush1.msra.mxu0 0.0
    %2017 = vmatprep.subr.mxu0 0.0
    %2018 = vmatpush1.msra.mxu0 0.0
    %2019 = vmatprep.subr.mxu0 0.0
    %2020 = vmatpush1.msra.mxu0 0.0
    %2021 = vmatprep.subr.mxu0 0.0
    %2022 = vmatpush1.msra.mxu0 0.0
    %2023 = vmatprep.subr.mxu0 0.0
    %2024 = vmatpush1.msra.mxu0 0.0
    %2025 = vmatprep.subr.mxu0 0.0
    %2026 = vmatpush1.msra.mxu0 0.0
    %2027 = vmatprep.subr.mxu0 0.0
    %2028 = vmatpush1.msra.mxu0 0.0
    %2029 = vmatprep.subr.mxu0 0.0
    %2030 = vmatpush1.msra.mxu0 0.0
    %2031 = vmatprep.subr.mxu0 0.0
    %2032 = vmatpush1.msra.mxu0 0.0
    %2033 = vmatprep.subr.mxu0 0.0
    %2034 = vmatpush1.msra.mxu0 0.0
    %2035 = vmatprep.mubr.f32.mxu0 0.0
    %2036 = vmatmul.mubr.f32.gmra.mrb[0].mxu0 %v1969
    %v2037 = vpop.f32.mrb[0].mxu0
    %v2038 = vadd.f32 0.0, %v2037
    %v2039 = vpop.f32.mrb[0].mxu0
    %2040 = vdwg.mxu0
    %v2042 = vrot.slane %v2038, 5
    %v2043 = vrot.slane %v2038, 6
    %2044 = vrot.lane.b32.xlu0 %v2042, 64
    %v2045 = vpop.permute.xlu0 %2044
    %2046 = vrot.lane.b32.xlu0 %v2043, 64
    %v2047 = vpop.permute.xlu0 %2046
    %v2050 = vadd.f32 %v175, %v2045
    %v2051 = vadd.f32 %v178, %v2047
    %v2052 = vxor.u32 %v2050, 2147483648
    %v2053 = vxor.u32 %v2051, 2147483648
    %v2054 = vmul.f32 %v2052, 1.442695
    %v2055 = vpow.pop %v2054
    %v2056 = vmul.f32 %v2053, 1.442695
    %v2057 = vpow.pop %v2056
    %v2058 = vadd.f32 %v2055, 1.0
    %v2059 = vadd.f32 %v2057, 1.0
    %v2060 = vrcp.pop %v2058
    %v2061 = vmul.f32 1.0, %v2060
    %v2062 = vrcp.pop %v2059
    %v2063 = vmul.f32 1.0, %v2062
    %v2064 = vtanh.pop %v2050
    %v2065 = vtanh.pop %v2051
    %v2068 = vrot.slane %v1939, 1
    %v2069 = vrot.slane %v1940, 1
    %v2072 = vmul.f32 %v2061, %v2068
    %v2073 = vmul.f32 %v2063, %v2069
    %2076 = vrot.lane.b32.xlu0 %v2064, 96
    %v2077 = vpop.permute.xlu0 %2076
    %2078 = vrot.lane.b32.xlu0 %v2065, 96
    %v2079 = vpop.permute.xlu0 %2078
    %v2082 = vmul.f32 %v2061, %v2077
    %v2083 = vmul.f32 %v2063, %v2079
    %2086 = vrot.lane.b32.xlu0 %v2082, 16
    %v2087 = vpop.permute.xlu0 %2086
    %2088 = vrot.lane.b32.xlu0 %v2083, 16
    %v2089 = vpop.permute.xlu0 %2088
    %v2092 = vadd.f32 %v2072, %v2087
    %v2093 = vadd.f32 %v2073, %v2089
    %v2094 = vtanh.pop %v2092
    %v2095 = vtanh.pop %v2093
    %2098 = vrot.lane.b32.xlu0 %v2094, 32
    %v2099 = vpop.permute.xlu0 %2098
    %2100 = vrot.lane.b32.xlu0 %v2095, 32
    %v2101 = vpop.permute.xlu0 %2100
    %v2104 = vmul.f32 %v2061, %v2099
    %v2105 = vmul.f32 %v2063, %v2101
    %2108 = vrot.lane.b32.xlu0 %v2104, 32
    %v2109 = vpop.permute.xlu0 %2108
    %2110 = vrot.lane.b32.xlu0 %v2105, 32
    %v2111 = vpop.permute.xlu0 %2110
    %vm2114 = vcmask 257155
    %2115 = vst.msk [vmem:[#allocation2] sm:$0x8] %vm2114, %v2109
    %2116 = vst.msk [vmem:[#allocation2 + $0x8] sm:$0x8] %vm2114, %v2111
    %v2117 = vrot.slane %v2104, 3
    %v2118 = vrot.slane %v2105, 2
    %v2119 = vsel %vm323, %v2118, %v2117
    %2120 = vrot.lane.b32.xlu0 %v2119, 16
    %v2121 = vpop.permute.xlu0 %2120
    %v2122 = vsel %vm183, %v2121, 0
    %2124 = vmatprep.subr.mxu0 0.0
    %2125 = vmatpush1.msra.mxu0 %v1363
    %2126 = vmatprep.subr.mxu0 0.0
    %2127 = vmatpush1.msra.mxu0 %v1364
    %2128 = vmatprep.subr.mxu0 0.0
    %2129 = vmatpush1.msra.mxu0 0.0
    %2130 = vmatprep.subr.mxu0 0.0
    %2131 = vmatpush1.msra.mxu0 0.0
    %2132 = vmatprep.subr.mxu0 0.0
    %2133 = vmatpush1.msra.mxu0 0.0
    %2134 = vmatprep.subr.mxu0 0.0
    %2135 = vmatpush1.msra.mxu0 0.0
    %2136 = vmatprep.subr.mxu0 0.0
    %2137 = vmatpush1.msra.mxu0 0.0
    %2138 = vmatprep.subr.mxu0 0.0
    %2139 = vmatpush1.msra.mxu0 0.0
    %2140 = vmatprep.subr.mxu0 0.0
    %2141 = vmatpush1.msra.mxu0 0.0
    %2142 = vmatprep.subr.mxu0 0.0
    %2143 = vmatpush1.msra.mxu0 0.0
    %2144 = vmatprep.subr.mxu0 0.0
    %2145 = vmatpush1.msra.mxu0 0.0
    %2146 = vmatprep.subr.mxu0 0.0
    %2147 = vmatpush1.msra.mxu0 0.0
    %2148 = vmatprep.subr.mxu0 0.0
    %2149 = vmatpush1.msra.mxu0 0.0
    %2150 = vmatprep.subr.mxu0 0.0
    %2151 = vmatpush1.msra.mxu0 0.0
    %2152 = vmatprep.subr.mxu0 0.0
    %2153 = vmatpush1.msra.mxu0 0.0
    %2154 = vmatprep.subr.mxu0 0.0
    %2155 = vmatpush1.msra.mxu0 0.0
    %2156 = vmatprep.subr.mxu0 0.0
    %2157 = vmatpush1.msra.mxu0 0.0
    %2158 = vmatprep.subr.mxu0 0.0
    %2159 = vmatpush1.msra.mxu0 0.0
    %2160 = vmatprep.subr.mxu0 0.0
    %2161 = vmatpush1.msra.mxu0 0.0
    %2162 = vmatprep.subr.mxu0 0.0
    %2163 = vmatpush1.msra.mxu0 0.0
    %2164 = vmatprep.subr.mxu0 0.0
    %2165 = vmatpush1.msra.mxu0 0.0
    %2166 = vmatprep.subr.mxu0 0.0
    %2167 = vmatpush1.msra.mxu0 0.0
    %2168 = vmatprep.subr.mxu0 0.0
    %2169 = vmatpush1.msra.mxu0 0.0
    %2170 = vmatprep.subr.mxu0 0.0
    %2171 = vmatpush1.msra.mxu0 0.0
    %2172 = vmatprep.subr.mxu0 0.0
    %2173 = vmatpush1.msra.mxu0 0.0
    %2174 = vmatprep.subr.mxu0 0.0
    %2175 = vmatpush1.msra.mxu0 0.0
    %2176 = vmatprep.subr.mxu0 0.0
    %2177 = vmatpush1.msra.mxu0 0.0
    %2178 = vmatprep.subr.mxu0 0.0
    %2179 = vmatpush1.msra.mxu0 0.0
    %2180 = vmatprep.subr.mxu0 0.0
    %2181 = vmatpush1.msra.mxu0 0.0
    %2182 = vmatprep.subr.mxu0 0.0
    %2183 = vmatpush1.msra.mxu0 0.0
    %2184 = vmatprep.subr.mxu0 0.0
    %2185 = vmatpush1.msra.mxu0 0.0
    %2186 = vmatprep.subr.mxu0 0.0
    %2187 = vmatpush1.msra.mxu0 0.0
    %2188 = vmatprep.mubr.f32.mxu0 0.0
    %2189 = vmatmul.mubr.f32.gmra.mrb[0].mxu0 %v2122
    %v2190 = vpop.f32.mrb[0].mxu0
    %v2191 = vadd.f32 0.0, %v2190
    %v2192 = vpop.f32.mrb[0].mxu0
    %2193 = vdwg.mxu0
    %v2195 = vrot.slane %v2191, 6
    %v2196 = vrot.slane %v2191, 7
    %2197 = vrot.lane.b32.xlu0 %v2195, 64
    %v2198 = vpop.permute.xlu0 %2197
    %2199 = vrot.lane.b32.xlu0 %v2196, 64
    %v2200 = vpop.permute.xlu0 %2199
    %v2203 = vadd.f32 %v175, %v2198
    %v2204 = vadd.f32 %v178, %v2200
    %v2205 = vxor.u32 %v2203, 2147483648
    %v2206 = vxor.u32 %v2204, 2147483648
    %v2207 = vmul.f32 %v2205, 1.442695
    %v2208 = vpow.pop %v2207
    %v2209 = vmul.f32 %v2206, 1.442695
    %v2210 = vpow.pop %v2209
    %v2211 = vadd.f32 %v2208, 1.0
    %v2212 = vadd.f32 %v2210, 1.0
    %v2213 = vrcp.pop %v2211
    %v2214 = vmul.f32 1.0, %v2213
    %v2215 = vrcp.pop %v2212
    %v2216 = vmul.f32 1.0, %v2215
    %v2217 = vtanh.pop %v2203
    %v2218 = vtanh.pop %v2204
    %v2221 = vrot.slane %v2092, 1
    %v2222 = vrot.slane %v2093, 1
    %v2225 = vmul.f32 %v2214, %v2221
    %v2226 = vmul.f32 %v2216, %v2222
    %2229 = vrot.lane.b32.xlu0 %v2217, 96
    %v2230 = vpop.permute.xlu0 %2229
    %2231 = vrot.lane.b32.xlu0 %v2218, 96
    %v2232 = vpop.permute.xlu0 %2231
    %v2235 = vmul.f32 %v2214, %v2230
    %v2236 = vmul.f32 %v2216, %v2232
    %2239 = vrot.lane.b32.xlu0 %v2235, 16
    %v2240 = vpop.permute.xlu0 %2239
    %2241 = vrot.lane.b32.xlu0 %v2236, 16
    %v2242 = vpop.permute.xlu0 %2241
    %v2245 = vadd.f32 %v2225, %v2240
    %v2246 = vadd.f32 %v2226, %v2242
    %v2247 = vtanh.pop %v2245
    %v2248 = vtanh.pop %v2246
    %2251 = vrot.lane.b32.xlu0 %v2247, 32
    %v2252 = vpop.permute.xlu0 %2251
    %2253 = vrot.lane.b32.xlu0 %v2248, 32
    %v2254 = vpop.permute.xlu0 %2253
    %v2257 = vmul.f32 %v2214, %v2252
    %v2258 = vmul.f32 %v2216, %v2254
    %2261 = vrot.lane.b32.xlu0 %v2257, 32
    %v2262 = vpop.permute.xlu0 %2261
    %2263 = vrot.lane.b32.xlu0 %v2258, 32
    %v2264 = vpop.permute.xlu0 %2263
    %vm2267 = vcmask 256130
    %2268 = vst.msk [vmem:[#allocation2] sm:$0x4] %vm2267, %v2262
    %2269 = vst.msk [vmem:[#allocation2 + $0x8] sm:$0x4] %vm2267, %v2264
    %v2270 = vrot.slane %v2257, 2
    %v2271 = vrot.slane %v2258, 1
    %v2272 = vsel %vm323, %v2271, %v2270
    %2273 = vrot.lane.b32.xlu0 %v2272, 16
    %v2274 = vpop.permute.xlu0 %2273
    %v2275 = vsel %vm183, %v2274, 0
    %2277 = vmatprep.subr.mxu0 0.0
    %2278 = vmatpush1.msra.mxu0 %v1363
    %2279 = vmatprep.subr.mxu0 0.0
    %2280 = vmatpush1.msra.mxu0 %v1364
    %2281 = vmatprep.subr.mxu0 0.0
    %2282 = vmatpush1.msra.mxu0 0.0
    %2283 = vmatprep.subr.mxu0 0.0
    %2284 = vmatpush1.msra.mxu0 0.0
    %2285 = vmatprep.subr.mxu0 0.0
    %2286 = vmatpush1.msra.mxu0 0.0
    %2287 = vmatprep.subr.mxu0 0.0
    %2288 = vmatpush1.msra.mxu0 0.0
    %2289 = vmatprep.subr.mxu0 0.0
    %2290 = vmatpush1.msra.mxu0 0.0
    %2291 = vmatprep.subr.mxu0 0.0
    %2292 = vmatpush1.msra.mxu0 0.0
    %2293 = vmatprep.subr.mxu0 0.0
    %2294 = vmatpush1.msra.mxu0 0.0
    %2295 = vmatprep.subr.mxu0 0.0
    %2296 = vmatpush1.msra.mxu0 0.0
    %2297 = vmatprep.subr.mxu0 0.0
    %2298 = vmatpush1.msra.mxu0 0.0
    %2299 = vmatprep.subr.mxu0 0.0
    %2300 = vmatpush1.msra.mxu0 0.0
    %2301 = vmatprep.subr.mxu0 0.0
    %2302 = vmatpush1.msra.mxu0 0.0
    %2303 = vmatprep.subr.mxu0 0.0
    %2304 = vmatpush1.msra.mxu0 0.0
    %2305 = vmatprep.subr.mxu0 0.0
    %2306 = vmatpush1.msra.mxu0 0.0
    %2307 = vmatprep.subr.mxu0 0.0
    %2308 = vmatpush1.msra.mxu0 0.0
    %2309 = vmatprep.subr.mxu0 0.0
    %2310 = vmatpush1.msra.mxu0 0.0
    %2311 = vmatprep.subr.mxu0 0.0
    %2312 = vmatpush1.msra.mxu0 0.0
    %2313 = vmatprep.subr.mxu0 0.0
    %2314 = vmatpush1.msra.mxu0 0.0
    %2315 = vmatprep.subr.mxu0 0.0
    %2316 = vmatpush1.msra.mxu0 0.0
    %2317 = vmatprep.subr.mxu0 0.0
    %2318 = vmatpush1.msra.mxu0 0.0
    %2319 = vmatprep.subr.mxu0 0.0
    %2320 = vmatpush1.msra.mxu0 0.0
    %2321 = vmatprep.subr.mxu0 0.0
    %2322 = vmatpush1.msra.mxu0 0.0
    %2323 = vmatprep.subr.mxu0 0.0
    %2324 = vmatpush1.msra.mxu0 0.0
    %2325 = vmatprep.subr.mxu0 0.0
    %2326 = vmatpush1.msra.mxu0 0.0
    %2327 = vmatprep.subr.mxu0 0.0
    %2328 = vmatpush1.msra.mxu0 0.0
    %2329 = vmatprep.subr.mxu0 0.0
    %2330 = vmatpush1.msra.mxu0 0.0
    %2331 = vmatprep.subr.mxu0 0.0
    %2332 = vmatpush1.msra.mxu0 0.0
    %2333 = vmatprep.subr.mxu0 0.0
    %2334 = vmatpush1.msra.mxu0 0.0
    %2335 = vmatprep.subr.mxu0 0.0
    %2336 = vmatpush1.msra.mxu0 0.0
    %2337 = vmatprep.subr.mxu0 0.0
    %2338 = vmatpush1.msra.mxu0 0.0
    %2339 = vmatprep.subr.mxu0 0.0
    %2340 = vmatpush1.msra.mxu0 0.0
    %2341 = vmatprep.mubr.f32.mxu0 0.0
    %2342 = vmatmul.mubr.f32.gmra.mrb[0].mxu0 %v2275
    %v2343 = vpop.f32.mrb[0].mxu0
    %v2344 = vadd.f32 0.0, %v2343
    %v2345 = vpop.f32.mrb[0].mxu0
    %2346 = vdwg.mxu0
    %v2348 = vrot.slane %v2344, 7
    %2349 = vrot.lane.b32.xlu0 %v2348, 64
    %v2350 = vpop.permute.xlu0 %2349
    %2351 = vrot.lane.b32.xlu0 %v2344, 64
    %v2352 = vpop.permute.xlu0 %2351
    %v2355 = vadd.f32 %v175, %v2350
    %v2356 = vadd.f32 %v178, %v2352
    %v2357 = vxor.u32 %v2355, 2147483648
    %v2358 = vxor.u32 %v2356, 2147483648
    %v2359 = vmul.f32 %v2357, 1.442695
    %v2360 = vpow.pop %v2359
    %v2361 = vmul.f32 %v2358, 1.442695
    %v2362 = vpow.pop %v2361
    %v2363 = vadd.f32 %v2360, 1.0
    %v2364 = vadd.f32 %v2362, 1.0
    %v2365 = vrcp.pop %v2363
    %v2366 = vmul.f32 1.0, %v2365
    %v2367 = vrcp.pop %v2364
    %v2368 = vmul.f32 1.0, %v2367
    %v2369 = vtanh.pop %v2355
    %v2370 = vtanh.pop %v2356
    %v2373 = vrot.slane %v2245, 1
    %v2374 = vrot.slane %v2246, 1
    %v2377 = vmul.f32 %v2366, %v2373
    %v2378 = vmul.f32 %v2368, %v2374
    %2381 = vrot.lane.b32.xlu0 %v2369, 96
    %v2382 = vpop.permute.xlu0 %2381
    %2383 = vrot.lane.b32.xlu0 %v2370, 96
    %v2384 = vpop.permute.xlu0 %2383
    %v2387 = vmul.f32 %v2366, %v2382
    %v2388 = vmul.f32 %v2368, %v2384
    %2391 = vrot.lane.b32.xlu0 %v2387, 16
    %v2392 = vpop.permute.xlu0 %2391
    %2393 = vrot.lane.b32.xlu0 %v2388, 16
    %v2394 = vpop.permute.xlu0 %2393
    %v2397 = vadd.f32 %v2377, %v2392
    %v2398 = vadd.f32 %v2378, %v2394
    %v2399 = vtanh.pop %v2397
    %v2400 = vtanh.pop %v2398
    %2403 = vrot.lane.b32.xlu0 %v2399, 32
    %v2404 = vpop.permute.xlu0 %2403
    %2405 = vrot.lane.b32.xlu0 %v2400, 32
    %v2406 = vpop.permute.xlu0 %2405
    %v2409 = vmul.f32 %v2366, %v2404
    %v2410 = vmul.f32 %v2368, %v2406
    %2413 = vrot.lane.b32.xlu0 %v2409, 32
    %v2414 = vpop.permute.xlu0 %2413
    %2415 = vrot.lane.b32.xlu0 %v2410, 32
    %v2416 = vpop.permute.xlu0 %2415
    %vm2419 = vcmask 255105
    %2420 = vst.msk [vmem:[#allocation2] sm:$0x2] %vm2419, %v2414
    %2421 = vst.msk [vmem:[#allocation2 + $0x8] sm:$0x2] %vm2419, %v2416
    %v2422 = vrot.slane %v2409, 1
    %v2423 = vsel %vm323, %v2410, %v2422
    %2424 = vrot.lane.b32.xlu0 %v2423, 16
    %v2425 = vpop.permute.xlu0 %2424
    %v2426 = vsel %vm183, %v2425, 0
    %2428 = vmatprep.subr.mxu0 0.0
    %2429 = vmatpush1.msra.mxu0 %v1363
    %2430 = vmatprep.subr.mxu0 0.0
    %2431 = vmatpush1.msra.mxu0 %v1364
    %2432 = vmatprep.subr.mxu0 0.0
    %2433 = vmatpush1.msra.mxu0 0.0
    %2434 = vmatprep.subr.mxu0 0.0
    %2435 = vmatpush1.msra.mxu0 0.0
    %2436 = vmatprep.subr.mxu0 0.0
    %2437 = vmatpush1.msra.mxu0 0.0
    %2438 = vmatprep.subr.mxu0 0.0
    %2439 = vmatpush1.msra.mxu0 0.0
    %2440 = vmatprep.subr.mxu0 0.0
    %2441 = vmatpush1.msra.mxu0 0.0
    %2442 = vmatprep.subr.mxu0 0.0
    %2443 = vmatpush1.msra.mxu0 0.0
    %2444 = vmatprep.subr.mxu0 0.0
    %2445 = vmatpush1.msra.mxu0 0.0
    %2446 = vmatprep.subr.mxu0 0.0
    %2447 = vmatpush1.msra.mxu0 0.0
    %2448 = vmatprep.subr.mxu0 0.0
    %2449 = vmatpush1.msra.mxu0 0.0
    %2450 = vmatprep.subr.mxu0 0.0
    %2451 = vmatpush1.msra.mxu0 0.0
    %2452 = vmatprep.subr.mxu0 0.0
    %2453 = vmatpush1.msra.mxu0 0.0
    %2454 = vmatprep.subr.mxu0 0.0
    %2455 = vmatpush1.msra.mxu0 0.0
    %2456 = vmatprep.subr.mxu0 0.0
    %2457 = vmatpush1.msra.mxu0 0.0
    %2458 = vmatprep.subr.mxu0 0.0
    %2459 = vmatpush1.msra.mxu0 0.0
    %2460 = vmatprep.subr.mxu0 0.0
    %2461 = vmatpush1.msra.mxu0 0.0
    %2462 = vmatprep.subr.mxu0 0.0
    %2463 = vmatpush1.msra.mxu0 0.0
    %2464 = vmatprep.subr.mxu0 0.0
    %2465 = vmatpush1.msra.mxu0 0.0
    %2466 = vmatprep.subr.mxu0 0.0
    %2467 = vmatpush1.msra.mxu0 0.0
    %2468 = vmatprep.subr.mxu0 0.0
    %2469 = vmatpush1.msra.mxu0 0.0
    %2470 = vmatprep.subr.mxu0 0.0
    %2471 = vmatpush1.msra.mxu0 0.0
    %2472 = vmatprep.subr.mxu0 0.0
    %2473 = vmatpush1.msra.mxu0 0.0
    %2474 = vmatprep.subr.mxu0 0.0
    %2475 = vmatpush1.msra.mxu0 0.0
    %2476 = vmatprep.subr.mxu0 0.0
    %2477 = vmatpush1.msra.mxu0 0.0
    %2478 = vmatprep.subr.mxu0 0.0
    %2479 = vmatpush1.msra.mxu0 0.0
    %2480 = vmatprep.subr.mxu0 0.0
    %2481 = vmatpush1.msra.mxu0 0.0
    %2482 = vmatprep.subr.mxu0 0.0
    %2483 = vmatpush1.msra.mxu0 0.0
    %2484 = vmatprep.subr.mxu0 0.0
    %2485 = vmatpush1.msra.mxu0 0.0
    %2486 = vmatprep.subr.mxu0 0.0
    %2487 = vmatpush1.msra.mxu0 0.0
    %2488 = vmatprep.subr.mxu0 0.0
    %2489 = vmatpush1.msra.mxu0 0.0
    %2490 = vmatprep.subr.mxu0 0.0
    %2491 = vmatpush1.msra.mxu0 0.0
    %2492 = vmatprep.mubr.f32.mxu0 0.0
    %2493 = vmatmul.mubr.f32.gmra.mrb[0].mxu0 %v2426
    %v2494 = vpop.f32.mrb[0].mxu0
    %v2495 = vadd.f32 0.0, %v2494
    %v2496 = vpop.f32.mrb[0].mxu0
    %2497 = vdwg.mxu0
    %v2499 = vrot.slane %v2495, 1
    %2500 = vrot.lane.b32.xlu0 %v2495, 64
    %v2501 = vpop.permute.xlu0 %2500
    %2502 = vrot.lane.b32.xlu0 %v2499, 64
    %v2503 = vpop.permute.xlu0 %2502
    %v2506 = vadd.f32 %v175, %v2501
    %v2507 = vadd.f32 %v178, %v2503
    %v2508 = vxor.u32 %v2506, 2147483648
    %v2509 = vxor.u32 %v2507, 2147483648
    %v2510 = vmul.f32 %v2508, 1.442695
    %v2511 = vpow.pop %v2510
    %v2512 = vmul.f32 %v2509, 1.442695
    %v2513 = vpow.pop %v2512
    %v2514 = vadd.f32 %v2511, 1.0
    %v2515 = vadd.f32 %v2513, 1.0
    %v2516 = vrcp.pop %v2514
    %v2517 = vmul.f32 1.0, %v2516
    %v2518 = vrcp.pop %v2515
    %v2519 = vmul.f32 1.0, %v2518
    %v2520 = vtanh.pop %v2506
    %v2521 = vtanh.pop %v2507
    %v2524 = vrot.slane %v2397, 1
    %v2525 = vrot.slane %v2398, 1
    %v2528 = vmul.f32 %v2517, %v2524
    %v2529 = vmul.f32 %v2519, %v2525
    %2532 = vrot.lane.b32.xlu0 %v2520, 96
    %v2533 = vpop.permute.xlu0 %2532
    %2534 = vrot.lane.b32.xlu0 %v2521, 96
    %v2535 = vpop.permute.xlu0 %2534
    %v2538 = vmul.f32 %v2517, %v2533
    %v2539 = vmul.f32 %v2519, %v2535
    %2542 = vrot.lane.b32.xlu0 %v2538, 16
    %v2543 = vpop.permute.xlu0 %2542
    %2544 = vrot.lane.b32.xlu0 %v2539, 16
    %v2545 = vpop.permute.xlu0 %2544
    %v2548 = vadd.f32 %v2528, %v2543
    %v2549 = vadd.f32 %v2529, %v2545
    %v2550 = vtanh.pop %v2548
    %v2551 = vtanh.pop %v2549
    %2554 = vrot.lane.b32.xlu0 %v2550, 32
    %v2555 = vpop.permute.xlu0 %2554
    %2556 = vrot.lane.b32.xlu0 %v2551, 32
    %v2557 = vpop.permute.xlu0 %2556
    %v2560 = vmul.f32 %v2517, %v2555
    %v2561 = vmul.f32 %v2519, %v2557
    %2564 = vrot.lane.b32.xlu0 %v2560, 32
    %v2565 = vpop.permute.xlu0 %2564
    %2566 = vrot.lane.b32.xlu0 %v2561, 32
    %v2567 = vpop.permute.xlu0 %2566
    %vm2570 = vcmask 254080
    %2571 = vst.msk [vmem:[#allocation2] sm:$0x1] %vm2570, %v2565
    %2572 = vst.msk [vmem:[#allocation2 + $0x8] sm:$0x1] %vm2570, %v2567
    %v2573 = vld [vmem:[#allocation2] sm:$0xff]
    %v2574 = vld [vmem:[#allocation2 + $0x8] sm:$0xff]
    %v2575 = vld [vmem:[#allocation6] sm:$0xff]
    %v2576 = vadd.f32 %v2573, %v2575
    %v2577 = vadd.f32 %v2574, %v2575
    %v2578 = vld [vmem:[%s6] sm:$0x1]
    %v2579 = vld [vmem:[%s7] sm:$0x1]
    %v2580 = vsel %vm136, %v2576, 0.0
    %2581 = vadd.xlane.f32.xlu0 %v2580
    %v2582 = vpop.xlane.xlu0 %2581
    %v2583 = vsel %vm136, %v2577, 0.0
    %2584 = vadd.xlane.f32.xlu0 %v2583
    %v2585 = vpop.xlane.xlu0 %2584
    %v2586 = vrcp.pop 32.0
    %v2587 = vmul.f32 %v2582, %v2586
    %v2588 = vmul.f32 %v2585, %v2586
    %v2589 = vsub.f32 %v2576, %v2587
    %v2590 = vsub.f32 %v2577, %v2588
    %v2591 = vmul.f32 %v2589, %v2589
    %v2592 = vmul.f32 %v2590, %v2590
    %v2593 = vsel %vm136, %v2591, 0.0
    %2594 = vadd.xlane.f32.xlu0 %v2593
    %v2595 = vpop.xlane.xlu0 %2594
    %v2596 = vsel %vm136, %v2592, 0.0
    %2597 = vadd.xlane.f32.xlu0 %v2596
    %v2598 = vpop.xlane.xlu0 %2597
    %v2599 = vmul.f32 %v2595, %v2586
    %v2600 = vmul.f32 %v2598, %v2586
    %v2601 = vadd.f32 %v2599, 1e-05
    %v2602 = vadd.f32 %v2600, 1e-05
    %v2603 = vrsqrt.pop %v2601
    %v2604 = vrsqrt.pop %v2602
    %v2605 = vmul.f32 %v2589, %v2603
    %v2606 = vmul.f32 %v2590, %v2604
    %v2608 = vlaneseq
    %v2609 = vshrl.u32 %v2608, 7
    %v2610 = vsub.s32 0, %v2609
    %v2611 = vrot.slane %v2578, %v2610
    %v2613 = vmul.f32 %v2605, %v2611
    %v2614 = vmul.f32 %v2606, %v2611
    %v2616 = vlaneseq
    %v2617 = vshrl.u32 %v2616, 7
    %v2618 = vsub.s32 0, %v2617
    %v2619 = vrot.slane %v2579, %v2618
    %v2621 = vadd.f32 %v2613, %v2619
    %v2622 = vadd.f32 %v2614, %v2619
    %v2623 = vpack.c.bf16 %v2622, %v2621
    %v2624 = vld [vmem:[%s8] sm:$0xf]
    %v2625 = vld [vmem:[%s8 + $0x4] sm:$0xf]
    %v2626 = vld [vmem:[%s8 + $0x8] sm:$0xf]
    %v2627 = vld [vmem:[%s8 + $0xc] sm:$0xf]
    %v2628 = vld [vmem:[%s9] sm:$0x1]
    %v2630 = vlaneseq
    %v2631 = vshrl.u32 %v2630, 7
    %v2632 = vsub.s32 0, %v2631
    %v2633 = vrot.slane %v2628, %v2632
    %v2639 = vunpack.c.l.b16 %v2624
    %v2640 = vunpack.c.l.b16 %v2625
    %v2641 = vunpack.c.l.b16 %v2626
    %v2642 = vunpack.c.l.b16 %v2627
    %v2643 = vpack.c.b16 %v2640, %v2639
    %v2644 = vpack.c.b16 %v2642, %v2641
    %v2648 = vsel %vm136, %v2623, 0
    %2650 = vmatprep.subr.bf16.mxu0 0
    %2651 = vmatpush1.bf16.msra.mxu0 %v2643
    %2652 = vmatprep.subr.bf16.mxu0 0
    %2653 = vmatpush1.bf16.msra.mxu0 %v2644
    %2654 = vmatprep.subr.bf16.mxu0 0
    %2655 = vmatpush1.bf16.msra.mxu0 0
    %2656 = vmatprep.subr.bf16.mxu0 0
    %2657 = vmatpush1.bf16.msra.mxu0 0
    %2658 = vmatprep.subr.bf16.mxu0 0
    %2659 = vmatpush1.bf16.msra.mxu0 0
    %2660 = vmatprep.subr.bf16.mxu0 0
    %2661 = vmatpush1.bf16.msra.mxu0 0
    %2662 = vmatprep.subr.bf16.mxu0 0
    %2663 = vmatpush1.bf16.msra.mxu0 0
    %2664 = vmatprep.subr.bf16.mxu0 0
    %2665 = vmatpush1.bf16.msra.mxu0 0
    %2666 = vmatprep.subr.bf16.mxu0 0
    %2667 = vmatpush1.bf16.msra.mxu0 0
    %2668 = vmatprep.subr.bf16.mxu0 0
    %2669 = vmatpush1.bf16.msra.mxu0 0
    %2670 = vmatprep.subr.bf16.mxu0 0
    %2671 = vmatpush1.bf16.msra.mxu0 0
    %2672 = vmatprep.subr.bf16.mxu0 0
    %2673 = vmatpush1.bf16.msra.mxu0 0
    %2674 = vmatprep.subr.bf16.mxu0 0
    %2675 = vmatpush1.bf16.msra.mxu0 0
    %2676 = vmatprep.subr.bf16.mxu0 0
    %2677 = vmatpush1.bf16.msra.mxu0 0
    %2678 = vmatprep.subr.bf16.mxu0 0
    %2679 = vmatpush1.bf16.msra.mxu0 0
    %2680 = vmatprep.subr.bf16.mxu0 0
    %2681 = vmatpush1.bf16.msra.mxu0 0
    %2682 = vmatprep.mubr.bf16.mxu0 0
    %2683 = vmatmul.mubr.bf16.gmra.mrb[0].mxu0 %v2648
    %v2684 = vpop.f32.mrb[0].mxu0
    %v2685 = vadd.f32 %v2633, %v2684
    %v2686 = vpop.f32.mrb[0].mxu0
    %v2687 = vpop.f32.mrb[0].mxu0
    %v2688 = vadd.f32 %v2633, %v2687
    %v2689 = vpop.f32.mrb[0].mxu0
    %2690 = vdwg.mxu0
    %2692 = vrot.lane.b32.xlu0 %v2685, 96
    %v2693 = vpop.permute.xlu0 %2692
    %vm2694 = vcmask 64512
    %v2695 = vsel %vm2694, %v2685, 0
    %v2697 = vsel %vm2694, %v2693, 0
    %2699 = vmatprep.subr.mxu0 0.0
    %2700 = vmatpush1.xpose.msra.mxu0 %v2697
    %2701 = vmatprep.subr.mxu0 0.0
    %2702 = vmatpush1.xpose.msra.mxu0 0.0
    %2703 = vmatprep.subr.mxu0 0.0
    %2704 = vmatpush1.xpose.msra.mxu0 0.0
    %2705 = vmatprep.subr.mxu0 0.0
    %2706 = vmatpush1.xpose.msra.mxu0 0.0
    %2707 = vmatprep.subr.mxu0 0.0
    %2708 = vmatpush1.xpose.msra.mxu0 0.0
    %2709 = vmatprep.subr.mxu0 0.0
    %2710 = vmatpush1.xpose.msra.mxu0 0.0
    %2711 = vmatprep.subr.mxu0 0.0
    %2712 = vmatpush1.xpose.msra.mxu0 0.0
    %2713 = vmatprep.subr.mxu0 0.0
    %2714 = vmatpush1.xpose.msra.mxu0 0.0
    %2715 = vmatprep.subr.mxu0 0.0
    %2716 = vmatpush1.xpose.msra.mxu0 0.0
    %2717 = vmatprep.subr.mxu0 0.0
    %2718 = vmatpush1.xpose.msra.mxu0 0.0
    %2719 = vmatprep.subr.mxu0 0.0
    %2720 = vmatpush1.xpose.msra.mxu0 0.0
    %2721 = vmatprep.subr.mxu0 0.0
    %2722 = vmatpush1.xpose.msra.mxu0 0.0
    %2723 = vmatprep.subr.mxu0 0.0
    %2724 = vmatpush1.xpose.msra.mxu0 0.0
    %2725 = vmatprep.subr.mxu0 0.0
    %2726 = vmatpush1.xpose.msra.mxu0 0.0
    %2727 = vmatprep.subr.mxu0 0.0
    %2728 = vmatpush1.xpose.msra.mxu0 0.0
    %2729 = vmatprep.subr.mxu0 0.0
    %2730 = vmatpush1.xpose.msra.mxu0 0.0
    %2731 = vmatprep.subr.mxu0 0.0
    %2732 = vmatpush1.xpose.msra.mxu0 0.0
    %2733 = vmatprep.subr.mxu0 0.0
    %2734 = vmatpush1.xpose.msra.mxu0 0.0
    %2735 = vmatprep.subr.mxu0 0.0
    %2736 = vmatpush1.xpose.msra.mxu0 0.0
    %2737 = vmatprep.subr.mxu0 0.0
    %2738 = vmatpush1.xpose.msra.mxu0 0.0
    %2739 = vmatprep.subr.mxu0 0.0
    %2740 = vmatpush1.xpose.msra.mxu0 0.0
    %2741 = vmatprep.subr.mxu0 0.0
    %2742 = vmatpush1.xpose.msra.mxu0 0.0
    %2743 = vmatprep.subr.mxu0 0.0
    %2744 = vmatpush1.xpose.msra.mxu0 0.0
    %2745 = vmatprep.subr.mxu0 0.0
    %2746 = vmatpush1.xpose.msra.mxu0 0.0
    %2747 = vmatprep.subr.mxu0 0.0
    %2748 = vmatpush1.xpose.msra.mxu0 0.0
    %2749 = vmatprep.subr.mxu0 0.0
    %2750 = vmatpush1.xpose.msra.mxu0 0.0
    %2751 = vmatprep.subr.mxu0 0.0
    %2752 = vmatpush1.xpose.msra.mxu0 0.0
    %2753 = vmatprep.subr.mxu0 0.0
    %2754 = vmatpush1.xpose.msra.mxu0 0.0
    %2755 = vmatprep.subr.mxu0 0.0
    %2756 = vmatpush1.xpose.msra.mxu0 0.0
    %2757 = vmatprep.subr.mxu0 0.0
    %2758 = vmatpush1.xpose.msra.mxu0 0.0
    %2759 = vmatprep.subr.mxu0 0.0
    %2760 = vmatpush1.xpose.msra.mxu0 0.0
    %2761 = vmatprep.subr.mxu0 0.0
    %2762 = vmatpush1.xpose.msra.mxu0 0.0
    %2763 = vmatprep.mubr.f32.mxu0 0.0
    %2764 = vmatmul.mubr.f32.gmra.mrb[0].mxu0 %v2695
    %v2765 = vpop.f32.mrb[0].mxu0
    %v2766 = vadd.f32 0.0, %v2765
    %v2767 = vpop.f32.mrb[0].mxu0
    %2768 = vdwg.mxu0
    %2770 = vrot.lane.b32.xlu0 %v2688, 96
    %v2771 = vpop.permute.xlu0 %2770
    %v2772 = vsel %vm2694, %v2688, 0
    %v2774 = vsel %vm2694, %v2771, 0
    %2776 = vmatprep.subr.mxu0 0.0
    %2777 = vmatpush1.xpose.msra.mxu0 %v2774
    %2778 = vmatprep.subr.mxu0 0.0
    %2779 = vmatpush1.xpose.msra.mxu0 0.0
    %2780 = vmatprep.subr.mxu0 0.0
    %2781 = vmatpush1.xpose.msra.mxu0 0.0
    %2782 = vmatprep.subr.mxu0 0.0
    %2783 = vmatpush1.xpose.msra.mxu0 0.0
    %2784 = vmatprep.subr.mxu0 0.0
    %2785 = vmatpush1.xpose.msra.mxu0 0.0
    %2786 = vmatprep.subr.mxu0 0.0
    %2787 = vmatpush1.xpose.msra.mxu0 0.0
    %2788 = vmatprep.subr.mxu0 0.0
    %2789 = vmatpush1.xpose.msra.mxu0 0.0
    %2790 = vmatprep.subr.mxu0 0.0
    %2791 = vmatpush1.xpose.msra.mxu0 0.0
    %2792 = vmatprep.subr.mxu0 0.0
    %2793 = vmatpush1.xpose.msra.mxu0 0.0
    %2794 = vmatprep.subr.mxu0 0.0
    %2795 = vmatpush1.xpose.msra.mxu0 0.0
    %2796 = vmatprep.subr.mxu0 0.0
    %2797 = vmatpush1.xpose.msra.mxu0 0.0
    %2798 = vmatprep.subr.mxu0 0.0
    %2799 = vmatpush1.xpose.msra.mxu0 0.0
    %2800 = vmatprep.subr.mxu0 0.0
    %2801 = vmatpush1.xpose.msra.mxu0 0.0
    %2802 = vmatprep.subr.mxu0 0.0
    %2803 = vmatpush1.xpose.msra.mxu0 0.0
    %2804 = vmatprep.subr.mxu0 0.0
    %2805 = vmatpush1.xpose.msra.mxu0 0.0
    %2806 = vmatprep.subr.mxu0 0.0
    %2807 = vmatpush1.xpose.msra.mxu0 0.0
    %2808 = vmatprep.subr.mxu0 0.0
    %2809 = vmatpush1.xpose.msra.mxu0 0.0
    %2810 = vmatprep.subr.mxu0 0.0
    %2811 = vmatpush1.xpose.msra.mxu0 0.0
    %2812 = vmatprep.subr.mxu0 0.0
    %2813 = vmatpush1.xpose.msra.mxu0 0.0
    %2814 = vmatprep.subr.mxu0 0.0
    %2815 = vmatpush1.xpose.msra.mxu0 0.0
    %2816 = vmatprep.subr.mxu0 0.0
    %2817 = vmatpush1.xpose.msra.mxu0 0.0
    %2818 = vmatprep.subr.mxu0 0.0
    %2819 = vmatpush1.xpose.msra.mxu0 0.0
    %2820 = vmatprep.subr.mxu0 0.0
    %2821 = vmatpush1.xpose.msra.mxu0 0.0
    %2822 = vmatprep.subr.mxu0 0.0
    %2823 = vmatpush1.xpose.msra.mxu0 0.0
    %2824 = vmatprep.subr.mxu0 0.0
    %2825 = vmatpush1.xpose.msra.mxu0 0.0
    %2826 = vmatprep.subr.mxu0 0.0
    %2827 = vmatpush1.xpose.msra.mxu0 0.0
    %2828 = vmatprep.subr.mxu0 0.0
    %2829 = vmatpush1.xpose.msra.mxu0 0.0
    %2830 = vmatprep.subr.mxu0 0.0
    %2831 = vmatpush1.xpose.msra.mxu0 0.0
    %2832 = vmatprep.subr.mxu0 0.0
    %2833 = vmatpush1.xpose.msra.mxu0 0.0
    %2834 = vmatprep.subr.mxu0 0.0
    %2835 = vmatpush1.xpose.msra.mxu0 0.0
    %2836 = vmatprep.subr.mxu0 0.0
    %2837 = vmatpush1.xpose.msra.mxu0 0.0
    %2838 = vmatprep.subr.mxu0 0.0
    %2839 = vmatpush1.xpose.msra.mxu0 0.0
    %2840 = vmatprep.mubr.f32.mxu0 0.0
    %2841 = vmatmul.mubr.f32.gmra.mrb[0].mxu0 %v2772
    %v2842 = vpop.f32.mrb[0].mxu0
    %v2843 = vadd.f32 0.0, %v2842
    %v2844 = vpop.f32.mrb[0].mxu0
    %2845 = vdwg.mxu0
    %v2846 = vmul.f32 %v2766, 0.35355338
    %v2847 = vmul.f32 %v2843, 0.35355338
    %v2848 = vsel %vm2694, %v2846, -inf
    %2849 = vmax.xlane.f32.xlu0 %v2848
    %v2850 = vpop.xlane.xlu0 %2849
    %v2851 = vsel %vm2694, %v2847, -inf
    %2852 = vmax.xlane.f32.xlu0 %v2851
    %v2853 = vpop.xlane.xlu0 %2852
    %v2854 = vsub.f32 %v2846, %v2850
    %v2855 = vsub.f32 %v2847, %v2853
    %v2856 = vmul.f32 %v2854, 1.442695
    %v2857 = vpow.pop %v2856
    %v2858 = vmul.f32 %v2855, 1.442695
    %v2859 = vpow.pop %v2858
    %v2860 = vsel %vm2694, %v2857, 0.0
    %2861 = vadd.xlane.f32.xlu0 %v2860
    %v2862 = vpop.xlane.xlu0 %2861
    %v2863 = vsel %vm2694, %v2859, 0.0
    %2864 = vadd.xlane.f32.xlu0 %v2863
    %v2865 = vpop.xlane.xlu0 %2864
    %v2866 = vrcp.pop %v2862
    %v2867 = vrcp.pop %v2865
    %v2868 = vmul.f32 %v2857, %v2866
    %v2869 = vmul.f32 %v2859, %v2867
    %2870 = vrot.lane.b32.xlu0 %v2685, 64
    %v2871 = vpop.permute.xlu0 %2870
    %v2874 = vsel %vm2694, %v2868, 0
    %2876 = vmatprep.subr.mxu0 0.0
    %2877 = vmatpush1.msra.mxu0 %v2871
    %2878 = vmatprep.subr.mxu0 0.0
    %2879 = vmatpush1.msra.mxu0 0.0
    %2880 = vmatprep.subr.mxu0 0.0
    %2881 = vmatpush1.msra.mxu0 0.0
    %2882 = vmatprep.subr.mxu0 0.0
    %2883 = vmatpush1.msra.mxu0 0.0
    %2884 = vmatprep.subr.mxu0 0.0
    %2885 = vmatpush1.msra.mxu0 0.0
    %2886 = vmatprep.subr.mxu0 0.0
    %2887 = vmatpush1.msra.mxu0 0.0
    %2888 = vmatprep.subr.mxu0 0.0
    %2889 = vmatpush1.msra.mxu0 0.0
    %2890 = vmatprep.subr.mxu0 0.0
    %2891 = vmatpush1.msra.mxu0 0.0
    %2892 = vmatprep.subr.mxu0 0.0
    %2893 = vmatpush1.msra.mxu0 0.0
    %2894 = vmatprep.subr.mxu0 0.0
    %2895 = vmatpush1.msra.mxu0 0.0
    %2896 = vmatprep.subr.mxu0 0.0
    %2897 = vmatpush1.msra.mxu0 0.0
    %2898 = vmatprep.subr.mxu0 0.0
    %2899 = vmatpush1.msra.mxu0 0.0
    %2900 = vmatprep.subr.mxu0 0.0
    %2901 = vmatpush1.msra.mxu0 0.0
    %2902 = vmatprep.subr.mxu0 0.0
    %2903 = vmatpush1.msra.mxu0 0.0
    %2904 = vmatprep.subr.mxu0 0.0
    %2905 = vmatpush1.msra.mxu0 0.0
    %2906 = vmatprep.subr.mxu0 0.0
    %2907 = vmatpush1.msra.mxu0 0.0
    %2908 = vmatprep.subr.mxu0 0.0
    %2909 = vmatpush1.msra.mxu0 0.0
    %2910 = vmatprep.subr.mxu0 0.0
    %2911 = vmatpush1.msra.mxu0 0.0
    %2912 = vmatprep.subr.mxu0 0.0
    %2913 = vmatpush1.msra.mxu0 0.0
    %2914 = vmatprep.subr.mxu0 0.0
    %2915 = vmatpush1.msra.mxu0 0.0
    %2916 = vmatprep.subr.mxu0 0.0
    %2917 = vmatpush1.msra.mxu0 0.0
    %2918 = vmatprep.subr.mxu0 0.0
    %2919 = vmatpush1.msra.mxu0 0.0
    %2920 = vmatprep.subr.mxu0 0.0
    %2921 = vmatpush1.msra.mxu0 0.0
    %2922 = vmatprep.subr.mxu0 0.0
    %2923 = vmatpush1.msra.mxu0 0.0
    %2924 = vmatprep.subr.mxu0 0.0
    %2925 = vmatpush1.msra.mxu0 0.0
    %2926 = vmatprep.subr.mxu0 0.0
    %2927 = vmatpush1.msra.mxu0 0.0
    %2928 = vmatprep.subr.mxu0 0.0
    %2929 = vmatpush1.msra.mxu0 0.0
    %2930 = vmatprep.subr.mxu0 0.0
    %2931 = vmatpush1.msra.mxu0 0.0
    %2932 = vmatprep.subr.mxu0 0.0
    %2933 = vmatpush1.msra.mxu0 0.0
    %2934 = vmatprep.subr.mxu0 0.0
    %2935 = vmatpush1.msra.mxu0 0.0
    %2936 = vmatprep.subr.mxu0 0.0
    %2937 = vmatpush1.msra.mxu0 0.0
    %2938 = vmatprep.subr.mxu0 0.0
    %2939 = vmatpush1.msra.mxu0 0.0
    %2940 = vmatprep.mubr.f32.mxu0 0.0
    %2941 = vmatmul.mubr.f32.gmra.mrb[0].mxu0 %v2874
    %v2942 = vpop.f32.mrb[0].mxu0
    %v2943 = vadd.f32 0.0, %v2942
    %v2944 = vpop.f32.mrb[0].mxu0
    %2945 = vdwg.mxu0
    %2946 = vrot.lane.b32.xlu0 %v2688, 64
    %v2947 = vpop.permute.xlu0 %2946
    %v2950 = vsel %vm2694, %v2869, 0
    %2952 = vmatprep.subr.mxu0 0.0
    %2953 = vmatpush1.msra.mxu0 %v2947
    %2954 = vmatprep.subr.mxu0 0.0
    %2955 = vmatpush1.msra.mxu0 0.0
    %2956 = vmatprep.subr.mxu0 0.0
    %2957 = vmatpush1.msra.mxu0 0.0
    %2958 = vmatprep.subr.mxu0 0.0
    %2959 = vmatpush1.msra.mxu0 0.0
    %2960 = vmatprep.subr.mxu0 0.0
    %2961 = vmatpush1.msra.mxu0 0.0
    %2962 = vmatprep.subr.mxu0 0.0
    %2963 = vmatpush1.msra.mxu0 0.0
    %2964 = vmatprep.subr.mxu0 0.0
    %2965 = vmatpush1.msra.mxu0 0.0
    %2966 = vmatprep.subr.mxu0 0.0
    %2967 = vmatpush1.msra.mxu0 0.0
    %2968 = vmatprep.subr.mxu0 0.0
    %2969 = vmatpush1.msra.mxu0 0.0
    %2970 = vmatprep.subr.mxu0 0.0
    %2971 = vmatpush1.msra.mxu0 0.0
    %2972 = vmatprep.subr.mxu0 0.0
    %2973 = vmatpush1.msra.mxu0 0.0
    %2974 = vmatprep.subr.mxu0 0.0
    %2975 = vmatpush1.msra.mxu0 0.0
    %2976 = vmatprep.subr.mxu0 0.0
    %2977 = vmatpush1.msra.mxu0 0.0
    %2978 = vmatprep.subr.mxu0 0.0
    %2979 = vmatpush1.msra.mxu0 0.0
    %2980 = vmatprep.subr.mxu0 0.0
    %2981 = vmatpush1.msra.mxu0 0.0
    %2982 = vmatprep.subr.mxu0 0.0
    %2983 = vmatpush1.msra.mxu0 0.0
    %2984 = vmatprep.subr.mxu0 0.0
    %2985 = vmatpush1.msra.mxu0 0.0
    %2986 = vmatprep.subr.mxu0 0.0
    %2987 = vmatpush1.msra.mxu0 0.0
    %2988 = vmatprep.subr.mxu0 0.0
    %2989 = vmatpush1.msra.mxu0 0.0
    %2990 = vmatprep.subr.mxu0 0.0
    %2991 = vmatpush1.msra.mxu0 0.0
    %2992 = vmatprep.subr.mxu0 0.0
    %2993 = vmatpush1.msra.mxu0 0.0
    %2994 = vmatprep.subr.mxu0 0.0
    %2995 = vmatpush1.msra.mxu0 0.0
    %2996 = vmatprep.subr.mxu0 0.0
    %2997 = vmatpush1.msra.mxu0 0.0
    %2998 = vmatprep.subr.mxu0 0.0
    %2999 = vmatpush1.msra.mxu0 0.0
    %3000 = vmatprep.subr.mxu0 0.0
    %3001 = vmatpush1.msra.mxu0 0.0
    %3002 = vmatprep.subr.mxu0 0.0
    %3003 = vmatpush1.msra.mxu0 0.0
    %3004 = vmatprep.subr.mxu0 0.0
    %3005 = vmatpush1.msra.mxu0 0.0
    %3006 = vmatprep.subr.mxu0 0.0
    %3007 = vmatpush1.msra.mxu0 0.0
    %3008 = vmatprep.subr.mxu0 0.0
    %3009 = vmatpush1.msra.mxu0 0.0
    %3010 = vmatprep.subr.mxu0 0.0
    %3011 = vmatpush1.msra.mxu0 0.0
    %3012 = vmatprep.subr.mxu0 0.0
    %3013 = vmatpush1.msra.mxu0 0.0
    %3014 = vmatprep.subr.mxu0 0.0
    %3015 = vmatpush1.msra.mxu0 0.0
    %3016 = vmatprep.mubr.f32.mxu0 0.0
    %3017 = vmatmul.mubr.f32.gmra.mrb[0].mxu0 %v2950
    %v3018 = vpop.f32.mrb[0].mxu0
    %v3019 = vadd.f32 0.0, %v3018
    %v3020 = vpop.f32.mrb[0].mxu0
    %3021 = vdwg.mxu0
    %3022 = vrot.lane.b32.xlu0 %v2685, 120
    %v3023 = vpop.permute.xlu0 %3022
    %3024 = vrot.lane.b32.xlu0 %v2685, 88
    %v3025 = vpop.permute.xlu0 %3024
    %v3026 = vsel %vm2694, %v3023, 0
    %v3028 = vsel %vm2694, %v3025, 0
    %3030 = vmatprep.subr.mxu0 0.0
    %3031 = vmatpush1.xpose.msra.mxu0 %v3028
    %3032 = vmatprep.subr.mxu0 0.0
    %3033 = vmatpush1.xpose.msra.mxu0 0.0
    %3034 = vmatprep.subr.mxu0 0.0
    %3035 = vmatpush1.xpose.msra.mxu0 0.0
    %3036 = vmatprep.subr.mxu0 0.0
    %3037 = vmatpush1.xpose.msra.mxu0 0.0
    %3038 = vmatprep.subr.mxu0 0.0
    %3039 = vmatpush1.xpose.msra.mxu0 0.0
    %3040 = vmatprep.subr.mxu0 0.0
    %3041 = vmatpush1.xpose.msra.mxu0 0.0
    %3042 = vmatprep.subr.mxu0 0.0
    %3043 = vmatpush1.xpose.msra.mxu0 0.0
    %3044 = vmatprep.subr.mxu0 0.0
    %3045 = vmatpush1.xpose.msra.mxu0 0.0
    %3046 = vmatprep.subr.mxu0 0.0
    %3047 = vmatpush1.xpose.msra.mxu0 0.0
    %3048 = vmatprep.subr.mxu0 0.0
    %3049 = vmatpush1.xpose.msra.mxu0 0.0
    %3050 = vmatprep.subr.mxu0 0.0
    %3051 = vmatpush1.xpose.msra.mxu0 0.0
    %3052 = vmatprep.subr.mxu0 0.0
    %3053 = vmatpush1.xpose.msra.mxu0 0.0
    %3054 = vmatprep.subr.mxu0 0.0
    %3055 = vmatpush1.xpose.msra.mxu0 0.0
    %3056 = vmatprep.subr.mxu0 0.0
    %3057 = vmatpush1.xpose.msra.mxu0 0.0
    %3058 = vmatprep.subr.mxu0 0.0
    %3059 = vmatpush1.xpose.msra.mxu0 0.0
    %3060 = vmatprep.subr.mxu0 0.0
    %3061 = vmatpush1.xpose.msra.mxu0 0.0
    %3062 = vmatprep.subr.mxu0 0.0
    %3063 = vmatpush1.xpose.msra.mxu0 0.0
    %3064 = vmatprep.subr.mxu0 0.0
    %3065 = vmatpush1.xpose.msra.mxu0 0.0
    %3066 = vmatprep.subr.mxu0 0.0
    %3067 = vmatpush1.xpose.msra.mxu0 0.0
    %3068 = vmatprep.subr.mxu0 0.0
    %3069 = vmatpush1.xpose.msra.mxu0 0.0
    %3070 = vmatprep.subr.mxu0 0.0
    %3071 = vmatpush1.xpose.msra.mxu0 0.0
    %3072 = vmatprep.subr.mxu0 0.0
    %3073 = vmatpush1.xpose.msra.mxu0 0.0
    %3074 = vmatprep.subr.mxu0 0.0
    %3075 = vmatpush1.xpose.msra.mxu0 0.0
    %3076 = vmatprep.subr.mxu0 0.0
    %3077 = vmatpush1.xpose.msra.mxu0 0.0
    %3078 = vmatprep.subr.mxu0 0.0
    %3079 = vmatpush1.xpose.msra.mxu0 0.0
    %3080 = vmatprep.subr.mxu0 0.0
    %3081 = vmatpush1.xpose.msra.mxu0 0.0
    %3082 = vmatprep.subr.mxu0 0.0
    %3083 = vmatpush1.xpose.msra.mxu0 0.0
    %3084 = vmatprep.subr.mxu0 0.0
    %3085 = vmatpush1.xpose.msra.mxu0 0.0
    %3086 = vmatprep.subr.mxu0 0.0
    %3087 = vmatpush1.xpose.msra.mxu0 0.0
    %3088 = vmatprep.subr.mxu0 0.0
    %3089 = vmatpush1.xpose.msra.mxu0 0.0
    %3090 = vmatprep.subr.mxu0 0.0
    %3091 = vmatpush1.xpose.msra.mxu0 0.0
    %3092 = vmatprep.subr.mxu0 0.0
    %3093 = vmatpush1.xpose.msra.mxu0 0.0
    %3094 = vmatprep.mubr.f32.mxu0 0.0
    %3095 = vmatmul.mubr.f32.gmra.mrb[0].mxu0 %v3026
    %v3096 = vpop.f32.mrb[0].mxu0
    %v3097 = vadd.f32 0.0, %v3096
    %v3098 = vpop.f32.mrb[0].mxu0
    %3099 = vdwg.mxu0
    %3100 = vrot.lane.b32.xlu0 %v2688, 120
    %v3101 = vpop.permute.xlu0 %3100
    %3102 = vrot.lane.b32.xlu0 %v2688, 88
    %v3103 = vpop.permute.xlu0 %3102
    %v3104 = vsel %vm2694, %v3101, 0
    %v3106 = vsel %vm2694, %v3103, 0
    %3108 = vmatprep.subr.mxu0 0.0
    %3109 = vmatpush1.xpose.msra.mxu0 %v3106
    %3110 = vmatprep.subr.mxu0 0.0
    %3111 = vmatpush1.xpose.msra.mxu0 0.0
    %3112 = vmatprep.subr.mxu0 0.0
    %3113 = vmatpush1.xpose.msra.mxu0 0.0
    %3114 = vmatprep.subr.mxu0 0.0
    %3115 = vmatpush1.xpose.msra.mxu0 0.0
    %3116 = vmatprep.subr.mxu0 0.0
    %3117 = vmatpush1.xpose.msra.mxu0 0.0
    %3118 = vmatprep.subr.mxu0 0.0
    %3119 = vmatpush1.xpose.msra.mxu0 0.0
    %3120 = vmatprep.subr.mxu0 0.0
    %3121 = vmatpush1.xpose.msra.mxu0 0.0
    %3122 = vmatprep.subr.mxu0 0.0
    %3123 = vmatpush1.xpose.msra.mxu0 0.0
    %3124 = vmatprep.subr.mxu0 0.0
    %3125 = vmatpush1.xpose.msra.mxu0 0.0
    %3126 = vmatprep.subr.mxu0 0.0
    %3127 = vmatpush1.xpose.msra.mxu0 0.0
    %3128 = vmatprep.subr.mxu0 0.0
    %3129 = vmatpush1.xpose.msra.mxu0 0.0
    %3130 = vmatprep.subr.mxu0 0.0
    %3131 = vmatpush1.xpose.msra.mxu0 0.0
    %3132 = vmatprep.subr.mxu0 0.0
    %3133 = vmatpush1.xpose.msra.mxu0 0.0
    %3134 = vmatprep.subr.mxu0 0.0
    %3135 = vmatpush1.xpose.msra.mxu0 0.0
    %3136 = vmatprep.subr.mxu0 0.0
    %3137 = vmatpush1.xpose.msra.mxu0 0.0
    %3138 = vmatprep.subr.mxu0 0.0
    %3139 = vmatpush1.xpose.msra.mxu0 0.0
    %3140 = vmatprep.subr.mxu0 0.0
    %3141 = vmatpush1.xpose.msra.mxu0 0.0
    %3142 = vmatprep.subr.mxu0 0.0
    %3143 = vmatpush1.xpose.msra.mxu0 0.0
    %3144 = vmatprep.subr.mxu0 0.0
    %3145 = vmatpush1.xpose.msra.mxu0 0.0
    %3146 = vmatprep.subr.mxu0 0.0
    %3147 = vmatpush1.xpose.msra.mxu0 0.0
    %3148 = vmatprep.subr.mxu0 0.0
    %3149 = vmatpush1.xpose.msra.mxu0 0.0
    %3150 = vmatprep.subr.mxu0 0.0
    %3151 = vmatpush1.xpose.msra.mxu0 0.0
    %3152 = vmatprep.subr.mxu0 0.0
    %3153 = vmatpush1.xpose.msra.mxu0 0.0
    %3154 = vmatprep.subr.mxu0 0.0
    %3155 = vmatpush1.xpose.msra.mxu0 0.0
    %3156 = vmatprep.subr.mxu0 0.0
    %3157 = vmatpush1.xpose.msra.mxu0 0.0
    %3158 = vmatprep.subr.mxu0 0.0
    %3159 = vmatpush1.xpose.msra.mxu0 0.0
    %3160 = vmatprep.subr.mxu0 0.0
    %3161 = vmatpush1.xpose.msra.mxu0 0.0
    %3162 = vmatprep.subr.mxu0 0.0
    %3163 = vmatpush1.xpose.msra.mxu0 0.0
    %3164 = vmatprep.subr.mxu0 0.0
    %3165 = vmatpush1.xpose.msra.mxu0 0.0
    %3166 = vmatprep.subr.mxu0 0.0
    %3167 = vmatpush1.xpose.msra.mxu0 0.0
    %3168 = vmatprep.subr.mxu0 0.0
    %3169 = vmatpush1.xpose.msra.mxu0 0.0
    %3170 = vmatprep.subr.mxu0 0.0
    %3171 = vmatpush1.xpose.msra.mxu0 0.0
    %3172 = vmatprep.mubr.f32.mxu0 0.0
    %3173 = vmatmul.mubr.f32.gmra.mrb[0].mxu0 %v3104
    %v3174 = vpop.f32.mrb[0].mxu0
    %v3175 = vadd.f32 0.0, %v3174
    %v3176 = vpop.f32.mrb[0].mxu0
    %3177 = vdwg.mxu0
    %v3178 = vmul.f32 %v3097, 0.35355338
    %v3179 = vmul.f32 %v3175, 0.35355338
    %v3180 = vsel %vm2694, %v3178, -inf
    %3181 = vmax.xlane.f32.xlu0 %v3180
    %v3182 = vpop.xlane.xlu0 %3181
    %v3183 = vsel %vm2694, %v3179, -inf
    %3184 = vmax.xlane.f32.xlu0 %v3183
    %v3185 = vpop.xlane.xlu0 %3184
    %v3186 = vsub.f32 %v3178, %v3182
    %v3187 = vsub.f32 %v3179, %v3185
    %v3188 = vmul.f32 %v3186, 1.442695
    %v3189 = vpow.pop %v3188
    %v3190 = vmul.f32 %v3187, 1.442695
    %v3191 = vpow.pop %v3190
    %v3192 = vsel %vm2694, %v3189, 0.0
    %3193 = vadd.xlane.f32.xlu0 %v3192
    %v3194 = vpop.xlane.xlu0 %3193
    %v3195 = vsel %vm2694, %v3191, 0.0
    %3196 = vadd.xlane.f32.xlu0 %v3195
    %v3197 = vpop.xlane.xlu0 %3196
    %v3198 = vrcp.pop %v3194
    %v3199 = vrcp.pop %v3197
    %v3200 = vmul.f32 %v3189, %v3198
    %v3201 = vmul.f32 %v3191, %v3199
    %3202 = vrot.lane.b32.xlu0 %v2685, 56
    %v3203 = vpop.permute.xlu0 %3202
    %v3206 = vsel %vm2694, %v3200, 0
    %3208 = vmatprep.subr.mxu0 0.0
    %3209 = vmatpush1.msra.mxu0 %v3203
    %3210 = vmatprep.subr.mxu0 0.0
    %3211 = vmatpush1.msra.mxu0 0.0
    %3212 = vmatprep.subr.mxu0 0.0
    %3213 = vmatpush1.msra.mxu0 0.0
    %3214 = vmatprep.subr.mxu0 0.0
    %3215 = vmatpush1.msra.mxu0 0.0
    %3216 = vmatprep.subr.mxu0 0.0
    %3217 = vmatpush1.msra.mxu0 0.0
    %3218 = vmatprep.subr.mxu0 0.0
    %3219 = vmatpush1.msra.mxu0 0.0
    %3220 = vmatprep.subr.mxu0 0.0
    %3221 = vmatpush1.msra.mxu0 0.0
    %3222 = vmatprep.subr.mxu0 0.0
    %3223 = vmatpush1.msra.mxu0 0.0
    %3224 = vmatprep.subr.mxu0 0.0
    %3225 = vmatpush1.msra.mxu0 0.0
    %3226 = vmatprep.subr.mxu0 0.0
    %3227 = vmatpush1.msra.mxu0 0.0
    %3228 = vmatprep.subr.mxu0 0.0
    %3229 = vmatpush1.msra.mxu0 0.0
    %3230 = vmatprep.subr.mxu0 0.0
    %3231 = vmatpush1.msra.mxu0 0.0
    %3232 = vmatprep.subr.mxu0 0.0
    %3233 = vmatpush1.msra.mxu0 0.0
    %3234 = vmatprep.subr.mxu0 0.0
    %3235 = vmatpush1.msra.mxu0 0.0
    %3236 = vmatprep.subr.mxu0 0.0
    %3237 = vmatpush1.msra.mxu0 0.0
    %3238 = vmatprep.subr.mxu0 0.0
    %3239 = vmatpush1.msra.mxu0 0.0
    %3240 = vmatprep.subr.mxu0 0.0
    %3241 = vmatpush1.msra.mxu0 0.0
    %3242 = vmatprep.subr.mxu0 0.0
    %3243 = vmatpush1.msra.mxu0 0.0
    %3244 = vmatprep.subr.mxu0 0.0
    %3245 = vmatpush1.msra.mxu0 0.0
    %3246 = vmatprep.subr.mxu0 0.0
    %3247 = vmatpush1.msra.mxu0 0.0
    %3248 = vmatprep.subr.mxu0 0.0
    %3249 = vmatpush1.msra.mxu0 0.0
    %3250 = vmatprep.subr.mxu0 0.0
    %3251 = vmatpush1.msra.mxu0 0.0
    %3252 = vmatprep.subr.mxu0 0.0
    %3253 = vmatpush1.msra.mxu0 0.0
    %3254 = vmatprep.subr.mxu0 0.0
    %3255 = vmatpush1.msra.mxu0 0.0
    %3256 = vmatprep.subr.mxu0 0.0
    %3257 = vmatpush1.msra.mxu0 0.0
    %3258 = vmatprep.subr.mxu0 0.0
    %3259 = vmatpush1.msra.mxu0 0.0
    %3260 = vmatprep.subr.mxu0 0.0
    %3261 = vmatpush1.msra.mxu0 0.0
    %3262 = vmatprep.subr.mxu0 0.0
    %3263 = vmatpush1.msra.mxu0 0.0
    %3264 = vmatprep.subr.mxu0 0.0
    %3265 = vmatpush1.msra.mxu0 0.0
    %3266 = vmatprep.subr.mxu0 0.0
    %3267 = vmatpush1.msra.mxu0 0.0
    %3268 = vmatprep.subr.mxu0 0.0
    %3269 = vmatpush1.msra.mxu0 0.0
    %3270 = vmatprep.subr.mxu0 0.0
    %3271 = vmatpush1.msra.mxu0 0.0
    %3272 = vmatprep.mubr.f32.mxu0 0.0
    %3273 = vmatmul.mubr.f32.gmra.mrb[0].mxu0 %v3206
    %v3274 = vpop.f32.mrb[0].mxu0
    %v3275 = vadd.f32 0.0, %v3274
    %v3276 = vpop.f32.mrb[0].mxu0
    %3277 = vdwg.mxu0
    %3278 = vrot.lane.b32.xlu0 %v2688, 56
    %v3279 = vpop.permute.xlu0 %3278
    %v3282 = vsel %vm2694, %v3201, 0
    %3284 = vmatprep.subr.mxu0 0.0
    %3285 = vmatpush1.msra.mxu0 %v3279
    %3286 = vmatprep.subr.mxu0 0.0
    %3287 = vmatpush1.msra.mxu0 0.0
    %3288 = vmatprep.subr.mxu0 0.0
    %3289 = vmatpush1.msra.mxu0 0.0
    %3290 = vmatprep.subr.mxu0 0.0
    %3291 = vmatpush1.msra.mxu0 0.0
    %3292 = vmatprep.subr.mxu0 0.0
    %3293 = vmatpush1.msra.mxu0 0.0
    %3294 = vmatprep.subr.mxu0 0.0
    %3295 = vmatpush1.msra.mxu0 0.0
    %3296 = vmatprep.subr.mxu0 0.0
    %3297 = vmatpush1.msra.mxu0 0.0
    %3298 = vmatprep.subr.mxu0 0.0
    %3299 = vmatpush1.msra.mxu0 0.0
    %3300 = vmatprep.subr.mxu0 0.0
    %3301 = vmatpush1.msra.mxu0 0.0
    %3302 = vmatprep.subr.mxu0 0.0
    %3303 = vmatpush1.msra.mxu0 0.0
    %3304 = vmatprep.subr.mxu0 0.0
    %3305 = vmatpush1.msra.mxu0 0.0
    %3306 = vmatprep.subr.mxu0 0.0
    %3307 = vmatpush1.msra.mxu0 0.0
    %3308 = vmatprep.subr.mxu0 0.0
    %3309 = vmatpush1.msra.mxu0 0.0
    %3310 = vmatprep.subr.mxu0 0.0
    %3311 = vmatpush1.msra.mxu0 0.0
    %3312 = vmatprep.subr.mxu0 0.0
    %3313 = vmatpush1.msra.mxu0 0.0
    %3314 = vmatprep.subr.mxu0 0.0
    %3315 = vmatpush1.msra.mxu0 0.0
    %3316 = vmatprep.subr.mxu0 0.0
    %3317 = vmatpush1.msra.mxu0 0.0
    %3318 = vmatprep.subr.mxu0 0.0
    %3319 = vmatpush1.msra.mxu0 0.0
    %3320 = vmatprep.subr.mxu0 0.0
    %3321 = vmatpush1.msra.mxu0 0.0
    %3322 = vmatprep.subr.mxu0 0.0
    %3323 = vmatpush1.msra.mxu0 0.0
    %3324 = vmatprep.subr.mxu0 0.0
    %3325 = vmatpush1.msra.mxu0 0.0
    %3326 = vmatprep.subr.mxu0 0.0
    %3327 = vmatpush1.msra.mxu0 0.0
    %3328 = vmatprep.subr.mxu0 0.0
    %3329 = vmatpush1.msra.mxu0 0.0
    %3330 = vmatprep.subr.mxu0 0.0
    %3331 = vmatpush1.msra.mxu0 0.0
    %3332 = vmatprep.subr.mxu0 0.0
    %3333 = vmatpush1.msra.mxu0 0.0
    %3334 = vmatprep.subr.mxu0 0.0
    %3335 = vmatpush1.msra.mxu0 0.0
    %3336 = vmatprep.subr.mxu0 0.0
    %3337 = vmatpush1.msra.mxu0 0.0
    %3338 = vmatprep.subr.mxu0 0.0
    %3339 = vmatpush1.msra.mxu0 0.0
    %3340 = vmatprep.subr.mxu0 0.0
    %3341 = vmatpush1.msra.mxu0 0.0
    %3342 = vmatprep.subr.mxu0 0.0
    %3343 = vmatpush1.msra.mxu0 0.0
    %3344 = vmatprep.subr.mxu0 0.0
    %3345 = vmatpush1.msra.mxu0 0.0
    %3346 = vmatprep.subr.mxu0 0.0
    %3347 = vmatpush1.msra.mxu0 0.0
    %3348 = vmatprep.mubr.f32.mxu0 0.0
    %3349 = vmatmul.mubr.f32.gmra.mrb[0].mxu0 %v3282
    %v3350 = vpop.f32.mrb[0].mxu0
    %v3351 = vadd.f32 0.0, %v3350
    %v3352 = vpop.f32.mrb[0].mxu0
    %3353 = vdwg.mxu0
    %3354 = vrot.lane.b32.xlu0 %v2685, 112
    %v3355 = vpop.permute.xlu0 %3354
    %3356 = vrot.lane.b32.xlu0 %v2685, 80
    %v3357 = vpop.permute.xlu0 %3356
    %v3358 = vsel %vm2694, %v3355, 0
    %v3360 = vsel %vm2694, %v3357, 0
    %3362 = vmatprep.subr.mxu0 0.0
    %3363 = vmatpush1.xpose.msra.mxu0 %v3360
    %3364 = vmatprep.subr.mxu0 0.0
    %3365 = vmatpush1.xpose.msra.mxu0 0.0
    %3366 = vmatprep.subr.mxu0 0.0
    %3367 = vmatpush1.xpose.msra.mxu0 0.0
    %3368 = vmatprep.subr.mxu0 0.0
    %3369 = vmatpush1.xpose.msra.mxu0 0.0
    %3370 = vmatprep.subr.mxu0 0.0
    %3371 = vmatpush1.xpose.msra.mxu0 0.0
    %3372 = vmatprep.subr.mxu0 0.0
    %3373 = vmatpush1.xpose.msra.mxu0 0.0
    %3374 = vmatprep.subr.mxu0 0.0
    %3375 = vmatpush1.xpose.msra.mxu0 0.0
    %3376 = vmatprep.subr.mxu0 0.0
    %3377 = vmatpush1.xpose.msra.mxu0 0.0
    %3378 = vmatprep.subr.mxu0 0.0
    %3379 = vmatpush1.xpose.msra.mxu0 0.0
    %3380 = vmatprep.subr.mxu0 0.0
    %3381 = vmatpush1.xpose.msra.mxu0 0.0
    %3382 = vmatprep.subr.mxu0 0.0
    %3383 = vmatpush1.xpose.msra.mxu0 0.0
    %3384 = vmatprep.subr.mxu0 0.0
    %3385 = vmatpush1.xpose.msra.mxu0 0.0
    %3386 = vmatprep.subr.mxu0 0.0
    %3387 = vmatpush1.xpose.msra.mxu0 0.0
    %3388 = vmatprep.subr.mxu0 0.0
    %3389 = vmatpush1.xpose.msra.mxu0 0.0
    %3390 = vmatprep.subr.mxu0 0.0
    %3391 = vmatpush1.xpose.msra.mxu0 0.0
    %3392 = vmatprep.subr.mxu0 0.0
    %3393 = vmatpush1.xpose.msra.mxu0 0.0
    %3394 = vmatprep.subr.mxu0 0.0
    %3395 = vmatpush1.xpose.msra.mxu0 0.0
    %3396 = vmatprep.subr.mxu0 0.0
    %3397 = vmatpush1.xpose.msra.mxu0 0.0
    %3398 = vmatprep.subr.mxu0 0.0
    %3399 = vmatpush1.xpose.msra.mxu0 0.0
    %3400 = vmatprep.subr.mxu0 0.0
    %3401 = vmatpush1.xpose.msra.mxu0 0.0
    %3402 = vmatprep.subr.mxu0 0.0
    %3403 = vmatpush1.xpose.msra.mxu0 0.0
    %3404 = vmatprep.subr.mxu0 0.0
    %3405 = vmatpush1.xpose.msra.mxu0 0.0
    %3406 = vmatprep.subr.mxu0 0.0
    %3407 = vmatpush1.xpose.msra.mxu0 0.0
    %3408 = vmatprep.subr.mxu0 0.0
    %3409 = vmatpush1.xpose.msra.mxu0 0.0
    %3410 = vmatprep.subr.mxu0 0.0
    %3411 = vmatpush1.xpose.msra.mxu0 0.0
    %3412 = vmatprep.subr.mxu0 0.0
    %3413 = vmatpush1.xpose.msra.mxu0 0.0
    %3414 = vmatprep.subr.mxu0 0.0
    %3415 = vmatpush1.xpose.msra.mxu0 0.0
    %3416 = vmatprep.subr.mxu0 0.0
    %3417 = vmatpush1.xpose.msra.mxu0 0.0
    %3418 = vmatprep.subr.mxu0 0.0
    %3419 = vmatpush1.xpose.msra.mxu0 0.0
    %3420 = vmatprep.subr.mxu0 0.0
    %3421 = vmatpush1.xpose.msra.mxu0 0.0
    %3422 = vmatprep.subr.mxu0 0.0
    %3423 = vmatpush1.xpose.msra.mxu0 0.0
    %3424 = vmatprep.subr.mxu0 0.0
    %3425 = vmatpush1.xpose.msra.mxu0 0.0
    %3426 = vmatprep.mubr.f32.mxu0 0.0
    %3427 = vmatmul.mubr.f32.gmra.mrb[0].mxu0 %v3358
    %v3428 = vpop.f32.mrb[0].mxu0
    %v3429 = vadd.f32 0.0, %v3428
    %v3430 = vpop.f32.mrb[0].mxu0
    %3431 = vdwg.mxu0
    %3432 = vrot.lane.b32.xlu0 %v2688, 112
    %v3433 = vpop.permute.xlu0 %3432
    %3434 = vrot.lane.b32.xlu0 %v2688, 80
    %v3435 = vpop.permute.xlu0 %3434
    %v3436 = vsel %vm2694, %v3433, 0
    %v3438 = vsel %vm2694, %v3435, 0
    %3440 = vmatprep.subr.mxu0 0.0
    %3441 = vmatpush1.xpose.msra.mxu0 %v3438
    %3442 = vmatprep.subr.mxu0 0.0
    %3443 = vmatpush1.xpose.msra.mxu0 0.0
    %3444 = vmatprep.subr.mxu0 0.0
    %3445 = vmatpush1.xpose.msra.mxu0 0.0
    %3446 = vmatprep.subr.mxu0 0.0
    %3447 = vmatpush1.xpose.msra.mxu0 0.0
    %3448 = vmatprep.subr.mxu0 0.0
    %3449 = vmatpush1.xpose.msra.mxu0 0.0
    %3450 = vmatprep.subr.mxu0 0.0
    %3451 = vmatpush1.xpose.msra.mxu0 0.0
    %3452 = vmatprep.subr.mxu0 0.0
    %3453 = vmatpush1.xpose.msra.mxu0 0.0
    %3454 = vmatprep.subr.mxu0 0.0
    %3455 = vmatpush1.xpose.msra.mxu0 0.0
    %3456 = vmatprep.subr.mxu0 0.0
    %3457 = vmatpush1.xpose.msra.mxu0 0.0
    %3458 = vmatprep.subr.mxu0 0.0
    %3459 = vmatpush1.xpose.msra.mxu0 0.0
    %3460 = vmatprep.subr.mxu0 0.0
    %3461 = vmatpush1.xpose.msra.mxu0 0.0
    %3462 = vmatprep.subr.mxu0 0.0
    %3463 = vmatpush1.xpose.msra.mxu0 0.0
    %3464 = vmatprep.subr.mxu0 0.0
    %3465 = vmatpush1.xpose.msra.mxu0 0.0
    %3466 = vmatprep.subr.mxu0 0.0
    %3467 = vmatpush1.xpose.msra.mxu0 0.0
    %3468 = vmatprep.subr.mxu0 0.0
    %3469 = vmatpush1.xpose.msra.mxu0 0.0
    %3470 = vmatprep.subr.mxu0 0.0
    %3471 = vmatpush1.xpose.msra.mxu0 0.0
    %3472 = vmatprep.subr.mxu0 0.0
    %3473 = vmatpush1.xpose.msra.mxu0 0.0
    %3474 = vmatprep.subr.mxu0 0.0
    %3475 = vmatpush1.xpose.msra.mxu0 0.0
    %3476 = vmatprep.subr.mxu0 0.0
    %3477 = vmatpush1.xpose.msra.mxu0 0.0
    %3478 = vmatprep.subr.mxu0 0.0
    %3479 = vmatpush1.xpose.msra.mxu0 0.0
    %3480 = vmatprep.subr.mxu0 0.0
    %3481 = vmatpush1.xpose.msra.mxu0 0.0
    %3482 = vmatprep.subr.mxu0 0.0
    %3483 = vmatpush1.xpose.msra.mxu0 0.0
    %3484 = vmatprep.subr.mxu0 0.0
    %3485 = vmatpush1.xpose.msra.mxu0 0.0
    %3486 = vmatprep.subr.mxu0 0.0
    %3487 = vmatpush1.xpose.msra.mxu0 0.0
    %3488 = vmatprep.subr.mxu0 0.0
    %3489 = vmatpush1.xpose.msra.mxu0 0.0
    %3490 = vmatprep.subr.mxu0 0.0
    %3491 = vmatpush1.xpose.msra.mxu0 0.0
    %3492 = vmatprep.subr.mxu0 0.0
    %3493 = vmatpush1.xpose.msra.mxu0 0.0
    %3494 = vmatprep.subr.mxu0 0.0
    %3495 = vmatpush1.xpose.msra.mxu0 0.0
    %3496 = vmatprep.subr.mxu0 0.0
    %3497 = vmatpush1.xpose.msra.mxu0 0.0
    %3498 = vmatprep.subr.mxu0 0.0
    %3499 = vmatpush1.xpose.msra.mxu0 0.0
    %3500 = vmatprep.subr.mxu0 0.0
    %3501 = vmatpush1.xpose.msra.mxu0 0.0
    %3502 = vmatprep.subr.mxu0 0.0
    %3503 = vmatpush1.xpose.msra.mxu0 0.0
    %3504 = vmatprep.mubr.f32.mxu0 0.0
    %3505 = vmatmul.mubr.f32.gmra.mrb[0].mxu0 %v3436
    %v3506 = vpop.f32.mrb[0].mxu0
    %v3507 = vadd.f32 0.0, %v3506
    %v3508 = vpop.f32.mrb[0].mxu0
    %3509 = vdwg.mxu0
    %v3510 = vmul.f32 %v3429, 0.35355338
    %v3511 = vmul.f32 %v3507, 0.35355338
    %v3512 = vsel %vm2694, %v3510, -inf
    %3513 = vmax.xlane.f32.xlu0 %v3512
    %v3514 = vpop.xlane.xlu0 %3513
    %v3515 = vsel %vm2694, %v3511, -inf
    %3516 = vmax.xlane.f32.xlu0 %v3515
    %v3517 = vpop.xlane.xlu0 %3516
    %v3518 = vsub.f32 %v3510, %v3514
    %v3519 = vsub.f32 %v3511, %v3517
    %v3520 = vmul.f32 %v3518, 1.442695
    %v3521 = vpow.pop %v3520
    %v3522 = vmul.f32 %v3519, 1.442695
    %v3523 = vpow.pop %v3522
    %v3524 = vsel %vm2694, %v3521, 0.0
    %3525 = vadd.xlane.f32.xlu0 %v3524
    %v3526 = vpop.xlane.xlu0 %3525
    %v3527 = vsel %vm2694, %v3523, 0.0
    %3528 = vadd.xlane.f32.xlu0 %v3527
    %v3529 = vpop.xlane.xlu0 %3528
    %v3530 = vrcp.pop %v3526
    %v3531 = vrcp.pop %v3529
    %v3532 = vmul.f32 %v3521, %v3530
    %v3533 = vmul.f32 %v3523, %v3531
    %3534 = vrot.lane.b32.xlu0 %v2685, 48
    %v3535 = vpop.permute.xlu0 %3534
    %v3538 = vsel %vm2694, %v3532, 0
    %3540 = vmatprep.subr.mxu0 0.0
    %3541 = vmatpush1.msra.mxu0 %v3535
    %3542 = vmatprep.subr.mxu0 0.0
    %3543 = vmatpush1.msra.mxu0 0.0
    %3544 = vmatprep.subr.mxu0 0.0
    %3545 = vmatpush1.msra.mxu0 0.0
    %3546 = vmatprep.subr.mxu0 0.0
    %3547 = vmatpush1.msra.mxu0 0.0
    %3548 = vmatprep.subr.mxu0 0.0
    %3549 = vmatpush1.msra.mxu0 0.0
    %3550 = vmatprep.subr.mxu0 0.0
    %3551 = vmatpush1.msra.mxu0 0.0
    %3552 = vmatprep.subr.mxu0 0.0
    %3553 = vmatpush1.msra.mxu0 0.0
    %3554 = vmatprep.subr.mxu0 0.0
    %3555 = vmatpush1.msra.mxu0 0.0
    %3556 = vmatprep.subr.mxu0 0.0
    %3557 = vmatpush1.msra.mxu0 0.0
    %3558 = vmatprep.subr.mxu0 0.0
    %3559 = vmatpush1.msra.mxu0 0.0
    %3560 = vmatprep.subr.mxu0 0.0
    %3561 = vmatpush1.msra.mxu0 0.0
    %3562 = vmatprep.subr.mxu0 0.0
    %3563 = vmatpush1.msra.mxu0 0.0
    %3564 = vmatprep.subr.mxu0 0.0
    %3565 = vmatpush1.msra.mxu0 0.0
    %3566 = vmatprep.subr.mxu0 0.0
    %3567 = vmatpush1.msra.mxu0 0.0
    %3568 = vmatprep.subr.mxu0 0.0
    %3569 = vmatpush1.msra.mxu0 0.0
    %3570 = vmatprep.subr.mxu0 0.0
    %3571 = vmatpush1.msra.mxu0 0.0
    %3572 = vmatprep.subr.mxu0 0.0
    %3573 = vmatpush1.msra.mxu0 0.0
    %3574 = vmatprep.subr.mxu0 0.0
    %3575 = vmatpush1.msra.mxu0 0.0
    %3576 = vmatprep.subr.mxu0 0.0
    %3577 = vmatpush1.msra.mxu0 0.0
    %3578 = vmatprep.subr.mxu0 0.0
    %3579 = vmatpush1.msra.mxu0 0.0
    %3580 = vmatprep.subr.mxu0 0.0
    %3581 = vmatpush1.msra.mxu0 0.0
    %3582 = vmatprep.subr.mxu0 0.0
    %3583 = vmatpush1.msra.mxu0 0.0
    %3584 = vmatprep.subr.mxu0 0.0
    %3585 = vmatpush1.msra.mxu0 0.0
    %3586 = vmatprep.subr.mxu0 0.0
    %3587 = vmatpush1.msra.mxu0 0.0
    %3588 = vmatprep.subr.mxu0 0.0
    %3589 = vmatpush1.msra.mxu0 0.0
    %3590 = vmatprep.subr.mxu0 0.0
    %3591 = vmatpush1.msra.mxu0 0.0
    %3592 = vmatprep.subr.mxu0 0.0
    %3593 = vmatpush1.msra.mxu0 0.0
    %3594 = vmatprep.subr.mxu0 0.0
    %3595 = vmatpush1.msra.mxu0 0.0
    %3596 = vmatprep.subr.mxu0 0.0
    %3597 = vmatpush1.msra.mxu0 0.0
    %3598 = vmatprep.subr.mxu0 0.0
    %3599 = vmatpush1.msra.mxu0 0.0
    %3600 = vmatprep.subr.mxu0 0.0
    %3601 = vmatpush1.msra.mxu0 0.0
    %3602 = vmatprep.subr.mxu0 0.0
    %3603 = vmatpush1.msra.mxu0 0.0
    %3604 = vmatprep.mubr.f32.mxu0 0.0
    %3605 = vmatmul.mubr.f32.gmra.mrb[0].mxu0 %v3538
    %v3606 = vpop.f32.mrb[0].mxu0
    %v3607 = vadd.f32 0.0, %v3606
    %v3608 = vpop.f32.mrb[0].mxu0
    %3609 = vdwg.mxu0
    %3610 = vrot.lane.b32.xlu0 %v2688, 48
    %v3611 = vpop.permute.xlu0 %3610
    %v3614 = vsel %vm2694, %v3533, 0
    %3616 = vmatprep.subr.mxu0 0.0
    %3617 = vmatpush1.msra.mxu0 %v3611
    %3618 = vmatprep.subr.mxu0 0.0
    %3619 = vmatpush1.msra.mxu0 0.0
    %3620 = vmatprep.subr.mxu0 0.0
    %3621 = vmatpush1.msra.mxu0 0.0
    %3622 = vmatprep.subr.mxu0 0.0
    %3623 = vmatpush1.msra.mxu0 0.0
    %3624 = vmatprep.subr.mxu0 0.0
    %3625 = vmatpush1.msra.mxu0 0.0
    %3626 = vmatprep.subr.mxu0 0.0
    %3627 = vmatpush1.msra.mxu0 0.0
    %3628 = vmatprep.subr.mxu0 0.0
    %3629 = vmatpush1.msra.mxu0 0.0
    %3630 = vmatprep.subr.mxu0 0.0
    %3631 = vmatpush1.msra.mxu0 0.0
    %3632 = vmatprep.subr.mxu0 0.0
    %3633 = vmatpush1.msra.mxu0 0.0
    %3634 = vmatprep.subr.mxu0 0.0
    %3635 = vmatpush1.msra.mxu0 0.0
    %3636 = vmatprep.subr.mxu0 0.0
    %3637 = vmatpush1.msra.mxu0 0.0
    %3638 = vmatprep.subr.mxu0 0.0
    %3639 = vmatpush1.msra.mxu0 0.0
    %3640 = vmatprep.subr.mxu0 0.0
    %3641 = vmatpush1.msra.mxu0 0.0
    %3642 = vmatprep.subr.mxu0 0.0
    %3643 = vmatpush1.msra.mxu0 0.0
    %3644 = vmatprep.subr.mxu0 0.0
    %3645 = vmatpush1.msra.mxu0 0.0
    %3646 = vmatprep.subr.mxu0 0.0
    %3647 = vmatpush1.msra.mxu0 0.0
    %3648 = vmatprep.subr.mxu0 0.0
    %3649 = vmatpush1.msra.mxu0 0.0
    %3650 = vmatprep.subr.mxu0 0.0
    %3651 = vmatpush1.msra.mxu0 0.0
    %3652 = vmatprep.subr.mxu0 0.0
    %3653 = vmatpush1.msra.mxu0 0.0
    %3654 = vmatprep.subr.mxu0 0.0
    %3655 = vmatpush1.msra.mxu0 0.0
    %3656 = vmatprep.subr.mxu0 0.0
    %3657 = vmatpush1.msra.mxu0 0.0
    %3658 = vmatprep.subr.mxu0 0.0
    %3659 = vmatpush1.msra.mxu0 0.0
    %3660 = vmatprep.subr.mxu0 0.0
    %3661 = vmatpush1.msra.mxu0 0.0
    %3662 = vmatprep.subr.mxu0 0.0
    %3663 = vmatpush1.msra.mxu0 0.0
    %3664 = vmatprep.subr.mxu0 0.0
    %3665 = vmatpush1.msra.mxu0 0.0
    %3666 = vmatprep.subr.mxu0 0.0
    %3667 = vmatpush1.msra.mxu0 0.0
    %3668 = vmatprep.subr.mxu0 0.0
    %3669 = vmatpush1.msra.mxu0 0.0
    %3670 = vmatprep.subr.mxu0 0.0
    %3671 = vmatpush1.msra.mxu0 0.0
    %3672 = vmatprep.subr.mxu0 0.0
    %3673 = vmatpush1.msra.mxu0 0.0
    %3674 = vmatprep.subr.mxu0 0.0
    %3675 = vmatpush1.msra.mxu0 0.0
    %3676 = vmatprep.subr.mxu0 0.0
    %3677 = vmatpush1.msra.mxu0 0.0
    %3678 = vmatprep.subr.mxu0 0.0
    %3679 = vmatpush1.msra.mxu0 0.0
    %3680 = vmatprep.mubr.f32.mxu0 0.0
    %3681 = vmatmul.mubr.f32.gmra.mrb[0].mxu0 %v3614
    %v3682 = vpop.f32.mrb[0].mxu0
    %v3683 = vadd.f32 0.0, %v3682
    %v3684 = vpop.f32.mrb[0].mxu0
    %3685 = vdwg.mxu0
    %3686 = vrot.lane.b32.xlu0 %v2685, 104
    %v3687 = vpop.permute.xlu0 %3686
    %3688 = vrot.lane.b32.xlu0 %v2685, 72
    %v3689 = vpop.permute.xlu0 %3688
    %v3690 = vsel %vm2694, %v3687, 0
    %v3692 = vsel %vm2694, %v3689, 0
    %3694 = vmatprep.subr.mxu0 0.0
    %3695 = vmatpush1.xpose.msra.mxu0 %v3692
    %3696 = vmatprep.subr.mxu0 0.0
    %3697 = vmatpush1.xpose.msra.mxu0 0.0
    %3698 = vmatprep.subr.mxu0 0.0
    %3699 = vmatpush1.xpose.msra.mxu0 0.0
    %3700 = vmatprep.subr.mxu0 0.0
    %3701 = vmatpush1.xpose.msra.mxu0 0.0
    %3702 = vmatprep.subr.mxu0 0.0
    %3703 = vmatpush1.xpose.msra.mxu0 0.0
    %3704 = vmatprep.subr.mxu0 0.0
    %3705 = vmatpush1.xpose.msra.mxu0 0.0
    %3706 = vmatprep.subr.mxu0 0.0
    %3707 = vmatpush1.xpose.msra.mxu0 0.0
    %3708 = vmatprep.subr.mxu0 0.0
    %3709 = vmatpush1.xpose.msra.mxu0 0.0
    %3710 = vmatprep.subr.mxu0 0.0
    %3711 = vmatpush1.xpose.msra.mxu0 0.0
    %3712 = vmatprep.subr.mxu0 0.0
    %3713 = vmatpush1.xpose.msra.mxu0 0.0
    %3714 = vmatprep.subr.mxu0 0.0
    %3715 = vmatpush1.xpose.msra.mxu0 0.0
    %3716 = vmatprep.subr.mxu0 0.0
    %3717 = vmatpush1.xpose.msra.mxu0 0.0
    %3718 = vmatprep.subr.mxu0 0.0
    %3719 = vmatpush1.xpose.msra.mxu0 0.0
    %3720 = vmatprep.subr.mxu0 0.0
    %3721 = vmatpush1.xpose.msra.mxu0 0.0
    %3722 = vmatprep.subr.mxu0 0.0
    %3723 = vmatpush1.xpose.msra.mxu0 0.0
    %3724 = vmatprep.subr.mxu0 0.0
    %3725 = vmatpush1.xpose.msra.mxu0 0.0
    %3726 = vmatprep.subr.mxu0 0.0
    %3727 = vmatpush1.xpose.msra.mxu0 0.0
    %3728 = vmatprep.subr.mxu0 0.0
    %3729 = vmatpush1.xpose.msra.mxu0 0.0
    %3730 = vmatprep.subr.mxu0 0.0
    %3731 = vmatpush1.xpose.msra.mxu0 0.0
    %3732 = vmatprep.subr.mxu0 0.0
    %3733 = vmatpush1.xpose.msra.mxu0 0.0
    %3734 = vmatprep.subr.mxu0 0.0
    %3735 = vmatpush1.xpose.msra.mxu0 0.0
    %3736 = vmatprep.subr.mxu0 0.0
    %3737 = vmatpush1.xpose.msra.mxu0 0.0
    %3738 = vmatprep.subr.mxu0 0.0
    %3739 = vmatpush1.xpose.msra.mxu0 0.0
    %3740 = vmatprep.subr.mxu0 0.0
    %3741 = vmatpush1.xpose.msra.mxu0 0.0
    %3742 = vmatprep.subr.mxu0 0.0
    %3743 = vmatpush1.xpose.msra.mxu0 0.0
    %3744 = vmatprep.subr.mxu0 0.0
    %3745 = vmatpush1.xpose.msra.mxu0 0.0
    %3746 = vmatprep.subr.mxu0 0.0
    %3747 = vmatpush1.xpose.msra.mxu0 0.0
    %3748 = vmatprep.subr.mxu0 0.0
    %3749 = vmatpush1.xpose.msra.mxu0 0.0
    %3750 = vmatprep.subr.mxu0 0.0
    %3751 = vmatpush1.xpose.msra.mxu0 0.0
    %3752 = vmatprep.subr.mxu0 0.0
    %3753 = vmatpush1.xpose.msra.mxu0 0.0
    %3754 = vmatprep.subr.mxu0 0.0
    %3755 = vmatpush1.xpose.msra.mxu0 0.0
    %3756 = vmatprep.subr.mxu0 0.0
    %3757 = vmatpush1.xpose.msra.mxu0 0.0
    %3758 = vmatprep.mubr.f32.mxu0 0.0
    %3759 = vmatmul.mubr.f32.gmra.mrb[0].mxu0 %v3690
    %v3760 = vpop.f32.mrb[0].mxu0
    %v3761 = vadd.f32 0.0, %v3760
    %v3762 = vpop.f32.mrb[0].mxu0
    %3763 = vdwg.mxu0
    %3764 = vrot.lane.b32.xlu0 %v2688, 104
    %v3765 = vpop.permute.xlu0 %3764
    %3766 = vrot.lane.b32.xlu0 %v2688, 72
    %v3767 = vpop.permute.xlu0 %3766
    %v3768 = vsel %vm2694, %v3765, 0
    %v3770 = vsel %vm2694, %v3767, 0
    %3772 = vmatprep.subr.mxu0 0.0
    %3773 = vmatpush1.xpose.msra.mxu0 %v3770
    %3774 = vmatprep.subr.mxu0 0.0
    %3775 = vmatpush1.xpose.msra.mxu0 0.0
    %3776 = vmatprep.subr.mxu0 0.0
    %3777 = vmatpush1.xpose.msra.mxu0 0.0
    %3778 = vmatprep.subr.mxu0 0.0
    %3779 = vmatpush1.xpose.msra.mxu0 0.0
    %3780 = vmatprep.subr.mxu0 0.0
    %3781 = vmatpush1.xpose.msra.mxu0 0.0
    %3782 = vmatprep.subr.mxu0 0.0
    %3783 = vmatpush1.xpose.msra.mxu0 0.0
    %3784 = vmatprep.subr.mxu0 0.0
    %3785 = vmatpush1.xpose.msra.mxu0 0.0
    %3786 = vmatprep.subr.mxu0 0.0
    %3787 = vmatpush1.xpose.msra.mxu0 0.0
    %3788 = vmatprep.subr.mxu0 0.0
    %3789 = vmatpush1.xpose.msra.mxu0 0.0
    %3790 = vmatprep.subr.mxu0 0.0
    %3791 = vmatpush1.xpose.msra.mxu0 0.0
    %3792 = vmatprep.subr.mxu0 0.0
    %3793 = vmatpush1.xpose.msra.mxu0 0.0
    %3794 = vmatprep.subr.mxu0 0.0
    %3795 = vmatpush1.xpose.msra.mxu0 0.0
    %3796 = vmatprep.subr.mxu0 0.0
    %3797 = vmatpush1.xpose.msra.mxu0 0.0
    %3798 = vmatprep.subr.mxu0 0.0
    %3799 = vmatpush1.xpose.msra.mxu0 0.0
    %3800 = vmatprep.subr.mxu0 0.0
    %3801 = vmatpush1.xpose.msra.mxu0 0.0
    %3802 = vmatprep.subr.mxu0 0.0
    %3803 = vmatpush1.xpose.msra.mxu0 0.0
    %3804 = vmatprep.subr.mxu0 0.0
    %3805 = vmatpush1.xpose.msra.mxu0 0.0
    %3806 = vmatprep.subr.mxu0 0.0
    %3807 = vmatpush1.xpose.msra.mxu0 0.0
    %3808 = vmatprep.subr.mxu0 0.0
    %3809 = vmatpush1.xpose.msra.mxu0 0.0
    %3810 = vmatprep.subr.mxu0 0.0
    %3811 = vmatpush1.xpose.msra.mxu0 0.0
    %3812 = vmatprep.subr.mxu0 0.0
    %3813 = vmatpush1.xpose.msra.mxu0 0.0
    %3814 = vmatprep.subr.mxu0 0.0
    %3815 = vmatpush1.xpose.msra.mxu0 0.0
    %3816 = vmatprep.subr.mxu0 0.0
    %3817 = vmatpush1.xpose.msra.mxu0 0.0
    %3818 = vmatprep.subr.mxu0 0.0
    %3819 = vmatpush1.xpose.msra.mxu0 0.0
    %3820 = vmatprep.subr.mxu0 0.0
    %3821 = vmatpush1.xpose.msra.mxu0 0.0
    %3822 = vmatprep.subr.mxu0 0.0
    %3823 = vmatpush1.xpose.msra.mxu0 0.0
    %3824 = vmatprep.subr.mxu0 0.0
    %3825 = vmatpush1.xpose.msra.mxu0 0.0
    %3826 = vmatprep.subr.mxu0 0.0
    %3827 = vmatpush1.xpose.msra.mxu0 0.0
    %3828 = vmatprep.subr.mxu0 0.0
    %3829 = vmatpush1.xpose.msra.mxu0 0.0
    %3830 = vmatprep.subr.mxu0 0.0
    %3831 = vmatpush1.xpose.msra.mxu0 0.0
    %3832 = vmatprep.subr.mxu0 0.0
    %3833 = vmatpush1.xpose.msra.mxu0 0.0
    %3834 = vmatprep.subr.mxu0 0.0
    %3835 = vmatpush1.xpose.msra.mxu0 0.0
    %3836 = vmatprep.mubr.f32.mxu0 0.0
    %3837 = vmatmul.mubr.f32.gmra.mrb[0].mxu0 %v3768
    %v3838 = vpop.f32.mrb[0].mxu0
    %v3839 = vadd.f32 0.0, %v3838
    %v3840 = vpop.f32.mrb[0].mxu0
    %3841 = vdwg.mxu0
    %v3842 = vmul.f32 %v3761, 0.35355338
    %v3843 = vmul.f32 %v3839, 0.35355338
    %v3844 = vsel %vm2694, %v3842, -inf
    %3845 = vmax.xlane.f32.xlu0 %v3844
    %v3846 = vpop.xlane.xlu0 %3845
    %v3847 = vsel %vm2694, %v3843, -inf
    %3848 = vmax.xlane.f32.xlu0 %v3847
    %v3849 = vpop.xlane.xlu0 %3848
    %v3850 = vsub.f32 %v3842, %v3846
    %v3851 = vsub.f32 %v3843, %v3849
    %v3852 = vmul.f32 %v3850, 1.442695
    %v3853 = vpow.pop %v3852
    %v3854 = vmul.f32 %v3851, 1.442695
    %v3855 = vpow.pop %v3854
    %v3856 = vsel %vm2694, %v3853, 0.0
    %3857 = vadd.xlane.f32.xlu0 %v3856
    %v3858 = vpop.xlane.xlu0 %3857
    %v3859 = vsel %vm2694, %v3855, 0.0
    %3860 = vadd.xlane.f32.xlu0 %v3859
    %v3861 = vpop.xlane.xlu0 %3860
    %v3862 = vrcp.pop %v3858
    %v3863 = vrcp.pop %v3861
    %v3864 = vmul.f32 %v3853, %v3862
    %v3865 = vmul.f32 %v3855, %v3863
    %3866 = vrot.lane.b32.xlu0 %v2685, 40
    %v3867 = vpop.permute.xlu0 %3866
    %v3870 = vsel %vm2694, %v3864, 0
    %3872 = vmatprep.subr.mxu0 0.0
    %3873 = vmatpush1.msra.mxu0 %v3867
    %3874 = vmatprep.subr.mxu0 0.0
    %3875 = vmatpush1.msra.mxu0 0.0
    %3876 = vmatprep.subr.mxu0 0.0
    %3877 = vmatpush1.msra.mxu0 0.0
    %3878 = vmatprep.subr.mxu0 0.0
    %3879 = vmatpush1.msra.mxu0 0.0
    %3880 = vmatprep.subr.mxu0 0.0
    %3881 = vmatpush1.msra.mxu0 0.0
    %3882 = vmatprep.subr.mxu0 0.0
    %3883 = vmatpush1.msra.mxu0 0.0
    %3884 = vmatprep.subr.mxu0 0.0
    %3885 = vmatpush1.msra.mxu0 0.0
    %3886 = vmatprep.subr.mxu0 0.0
    %3887 = vmatpush1.msra.mxu0 0.0
    %3888 = vmatprep.subr.mxu0 0.0
    %3889 = vmatpush1.msra.mxu0 0.0
    %3890 = vmatprep.subr.mxu0 0.0
    %3891 = vmatpush1.msra.mxu0 0.0
    %3892 = vmatprep.subr.mxu0 0.0
    %3893 = vmatpush1.msra.mxu0 0.0
    %3894 = vmatprep.subr.mxu0 0.0
    %3895 = vmatpush1.msra.mxu0 0.0
    %3896 = vmatprep.subr.mxu0 0.0
    %3897 = vmatpush1.msra.mxu0 0.0
    %3898 = vmatprep.subr.mxu0 0.0
    %3899 = vmatpush1.msra.mxu0 0.0
    %3900 = vmatprep.subr.mxu0 0.0
    %3901 = vmatpush1.msra.mxu0 0.0
    %3902 = vmatprep.subr.mxu0 0.0
    %3903 = vmatpush1.msra.mxu0 0.0
    %3904 = vmatprep.subr.mxu0 0.0
    %3905 = vmatpush1.msra.mxu0 0.0
    %3906 = vmatprep.subr.mxu0 0.0
    %3907 = vmatpush1.msra.mxu0 0.0
    %3908 = vmatprep.subr.mxu0 0.0
    %3909 = vmatpush1.msra.mxu0 0.0
    %3910 = vmatprep.subr.mxu0 0.0
    %3911 = vmatpush1.msra.mxu0 0.0
    %3912 = vmatprep.subr.mxu0 0.0
    %3913 = vmatpush1.msra.mxu0 0.0
    %3914 = vmatprep.subr.mxu0 0.0
    %3915 = vmatpush1.msra.mxu0 0.0
    %3916 = vmatprep.subr.mxu0 0.0
    %3917 = vmatpush1.msra.mxu0 0.0
    %3918 = vmatprep.subr.mxu0 0.0
    %3919 = vmatpush1.msra.mxu0 0.0
    %3920 = vmatprep.subr.mxu0 0.0
    %3921 = vmatpush1.msra.mxu0 0.0
    %3922 = vmatprep.subr.mxu0 0.0
    %3923 = vmatpush1.msra.mxu0 0.0
    %3924 = vmatprep.subr.mxu0 0.0
    %3925 = vmatpush1.msra.mxu0 0.0
    %3926 = vmatprep.subr.mxu0 0.0
    %3927 = vmatpush1.msra.mxu0 0.0
    %3928 = vmatprep.subr.mxu0 0.0
    %3929 = vmatpush1.msra.mxu0 0.0
    %3930 = vmatprep.subr.mxu0 0.0
    %3931 = vmatpush1.msra.mxu0 0.0
    %3932 = vmatprep.subr.mxu0 0.0
    %3933 = vmatpush1.msra.mxu0 0.0
    %3934 = vmatprep.subr.mxu0 0.0
    %3935 = vmatpush1.msra.mxu0 0.0
    %3936 = vmatprep.mubr.f32.mxu0 0.0
    %3937 = vmatmul.mubr.f32.gmra.mrb[0].mxu0 %v3870
    %v3938 = vpop.f32.mrb[0].mxu0
    %v3939 = vadd.f32 0.0, %v3938
    %v3940 = vpop.f32.mrb[0].mxu0
    %3941 = vdwg.mxu0
    %3942 = vrot.lane.b32.xlu0 %v2688, 40
    %v3943 = vpop.permute.xlu0 %3942
    %v3946 = vsel %vm2694, %v3865, 0
    %3948 = vmatprep.subr.mxu0 0.0
    %3949 = vmatpush1.msra.mxu0 %v3943
    %3950 = vmatprep.subr.mxu0 0.0
    %3951 = vmatpush1.msra.mxu0 0.0
    %3952 = vmatprep.subr.mxu0 0.0
    %3953 = vmatpush1.msra.mxu0 0.0
    %3954 = vmatprep.subr.mxu0 0.0
    %3955 = vmatpush1.msra.mxu0 0.0
    %3956 = vmatprep.subr.mxu0 0.0
    %3957 = vmatpush1.msra.mxu0 0.0
    %3958 = vmatprep.subr.mxu0 0.0
    %3959 = vmatpush1.msra.mxu0 0.0
    %3960 = vmatprep.subr.mxu0 0.0
    %3961 = vmatpush1.msra.mxu0 0.0
    %3962 = vmatprep.subr.mxu0 0.0
    %3963 = vmatpush1.msra.mxu0 0.0
    %3964 = vmatprep.subr.mxu0 0.0
    %3965 = vmatpush1.msra.mxu0 0.0
    %3966 = vmatprep.subr.mxu0 0.0
    %3967 = vmatpush1.msra.mxu0 0.0
    %3968 = vmatprep.subr.mxu0 0.0
    %3969 = vmatpush1.msra.mxu0 0.0
    %3970 = vmatprep.subr.mxu0 0.0
    %3971 = vmatpush1.msra.mxu0 0.0
    %3972 = vmatprep.subr.mxu0 0.0
    %3973 = vmatpush1.msra.mxu0 0.0
    %3974 = vmatprep.subr.mxu0 0.0
    %3975 = vmatpush1.msra.mxu0 0.0
    %3976 = vmatprep.subr.mxu0 0.0
    %3977 = vmatpush1.msra.mxu0 0.0
    %3978 = vmatprep.subr.mxu0 0.0
    %3979 = vmatpush1.msra.mxu0 0.0
    %3980 = vmatprep.subr.mxu0 0.0
    %3981 = vmatpush1.msra.mxu0 0.0
    %3982 = vmatprep.subr.mxu0 0.0
    %3983 = vmatpush1.msra.mxu0 0.0
    %3984 = vmatprep.subr.mxu0 0.0
    %3985 = vmatpush1.msra.mxu0 0.0
    %3986 = vmatprep.subr.mxu0 0.0
    %3987 = vmatpush1.msra.mxu0 0.0
    %3988 = vmatprep.subr.mxu0 0.0
    %3989 = vmatpush1.msra.mxu0 0.0
    %3990 = vmatprep.subr.mxu0 0.0
    %3991 = vmatpush1.msra.mxu0 0.0
    %3992 = vmatprep.subr.mxu0 0.0
    %3993 = vmatpush1.msra.mxu0 0.0
    %3994 = vmatprep.subr.mxu0 0.0
    %3995 = vmatpush1.msra.mxu0 0.0
    %3996 = vmatprep.subr.mxu0 0.0
    %3997 = vmatpush1.msra.mxu0 0.0
    %3998 = vmatprep.subr.mxu0 0.0
    %3999 = vmatpush1.msra.mxu0 0.0
    %4000 = vmatprep.subr.mxu0 0.0
    %4001 = vmatpush1.msra.mxu0 0.0
    %4002 = vmatprep.subr.mxu0 0.0
    %4003 = vmatpush1.msra.mxu0 0.0
    %4004 = vmatprep.subr.mxu0 0.0
    %4005 = vmatpush1.msra.mxu0 0.0
    %4006 = vmatprep.subr.mxu0 0.0
    %4007 = vmatpush1.msra.mxu0 0.0
    %4008 = vmatprep.subr.mxu0 0.0
    %4009 = vmatpush1.msra.mxu0 0.0
    %4010 = vmatprep.subr.mxu0 0.0
    %4011 = vmatpush1.msra.mxu0 0.0
    %4012 = vmatprep.mubr.f32.mxu0 0.0
    %4013 = vmatmul.mubr.f32.gmra.mrb[0].mxu0 %v3946
    %v4014 = vpop.f32.mrb[0].mxu0
    %v4015 = vadd.f32 0.0, %v4014
    %v4016 = vpop.f32.mrb[0].mxu0
    %4017 = vdwg.mxu0
    %4020 = vrot.lane.b32.xlu0 %v3275, 8
    %v4021 = vpop.permute.xlu0 %4020
    %4022 = vrot.lane.b32.xlu0 %v3351, 8
    %v4023 = vpop.permute.xlu0 %4022
    %4028 = vrot.lane.b32.xlu0 %v3607, 16
    %v4029 = vpop.permute.xlu0 %4028
    %4030 = vrot.lane.b32.xlu0 %v3683, 16
    %v4031 = vpop.permute.xlu0 %4030
    %4036 = vrot.lane.b32.xlu0 %v3939, 24
    %v4037 = vpop.permute.xlu0 %4036
    %4038 = vrot.lane.b32.xlu0 %v4015, 24
    %v4039 = vpop.permute.xlu0 %4038
    %v4042 = vsel %vm2694, %v2943, %v4021
    %v4043 = vsel %vm2694, %v3019, %v4023
    %v4044 = vsel %vm183, %v4042, %v4029
    %v4045 = vsel %vm183, %v4043, %v4031
    %vm4046 = vcmask 195584
    %v4047 = vsel %vm4046, %v4044, %v4037
    %v4048 = vsel %vm4046, %v4045, %v4039
    %v4049 = vpack.c.bf16 %v4048, %v4047
    %v4050 = vld [vmem:[%s10] sm:$0xf]
    %v4051 = vld [vmem:[%s10 + $0x4] sm:$0xf]
    %v4052 = vld [vmem:[%s10 + $0x8] sm:$0xf]
    %v4053 = vld [vmem:[%s10 + $0xc] sm:$0xf]
    %v4054 = vld [vmem:[%s11] sm:$0x1]
    %v4056 = vlaneseq
    %v4057 = vshrl.u32 %v4056, 7
    %v4058 = vsub.s32 0, %v4057
    %v4059 = vrot.slane %v4054, %v4058
    %v4065 = vunpack.c.l.b16 %v4050
    %v4066 = vunpack.c.l.b16 %v4051
    %v4067 = vunpack.c.l.b16 %v4052
    %v4068 = vunpack.c.l.b16 %v4053
    %v4069 = vpack.c.b16 %v4066, %v4065
    %v4070 = vpack.c.b16 %v4068, %v4067
    %v4074 = vsel %vm136, %v4049, 0
    %4076 = vmatprep.subr.bf16.mxu0 0
    %4077 = vmatpush1.bf16.msra.mxu0 %v4069
    %4078 = vmatprep.subr.bf16.mxu0 0
    %4079 = vmatpush1.bf16.msra.mxu0 %v4070
    %4080 = vmatprep.subr.bf16.mxu0 0
    %4081 = vmatpush1.bf16.msra.mxu0 0
    %4082 = vmatprep.subr.bf16.mxu0 0
    %4083 = vmatpush1.bf16.msra.mxu0 0
    %4084 = vmatprep.subr.bf16.mxu0 0
    %4085 = vmatpush1.bf16.msra.mxu0 0
    %4086 = vmatprep.subr.bf16.mxu0 0
    %4087 = vmatpush1.bf16.msra.mxu0 0
    %4088 = vmatprep.subr.bf16.mxu0 0
    %4089 = vmatpush1.bf16.msra.mxu0 0
    %4090 = vmatprep.subr.bf16.mxu0 0
    %4091 = vmatpush1.bf16.msra.mxu0 0
    %4092 = vmatprep.subr.bf16.mxu0 0
    %4093 = vmatpush1.bf16.msra.mxu0 0
    %4094 = vmatprep.subr.bf16.mxu0 0
    %4095 = vmatpush1.bf16.msra.mxu0 0
    %4096 = vmatprep.subr.bf16.mxu0 0
    %4097 = vmatpush1.bf16.msra.mxu0 0
    %4098 = vmatprep.subr.bf16.mxu0 0
    %4099 = vmatpush1.bf16.msra.mxu0 0
    %4100 = vmatprep.subr.bf16.mxu0 0
    %4101 = vmatpush1.bf16.msra.mxu0 0
    %4102 = vmatprep.subr.bf16.mxu0 0
    %4103 = vmatpush1.bf16.msra.mxu0 0
    %4104 = vmatprep.subr.bf16.mxu0 0
    %4105 = vmatpush1.bf16.msra.mxu0 0
    %4106 = vmatprep.subr.bf16.mxu0 0
    %4107 = vmatpush1.bf16.msra.mxu0 0
    %4108 = vmatprep.mubr.bf16.mxu0 0
    %4109 = vmatmul.mubr.bf16.gmra.mrb[0].mxu0 %v4074
    %v4110 = vpop.f32.mrb[0].mxu0
    %v4111 = vadd.f32 %v4059, %v4110
    %v4112 = vpop.f32.mrb[0].mxu0
    %v4113 = vpop.f32.mrb[0].mxu0
    %v4114 = vadd.f32 %v4059, %v4113
    %v4115 = vpop.f32.mrb[0].mxu0
    %4116 = vdwg.mxu0
    %v4117 = vadd.f32 %v2576, %v4111
    %v4118 = vadd.f32 %v2577, %v4114
    %v4119 = vld [vmem:[%s12] sm:$0x1]
    %v4120 = vld [vmem:[%s13] sm:$0x1]
    %v4121 = vsel %vm136, %v4117, 0.0
    %4122 = vadd.xlane.f32.xlu0 %v4121
    %v4123 = vpop.xlane.xlu0 %4122
    %v4124 = vsel %vm136, %v4118, 0.0
    %4125 = vadd.xlane.f32.xlu0 %v4124
    %v4126 = vpop.xlane.xlu0 %4125
    %v4127 = vmul.f32 %v4123, %v2586
    %v4128 = vmul.f32 %v4126, %v2586
    %v4129 = vsub.f32 %v4117, %v4127
    %v4130 = vsub.f32 %v4118, %v4128
    %v4131 = vmul.f32 %v4129, %v4129
    %v4132 = vmul.f32 %v4130, %v4130
    %v4133 = vsel %vm136, %v4131, 0.0
    %4134 = vadd.xlane.f32.xlu0 %v4133
    %v4135 = vpop.xlane.xlu0 %4134
    %v4136 = vsel %vm136, %v4132, 0.0
    %4137 = vadd.xlane.f32.xlu0 %v4136
    %v4138 = vpop.xlane.xlu0 %4137
    %v4139 = vmul.f32 %v4135, %v2586
    %v4140 = vmul.f32 %v4138, %v2586
    %v4141 = vadd.f32 %v4139, 1e-05
    %v4142 = vadd.f32 %v4140, 1e-05
    %v4143 = vrsqrt.pop %v4141
    %v4144 = vrsqrt.pop %v4142
    %v4145 = vmul.f32 %v4129, %v4143
    %v4146 = vmul.f32 %v4130, %v4144
    %v4148 = vlaneseq
    %v4149 = vshrl.u32 %v4148, 7
    %v4150 = vsub.s32 0, %v4149
    %v4151 = vrot.slane %v4119, %v4150
    %v4153 = vmul.f32 %v4145, %v4151
    %v4154 = vmul.f32 %v4146, %v4151
    %v4156 = vlaneseq
    %v4157 = vshrl.u32 %v4156, 7
    %v4158 = vsub.s32 0, %v4157
    %v4159 = vrot.slane %v4120, %v4158
    %v4161 = vadd.f32 %v4153, %v4159
    %v4162 = vadd.f32 %v4154, %v4159
    %v4163 = vpack.c.bf16 %v4162, %v4161
    %v4164 = vld [vmem:[%s14] sm:$0xf]
    %v4165 = vld [vmem:[%s14 + $0x4] sm:$0xf]
    %v4166 = vld [vmem:[%s14 + $0x8] sm:$0xf]
    %v4167 = vld [vmem:[%s14 + $0xc] sm:$0xf]
    %v4168 = vld [vmem:[#allocation8] sm:$0x1]
    %v4170 = vlaneseq
    %v4171 = vshrl.u32 %v4170, 7
    %v4172 = vsub.s32 0, %v4171
    %v4173 = vrot.slane %v4168, %v4172
    %v4179 = vunpack.c.l.b16 %v4164
    %v4180 = vunpack.c.l.b16 %v4165
    %v4181 = vunpack.c.l.b16 %v4166
    %v4182 = vunpack.c.l.b16 %v4167
    %v4183 = vpack.c.b16 %v4180, %v4179
    %v4184 = vpack.c.b16 %v4182, %v4181
    %v4188 = vsel %vm136, %v4163, 0
    %4190 = vmatprep.subr.bf16.mxu0 0
    %4191 = vmatpush1.bf16.msra.mxu0 %v4183
    %4192 = vmatprep.subr.bf16.mxu0 0
    %4193 = vmatpush1.bf16.msra.mxu0 %v4184
    %4194 = vmatprep.subr.bf16.mxu0 0
    %4195 = vmatpush1.bf16.msra.mxu0 0
    %4196 = vmatprep.subr.bf16.mxu0 0
    %4197 = vmatpush1.bf16.msra.mxu0 0
    %4198 = vmatprep.subr.bf16.mxu0 0
    %4199 = vmatpush1.bf16.msra.mxu0 0
    %4200 = vmatprep.subr.bf16.mxu0 0
    %4201 = vmatpush1.bf16.msra.mxu0 0
    %4202 = vmatprep.subr.bf16.mxu0 0
    %4203 = vmatpush1.bf16.msra.mxu0 0
    %4204 = vmatprep.subr.bf16.mxu0 0
    %4205 = vmatpush1.bf16.msra.mxu0 0
    %4206 = vmatprep.subr.bf16.mxu0 0
    %4207 = vmatpush1.bf16.msra.mxu0 0
    %4208 = vmatprep.subr.bf16.mxu0 0
    %4209 = vmatpush1.bf16.msra.mxu0 0
    %4210 = vmatprep.subr.bf16.mxu0 0
    %4211 = vmatpush1.bf16.msra.mxu0 0
    %4212 = vmatprep.subr.bf16.mxu0 0
    %4213 = vmatpush1.bf16.msra.mxu0 0
    %4214 = vmatprep.subr.bf16.mxu0 0
    %4215 = vmatpush1.bf16.msra.mxu0 0
    %4216 = vmatprep.subr.bf16.mxu0 0
    %4217 = vmatpush1.bf16.msra.mxu0 0
    %4218 = vmatprep.subr.bf16.mxu0 0
    %4219 = vmatpush1.bf16.msra.mxu0 0
    %4220 = vmatprep.subr.bf16.mxu0 0
    %4221 = vmatpush1.bf16.msra.mxu0 0
    %4222 = vmatprep.mubr.bf16.mxu0 0
    %4223 = vmatmul.mubr.bf16.gmra.mrb[0].mxu0 %v4188
    %v4224 = vpop.f32.mrb[0].mxu0
    %v4225 = vadd.f32 %v4173, %v4224
    %v4226 = vpop.f32.mrb[0].mxu0
    %v4227 = vpop.f32.mrb[0].mxu0
    %v4228 = vadd.f32 %v4173, %v4227
    %v4229 = vpop.f32.mrb[0].mxu0
    %4230 = vdwg.mxu0
    %v4231 = vmul.f32 %v4225, %v4225
    %v4232 = vmul.f32 %v4228, %v4228
    %v4233 = vmul.f32 %v4225, %v4231
    %v4234 = vmul.f32 %v4228, %v4232
    %v4235 = vmul.f32 %v4233, 0.044715
    %v4236 = vmul.f32 %v4234, 0.044715
    %v4237 = vadd.f32 %v4225, %v4235
    %v4238 = vadd.f32 %v4228, %v4236
    %v4239 = vmul.f32 %v4237, 0.7978846
    %v4240 = vmul.f32 %v4238, 0.7978846
    %v4241 = vtanh.pop %v4239
    %v4242 = vtanh.pop %v4240
    %v4243 = vadd.f32 %v4241, 1.0
    %v4244 = vadd.f32 %v4242, 1.0
    %v4245 = vmul.f32 %v4243, 0.5
    %v4246 = vmul.f32 %v4244, 0.5
    %v4247 = vmul.f32 %v4225, %v4245
    %v4248 = vmul.f32 %v4228, %v4246
    %v4249 = vpack.c.bf16 %v4248, %v4247
    %v4250 = vld [vmem:[%s16] sm:$0xf]
    %v4251 = vld [vmem:[%s16 + $0x4] sm:$0xf]
    %v4252 = vld [vmem:[%s16 + $0x8] sm:$0xf]
    %v4253 = vld [vmem:[%s16 + $0xc] sm:$0xf]
    %v4254 = vld [vmem:[%s16 + $0x10] sm:$0xf]
    %v4255 = vld [vmem:[%s16 + $0x14] sm:$0xf]
    %v4256 = vld [vmem:[%s16 + $0x18] sm:$0xf]
    %v4257 = vld [vmem:[%s16 + $0x1c] sm:$0xf]
    %v4258 = vld [vmem:[%s16 + $0x20] sm:$0xf]
    %v4259 = vld [vmem:[%s16 + $0x24] sm:$0xf]
    %v4260 = vld [vmem:[%s16 + $0x28] sm:$0xf]
    %v4261 = vld [vmem:[%s16 + $0x2c] sm:$0xf]
    %v4262 = vld [vmem:[%s16 + $0x30] sm:$0xf]
    %v4263 = vld [vmem:[%s16 + $0x34] sm:$0xf]
    %v4264 = vld [vmem:[%s16 + $0x38] sm:$0xf]
    %v4265 = vld [vmem:[%s16 + $0x3c] sm:$0xf]
    %v4266 = vld [vmem:[%s17] sm:$0x1]
    %v4268 = vlaneseq
    %v4269 = vshrl.u32 %v4268, 7
    %v4270 = vsub.s32 0, %v4269
    %v4271 = vrot.slane %v4266, %v4270
    %v4289 = vunpack.c.l.b16 %v4250
    %v4290 = vunpack.c.l.b16 %v4251
    %v4291 = vunpack.c.l.b16 %v4252
    %v4292 = vunpack.c.l.b16 %v4253
    %v4293 = vunpack.c.l.b16 %v4254
    %v4294 = vunpack.c.l.b16 %v4255
    %v4295 = vunpack.c.l.b16 %v4256
    %v4296 = vunpack.c.l.b16 %v4257
    %v4297 = vunpack.c.l.b16 %v4258
    %v4298 = vunpack.c.l.b16 %v4259
    %v4299 = vunpack.c.l.b16 %v4260
    %v4300 = vunpack.c.l.b16 %v4261
    %v4301 = vunpack.c.l.b16 %v4262
    %v4302 = vunpack.c.l.b16 %v4263
    %v4303 = vunpack.c.l.b16 %v4264
    %v4304 = vunpack.c.l.b16 %v4265
    %v4305 = vpack.c.b16 %v4290, %v4289
    %v4306 = vpack.c.b16 %v4292, %v4291
    %v4307 = vpack.c.b16 %v4294, %v4293
    %v4308 = vpack.c.b16 %v4296, %v4295
    %v4309 = vpack.c.b16 %v4298, %v4297
    %v4310 = vpack.c.b16 %v4300, %v4299
    %v4311 = vpack.c.b16 %v4302, %v4301
    %v4312 = vpack.c.b16 %v4304, %v4303
    %4321 = vmatprep.subr.bf16.mxu0 0
    %4322 = vmatpush1.bf16.msra.mxu0 %v4305
    %4323 = vmatprep.subr.bf16.mxu0 0
    %4324 = vmatpush1.bf16.msra.mxu0 %v4306
    %4325 = vmatprep.subr.bf16.mxu0 0
    %4326 = vmatpush1.bf16.msra.mxu0 %v4307
    %4327 = vmatprep.subr.bf16.mxu0 0
    %4328 = vmatpush1.bf16.msra.mxu0 %v4308
    %4329 = vmatprep.subr.bf16.mxu0 0
    %4330 = vmatpush1.bf16.msra.mxu0 %v4309
    %4331 = vmatprep.subr.bf16.mxu0 0
    %4332 = vmatpush1.bf16.msra.mxu0 %v4310
    %4333 = vmatprep.subr.bf16.mxu0 0
    %4334 = vmatpush1.bf16.msra.mxu0 %v4311
    %4335 = vmatprep.subr.bf16.mxu0 0
    %4336 = vmatpush1.bf16.msra.mxu0 %v4312
    %4337 = vmatprep.subr.bf16.mxu0 0
    %4338 = vmatpush1.bf16.msra.mxu0 0
    %4339 = vmatprep.subr.bf16.mxu0 0
    %4340 = vmatpush1.bf16.msra.mxu0 0
    %4341 = vmatprep.subr.bf16.mxu0 0
    %4342 = vmatpush1.bf16.msra.mxu0 0
    %4343 = vmatprep.subr.bf16.mxu0 0
    %4344 = vmatpush1.bf16.msra.mxu0 0
    %4345 = vmatprep.subr.bf16.mxu0 0
    %4346 = vmatpush1.bf16.msra.mxu0 0
    %4347 = vmatprep.subr.bf16.mxu0 0
    %4348 = vmatpush1.bf16.msra.mxu0 0
    %4349 = vmatprep.subr.bf16.mxu0 0
    %4350 = vmatpush1.bf16.msra.mxu0 0
    %4351 = vmatprep.subr.bf16.mxu0 0
    %4352 = vmatpush1.bf16.msra.mxu0 0
    %4353 = vmatprep.mubr.bf16.mxu0 0
    %4354 = vmatmul.mubr.bf16.gmra.mrb[0].mxu0 %v4249
    %v4355 = vpop.f32.mrb[0].mxu0
    %v4356 = vadd.f32 %v4271, %v4355
    %v4357 = vpop.f32.mrb[0].mxu0
    %v4358 = vpop.f32.mrb[0].mxu0
    %v4359 = vadd.f32 %v4271, %v4358
    %v4360 = vpop.f32.mrb[0].mxu0
    %4361 = vdwg.mxu0
    %v4362 = vadd.f32 %v4117, %v4356
    %v4363 = vadd.f32 %v4118, %v4359
    %s4364 = scalar_lea.vmem %s6, 1
    %v4365 = vld [vmem:[%s4364] sm:$0x1]
    %s4366 = scalar_lea.vmem %s7, 1
    %v4367 = vld [vmem:[%s4366] sm:$0x1]
    %v4368 = vsel %vm136, %v4362, 0.0
    %4369 = vadd.xlane.f32.xlu0 %v4368
    %v4370 = vpop.xlane.xlu0 %4369
    %v4371 = vsel %vm136, %v4363, 0.0
    %4372 = vadd.xlane.f32.xlu0 %v4371
    %v4373 = vpop.xlane.xlu0 %4372
    %v4374 = vmul.f32 %v4370, %v2586
    %v4375 = vmul.f32 %v4373, %v2586
    %v4376 = vsub.f32 %v4362, %v4374
    %v4377 = vsub.f32 %v4363, %v4375
    %v4378 = vmul.f32 %v4376, %v4376
    %v4379 = vmul.f32 %v4377, %v4377
    %v4380 = vsel %vm136, %v4378, 0.0
    %4381 = vadd.xlane.f32.xlu0 %v4380
    %v4382 = vpop.xlane.xlu0 %4381
    %v4383 = vsel %vm136, %v4379, 0.0
    %4384 = vadd.xlane.f32.xlu0 %v4383
    %v4385 = vpop.xlane.xlu0 %4384
    %v4386 = vmul.f32 %v4382, %v2586
    %v4387 = vmul.f32 %v4385, %v2586
    %v4388 = vadd.f32 %v4386, 1e-05
    %v4389 = vadd.f32 %v4387, 1e-05
    %v4390 = vrsqrt.pop %v4388
    %v4391 = vrsqrt.pop %v4389
    %v4392 = vmul.f32 %v4376, %v4390
    %v4393 = vmul.f32 %v4377, %v4391
    %v4395 = vlaneseq
    %v4396 = vshrl.u32 %v4395, 7
    %v4397 = vsub.s32 0, %v4396
    %v4398 = vrot.slane %v4365, %v4397
    %v4400 = vmul.f32 %v4392, %v4398
    %v4401 = vmul.f32 %v4393, %v4398
    %v4403 = vlaneseq
    %v4404 = vshrl.u32 %v4403, 7
    %v4405 = vsub.s32 0, %v4404
    %v4406 = vrot.slane %v4367, %v4405
    %v4408 = vadd.f32 %v4400, %v4406
    %v4409 = vadd.f32 %v4401, %v4406
    %v4410 = vpack.c.bf16 %v4409, %v4408
    %s4411 = scalar_lea.vmem %s8, 16
    %v4412 = vld [vmem:[%s4411] sm:$0xf]
    %v4413 = vld [vmem:[%s4411 + $0x4] sm:$0xf]
    %v4414 = vld [vmem:[%s4411 + $0x8] sm:$0xf]
    %v4415 = vld [vmem:[%s4411 + $0xc] sm:$0xf]
    %s4416 = scalar_lea.vmem %s9, 1
    %v4417 = vld [vmem:[%s4416] sm:$0x1]
    %v4419 = vlaneseq
    %v4420 = vshrl.u32 %v4419, 7
    %v4421 = vsub.s32 0, %v4420
    %v4422 = vrot.slane %v4417, %v4421
    %v4428 = vunpack.c.l.b16 %v4412
    %v4429 = vunpack.c.l.b16 %v4413
    %v4430 = vunpack.c.l.b16 %v4414
    %v4431 = vunpack.c.l.b16 %v4415
    %v4432 = vpack.c.b16 %v4429, %v4428
    %v4433 = vpack.c.b16 %v4431, %v4430
    %v4437 = vsel %vm136, %v4410, 0
    %4439 = vmatprep.subr.bf16.mxu0 0
    %4440 = vmatpush1.bf16.msra.mxu0 %v4432
    %4441 = vmatprep.subr.bf16.mxu0 0
    %4442 = vmatpush1.bf16.msra.mxu0 %v4433
    %4443 = vmatprep.subr.bf16.mxu0 0
    %4444 = vmatpush1.bf16.msra.mxu0 0
    %4445 = vmatprep.subr.bf16.mxu0 0
    %4446 = vmatpush1.bf16.msra.mxu0 0
    %4447 = vmatprep.subr.bf16.mxu0 0
    %4448 = vmatpush1.bf16.msra.mxu0 0
    %4449 = vmatprep.subr.bf16.mxu0 0
    %4450 = vmatpush1.bf16.msra.mxu0 0
    %4451 = vmatprep.subr.bf16.mxu0 0
    %4452 = vmatpush1.bf16.msra.mxu0 0
    %4453 = vmatprep.subr.bf16.mxu0 0
    %4454 = vmatpush1.bf16.msra.mxu0 0
    %4455 = vmatprep.subr.bf16.mxu0 0
    %4456 = vmatpush1.bf16.msra.mxu0 0
    %4457 = vmatprep.subr.bf16.mxu0 0
    %4458 = vmatpush1.bf16.msra.mxu0 0
    %4459 = vmatprep.subr.bf16.mxu0 0
    %4460 = vmatpush1.bf16.msra.mxu0 0
    %4461 = vmatprep.subr.bf16.mxu0 0
    %4462 = vmatpush1.bf16.msra.mxu0 0
    %4463 = vmatprep.subr.bf16.mxu0 0
    %4464 = vmatpush1.bf16.msra.mxu0 0
    %4465 = vmatprep.subr.bf16.mxu0 0
    %4466 = vmatpush1.bf16.msra.mxu0 0
    %4467 = vmatprep.subr.bf16.mxu0 0
    %4468 = vmatpush1.bf16.msra.mxu0 0
    %4469 = vmatprep.subr.bf16.mxu0 0
    %4470 = vmatpush1.bf16.msra.mxu0 0
    %4471 = vmatprep.mubr.bf16.mxu0 0
    %4472 = vmatmul.mubr.bf16.gmra.mrb[0].mxu0 %v4437
    %v4473 = vpop.f32.mrb[0].mxu0
    %v4474 = vadd.f32 %v4422, %v4473
    %v4475 = vpop.f32.mrb[0].mxu0
    %v4476 = vpop.f32.mrb[0].mxu0
    %v4477 = vadd.f32 %v4422, %v4476
    %v4478 = vpop.f32.mrb[0].mxu0
    %4479 = vdwg.mxu0
    %4481 = vrot.lane.b32.xlu0 %v4474, 96
    %v4482 = vpop.permute.xlu0 %4481
    %v4483 = vsel %vm2694, %v4474, 0
    %v4485 = vsel %vm2694, %v4482, 0
    %4487 = vmatprep.subr.mxu0 0.0
    %4488 = vmatpush1.xpose.msra.mxu0 %v4485
    %4489 = vmatprep.subr.mxu0 0.0
    %4490 = vmatpush1.xpose.msra.mxu0 0.0
    %4491 = vmatprep.subr.mxu0 0.0
    %4492 = vmatpush1.xpose.msra.mxu0 0.0
    %4493 = vmatprep.subr.mxu0 0.0
    %4494 = vmatpush1.xpose.msra.mxu0 0.0
    %4495 = vmatprep.subr.mxu0 0.0
    %4496 = vmatpush1.xpose.msra.mxu0 0.0
    %4497 = vmatprep.subr.mxu0 0.0
    %4498 = vmatpush1.xpose.msra.mxu0 0.0
    %4499 = vmatprep.subr.mxu0 0.0
    %4500 = vmatpush1.xpose.msra.mxu0 0.0
    %4501 = vmatprep.subr.mxu0 0.0
    %4502 = vmatpush1.xpose.msra.mxu0 0.0
    %4503 = vmatprep.subr.mxu0 0.0
    %4504 = vmatpush1.xpose.msra.mxu0 0.0
    %4505 = vmatprep.subr.mxu0 0.0
    %4506 = vmatpush1.xpose.msra.mxu0 0.0
    %4507 = vmatprep.subr.mxu0 0.0
    %4508 = vmatpush1.xpose.msra.mxu0 0.0
    %4509 = vmatprep.subr.mxu0 0.0
    %4510 = vmatpush1.xpose.msra.mxu0 0.0
    %4511 = vmatprep.subr.mxu0 0.0
    %4512 = vmatpush1.xpose.msra.mxu0 0.0
    %4513 = vmatprep.subr.mxu0 0.0
    %4514 = vmatpush1.xpose.msra.mxu0 0.0
    %4515 = vmatprep.subr.mxu0 0.0
    %4516 = vmatpush1.xpose.msra.mxu0 0.0
    %4517 = vmatprep.subr.mxu0 0.0
    %4518 = vmatpush1.xpose.msra.mxu0 0.0
    %4519 = vmatprep.subr.mxu0 0.0
    %4520 = vmatpush1.xpose.msra.mxu0 0.0
    %4521 = vmatprep.subr.mxu0 0.0
    %4522 = vmatpush1.xpose.msra.mxu0 0.0
    %4523 = vmatprep.subr.mxu0 0.0
    %4524 = vmatpush1.xpose.msra.mxu0 0.0
    %4525 = vmatprep.subr.mxu0 0.0
    %4526 = vmatpush1.xpose.msra.mxu0 0.0
    %4527 = vmatprep.subr.mxu0 0.0
    %4528 = vmatpush1.xpose.msra.mxu0 0.0
    %4529 = vmatprep.subr.mxu0 0.0
    %4530 = vmatpush1.xpose.msra.mxu0 0.0
    %4531 = vmatprep.subr.mxu0 0.0
    %4532 = vmatpush1.xpose.msra.mxu0 0.0
    %4533 = vmatprep.subr.mxu0 0.0
    %4534 = vmatpush1.xpose.msra.mxu0 0.0
    %4535 = vmatprep.subr.mxu0 0.0
    %4536 = vmatpush1.xpose.msra.mxu0 0.0
    %4537 = vmatprep.subr.mxu0 0.0
    %4538 = vmatpush1.xpose.msra.mxu0 0.0
    %4539 = vmatprep.subr.mxu0 0.0
    %4540 = vmatpush1.xpose.msra.mxu0 0.0
    %4541 = vmatprep.subr.mxu0 0.0
    %4542 = vmatpush1.xpose.msra.mxu0 0.0
    %4543 = vmatprep.subr.mxu0 0.0
    %4544 = vmatpush1.xpose.msra.mxu0 0.0
    %4545 = vmatprep.subr.mxu0 0.0
    %4546 = vmatpush1.xpose.msra.mxu0 0.0
    %4547 = vmatprep.subr.mxu0 0.0
    %4548 = vmatpush1.xpose.msra.mxu0 0.0
    %4549 = vmatprep.subr.mxu0 0.0
    %4550 = vmatpush1.xpose.msra.mxu0 0.0
    %4551 = vmatprep.mubr.f32.mxu0 0.0
    %4552 = vmatmul.mubr.f32.gmra.mrb[0].mxu0 %v4483
    %v4553 = vpop.f32.mrb[0].mxu0
    %v4554 = vadd.f32 0.0, %v4553
    %v4555 = vpop.f32.mrb[0].mxu0
    %4556 = vdwg.mxu0
    %4558 = vrot.lane.b32.xlu0 %v4477, 96
    %v4559 = vpop.permute.xlu0 %4558
    %v4560 = vsel %vm2694, %v4477, 0
    %v4562 = vsel %vm2694, %v4559, 0
    %4564 = vmatprep.subr.mxu0 0.0
    %4565 = vmatpush1.xpose.msra.mxu0 %v4562
    %4566 = vmatprep.subr.mxu0 0.0
    %4567 = vmatpush1.xpose.msra.mxu0 0.0
    %4568 = vmatprep.subr.mxu0 0.0
    %4569 = vmatpush1.xpose.msra.mxu0 0.0
    %4570 = vmatprep.subr.mxu0 0.0
    %4571 = vmatpush1.xpose.msra.mxu0 0.0
    %4572 = vmatprep.subr.mxu0 0.0
    %4573 = vmatpush1.xpose.msra.mxu0 0.0
    %4574 = vmatprep.subr.mxu0 0.0
    %4575 = vmatpush1.xpose.msra.mxu0 0.0
    %4576 = vmatprep.subr.mxu0 0.0
    %4577 = vmatpush1.xpose.msra.mxu0 0.0
    %4578 = vmatprep.subr.mxu0 0.0
    %4579 = vmatpush1.xpose.msra.mxu0 0.0
    %4580 = vmatprep.subr.mxu0 0.0
    %4581 = vmatpush1.xpose.msra.mxu0 0.0
    %4582 = vmatprep.subr.mxu0 0.0
    %4583 = vmatpush1.xpose.msra.mxu0 0.0
    %4584 = vmatprep.subr.mxu0 0.0
    %4585 = vmatpush1.xpose.msra.mxu0 0.0
    %4586 = vmatprep.subr.mxu0 0.0
    %4587 = vmatpush1.xpose.msra.mxu0 0.0
    %4588 = vmatprep.subr.mxu0 0.0
    %4589 = vmatpush1.xpose.msra.mxu0 0.0
    %4590 = vmatprep.subr.mxu0 0.0
    %4591 = vmatpush1.xpose.msra.mxu0 0.0
    %4592 = vmatprep.subr.mxu0 0.0
    %4593 = vmatpush1.xpose.msra.mxu0 0.0
    %4594 = vmatprep.subr.mxu0 0.0
    %4595 = vmatpush1.xpose.msra.mxu0 0.0
    %4596 = vmatprep.subr.mxu0 0.0
    %4597 = vmatpush1.xpose.msra.mxu0 0.0
    %4598 = vmatprep.subr.mxu0 0.0
    %4599 = vmatpush1.xpose.msra.mxu0 0.0
    %4600 = vmatprep.subr.mxu0 0.0
    %4601 = vmatpush1.xpose.msra.mxu0 0.0
    %4602 = vmatprep.subr.mxu0 0.0
    %4603 = vmatpush1.xpose.msra.mxu0 0.0
    %4604 = vmatprep.subr.mxu0 0.0
    %4605 = vmatpush1.xpose.msra.mxu0 0.0
    %4606 = vmatprep.subr.mxu0 0.0
    %4607 = vmatpush1.xpose.msra.mxu0 0.0
    %4608 = vmatprep.subr.mxu0 0.0
    %4609 = vmatpush1.xpose.msra.mxu0 0.0
    %4610 = vmatprep.subr.mxu0 0.0
    %4611 = vmatpush1.xpose.msra.mxu0 0.0
    %4612 = vmatprep.subr.mxu0 0.0
    %4613 = vmatpush1.xpose.msra.mxu0 0.0
    %4614 = vmatprep.subr.mxu0 0.0
    %4615 = vmatpush1.xpose.msra.mxu0 0.0
    %4616 = vmatprep.subr.mxu0 0.0
    %4617 = vmatpush1.xpose.msra.mxu0 0.0
    %4618 = vmatprep.subr.mxu0 0.0
    %4619 = vmatpush1.xpose.msra.mxu0 0.0
    %4620 = vmatprep.subr.mxu0 0.0
    %4621 = vmatpush1.xpose.msra.mxu0 0.0
    %4622 = vmatprep.subr.mxu0 0.0
    %4623 = vmatpush1.xpose.msra.mxu0 0.0
    %4624 = vmatprep.subr.mxu0 0.0
    %4625 = vmatpush1.xpose.msra.mxu0 0.0
    %4626 = vmatprep.subr.mxu0 0.0
    %4627 = vmatpush1.xpose.msra.mxu0 0.0
    %4628 = vmatprep.mubr.f32.mxu0 0.0
    %4629 = vmatmul.mubr.f32.gmra.mrb[0].mxu0 %v4560
    %v4630 = vpop.f32.mrb[0].mxu0
    %v4631 = vadd.f32 0.0, %v4630
    %v4632 = vpop.f32.mrb[0].mxu0
    %4633 = vdwg.mxu0
    %v4634 = vmul.f32 %v4554, 0.35355338
    %v4635 = vmul.f32 %v4631, 0.35355338
    %v4636 = vsel %vm2694, %v4634, -inf
    %4637 = vmax.xlane.f32.xlu0 %v4636
    %v4638 = vpop.xlane.xlu0 %4637
    %v4639 = vsel %vm2694, %v4635, -inf
    %4640 = vmax.xlane.f32.xlu0 %v4639
    %v4641 = vpop.xlane.xlu0 %4640
    %v4642 = vsub.f32 %v4634, %v4638
    %v4643 = vsub.f32 %v4635, %v4641
    %v4644 = vmul.f32 %v4642, 1.442695
    %v4645 = vpow.pop %v4644
    %v4646 = vmul.f32 %v4643, 1.442695
    %v4647 = vpow.pop %v4646
    %v4648 = vsel %vm2694, %v4645, 0.0
    %4649 = vadd.xlane.f32.xlu0 %v4648
    %v4650 = vpop.xlane.xlu0 %4649
    %v4651 = vsel %vm2694, %v4647, 0.0
    %4652 = vadd.xlane.f32.xlu0 %v4651
    %v4653 = vpop.xlane.xlu0 %4652
    %v4654 = vrcp.pop %v4650
    %v4655 = vrcp.pop %v4653
    %v4656 = vmul.f32 %v4645, %v4654
    %v4657 = vmul.f32 %v4647, %v4655
    %4658 = vrot.lane.b32.xlu0 %v4474, 64
    %v4659 = vpop.permute.xlu0 %4658
    %v4662 = vsel %vm2694, %v4656, 0
    %4664 = vmatprep.subr.mxu0 0.0
    %4665 = vmatpush1.msra.mxu0 %v4659
    %4666 = vmatprep.subr.mxu0 0.0
    %4667 = vmatpush1.msra.mxu0 0.0
    %4668 = vmatprep.subr.mxu0 0.0
    %4669 = vmatpush1.msra.mxu0 0.0
    %4670 = vmatprep.subr.mxu0 0.0
    %4671 = vmatpush1.msra.mxu0 0.0
    %4672 = vmatprep.subr.mxu0 0.0
    %4673 = vmatpush1.msra.mxu0 0.0
    %4674 = vmatprep.subr.mxu0 0.0
    %4675 = vmatpush1.msra.mxu0 0.0
    %4676 = vmatprep.subr.mxu0 0.0
    %4677 = vmatpush1.msra.mxu0 0.0
    %4678 = vmatprep.subr.mxu0 0.0
    %4679 = vmatpush1.msra.mxu0 0.0
    %4680 = vmatprep.subr.mxu0 0.0
    %4681 = vmatpush1.msra.mxu0 0.0
    %4682 = vmatprep.subr.mxu0 0.0
    %4683 = vmatpush1.msra.mxu0 0.0
    %4684 = vmatprep.subr.mxu0 0.0
    %4685 = vmatpush1.msra.mxu0 0.0
    %4686 = vmatprep.subr.mxu0 0.0
    %4687 = vmatpush1.msra.mxu0 0.0
    %4688 = vmatprep.subr.mxu0 0.0
    %4689 = vmatpush1.msra.mxu0 0.0
    %4690 = vmatprep.subr.mxu0 0.0
    %4691 = vmatpush1.msra.mxu0 0.0
    %4692 = vmatprep.subr.mxu0 0.0
    %4693 = vmatpush1.msra.mxu0 0.0
    %4694 = vmatprep.subr.mxu0 0.0
    %4695 = vmatpush1.msra.mxu0 0.0
    %4696 = vmatprep.subr.mxu0 0.0
    %4697 = vmatpush1.msra.mxu0 0.0
    %4698 = vmatprep.subr.mxu0 0.0
    %4699 = vmatpush1.msra.mxu0 0.0
    %4700 = vmatprep.subr.mxu0 0.0
    %4701 = vmatpush1.msra.mxu0 0.0
    %4702 = vmatprep.subr.mxu0 0.0
    %4703 = vmatpush1.msra.mxu0 0.0
    %4704 = vmatprep.subr.mxu0 0.0
    %4705 = vmatpush1.msra.mxu0 0.0
    %4706 = vmatprep.subr.mxu0 0.0
    %4707 = vmatpush1.msra.mxu0 0.0
    %4708 = vmatprep.subr.mxu0 0.0
    %4709 = vmatpush1.msra.mxu0 0.0
    %4710 = vmatprep.subr.mxu0 0.0
    %4711 = vmatpush1.msra.mxu0 0.0
    %4712 = vmatprep.subr.mxu0 0.0
    %4713 = vmatpush1.msra.mxu0 0.0
    %4714 = vmatprep.subr.mxu0 0.0
    %4715 = vmatpush1.msra.mxu0 0.0
    %4716 = vmatprep.subr.mxu0 0.0
    %4717 = vmatpush1.msra.mxu0 0.0
    %4718 = vmatprep.subr.mxu0 0.0
    %4719 = vmatpush1.msra.mxu0 0.0
    %4720 = vmatprep.subr.mxu0 0.0
    %4721 = vmatpush1.msra.mxu0 0.0
    %4722 = vmatprep.subr.mxu0 0.0
    %4723 = vmatpush1.msra.mxu0 0.0
    %4724 = vmatprep.subr.mxu0 0.0
    %4725 = vmatpush1.msra.mxu0 0.0
    %4726 = vmatprep.subr.mxu0 0.0
    %4727 = vmatpush1.msra.mxu0 0.0
    %4728 = vmatprep.mubr.f32.mxu0 0.0
    %4729 = vmatmul.mubr.f32.gmra.mrb[0].mxu0 %v4662
    %v4730 = vpop.f32.mrb[0].mxu0
    %v4731 = vadd.f32 0.0, %v4730
    %v4732 = vpop.f32.mrb[0].mxu0
    %4733 = vdwg.mxu0
    %4734 = vrot.lane.b32.xlu0 %v4477, 64
    %v4735 = vpop.permute.xlu0 %4734
    %v4738 = vsel %vm2694, %v4657, 0
    %4740 = vmatprep.subr.mxu0 0.0
    %4741 = vmatpush1.msra.mxu0 %v4735
    %4742 = vmatprep.subr.mxu0 0.0
    %4743 = vmatpush1.msra.mxu0 0.0
    %4744 = vmatprep.subr.mxu0 0.0
    %4745 = vmatpush1.msra.mxu0 0.0
    %4746 = vmatprep.subr.mxu0 0.0
    %4747 = vmatpush1.msra.mxu0 0.0
    %4748 = vmatprep.subr.mxu0 0.0
    %4749 = vmatpush1.msra.mxu0 0.0
    %4750 = vmatprep.subr.mxu0 0.0
    %4751 = vmatpush1.msra.mxu0 0.0
    %4752 = vmatprep.subr.mxu0 0.0
    %4753 = vmatpush1.msra.mxu0 0.0
    %4754 = vmatprep.subr.mxu0 0.0
    %4755 = vmatpush1.msra.mxu0 0.0
    %4756 = vmatprep.subr.mxu0 0.0
    %4757 = vmatpush1.msra.mxu0 0.0
    %4758 = vmatprep.subr.mxu0 0.0
    %4759 = vmatpush1.msra.mxu0 0.0
    %4760 = vmatprep.subr.mxu0 0.0
    %4761 = vmatpush1.msra.mxu0 0.0
    %4762 = vmatprep.subr.mxu0 0.0
    %4763 = vmatpush1.msra.mxu0 0.0
    %4764 = vmatprep.subr.mxu0 0.0
    %4765 = vmatpush1.msra.mxu0 0.0
    %4766 = vmatprep.subr.mxu0 0.0
    %4767 = vmatpush1.msra.mxu0 0.0
    %4768 = vmatprep.subr.mxu0 0.0
    %4769 = vmatpush1.msra.mxu0 0.0
    %4770 = vmatprep.subr.mxu0 0.0
    %4771 = vmatpush1.msra.mxu0 0.0
    %4772 = vmatprep.subr.mxu0 0.0
    %4773 = vmatpush1.msra.mxu0 0.0
    %4774 = vmatprep.subr.mxu0 0.0
    %4775 = vmatpush1.msra.mxu0 0.0
    %4776 = vmatprep.subr.mxu0 0.0
    %4777 = vmatpush1.msra.mxu0 0.0
    %4778 = vmatprep.subr.mxu0 0.0
    %4779 = vmatpush1.msra.mxu0 0.0
    %4780 = vmatprep.subr.mxu0 0.0
    %4781 = vmatpush1.msra.mxu0 0.0
    %4782 = vmatprep.subr.mxu0 0.0
    %4783 = vmatpush1.msra.mxu0 0.0
    %4784 = vmatprep.subr.mxu0 0.0
    %4785 = vmatpush1.msra.mxu0 0.0
    %4786 = vmatprep.subr.mxu0 0.0
    %4787 = vmatpush1.msra.mxu0 0.0
    %4788 = vmatprep.subr.mxu0 0.0
    %4789 = vmatpush1.msra.mxu0 0.0
    %4790 = vmatprep.subr.mxu0 0.0
    %4791 = vmatpush1.msra.mxu0 0.0
    %4792 = vmatprep.subr.mxu0 0.0
    %4793 = vmatpush1.msra.mxu0 0.0
    %4794 = vmatprep.subr.mxu0 0.0
    %4795 = vmatpush1.msra.mxu0 0.0
    %4796 = vmatprep.subr.mxu0 0.0
    %4797 = vmatpush1.msra.mxu0 0.0
    %4798 = vmatprep.subr.mxu0 0.0
    %4799 = vmatpush1.msra.mxu0 0.0
    %4800 = vmatprep.subr.mxu0 0.0
    %4801 = vmatpush1.msra.mxu0 0.0
    %4802 = vmatprep.subr.mxu0 0.0
    %4803 = vmatpush1.msra.mxu0 0.0
    %4804 = vmatprep.mubr.f32.mxu0 0.0
    %4805 = vmatmul.mubr.f32.gmra.mrb[0].mxu0 %v4738
    %v4806 = vpop.f32.mrb[0].mxu0
    %v4807 = vadd.f32 0.0, %v4806
    %v4808 = vpop.f32.mrb[0].mxu0
    %4809 = vdwg.mxu0
    %4810 = vrot.lane.b32.xlu0 %v4474, 120
    %v4811 = vpop.permute.xlu0 %4810
    %4812 = vrot.lane.b32.xlu0 %v4474, 88
    %v4813 = vpop.permute.xlu0 %4812
    %v4814 = vsel %vm2694, %v4811, 0
    %v4816 = vsel %vm2694, %v4813, 0
    %4818 = vmatprep.subr.mxu0 0.0
    %4819 = vmatpush1.xpose.msra.mxu0 %v4816
    %4820 = vmatprep.subr.mxu0 0.0
    %4821 = vmatpush1.xpose.msra.mxu0 0.0
    %4822 = vmatprep.subr.mxu0 0.0
    %4823 = vmatpush1.xpose.msra.mxu0 0.0
    %4824 = vmatprep.subr.mxu0 0.0
    %4825 = vmatpush1.xpose.msra.mxu0 0.0
    %4826 = vmatprep.subr.mxu0 0.0
    %4827 = vmatpush1.xpose.msra.mxu0 0.0
    %4828 = vmatprep.subr.mxu0 0.0
    %4829 = vmatpush1.xpose.msra.mxu0 0.0
    %4830 = vmatprep.subr.mxu0 0.0
    %4831 = vmatpush1.xpose.msra.mxu0 0.0
    %4832 = vmatprep.subr.mxu0 0.0
    %4833 = vmatpush1.xpose.msra.mxu0 0.0
    %4834 = vmatprep.subr.mxu0 0.0
    %4835 = vmatpush1.xpose.msra.mxu0 0.0
    %4836 = vmatprep.subr.mxu0 0.0
    %4837 = vmatpush1.xpose.msra.mxu0 0.0
    %4838 = vmatprep.subr.mxu0 0.0
    %4839 = vmatpush1.xpose.msra.mxu0 0.0
    %4840 = vmatprep.subr.mxu0 0.0
    %4841 = vmatpush1.xpose.msra.mxu0 0.0
    %4842 = vmatprep.subr.mxu0 0.0
    %4843 = vmatpush1.xpose.msra.mxu0 0.0
    %4844 = vmatprep.subr.mxu0 0.0
    %4845 = vmatpush1.xpose.msra.mxu0 0.0
    %4846 = vmatprep.subr.mxu0 0.0
    %4847 = vmatpush1.xpose.msra.mxu0 0.0
    %4848 = vmatprep.subr.mxu0 0.0
    %4849 = vmatpush1.xpose.msra.mxu0 0.0
    %4850 = vmatprep.subr.mxu0 0.0
    %4851 = vmatpush1.xpose.msra.mxu0 0.0
    %4852 = vmatprep.subr.mxu0 0.0
    %4853 = vmatpush1.xpose.msra.mxu0 0.0
    %4854 = vmatprep.subr.mxu0 0.0
    %4855 = vmatpush1.xpose.msra.mxu0 0.0
    %4856 = vmatprep.subr.mxu0 0.0
    %4857 = vmatpush1.xpose.msra.mxu0 0.0
    %4858 = vmatprep.subr.mxu0 0.0
    %4859 = vmatpush1.xpose.msra.mxu0 0.0
    %4860 = vmatprep.subr.mxu0 0.0
    %4861 = vmatpush1.xpose.msra.mxu0 0.0
    %4862 = vmatprep.subr.mxu0 0.0
    %4863 = vmatpush1.xpose.msra.mxu0 0.0
    %4864 = vmatprep.subr.mxu0 0.0
    %4865 = vmatpush1.xpose.msra.mxu0 0.0
    %4866 = vmatprep.subr.mxu0 0.0
    %4867 = vmatpush1.xpose.msra.mxu0 0.0
    %4868 = vmatprep.subr.mxu0 0.0
    %4869 = vmatpush1.xpose.msra.mxu0 0.0
    %4870 = vmatprep.subr.mxu0 0.0
    %4871 = vmatpush1.xpose.msra.mxu0 0.0
    %4872 = vmatprep.subr.mxu0 0.0
    %4873 = vmatpush1.xpose.msra.mxu0 0.0
    %4874 = vmatprep.subr.mxu0 0.0
    %4875 = vmatpush1.xpose.msra.mxu0 0.0
    %4876 = vmatprep.subr.mxu0 0.0
    %4877 = vmatpush1.xpose.msra.mxu0 0.0
    %4878 = vmatprep.subr.mxu0 0.0
    %4879 = vmatpush1.xpose.msra.mxu0 0.0
    %4880 = vmatprep.subr.mxu0 0.0
    %4881 = vmatpush1.xpose.msra.mxu0 0.0
    %4882 = vmatprep.mubr.f32.mxu0 0.0
    %4883 = vmatmul.mubr.f32.gmra.mrb[0].mxu0 %v4814
    %v4884 = vpop.f32.mrb[0].mxu0
    %v4885 = vadd.f32 0.0, %v4884
    %v4886 = vpop.f32.mrb[0].mxu0
    %4887 = vdwg.mxu0
    %4888 = vrot.lane.b32.xlu0 %v4477, 120
    %v4889 = vpop.permute.xlu0 %4888
    %4890 = vrot.lane.b32.xlu0 %v4477, 88
    %v4891 = vpop.permute.xlu0 %4890
    %v4892 = vsel %vm2694, %v4889, 0
    %v4894 = vsel %vm2694, %v4891, 0
    %4896 = vmatprep.subr.mxu0 0.0
    %4897 = vmatpush1.xpose.msra.mxu0 %v4894
    %4898 = vmatprep.subr.mxu0 0.0
    %4899 = vmatpush1.xpose.msra.mxu0 0.0
    %4900 = vmatprep.subr.mxu0 0.0
    %4901 = vmatpush1.xpose.msra.mxu0 0.0
    %4902 = vmatprep.subr.mxu0 0.0
    %4903 = vmatpush1.xpose.msra.mxu0 0.0
    %4904 = vmatprep.subr.mxu0 0.0
    %4905 = vmatpush1.xpose.msra.mxu0 0.0
    %4906 = vmatprep.subr.mxu0 0.0
    %4907 = vmatpush1.xpose.msra.mxu0 0.0
    %4908 = vmatprep.subr.mxu0 0.0
    %4909 = vmatpush1.xpose.msra.mxu0 0.0
    %4910 = vmatprep.subr.mxu0 0.0
    %4911 = vmatpush1.xpose.msra.mxu0 0.0
    %4912 = vmatprep.subr.mxu0 0.0
    %4913 = vmatpush1.xpose.msra.mxu0 0.0
    %4914 = vmatprep.subr.mxu0 0.0
    %4915 = vmatpush1.xpose.msra.mxu0 0.0
    %4916 = vmatprep.subr.mxu0 0.0
    %4917 = vmatpush1.xpose.msra.mxu0 0.0
    %4918 = vmatprep.subr.mxu0 0.0
    %4919 = vmatpush1.xpose.msra.mxu0 0.0
    %4920 = vmatprep.subr.mxu0 0.0
    %4921 = vmatpush1.xpose.msra.mxu0 0.0
    %4922 = vmatprep.subr.mxu0 0.0
    %4923 = vmatpush1.xpose.msra.mxu0 0.0
    %4924 = vmatprep.subr.mxu0 0.0
    %4925 = vmatpush1.xpose.msra.mxu0 0.0
    %4926 = vmatprep.subr.mxu0 0.0
    %4927 = vmatpush1.xpose.msra.mxu0 0.0
    %4928 = vmatprep.subr.mxu0 0.0
    %4929 = vmatpush1.xpose.msra.mxu0 0.0
    %4930 = vmatprep.subr.mxu0 0.0
    %4931 = vmatpush1.xpose.msra.mxu0 0.0
    %4932 = vmatprep.subr.mxu0 0.0
    %4933 = vmatpush1.xpose.msra.mxu0 0.0
    %4934 = vmatprep.subr.mxu0 0.0
    %4935 = vmatpush1.xpose.msra.mxu0 0.0
    %4936 = vmatprep.subr.mxu0 0.0
    %4937 = vmatpush1.xpose.msra.mxu0 0.0
    %4938 = vmatprep.subr.mxu0 0.0
    %4939 = vmatpush1.xpose.msra.mxu0 0.0
    %4940 = vmatprep.subr.mxu0 0.0
    %4941 = vmatpush1.xpose.msra.mxu0 0.0
    %4942 = vmatprep.subr.mxu0 0.0
    %4943 = vmatpush1.xpose.msra.mxu0 0.0
    %4944 = vmatprep.subr.mxu0 0.0
    %4945 = vmatpush1.xpose.msra.mxu0 0.0
    %4946 = vmatprep.subr.mxu0 0.0
    %4947 = vmatpush1.xpose.msra.mxu0 0.0
    %4948 = vmatprep.subr.mxu0 0.0
    %4949 = vmatpush1.xpose.msra.mxu0 0.0
    %4950 = vmatprep.subr.mxu0 0.0
    %4951 = vmatpush1.xpose.msra.mxu0 0.0
    %4952 = vmatprep.subr.mxu0 0.0
    %4953 = vmatpush1.xpose.msra.mxu0 0.0
    %4954 = vmatprep.subr.mxu0 0.0
    %4955 = vmatpush1.xpose.msra.mxu0 0.0
    %4956 = vmatprep.subr.mxu0 0.0
    %4957 = vmatpush1.xpose.msra.mxu0 0.0
    %4958 = vmatprep.subr.mxu0 0.0
    %4959 = vmatpush1.xpose.msra.mxu0 0.0
    %4960 = vmatprep.mubr.f32.mxu0 0.0
    %4961 = vmatmul.mubr.f32.gmra.mrb[0].mxu0 %v4892
    %v4962 = vpop.f32.mrb[0].mxu0
    %v4963 = vadd.f32 0.0, %v4962
    %v4964 = vpop.f32.mrb[0].mxu0
    %4965 = vdwg.mxu0
    %v4966 = vmul.f32 %v4885, 0.35355338
    %v4967 = vmul.f32 %v4963, 0.35355338
    %v4968 = vsel %vm2694, %v4966, -inf
    %4969 = vmax.xlane.f32.xlu0 %v4968
    %v4970 = vpop.xlane.xlu0 %4969
    %v4971 = vsel %vm2694, %v4967, -inf
    %4972 = vmax.xlane.f32.xlu0 %v4971
    %v4973 = vpop.xlane.xlu0 %4972
    %v4974 = vsub.f32 %v4966, %v4970
    %v4975 = vsub.f32 %v4967, %v4973
    %v4976 = vmul.f32 %v4974, 1.442695
    %v4977 = vpow.pop %v4976
    %v4978 = vmul.f32 %v4975, 1.442695
    %v4979 = vpow.pop %v4978
    %v4980 = vsel %vm2694, %v4977, 0.0
    %4981 = vadd.xlane.f32.xlu0 %v4980
    %v4982 = vpop.xlane.xlu0 %4981
    %v4983 = vsel %vm2694, %v4979, 0.0
    %4984 = vadd.xlane.f32.xlu0 %v4983
    %v4985 = vpop.xlane.xlu0 %4984
    %v4986 = vrcp.pop %v4982
    %v4987 = vrcp.pop %v4985
    %v4988 = vmul.f32 %v4977, %v4986
    %v4989 = vmul.f32 %v4979, %v4987
    %4990 = vrot.lane.b32.xlu0 %v4474, 56
    %v4991 = vpop.permute.xlu0 %4990
    %v4994 = vsel %vm2694, %v4988, 0
    %4996 = vmatprep.subr.mxu0 0.0
    %4997 = vmatpush1.msra.mxu0 %v4991
    %4998 = vmatprep.subr.mxu0 0.0
    %4999 = vmatpush1.msra.mxu0 0.0
    %5000 = vmatprep.subr.mxu0 0.0
    %5001 = vmatpush1.msra.mxu0 0.0
    %5002 = vmatprep.subr.mxu0 0.0
    %5003 = vmatpush1.msra.mxu0 0.0
    %5004 = vmatprep.subr.mxu0 0.0
    %5005 = vmatpush1.msra.mxu0 0.0
    %5006 = vmatprep.subr.mxu0 0.0
    %5007 = vmatpush1.msra.mxu0 0.0
    %5008 = vmatprep.subr.mxu0 0.0
    %5009 = vmatpush1.msra.mxu0 0.0
    %5010 = vmatprep.subr.mxu0 0.0
    %5011 = vmatpush1.msra.mxu0 0.0
    %5012 = vmatprep.subr.mxu0 0.0
    %5013 = vmatpush1.msra.mxu0 0.0
    %5014 = vmatprep.subr.mxu0 0.0
    %5015 = vmatpush1.msra.mxu0 0.0
    %5016 = vmatprep.subr.mxu0 0.0
    %5017 = vmatpush1.msra.mxu0 0.0
    %5018 = vmatprep.subr.mxu0 0.0
    %5019 = vmatpush1.msra.mxu0 0.0
    %5020 = vmatprep.subr.mxu0 0.0
    %5021 = vmatpush1.msra.mxu0 0.0
    %5022 = vmatprep.subr.mxu0 0.0
    %5023 = vmatpush1.msra.mxu0 0.0
    %5024 = vmatprep.subr.mxu0 0.0
    %5025 = vmatpush1.msra.mxu0 0.0
    %5026 = vmatprep.subr.mxu0 0.0
    %5027 = vmatpush1.msra.mxu0 0.0
    %5028 = vmatprep.subr.mxu0 0.0
    %5029 = vmatpush1.msra.mxu0 0.0
    %5030 = vmatprep.subr.mxu0 0.0
    %5031 = vmatpush1.msra.mxu0 0.0
    %5032 = vmatprep.subr.mxu0 0.0
    %5033 = vmatpush1.msra.mxu0 0.0
    %5034 = vmatprep.subr.mxu0 0.0
    %5035 = vmatpush1.msra.mxu0 0.0
    %5036 = vmatprep.subr.mxu0 0.0
    %5037 = vmatpush1.msra.mxu0 0.0
    %5038 = vmatprep.subr.mxu0 0.0
    %5039 = vmatpush1.msra.mxu0 0.0
    %5040 = vmatprep.subr.mxu0 0.0
    %5041 = vmatpush1.msra.mxu0 0.0
    %5042 = vmatprep.subr.mxu0 0.0
    %5043 = vmatpush1.msra.mxu0 0.0
    %5044 = vmatprep.subr.mxu0 0.0
    %5045 = vmatpush1.msra.mxu0 0.0
    %5046 = vmatprep.subr.mxu0 0.0
    %5047 = vmatpush1.msra.mxu0 0.0
    %5048 = vmatprep.subr.mxu0 0.0
    %5049 = vmatpush1.msra.mxu0 0.0
    %5050 = vmatprep.subr.mxu0 0.0
    %5051 = vmatpush1.msra.mxu0 0.0
    %5052 = vmatprep.subr.mxu0 0.0
    %5053 = vmatpush1.msra.mxu0 0.0
    %5054 = vmatprep.subr.mxu0 0.0
    %5055 = vmatpush1.msra.mxu0 0.0
    %5056 = vmatprep.subr.mxu0 0.0
    %5057 = vmatpush1.msra.mxu0 0.0
    %5058 = vmatprep.subr.mxu0 0.0
    %5059 = vmatpush1.msra.mxu0 0.0
    %5060 = vmatprep.mubr.f32.mxu0 0.0
    %5061 = vmatmul.mubr.f32.gmra.mrb[0].mxu0 %v4994
    %v5062 = vpop.f32.mrb[0].mxu0
    %v5063 = vadd.f32 0.0, %v5062
    %v5064 = vpop.f32.mrb[0].mxu0
    %5065 = vdwg.mxu0
    %5066 = vrot.lane.b32.xlu0 %v4477, 56
    %v5067 = vpop.permute.xlu0 %5066
    %v5070 = vsel %vm2694, %v4989, 0
    %5072 = vmatprep.subr.mxu0 0.0
    %5073 = vmatpush1.msra.mxu0 %v5067
    %5074 = vmatprep.subr.mxu0 0.0
    %5075 = vmatpush1.msra.mxu0 0.0
    %5076 = vmatprep.subr.mxu0 0.0
    %5077 = vmatpush1.msra.mxu0 0.0
    %5078 = vmatprep.subr.mxu0 0.0
    %5079 = vmatpush1.msra.mxu0 0.0
    %5080 = vmatprep.subr.mxu0 0.0
    %5081 = vmatpush1.msra.mxu0 0.0
    %5082 = vmatprep.subr.mxu0 0.0
    %5083 = vmatpush1.msra.mxu0 0.0
    %5084 = vmatprep.subr.mxu0 0.0
    %5085 = vmatpush1.msra.mxu0 0.0
    %5086 = vmatprep.subr.mxu0 0.0
    %5087 = vmatpush1.msra.mxu0 0.0
    %5088 = vmatprep.subr.mxu0 0.0
    %5089 = vmatpush1.msra.mxu0 0.0
    %5090 = vmatprep.subr.mxu0 0.0
    %5091 = vmatpush1.msra.mxu0 0.0
    %5092 = vmatprep.subr.mxu0 0.0
    %5093 = vmatpush1.msra.mxu0 0.0
    %5094 = vmatprep.subr.mxu0 0.0
    %5095 = vmatpush1.msra.mxu0 0.0
    %5096 = vmatprep.subr.mxu0 0.0
    %5097 = vmatpush1.msra.mxu0 0.0
    %5098 = vmatprep.subr.mxu0 0.0
    %5099 = vmatpush1.msra.mxu0 0.0
    %5100 = vmatprep.subr.mxu0 0.0
    %5101 = vmatpush1.msra.mxu0 0.0
    %5102 = vmatprep.subr.mxu0 0.0
    %5103 = vmatpush1.msra.mxu0 0.0
    %5104 = vmatprep.subr.mxu0 0.0
    %5105 = vmatpush1.msra.mxu0 0.0
    %5106 = vmatprep.subr.mxu0 0.0
    %5107 = vmatpush1.msra.mxu0 0.0
    %5108 = vmatprep.subr.mxu0 0.0
    %5109 = vmatpush1.msra.mxu0 0.0
    %5110 = vmatprep.subr.mxu0 0.0
    %5111 = vmatpush1.msra.mxu0 0.0
    %5112 = vmatprep.subr.mxu0 0.0
    %5113 = vmatpush1.msra.mxu0 0.0
    %5114 = vmatprep.subr.mxu0 0.0
    %5115 = vmatpush1.msra.mxu0 0.0
    %5116 = vmatprep.subr.mxu0 0.0
    %5117 = vmatpush1.msra.mxu0 0.0
    %5118 = vmatprep.subr.mxu0 0.0
    %5119 = vmatpush1.msra.mxu0 0.0
    %5120 = vmatprep.subr.mxu0 0.0
    %5121 = vmatpush1.msra.mxu0 0.0
    %5122 = vmatprep.subr.mxu0 0.0
    %5123 = vmatpush1.msra.mxu0 0.0
    %5124 = vmatprep.subr.mxu0 0.0
    %5125 = vmatpush1.msra.mxu0 0.0
    %5126 = vmatprep.subr.mxu0 0.0
    %5127 = vmatpush1.msra.mxu0 0.0
    %5128 = vmatprep.subr.mxu0 0.0
    %5129 = vmatpush1.msra.mxu0 0.0
    %5130 = vmatprep.subr.mxu0 0.0
    %5131 = vmatpush1.msra.mxu0 0.0
    %5132 = vmatprep.subr.mxu0 0.0
    %5133 = vmatpush1.msra.mxu0 0.0
    %5134 = vmatprep.subr.mxu0 0.0
    %5135 = vmatpush1.msra.mxu0 0.0
    %5136 = vmatprep.mubr.f32.mxu0 0.0
    %5137 = vmatmul.mubr.f32.gmra.mrb[0].mxu0 %v5070
    %v5138 = vpop.f32.mrb[0].mxu0
    %v5139 = vadd.f32 0.0, %v5138
    %v5140 = vpop.f32.mrb[0].mxu0
    %5141 = vdwg.mxu0
    %5142 = vrot.lane.b32.xlu0 %v4474, 112
    %v5143 = vpop.permute.xlu0 %5142
    %5144 = vrot.lane.b32.xlu0 %v4474, 80
    %v5145 = vpop.permute.xlu0 %5144
    %v5146 = vsel %vm2694, %v5143, 0
    %v5148 = vsel %vm2694, %v5145, 0
    %5150 = vmatprep.subr.mxu0 0.0
    %5151 = vmatpush1.xpose.msra.mxu0 %v5148
    %5152 = vmatprep.subr.mxu0 0.0
    %5153 = vmatpush1.xpose.msra.mxu0 0.0
    %5154 = vmatprep.subr.mxu0 0.0
    %5155 = vmatpush1.xpose.msra.mxu0 0.0
    %5156 = vmatprep.subr.mxu0 0.0
    %5157 = vmatpush1.xpose.msra.mxu0 0.0
    %5158 = vmatprep.subr.mxu0 0.0
    %5159 = vmatpush1.xpose.msra.mxu0 0.0
    %5160 = vmatprep.subr.mxu0 0.0
    %5161 = vmatpush1.xpose.msra.mxu0 0.0
    %5162 = vmatprep.subr.mxu0 0.0
    %5163 = vmatpush1.xpose.msra.mxu0 0.0
    %5164 = vmatprep.subr.mxu0 0.0
    %5165 = vmatpush1.xpose.msra.mxu0 0.0
    %5166 = vmatprep.subr.mxu0 0.0
    %5167 = vmatpush1.xpose.msra.mxu0 0.0
    %5168 = vmatprep.subr.mxu0 0.0
    %5169 = vmatpush1.xpose.msra.mxu0 0.0
    %5170 = vmatprep.subr.mxu0 0.0
    %5171 = vmatpush1.xpose.msra.mxu0 0.0
    %5172 = vmatprep.subr.mxu0 0.0
    %5173 = vmatpush1.xpose.msra.mxu0 0.0
    %5174 = vmatprep.subr.mxu0 0.0
    %5175 = vmatpush1.xpose.msra.mxu0 0.0
    %5176 = vmatprep.subr.mxu0 0.0
    %5177 = vmatpush1.xpose.msra.mxu0 0.0
    %5178 = vmatprep.subr.mxu0 0.0
    %5179 = vmatpush1.xpose.msra.mxu0 0.0
    %5180 = vmatprep.subr.mxu0 0.0
    %5181 = vmatpush1.xpose.msra.mxu0 0.0
    %5182 = vmatprep.subr.mxu0 0.0
    %5183 = vmatpush1.xpose.msra.mxu0 0.0
    %5184 = vmatprep.subr.mxu0 0.0
    %5185 = vmatpush1.xpose.msra.mxu0 0.0
    %5186 = vmatprep.subr.mxu0 0.0
    %5187 = vmatpush1.xpose.msra.mxu0 0.0
    %5188 = vmatprep.subr.mxu0 0.0
    %5189 = vmatpush1.xpose.msra.mxu0 0.0
    %5190 = vmatprep.subr.mxu0 0.0
    %5191 = vmatpush1.xpose.msra.mxu0 0.0
    %5192 = vmatprep.subr.mxu0 0.0
    %5193 = vmatpush1.xpose.msra.mxu0 0.0
    %5194 = vmatprep.subr.mxu0 0.0
    %5195 = vmatpush1.xpose.msra.mxu0 0.0
    %5196 = vmatprep.subr.mxu0 0.0
    %5197 = vmatpush1.xpose.msra.mxu0 0.0
    %5198 = vmatprep.subr.mxu0 0.0
    %5199 = vmatpush1.xpose.msra.mxu0 0.0
    %5200 = vmatprep.subr.mxu0 0.0
    %5201 = vmatpush1.xpose.msra.mxu0 0.0
    %5202 = vmatprep.subr.mxu0 0.0
    %5203 = vmatpush1.xpose.msra.mxu0 0.0
    %5204 = vmatprep.subr.mxu0 0.0
    %5205 = vmatpush1.xpose.msra.mxu0 0.0
    %5206 = vmatprep.subr.mxu0 0.0
    %5207 = vmatpush1.xpose.msra.mxu0 0.0
    %5208 = vmatprep.subr.mxu0 0.0
    %5209 = vmatpush1.xpose.msra.mxu0 0.0
    %5210 = vmatprep.subr.mxu0 0.0
    %5211 = vmatpush1.xpose.msra.mxu0 0.0
    %5212 = vmatprep.subr.mxu0 0.0
    %5213 = vmatpush1.xpose.msra.mxu0 0.0
    %5214 = vmatprep.mubr.f32.mxu0 0.0
    %5215 = vmatmul.mubr.f32.gmra.mrb[0].mxu0 %v5146
    %v5216 = vpop.f32.mrb[0].mxu0
    %v5217 = vadd.f32 0.0, %v5216
    %v5218 = vpop.f32.mrb[0].mxu0
    %5219 = vdwg.mxu0
    %5220 = vrot.lane.b32.xlu0 %v4477, 112
    %v5221 = vpop.permute.xlu0 %5220
    %5222 = vrot.lane.b32.xlu0 %v4477, 80
    %v5223 = vpop.permute.xlu0 %5222
    %v5224 = vsel %vm2694, %v5221, 0
    %v5226 = vsel %vm2694, %v5223, 0
    %5228 = vmatprep.subr.mxu0 0.0
    %5229 = vmatpush1.xpose.msra.mxu0 %v5226
    %5230 = vmatprep.subr.mxu0 0.0
    %5231 = vmatpush1.xpose.msra.mxu0 0.0
    %5232 = vmatprep.subr.mxu0 0.0
    %5233 = vmatpush1.xpose.msra.mxu0 0.0
    %5234 = vmatprep.subr.mxu0 0.0
    %5235 = vmatpush1.xpose.msra.mxu0 0.0
    %5236 = vmatprep.subr.mxu0 0.0
    %5237 = vmatpush1.xpose.msra.mxu0 0.0
    %5238 = vmatprep.subr.mxu0 0.0
    %5239 = vmatpush1.xpose.msra.mxu0 0.0
    %5240 = vmatprep.subr.mxu0 0.0
    %5241 = vmatpush1.xpose.msra.mxu0 0.0
    %5242 = vmatprep.subr.mxu0 0.0
    %5243 = vmatpush1.xpose.msra.mxu0 0.0
    %5244 = vmatprep.subr.mxu0 0.0
    %5245 = vmatpush1.xpose.msra.mxu0 0.0
    %5246 = vmatprep.subr.mxu0 0.0
    %5247 = vmatpush1.xpose.msra.mxu0 0.0
    %5248 = vmatprep.subr.mxu0 0.0
    %5249 = vmatpush1.xpose.msra.mxu0 0.0
    %5250 = vmatprep.subr.mxu0 0.0
    %5251 = vmatpush1.xpose.msra.mxu0 0.0
    %5252 = vmatprep.subr.mxu0 0.0
    %5253 = vmatpush1.xpose.msra.mxu0 0.0
    %5254 = vmatprep.subr.mxu0 0.0
    %5255 = vmatpush1.xpose.msra.mxu0 0.0
    %5256 = vmatprep.subr.mxu0 0.0
    %5257 = vmatpush1.xpose.msra.mxu0 0.0
    %5258 = vmatprep.subr.mxu0 0.0
    %5259 = vmatpush1.xpose.msra.mxu0 0.0
    %5260 = vmatprep.subr.mxu0 0.0
    %5261 = vmatpush1.xpose.msra.mxu0 0.0
    %5262 = vmatprep.subr.mxu0 0.0
    %5263 = vmatpush1.xpose.msra.mxu0 0.0
    %5264 = vmatprep.subr.mxu0 0.0
    %5265 = vmatpush1.xpose.msra.mxu0 0.0
    %5266 = vmatprep.subr.mxu0 0.0
    %5267 = vmatpush1.xpose.msra.mxu0 0.0
    %5268 = vmatprep.subr.mxu0 0.0
    %5269 = vmatpush1.xpose.msra.mxu0 0.0
    %5270 = vmatprep.subr.mxu0 0.0
    %5271 = vmatpush1.xpose.msra.mxu0 0.0
    %5272 = vmatprep.subr.mxu0 0.0
    %5273 = vmatpush1.xpose.msra.mxu0 0.0
    %5274 = vmatprep.subr.mxu0 0.0
    %5275 = vmatpush1.xpose.msra.mxu0 0.0
    %5276 = vmatprep.subr.mxu0 0.0
    %5277 = vmatpush1.xpose.msra.mxu0 0.0
    %5278 = vmatprep.subr.mxu0 0.0
    %5279 = vmatpush1.xpose.msra.mxu0 0.0
    %5280 = vmatprep.subr.mxu0 0.0
    %5281 = vmatpush1.xpose.msra.mxu0 0.0
    %5282 = vmatprep.subr.mxu0 0.0
    %5283 = vmatpush1.xpose.msra.mxu0 0.0
    %5284 = vmatprep.subr.mxu0 0.0
    %5285 = vmatpush1.xpose.msra.mxu0 0.0
    %5286 = vmatprep.subr.mxu0 0.0
    %5287 = vmatpush1.xpose.msra.mxu0 0.0
    %5288 = vmatprep.subr.mxu0 0.0
    %5289 = vmatpush1.xpose.msra.mxu0 0.0
    %5290 = vmatprep.subr.mxu0 0.0
    %5291 = vmatpush1.xpose.msra.mxu0 0.0
    %5292 = vmatprep.mubr.f32.mxu0 0.0
    %5293 = vmatmul.mubr.f32.gmra.mrb[0].mxu0 %v5224
    %v5294 = vpop.f32.mrb[0].mxu0
    %v5295 = vadd.f32 0.0, %v5294
    %v5296 = vpop.f32.mrb[0].mxu0
    %5297 = vdwg.mxu0
    %v5298 = vmul.f32 %v5217, 0.35355338
    %v5299 = vmul.f32 %v5295, 0.35355338
    %v5300 = vsel %vm2694, %v5298, -inf
    %5301 = vmax.xlane.f32.xlu0 %v5300
    %v5302 = vpop.xlane.xlu0 %5301
    %v5303 = vsel %vm2694, %v5299, -inf
    %5304 = vmax.xlane.f32.xlu0 %v5303
    %v5305 = vpop.xlane.xlu0 %5304
    %v5306 = vsub.f32 %v5298, %v5302
    %v5307 = vsub.f32 %v5299, %v5305
    %v5308 = vmul.f32 %v5306, 1.442695
    %v5309 = vpow.pop %v5308
    %v5310 = vmul.f32 %v5307, 1.442695
    %v5311 = vpow.pop %v5310
    %v5312 = vsel %vm2694, %v5309, 0.0
    %5313 = vadd.xlane.f32.xlu0 %v5312
    %v5314 = vpop.xlane.xlu0 %5313
    %v5315 = vsel %vm2694, %v5311, 0.0
    %5316 = vadd.xlane.f32.xlu0 %v5315
    %v5317 = vpop.xlane.xlu0 %5316
    %v5318 = vrcp.pop %v5314
    %v5319 = vrcp.pop %v5317
    %v5320 = vmul.f32 %v5309, %v5318
    %v5321 = vmul.f32 %v5311, %v5319
    %5322 = vrot.lane.b32.xlu0 %v4474, 48
    %v5323 = vpop.permute.xlu0 %5322
    %v5326 = vsel %vm2694, %v5320, 0
    %5328 = vmatprep.subr.mxu0 0.0
    %5329 = vmatpush1.msra.mxu0 %v5323
    %5330 = vmatprep.subr.mxu0 0.0
    %5331 = vmatpush1.msra.mxu0 0.0
    %5332 = vmatprep.subr.mxu0 0.0
    %5333 = vmatpush1.msra.mxu0 0.0
    %5334 = vmatprep.subr.mxu0 0.0
    %5335 = vmatpush1.msra.mxu0 0.0
    %5336 = vmatprep.subr.mxu0 0.0
    %5337 = vmatpush1.msra.mxu0 0.0
    %5338 = vmatprep.subr.mxu0 0.0
    %5339 = vmatpush1.msra.mxu0 0.0
    %5340 = vmatprep.subr.mxu0 0.0
    %5341 = vmatpush1.msra.mxu0 0.0
    %5342 = vmatprep.subr.mxu0 0.0
    %5343 = vmatpush1.msra.mxu0 0.0
    %5344 = vmatprep.subr.mxu0 0.0
    %5345 = vmatpush1.msra.mxu0 0.0
    %5346 = vmatprep.subr.mxu0 0.0
    %5347 = vmatpush1.msra.mxu0 0.0
    %5348 = vmatprep.subr.mxu0 0.0
    %5349 = vmatpush1.msra.mxu0 0.0
    %5350 = vmatprep.subr.mxu0 0.0
    %5351 = vmatpush1.msra.mxu0 0.0
    %5352 = vmatprep.subr.mxu0 0.0
    %5353 = vmatpush1.msra.mxu0 0.0
    %5354 = vmatprep.subr.mxu0 0.0
    %5355 = vmatpush1.msra.mxu0 0.0
    %5356 = vmatprep.subr.mxu0 0.0
    %5357 = vmatpush1.msra.mxu0 0.0
    %5358 = vmatprep.subr.mxu0 0.0
    %5359 = vmatpush1.msra.mxu0 0.0
    %5360 = vmatprep.subr.mxu0 0.0
    %5361 = vmatpush1.msra.mxu0 0.0
    %5362 = vmatprep.subr.mxu0 0.0
    %5363 = vmatpush1.msra.mxu0 0.0
    %5364 = vmatprep.subr.mxu0 0.0
    %5365 = vmatpush1.msra.mxu0 0.0
    %5366 = vmatprep.subr.mxu0 0.0
    %5367 = vmatpush1.msra.mxu0 0.0
    %5368 = vmatprep.subr.mxu0 0.0
    %5369 = vmatpush1.msra.mxu0 0.0
    %5370 = vmatprep.subr.mxu0 0.0
    %5371 = vmatpush1.msra.mxu0 0.0
    %5372 = vmatprep.subr.mxu0 0.0
    %5373 = vmatpush1.msra.mxu0 0.0
    %5374 = vmatprep.subr.mxu0 0.0
    %5375 = vmatpush1.msra.mxu0 0.0
    %5376 = vmatprep.subr.mxu0 0.0
    %5377 = vmatpush1.msra.mxu0 0.0
    %5378 = vmatprep.subr.mxu0 0.0
    %5379 = vmatpush1.msra.mxu0 0.0
    %5380 = vmatprep.subr.mxu0 0.0
    %5381 = vmatpush1.msra.mxu0 0.0
    %5382 = vmatprep.subr.mxu0 0.0
    %5383 = vmatpush1.msra.mxu0 0.0
    %5384 = vmatprep.subr.mxu0 0.0
    %5385 = vmatpush1.msra.mxu0 0.0
    %5386 = vmatprep.subr.mxu0 0.0
    %5387 = vmatpush1.msra.mxu0 0.0
    %5388 = vmatprep.subr.mxu0 0.0
    %5389 = vmatpush1.msra.mxu0 0.0
    %5390 = vmatprep.subr.mxu0 0.0
    %5391 = vmatpush1.msra.mxu0 0.0
    %5392 = vmatprep.mubr.f32.mxu0 0.0
    %5393 = vmatmul.mubr.f32.gmra.mrb[0].mxu0 %v5326
    %v5394 = vpop.f32.mrb[0].mxu0
    %v5395 = vadd.f32 0.0, %v5394
    %v5396 = vpop.f32.mrb[0].mxu0
    %5397 = vdwg.mxu0
    %5398 = vrot.lane.b32.xlu0 %v4477, 48
    %v5399 = vpop.permute.xlu0 %5398
    %v5402 = vsel %vm2694, %v5321, 0
    %5404 = vmatprep.subr.mxu0 0.0
    %5405 = vmatpush1.msra.mxu0 %v5399
    %5406 = vmatprep.subr.mxu0 0.0
    %5407 = vmatpush1.msra.mxu0 0.0
    %5408 = vmatprep.subr.mxu0 0.0
    %5409 = vmatpush1.msra.mxu0 0.0
    %5410 = vmatprep.subr.mxu0 0.0
    %5411 = vmatpush1.msra.mxu0 0.0
    %5412 = vmatprep.subr.mxu0 0.0
    %5413 = vmatpush1.msra.mxu0 0.0
    %5414 = vmatprep.subr.mxu0 0.0
    %5415 = vmatpush1.msra.mxu0 0.0
    %5416 = vmatprep.subr.mxu0 0.0
    %5417 = vmatpush1.msra.mxu0 0.0
    %5418 = vmatprep.subr.mxu0 0.0
    %5419 = vmatpush1.msra.mxu0 0.0
    %5420 = vmatprep.subr.mxu0 0.0
    %5421 = vmatpush1.msra.mxu0 0.0
    %5422 = vmatprep.subr.mxu0 0.0
    %5423 = vmatpush1.msra.mxu0 0.0
    %5424 = vmatprep.subr.mxu0 0.0
    %5425 = vmatpush1.msra.mxu0 0.0
    %5426 = vmatprep.subr.mxu0 0.0
    %5427 = vmatpush1.msra.mxu0 0.0
    %5428 = vmatprep.subr.mxu0 0.0
    %5429 = vmatpush1.msra.mxu0 0.0
    %5430 = vmatprep.subr.mxu0 0.0
    %5431 = vmatpush1.msra.mxu0 0.0
    %5432 = vmatprep.subr.mxu0 0.0
    %5433 = vmatpush1.msra.mxu0 0.0
    %5434 = vmatprep.subr.mxu0 0.0
    %5435 = vmatpush1.msra.mxu0 0.0
    %5436 = vmatprep.subr.mxu0 0.0
    %5437 = vmatpush1.msra.mxu0 0.0
    %5438 = vmatprep.subr.mxu0 0.0
    %5439 = vmatpush1.msra.mxu0 0.0
    %5440 = vmatprep.subr.mxu0 0.0
    %5441 = vmatpush1.msra.mxu0 0.0
    %5442 = vmatprep.subr.mxu0 0.0
    %5443 = vmatpush1.msra.mxu0 0.0
    %5444 = vmatprep.subr.mxu0 0.0
    %5445 = vmatpush1.msra.mxu0 0.0
    %5446 = vmatprep.subr.mxu0 0.0
    %5447 = vmatpush1.msra.mxu0 0.0
    %5448 = vmatprep.subr.mxu0 0.0
    %5449 = vmatpush1.msra.mxu0 0.0
    %5450 = vmatprep.subr.mxu0 0.0
    %5451 = vmatpush1.msra.mxu0 0.0
    %5452 = vmatprep.subr.mxu0 0.0
    %5453 = vmatpush1.msra.mxu0 0.0
    %5454 = vmatprep.subr.mxu0 0.0
    %5455 = vmatpush1.msra.mxu0 0.0
    %5456 = vmatprep.subr.mxu0 0.0
    %5457 = vmatpush1.msra.mxu0 0.0
    %5458 = vmatprep.subr.mxu0 0.0
    %5459 = vmatpush1.msra.mxu0 0.0
    %5460 = vmatprep.subr.mxu0 0.0
    %5461 = vmatpush1.msra.mxu0 0.0
    %5462 = vmatprep.subr.mxu0 0.0
    %5463 = vmatpush1.msra.mxu0 0.0
    %5464 = vmatprep.subr.mxu0 0.0
    %5465 = vmatpush1.msra.mxu0 0.0
    %5466 = vmatprep.subr.mxu0 0.0
    %5467 = vmatpush1.msra.mxu0 0.0
    %5468 = vmatprep.mubr.f32.mxu0 0.0
    %5469 = vmatmul.mubr.f32.gmra.mrb[0].mxu0 %v5402
    %v5470 = vpop.f32.mrb[0].mxu0
    %v5471 = vadd.f32 0.0, %v5470
    %v5472 = vpop.f32.mrb[0].mxu0
    %5473 = vdwg.mxu0
    %5474 = vrot.lane.b32.xlu0 %v4474, 104
    %v5475 = vpop.permute.xlu0 %5474
    %5476 = vrot.lane.b32.xlu0 %v4474, 72
    %v5477 = vpop.permute.xlu0 %5476
    %v5478 = vsel %vm2694, %v5475, 0
    %v5480 = vsel %vm2694, %v5477, 0
    %5482 = vmatprep.subr.mxu0 0.0
    %5483 = vmatpush1.xpose.msra.mxu0 %v5480
    %5484 = vmatprep.subr.mxu0 0.0
    %5485 = vmatpush1.xpose.msra.mxu0 0.0
    %5486 = vmatprep.subr.mxu0 0.0
    %5487 = vmatpush1.xpose.msra.mxu0 0.0
    %5488 = vmatprep.subr.mxu0 0.0
    %5489 = vmatpush1.xpose.msra.mxu0 0.0
    %5490 = vmatprep.subr.mxu0 0.0
    %5491 = vmatpush1.xpose.msra.mxu0 0.0
    %5492 = vmatprep.subr.mxu0 0.0
    %5493 = vmatpush1.xpose.msra.mxu0 0.0
    %5494 = vmatprep.subr.mxu0 0.0
    %5495 = vmatpush1.xpose.msra.mxu0 0.0
    %5496 = vmatprep.subr.mxu0 0.0
    %5497 = vmatpush1.xpose.msra.mxu0 0.0
    %5498 = vmatprep.subr.mxu0 0.0
    %5499 = vmatpush1.xpose.msra.mxu0 0.0
    %5500 = vmatprep.subr.mxu0 0.0
    %5501 = vmatpush1.xpose.msra.mxu0 0.0
    %5502 = vmatprep.subr.mxu0 0.0
    %5503 = vmatpush1.xpose.msra.mxu0 0.0
    %5504 = vmatprep.subr.mxu0 0.0
    %5505 = vmatpush1.xpose.msra.mxu0 0.0
    %5506 = vmatprep.subr.mxu0 0.0
    %5507 = vmatpush1.xpose.msra.mxu0 0.0
    %5508 = vmatprep.subr.mxu0 0.0
    %5509 = vmatpush1.xpose.msra.mxu0 0.0
    %5510 = vmatprep.subr.mxu0 0.0
    %5511 = vmatpush1.xpose.msra.mxu0 0.0
    %5512 = vmatprep.subr.mxu0 0.0
    %5513 = vmatpush1.xpose.msra.mxu0 0.0
    %5514 = vmatprep.subr.mxu0 0.0
    %5515 = vmatpush1.xpose.msra.mxu0 0.0
    %5516 = vmatprep.subr.mxu0 0.0
    %5517 = vmatpush1.xpose.msra.mxu0 0.0
    %5518 = vmatprep.subr.mxu0 0.0
    %5519 = vmatpush1.xpose.msra.mxu0 0.0
    %5520 = vmatprep.subr.mxu0 0.0
    %5521 = vmatpush1.xpose.msra.mxu0 0.0
    %5522 = vmatprep.subr.mxu0 0.0
    %5523 = vmatpush1.xpose.msra.mxu0 0.0
    %5524 = vmatprep.subr.mxu0 0.0
    %5525 = vmatpush1.xpose.msra.mxu0 0.0
    %5526 = vmatprep.subr.mxu0 0.0
    %5527 = vmatpush1.xpose.msra.mxu0 0.0
    %5528 = vmatprep.subr.mxu0 0.0
    %5529 = vmatpush1.xpose.msra.mxu0 0.0
    %5530 = vmatprep.subr.mxu0 0.0
    %5531 = vmatpush1.xpose.msra.mxu0 0.0
    %5532 = vmatprep.subr.mxu0 0.0
    %5533 = vmatpush1.xpose.msra.mxu0 0.0
    %5534 = vmatprep.subr.mxu0 0.0
    %5535 = vmatpush1.xpose.msra.mxu0 0.0
    %5536 = vmatprep.subr.mxu0 0.0
    %5537 = vmatpush1.xpose.msra.mxu0 0.0
    %5538 = vmatprep.subr.mxu0 0.0
    %5539 = vmatpush1.xpose.msra.mxu0 0.0
    %5540 = vmatprep.subr.mxu0 0.0
    %5541 = vmatpush1.xpose.msra.mxu0 0.0
    %5542 = vmatprep.subr.mxu0 0.0
    %5543 = vmatpush1.xpose.msra.mxu0 0.0
    %5544 = vmatprep.subr.mxu0 0.0
    %5545 = vmatpush1.xpose.msra.mxu0 0.0
    %5546 = vmatprep.mubr.f32.mxu0 0.0
    %5547 = vmatmul.mubr.f32.gmra.mrb[0].mxu0 %v5478
    %v5548 = vpop.f32.mrb[0].mxu0
    %v5549 = vadd.f32 0.0, %v5548
    %v5550 = vpop.f32.mrb[0].mxu0
    %5551 = vdwg.mxu0
    %5552 = vrot.lane.b32.xlu0 %v4477, 104
    %v5553 = vpop.permute.xlu0 %5552
    %5554 = vrot.lane.b32.xlu0 %v4477, 72
    %v5555 = vpop.permute.xlu0 %5554
    %v5556 = vsel %vm2694, %v5553, 0
    %v5558 = vsel %vm2694, %v5555, 0
    %5560 = vmatprep.subr.mxu0 0.0
    %5561 = vmatpush1.xpose.msra.mxu0 %v5558
    %5562 = vmatprep.subr.mxu0 0.0
    %5563 = vmatpush1.xpose.msra.mxu0 0.0
    %5564 = vmatprep.subr.mxu0 0.0
    %5565 = vmatpush1.xpose.msra.mxu0 0.0
    %5566 = vmatprep.subr.mxu0 0.0
    %5567 = vmatpush1.xpose.msra.mxu0 0.0
    %5568 = vmatprep.subr.mxu0 0.0
    %5569 = vmatpush1.xpose.msra.mxu0 0.0
    %5570 = vmatprep.subr.mxu0 0.0
    %5571 = vmatpush1.xpose.msra.mxu0 0.0
    %5572 = vmatprep.subr.mxu0 0.0
    %5573 = vmatpush1.xpose.msra.mxu0 0.0
    %5574 = vmatprep.subr.mxu0 0.0
    %5575 = vmatpush1.xpose.msra.mxu0 0.0
    %5576 = vmatprep.subr.mxu0 0.0
    %5577 = vmatpush1.xpose.msra.mxu0 0.0
    %5578 = vmatprep.subr.mxu0 0.0
    %5579 = vmatpush1.xpose.msra.mxu0 0.0
    %5580 = vmatprep.subr.mxu0 0.0
    %5581 = vmatpush1.xpose.msra.mxu0 0.0
    %5582 = vmatprep.subr.mxu0 0.0
    %5583 = vmatpush1.xpose.msra.mxu0 0.0
    %5584 = vmatprep.subr.mxu0 0.0
    %5585 = vmatpush1.xpose.msra.mxu0 0.0
    %5586 = vmatprep.subr.mxu0 0.0
    %5587 = vmatpush1.xpose.msra.mxu0 0.0
    %5588 = vmatprep.subr.mxu0 0.0
    %5589 = vmatpush1.xpose.msra.mxu0 0.0
    %5590 = vmatprep.subr.mxu0 0.0
    %5591 = vmatpush1.xpose.msra.mxu0 0.0
    %5592 = vmatprep.subr.mxu0 0.0
    %5593 = vmatpush1.xpose.msra.mxu0 0.0
    %5594 = vmatprep.subr.mxu0 0.0
    %5595 = vmatpush1.xpose.msra.mxu0 0.0
    %5596 = vmatprep.subr.mxu0 0.0
    %5597 = vmatpush1.xpose.msra.mxu0 0.0
    %5598 = vmatprep.subr.mxu0 0.0
    %5599 = vmatpush1.xpose.msra.mxu0 0.0
    %5600 = vmatprep.subr.mxu0 0.0
    %5601 = vmatpush1.xpose.msra.mxu0 0.0
    %5602 = vmatprep.subr.mxu0 0.0
    %5603 = vmatpush1.xpose.msra.mxu0 0.0
    %5604 = vmatprep.subr.mxu0 0.0
    %5605 = vmatpush1.xpose.msra.mxu0 0.0
    %5606 = vmatprep.subr.mxu0 0.0
    %5607 = vmatpush1.xpose.msra.mxu0 0.0
    %5608 = vmatprep.subr.mxu0 0.0
    %5609 = vmatpush1.xpose.msra.mxu0 0.0
    %5610 = vmatprep.subr.mxu0 0.0
    %5611 = vmatpush1.xpose.msra.mxu0 0.0
    %5612 = vmatprep.subr.mxu0 0.0
    %5613 = vmatpush1.xpose.msra.mxu0 0.0
    %5614 = vmatprep.subr.mxu0 0.0
    %5615 = vmatpush1.xpose.msra.mxu0 0.0
    %5616 = vmatprep.subr.mxu0 0.0
    %5617 = vmatpush1.xpose.msra.mxu0 0.0
    %5618 = vmatprep.subr.mxu0 0.0
    %5619 = vmatpush1.xpose.msra.mxu0 0.0
    %5620 = vmatprep.subr.mxu0 0.0
    %5621 = vmatpush1.xpose.msra.mxu0 0.0
    %5622 = vmatprep.subr.mxu0 0.0
    %5623 = vmatpush1.xpose.msra.mxu0 0.0
    %5624 = vmatprep.mubr.f32.mxu0 0.0
    %5625 = vmatmul.mubr.f32.gmra.mrb[0].mxu0 %v5556
    %v5626 = vpop.f32.mrb[0].mxu0
    %v5627 = vadd.f32 0.0, %v5626
    %v5628 = vpop.f32.mrb[0].mxu0
    %5629 = vdwg.mxu0
    %v5630 = vmul.f32 %v5549, 0.35355338
    %v5631 = vmul.f32 %v5627, 0.35355338
    %v5632 = vsel %vm2694, %v5630, -inf
    %5633 = vmax.xlane.f32.xlu0 %v5632
    %v5634 = vpop.xlane.xlu0 %5633
    %v5635 = vsel %vm2694, %v5631, -inf
    %5636 = vmax.xlane.f32.xlu0 %v5635
    %v5637 = vpop.xlane.xlu0 %5636
    %v5638 = vsub.f32 %v5630, %v5634
    %v5639 = vsub.f32 %v5631, %v5637
    %v5640 = vmul.f32 %v5638, 1.442695
    %v5641 = vpow.pop %v5640
    %v5642 = vmul.f32 %v5639, 1.442695
    %v5643 = vpow.pop %v5642
    %v5644 = vsel %vm2694, %v5641, 0.0
    %5645 = vadd.xlane.f32.xlu0 %v5644
    %v5646 = vpop.xlane.xlu0 %5645
    %v5647 = vsel %vm2694, %v5643, 0.0
    %5648 = vadd.xlane.f32.xlu0 %v5647
    %v5649 = vpop.xlane.xlu0 %5648
    %v5650 = vrcp.pop %v5646
    %v5651 = vrcp.pop %v5649
    %v5652 = vmul.f32 %v5641, %v5650
    %v5653 = vmul.f32 %v5643, %v5651
    %5654 = vrot.lane.b32.xlu0 %v4474, 40
    %v5655 = vpop.permute.xlu0 %5654
    %v5658 = vsel %vm2694, %v5652, 0
    %5660 = vmatprep.subr.mxu0 0.0
    %5661 = vmatpush1.msra.mxu0 %v5655
    %5662 = vmatprep.subr.mxu0 0.0
    %5663 = vmatpush1.msra.mxu0 0.0
    %5664 = vmatprep.subr.mxu0 0.0
    %5665 = vmatpush1.msra.mxu0 0.0
    %5666 = vmatprep.subr.mxu0 0.0
    %5667 = vmatpush1.msra.mxu0 0.0
    %5668 = vmatprep.subr.mxu0 0.0
    %5669 = vmatpush1.msra.mxu0 0.0
    %5670 = vmatprep.subr.mxu0 0.0
    %5671 = vmatpush1.msra.mxu0 0.0
    %5672 = vmatprep.subr.mxu0 0.0
    %5673 = vmatpush1.msra.mxu0 0.0
    %5674 = vmatprep.subr.mxu0 0.0
    %5675 = vmatpush1.msra.mxu0 0.0
    %5676 = vmatprep.subr.mxu0 0.0
    %5677 = vmatpush1.msra.mxu0 0.0
    %5678 = vmatprep.subr.mxu0 0.0
    %5679 = vmatpush1.msra.mxu0 0.0
    %5680 = vmatprep.subr.mxu0 0.0
    %5681 = vmatpush1.msra.mxu0 0.0
    %5682 = vmatprep.subr.mxu0 0.0
    %5683 = vmatpush1.msra.mxu0 0.0
    %5684 = vmatprep.subr.mxu0 0.0
    %5685 = vmatpush1.msra.mxu0 0.0
    %5686 = vmatprep.subr.mxu0 0.0
    %5687 = vmatpush1.msra.mxu0 0.0
    %5688 = vmatprep.subr.mxu0 0.0
    %5689 = vmatpush1.msra.mxu0 0.0
    %5690 = vmatprep.subr.mxu0 0.0
    %5691 = vmatpush1.msra.mxu0 0.0
    %5692 = vmatprep.subr.mxu0 0.0
    %5693 = vmatpush1.msra.mxu0 0.0
    %5694 = vmatprep.subr.mxu0 0.0
    %5695 = vmatpush1.msra.mxu0 0.0
    %5696 = vmatprep.subr.mxu0 0.0
    %5697 = vmatpush1.msra.mxu0 0.0
    %5698 = vmatprep.subr.mxu0 0.0
    %5699 = vmatpush1.msra.mxu0 0.0
    %5700 = vmatprep.subr.mxu0 0.0
    %5701 = vmatpush1.msra.mxu0 0.0
    %5702 = vmatprep.subr.mxu0 0.0
    %5703 = vmatpush1.msra.mxu0 0.0
    %5704 = vmatprep.subr.mxu0 0.0
    %5705 = vmatpush1.msra.mxu0 0.0
    %5706 = vmatprep.subr.mxu0 0.0
    %5707 = vmatpush1.msra.mxu0 0.0
    %5708 = vmatprep.subr.mxu0 0.0
    %5709 = vmatpush1.msra.mxu0 0.0
    %5710 = vmatprep.subr.mxu0 0.0
    %5711 = vmatpush1.msra.mxu0 0.0
    %5712 = vmatprep.subr.mxu0 0.0
    %5713 = vmatpush1.msra.mxu0 0.0
    %5714 = vmatprep.subr.mxu0 0.0
    %5715 = vmatpush1.msra.mxu0 0.0
    %5716 = vmatprep.subr.mxu0 0.0
    %5717 = vmatpush1.msra.mxu0 0.0
    %5718 = vmatprep.subr.mxu0 0.0
    %5719 = vmatpush1.msra.mxu0 0.0
    %5720 = vmatprep.subr.mxu0 0.0
    %5721 = vmatpush1.msra.mxu0 0.0
    %5722 = vmatprep.subr.mxu0 0.0
    %5723 = vmatpush1.msra.mxu0 0.0
    %5724 = vmatprep.mubr.f32.mxu0 0.0
    %5725 = vmatmul.mubr.f32.gmra.mrb[0].mxu0 %v5658
    %v5726 = vpop.f32.mrb[0].mxu0
    %v5727 = vadd.f32 0.0, %v5726
    %v5728 = vpop.f32.mrb[0].mxu0
    %5729 = vdwg.mxu0
    %5730 = vrot.lane.b32.xlu0 %v4477, 40
    %v5731 = vpop.permute.xlu0 %5730
    %v5734 = vsel %vm2694, %v5653, 0
    %5736 = vmatprep.subr.mxu0 0.0
    %5737 = vmatpush1.msra.mxu0 %v5731
    %5738 = vmatprep.subr.mxu0 0.0
    %5739 = vmatpush1.msra.mxu0 0.0
    %5740 = vmatprep.subr.mxu0 0.0
    %5741 = vmatpush1.msra.mxu0 0.0
    %5742 = vmatprep.subr.mxu0 0.0
    %5743 = vmatpush1.msra.mxu0 0.0
    %5744 = vmatprep.subr.mxu0 0.0
    %5745 = vmatpush1.msra.mxu0 0.0
    %5746 = vmatprep.subr.mxu0 0.0
    %5747 = vmatpush1.msra.mxu0 0.0
    %5748 = vmatprep.subr.mxu0 0.0
    %5749 = vmatpush1.msra.mxu0 0.0
    %5750 = vmatprep.subr.mxu0 0.0
    %5751 = vmatpush1.msra.mxu0 0.0
    %5752 = vmatprep.subr.mxu0 0.0
    %5753 = vmatpush1.msra.mxu0 0.0
    %5754 = vmatprep.subr.mxu0 0.0
    %5755 = vmatpush1.msra.mxu0 0.0
    %5756 = vmatprep.subr.mxu0 0.0
    %5757 = vmatpush1.msra.mxu0 0.0
    %5758 = vmatprep.subr.mxu0 0.0
    %5759 = vmatpush1.msra.mxu0 0.0
    %5760 = vmatprep.subr.mxu0 0.0
    %5761 = vmatpush1.msra.mxu0 0.0
    %5762 = vmatprep.subr.mxu0 0.0
    %5763 = vmatpush1.msra.mxu0 0.0
    %5764 = vmatprep.subr.mxu0 0.0
    %5765 = vmatpush1.msra.mxu0 0.0
    %5766 = vmatprep.subr.mxu0 0.0
    %5767 = vmatpush1.msra.mxu0 0.0
    %5768 = vmatprep.subr.mxu0 0.0
    %5769 = vmatpush1.msra.mxu0 0.0
    %5770 = vmatprep.subr.mxu0 0.0
    %5771 = vmatpush1.msra.mxu0 0.0
    %5772 = vmatprep.subr.mxu0 0.0
    %5773 = vmatpush1.msra.mxu0 0.0
    %5774 = vmatprep.subr.mxu0 0.0
    %5775 = vmatpush1.msra.mxu0 0.0
    %5776 = vmatprep.subr.mxu0 0.0
    %5777 = vmatpush1.msra.mxu0 0.0
    %5778 = vmatprep.subr.mxu0 0.0
    %5779 = vmatpush1.msra.mxu0 0.0
    %5780 = vmatprep.subr.mxu0 0.0
    %5781 = vmatpush1.msra.mxu0 0.0
    %5782 = vmatprep.subr.mxu0 0.0
    %5783 = vmatpush1.msra.mxu0 0.0
    %5784 = vmatprep.subr.mxu0 0.0
    %5785 = vmatpush1.msra.mxu0 0.0
    %5786 = vmatprep.subr.mxu0 0.0
    %5787 = vmatpush1.msra.mxu0 0.0
    %5788 = vmatprep.subr.mxu0 0.0
    %5789 = vmatpush1.msra.mxu0 0.0
    %5790 = vmatprep.subr.mxu0 0.0
    %5791 = vmatpush1.msra.mxu0 0.0
    %5792 = vmatprep.subr.mxu0 0.0
    %5793 = vmatpush1.msra.mxu0 0.0
    %5794 = vmatprep.subr.mxu0 0.0
    %5795 = vmatpush1.msra.mxu0 0.0
    %5796 = vmatprep.subr.mxu0 0.0
    %5797 = vmatpush1.msra.mxu0 0.0
    %5798 = vmatprep.subr.mxu0 0.0
    %5799 = vmatpush1.msra.mxu0 0.0
    %5800 = vmatprep.mubr.f32.mxu0 0.0
    %5801 = vmatmul.mubr.f32.gmra.mrb[0].mxu0 %v5734
    %v5802 = vpop.f32.mrb[0].mxu0
    %v5803 = vadd.f32 0.0, %v5802
    %v5804 = vpop.f32.mrb[0].mxu0
    %5805 = vdwg.mxu0
    %5808 = vrot.lane.b32.xlu0 %v5063, 8
    %v5809 = vpop.permute.xlu0 %5808
    %5810 = vrot.lane.b32.xlu0 %v5139, 8
    %v5811 = vpop.permute.xlu0 %5810
    %5816 = vrot.lane.b32.xlu0 %v5395, 16
    %v5817 = vpop.permute.xlu0 %5816
    %5818 = vrot.lane.b32.xlu0 %v5471, 16
    %v5819 = vpop.permute.xlu0 %5818
    %5824 = vrot.lane.b32.xlu0 %v5727, 24
    %v5825 = vpop.permute.xlu0 %5824
    %5826 = vrot.lane.b32.xlu0 %v5803, 24
    %v5827 = vpop.permute.xlu0 %5826
    %v5830 = vsel %vm2694, %v4731, %v5809
    %v5831 = vsel %vm2694, %v4807, %v5811
    %v5832 = vsel %vm183, %v5830, %v5817
    %v5833 = vsel %vm183, %v5831, %v5819
    %v5834 = vsel %vm4046, %v5832, %v5825
    %v5835 = vsel %vm4046, %v5833, %v5827
    %v5836 = vpack.c.bf16 %v5835, %v5834
    %s5837 = scalar_lea.vmem %s10, 16
    %v5838 = vld [vmem:[%s5837] sm:$0xf]
    %v5839 = vld [vmem:[%s5837 + $0x4] sm:$0xf]
    %v5840 = vld [vmem:[%s5837 + $0x8] sm:$0xf]
    %v5841 = vld [vmem:[%s5837 + $0xc] sm:$0xf]
    %s5842 = scalar_lea.vmem %s11, 1
    %v5843 = vld [vmem:[%s5842] sm:$0x1]
    %v5845 = vlaneseq
    %v5846 = vshrl.u32 %v5845, 7
    %v5847 = vsub.s32 0, %v5846
    %v5848 = vrot.slane %v5843, %v5847
    %v5854 = vunpack.c.l.b16 %v5838
    %v5855 = vunpack.c.l.b16 %v5839
    %v5856 = vunpack.c.l.b16 %v5840
    %v5857 = vunpack.c.l.b16 %v5841
    %v5858 = vpack.c.b16 %v5855, %v5854
    %v5859 = vpack.c.b16 %v5857, %v5856
    %v5863 = vsel %vm136, %v5836, 0
    %5865 = vmatprep.subr.bf16.mxu0 0
    %5866 = vmatpush1.bf16.msra.mxu0 %v5858
    %5867 = vmatprep.subr.bf16.mxu0 0
    %5868 = vmatpush1.bf16.msra.mxu0 %v5859
    %5869 = vmatprep.subr.bf16.mxu0 0
    %5870 = vmatpush1.bf16.msra.mxu0 0
    %5871 = vmatprep.subr.bf16.mxu0 0
    %5872 = vmatpush1.bf16.msra.mxu0 0
    %5873 = vmatprep.subr.bf16.mxu0 0
    %5874 = vmatpush1.bf16.msra.mxu0 0
    %5875 = vmatprep.subr.bf16.mxu0 0
    %5876 = vmatpush1.bf16.msra.mxu0 0
    %5877 = vmatprep.subr.bf16.mxu0 0
    %5878 = vmatpush1.bf16.msra.mxu0 0
    %5879 = vmatprep.subr.bf16.mxu0 0
    %5880 = vmatpush1.bf16.msra.mxu0 0
    %5881 = vmatprep.subr.bf16.mxu0 0
    %5882 = vmatpush1.bf16.msra.mxu0 0
    %5883 = vmatprep.subr.bf16.mxu0 0
    %5884 = vmatpush1.bf16.msra.mxu0 0
    %5885 = vmatprep.subr.bf16.mxu0 0
    %5886 = vmatpush1.bf16.msra.mxu0 0
    %5887 = vmatprep.subr.bf16.mxu0 0
    %5888 = vmatpush1.bf16.msra.mxu0 0
    %5889 = vmatprep.subr.bf16.mxu0 0
    %5890 = vmatpush1.bf16.msra.mxu0 0
    %5891 = vmatprep.subr.bf16.mxu0 0
    %5892 = vmatpush1.bf16.msra.mxu0 0
    %5893 = vmatprep.subr.bf16.mxu0 0
    %5894 = vmatpush1.bf16.msra.mxu0 0
    %5895 = vmatprep.subr.bf16.mxu0 0
    %5896 = vmatpush1.bf16.msra.mxu0 0
    %5897 = vmatprep.mubr.bf16.mxu0 0
    %5898 = vmatmul.mubr.bf16.gmra.mrb[0].mxu0 %v5863
    %v5899 = vpop.f32.mrb[0].mxu0
    %v5900 = vadd.f32 %v5848, %v5899
    %v5901 = vpop.f32.mrb[0].mxu0
    %v5902 = vpop.f32.mrb[0].mxu0
    %v5903 = vadd.f32 %v5848, %v5902
    %v5904 = vpop.f32.mrb[0].mxu0
    %5905 = vdwg.mxu0
    %v5906 = vadd.f32 %v4362, %v5900
    %v5907 = vadd.f32 %v4363, %v5903
    %s5908 = scalar_lea.vmem %s12, 1
    %v5909 = vld [vmem:[%s5908] sm:$0x1]
    %s5910 = scalar_lea.vmem %s13, 1
    %v5911 = vld [vmem:[%s5910] sm:$0x1]
    %v5912 = vsel %vm136, %v5906, 0.0
    %5913 = vadd.xlane.f32.xlu0 %v5912
    %v5914 = vpop.xlane.xlu0 %5913
    %v5915 = vsel %vm136, %v5907, 0.0
    %5916 = vadd.xlane.f32.xlu0 %v5915
    %v5917 = vpop.xlane.xlu0 %5916
    %v5918 = vmul.f32 %v5914, %v2586
    %v5919 = vmul.f32 %v5917, %v2586
    %v5920 = vsub.f32 %v5906, %v5918
    %v5921 = vsub.f32 %v5907, %v5919
    %v5922 = vmul.f32 %v5920, %v5920
    %v5923 = vmul.f32 %v5921, %v5921
    %v5924 = vsel %vm136, %v5922, 0.0
    %5925 = vadd.xlane.f32.xlu0 %v5924
    %v5926 = vpop.xlane.xlu0 %5925
    %v5927 = vsel %vm136, %v5923, 0.0
    %5928 = vadd.xlane.f32.xlu0 %v5927
    %v5929 = vpop.xlane.xlu0 %5928
    %v5930 = vmul.f32 %v5926, %v2586
    %v5931 = vmul.f32 %v5929, %v2586
    %v5932 = vadd.f32 %v5930, 1e-05
    %v5933 = vadd.f32 %v5931, 1e-05
    %v5934 = vrsqrt.pop %v5932
    %v5935 = vrsqrt.pop %v5933
    %v5936 = vmul.f32 %v5920, %v5934
    %v5937 = vmul.f32 %v5921, %v5935
    %v5939 = vlaneseq
    %v5940 = vshrl.u32 %v5939, 7
    %v5941 = vsub.s32 0, %v5940
    %v5942 = vrot.slane %v5909, %v5941
    %v5944 = vmul.f32 %v5936, %v5942
    %v5945 = vmul.f32 %v5937, %v5942
    %v5947 = vlaneseq
    %v5948 = vshrl.u32 %v5947, 7
    %v5949 = vsub.s32 0, %v5948
    %v5950 = vrot.slane %v5911, %v5949
    %v5952 = vadd.f32 %v5944, %v5950
    %v5953 = vadd.f32 %v5945, %v5950
    %v5954 = vpack.c.bf16 %v5953, %v5952
    %s5955 = scalar_lea.vmem %s14, 16
    %v5956 = vld [vmem:[%s5955] sm:$0xf]
    %v5957 = vld [vmem:[%s5955 + $0x4] sm:$0xf]
    %v5958 = vld [vmem:[%s5955 + $0x8] sm:$0xf]
    %v5959 = vld [vmem:[%s5955 + $0xc] sm:$0xf]
    %s5960 = scalar_lea.vmem [#allocation8], 1
    %v5961 = vld [vmem:[%s5960] sm:$0x1]
    %v5963 = vlaneseq
    %v5964 = vshrl.u32 %v5963, 7
    %v5965 = vsub.s32 0, %v5964
    %v5966 = vrot.slane %v5961, %v5965
    %v5972 = vunpack.c.l.b16 %v5956
    %v5973 = vunpack.c.l.b16 %v5957
    %v5974 = vunpack.c.l.b16 %v5958
    %v5975 = vunpack.c.l.b16 %v5959
    %v5976 = vpack.c.b16 %v5973, %v5972
    %v5977 = vpack.c.b16 %v5975, %v5974
    %v5981 = vsel %vm136, %v5954, 0
    %5983 = vmatprep.subr.bf16.mxu0 0
    %5984 = vmatpush1.bf16.msra.mxu0 %v5976
    %5985 = vmatprep.subr.bf16.mxu0 0
    %5986 = vmatpush1.bf16.msra.mxu0 %v5977
    %5987 = vmatprep.subr.bf16.mxu0 0
    %5988 = vmatpush1.bf16.msra.mxu0 0
    %5989 = vmatprep.subr.bf16.mxu0 0
    %5990 = vmatpush1.bf16.msra.mxu0 0
    %5991 = vmatprep.subr.bf16.mxu0 0
    %5992 = vmatpush1.bf16.msra.mxu0 0
    %5993 = vmatprep.subr.bf16.mxu0 0
    %5994 = vmatpush1.bf16.msra.mxu0 0
    %5995 = vmatprep.subr.bf16.mxu0 0
    %5996 = vmatpush1.bf16.msra.mxu0 0
    %5997 = vmatprep.subr.bf16.mxu0 0
    %5998 = vmatpush1.bf16.msra.mxu0 0
    %5999 = vmatprep.subr.bf16.mxu0 0
    %6000 = vmatpush1.bf16.msra.mxu0 0
    %6001 = vmatprep.subr.bf16.mxu0 0
    %6002 = vmatpush1.bf16.msra.mxu0 0
    %6003 = vmatprep.subr.bf16.mxu0 0
    %6004 = vmatpush1.bf16.msra.mxu0 0
    %6005 = vmatprep.subr.bf16.mxu0 0
    %6006 = vmatpush1.bf16.msra.mxu0 0
    %6007 = vmatprep.subr.bf16.mxu0 0
    %6008 = vmatpush1.bf16.msra.mxu0 0
    %6009 = vmatprep.subr.bf16.mxu0 0
    %6010 = vmatpush1.bf16.msra.mxu0 0
    %6011 = vmatprep.subr.bf16.mxu0 0
    %6012 = vmatpush1.bf16.msra.mxu0 0
    %6013 = vmatprep.subr.bf16.mxu0 0
    %6014 = vmatpush1.bf16.msra.mxu0 0
    %6015 = vmatprep.mubr.bf16.mxu0 0
    %6016 = vmatmul.mubr.bf16.gmra.mrb[0].mxu0 %v5981
    %v6017 = vpop.f32.mrb[0].mxu0
    %v6018 = vadd.f32 %v5966, %v6017
    %v6019 = vpop.f32.mrb[0].mxu0
    %v6020 = vpop.f32.mrb[0].mxu0
    %v6021 = vadd.f32 %v5966, %v6020
    %v6022 = vpop.f32.mrb[0].mxu0
    %6023 = vdwg.mxu0
    %v6024 = vmul.f32 %v6018, %v6018
    %v6025 = vmul.f32 %v6021, %v6021
    %v6026 = vmul.f32 %v6018, %v6024
    %v6027 = vmul.f32 %v6021, %v6025
    %v6028 = vmul.f32 %v6026, 0.044715
    %v6029 = vmul.f32 %v6027, 0.044715
    %v6030 = vadd.f32 %v6018, %v6028
    %v6031 = vadd.f32 %v6021, %v6029
    %v6032 = vmul.f32 %v6030, 0.7978846
    %v6033 = vmul.f32 %v6031, 0.7978846
    %v6034 = vtanh.pop %v6032
    %v6035 = vtanh.pop %v6033
    %v6036 = vadd.f32 %v6034, 1.0
    %v6037 = vadd.f32 %v6035, 1.0
    %v6038 = vmul.f32 %v6036, 0.5
    %v6039 = vmul.f32 %v6037, 0.5
    %v6040 = vmul.f32 %v6018, %v6038
    %v6041 = vmul.f32 %v6021, %v6039
    %v6042 = vpack.c.bf16 %v6041, %v6040
    %s6043 = scalar_lea.vmem %s16, 64
    %v6044 = vld [vmem:[%s6043] sm:$0xf]
    %v6045 = vld [vmem:[%s6043 + $0x4] sm:$0xf]
    %v6046 = vld [vmem:[%s6043 + $0x8] sm:$0xf]
    %v6047 = vld [vmem:[%s6043 + $0xc] sm:$0xf]
    %v6048 = vld [vmem:[%s6043 + $0x10] sm:$0xf]
    %v6049 = vld [vmem:[%s6043 + $0x14] sm:$0xf]
    %v6050 = vld [vmem:[%s6043 + $0x18] sm:$0xf]
    %v6051 = vld [vmem:[%s6043 + $0x1c] sm:$0xf]
    %v6052 = vld [vmem:[%s6043 + $0x20] sm:$0xf]
    %v6053 = vld [vmem:[%s6043 + $0x24] sm:$0xf]
    %v6054 = vld [vmem:[%s6043 + $0x28] sm:$0xf]
    %v6055 = vld [vmem:[%s6043 + $0x2c] sm:$0xf]
    %v6056 = vld [vmem:[%s6043 + $0x30] sm:$0xf]
    %v6057 = vld [vmem:[%s6043 + $0x34] sm:$0xf]
    %v6058 = vld [vmem:[%s6043 + $0x38] sm:$0xf]
    %v6059 = vld [vmem:[%s6043 + $0x3c] sm:$0xf]
    %s6060 = scalar_lea.vmem %s17, 1
    %v6061 = vld [vmem:[%s6060] sm:$0x1]
    %v6063 = vlaneseq
    %v6064 = vshrl.u32 %v6063, 7
    %v6065 = vsub.s32 0, %v6064
    %v6066 = vrot.slane %v6061, %v6065
    %v6084 = vunpack.c.l.b16 %v6044
    %v6085 = vunpack.c.l.b16 %v6045
    %v6086 = vunpack.c.l.b16 %v6046
    %v6087 = vunpack.c.l.b16 %v6047
    %v6088 = vunpack.c.l.b16 %v6048
    %v6089 = vunpack.c.l.b16 %v6049
    %v6090 = vunpack.c.l.b16 %v6050
    %v6091 = vunpack.c.l.b16 %v6051
    %v6092 = vunpack.c.l.b16 %v6052
    %v6093 = vunpack.c.l.b16 %v6053
    %v6094 = vunpack.c.l.b16 %v6054
    %v6095 = vunpack.c.l.b16 %v6055
    %v6096 = vunpack.c.l.b16 %v6056
    %v6097 = vunpack.c.l.b16 %v6057
    %v6098 = vunpack.c.l.b16 %v6058
    %v6099 = vunpack.c.l.b16 %v6059
    %v6100 = vpack.c.b16 %v6085, %v6084
    %v6101 = vpack.c.b16 %v6087, %v6086
    %v6102 = vpack.c.b16 %v6089, %v6088
    %v6103 = vpack.c.b16 %v6091, %v6090
    %v6104 = vpack.c.b16 %v6093, %v6092
    %v6105 = vpack.c.b16 %v6095, %v6094
    %v6106 = vpack.c.b16 %v6097, %v6096
    %v6107 = vpack.c.b16 %v6099, %v6098
    %6116 = vmatprep.subr.bf16.mxu0 0
    %6117 = vmatpush1.bf16.msra.mxu0 %v6100
    %6118 = vmatprep.subr.bf16.mxu0 0
    %6119 = vmatpush1.bf16.msra.mxu0 %v6101
    %6120 = vmatprep.subr.bf16.mxu0 0
    %6121 = vmatpush1.bf16.msra.mxu0 %v6102
    %6122 = vmatprep.subr.bf16.mxu0 0
    %6123 = vmatpush1.bf16.msra.mxu0 %v6103
    %6124 = vmatprep.subr.bf16.mxu0 0
    %6125 = vmatpush1.bf16.msra.mxu0 %v6104
    %6126 = vmatprep.subr.bf16.mxu0 0
    %6127 = vmatpush1.bf16.msra.mxu0 %v6105
    %6128 = vmatprep.subr.bf16.mxu0 0
    %6129 = vmatpush1.bf16.msra.mxu0 %v6106
    %6130 = vmatprep.subr.bf16.mxu0 0
    %6131 = vmatpush1.bf16.msra.mxu0 %v6107
    %6132 = vmatprep.subr.bf16.mxu0 0
    %6133 = vmatpush1.bf16.msra.mxu0 0
    %6134 = vmatprep.subr.bf16.mxu0 0
    %6135 = vmatpush1.bf16.msra.mxu0 0
    %6136 = vmatprep.subr.bf16.mxu0 0
    %6137 = vmatpush1.bf16.msra.mxu0 0
    %6138 = vmatprep.subr.bf16.mxu0 0
    %6139 = vmatpush1.bf16.msra.mxu0 0
    %6140 = vmatprep.subr.bf16.mxu0 0
    %6141 = vmatpush1.bf16.msra.mxu0 0
    %6142 = vmatprep.subr.bf16.mxu0 0
    %6143 = vmatpush1.bf16.msra.mxu0 0
    %6144 = vmatprep.subr.bf16.mxu0 0
    %6145 = vmatpush1.bf16.msra.mxu0 0
    %6146 = vmatprep.subr.bf16.mxu0 0
    %6147 = vmatpush1.bf16.msra.mxu0 0
    %6148 = vmatprep.mubr.bf16.mxu0 0
    %6149 = vmatmul.mubr.bf16.gmra.mrb[0].mxu0 %v6042
    %v6150 = vpop.f32.mrb[0].mxu0
    %v6151 = vadd.f32 %v6066, %v6150
    %v6152 = vpop.f32.mrb[0].mxu0
    %v6153 = vpop.f32.mrb[0].mxu0
    %v6154 = vadd.f32 %v6066, %v6153
    %v6155 = vpop.f32.mrb[0].mxu0
    %6156 = vdwg.mxu0
    %v6157 = vadd.f32 %v5906, %v6151
    %v6158 = vadd.f32 %v5907, %v6154
    %v6159 = vld [vmem:[%s18] sm:$0x1]
    %v6160 = vld [vmem:[%s19] sm:$0x1]
    %v6161 = vsel %vm136, %v6157, 0.0
    %6162 = vadd.xlane.f32.xlu0 %v6161
    %v6163 = vpop.xlane.xlu0 %6162
    %v6164 = vsel %vm136, %v6158, 0.0
    %6165 = vadd.xlane.f32.xlu0 %v6164
    %v6166 = vpop.xlane.xlu0 %6165
    %v6167 = vmul.f32 %v6163, %v2586
    %v6168 = vmul.f32 %v6166, %v2586
    %v6169 = vsub.f32 %v6157, %v6167
    %v6170 = vsub.f32 %v6158, %v6168
    %v6171 = vmul.f32 %v6169, %v6169
    %v6172 = vmul.f32 %v6170, %v6170
    %v6173 = vsel %vm136, %v6171, 0.0
    %6174 = vadd.xlane.f32.xlu0 %v6173
    %v6175 = vpop.xlane.xlu0 %6174
    %v6176 = vsel %vm136, %v6172, 0.0
    %6177 = vadd.xlane.f32.xlu0 %v6176
    %v6178 = vpop.xlane.xlu0 %6177
    %v6179 = vmul.f32 %v6175, %v2586
    %v6180 = vmul.f32 %v6178, %v2586
    %v6181 = vadd.f32 %v6179, 1e-05
    %v6182 = vadd.f32 %v6180, 1e-05
    %v6183 = vrsqrt.pop %v6181
    %v6184 = vrsqrt.pop %v6182
    %v6185 = vmul.f32 %v6169, %v6183
    %v6186 = vmul.f32 %v6170, %v6184
    %v6188 = vlaneseq
    %v6189 = vshrl.u32 %v6188, 7
    %v6190 = vsub.s32 0, %v6189
    %v6191 = vrot.slane %v6159, %v6190
    %v6193 = vmul.f32 %v6185, %v6191
    %v6194 = vmul.f32 %v6186, %v6191
    %v6196 = vlaneseq
    %v6197 = vshrl.u32 %v6196, 7
    %v6198 = vsub.s32 0, %v6197
    %v6199 = vrot.slane %v6160, %v6198
    %v6201 = vadd.f32 %v6193, %v6199
    %v6202 = vadd.f32 %v6194, %v6199
    %v6203 = vpack.c.bf16 %v6202, %v6201
    %v6204 = vld [vmem:[%s20] sm:$0xf]
    %v6205 = vld [vmem:[%s20 + $0x4] sm:$0xf]
    %v6206 = vld [vmem:[%s20 + $0x8] sm:$0xf]
    %v6207 = vld [vmem:[%s20 + $0xc] sm:$0xf]
    %v6208 = vld [vmem:[%s21] sm:$0x1]
    %v6210 = vlaneseq
    %v6211 = vshrl.u32 %v6210, 7
    %v6212 = vsub.s32 0, %v6211
    %v6213 = vrot.slane %v6208, %v6212
    %v6219 = vunpack.c.l.b16 %v6204
    %v6220 = vunpack.c.l.b16 %v6205
    %v6221 = vunpack.c.l.b16 %v6206
    %v6222 = vunpack.c.l.b16 %v6207
    %v6223 = vpack.c.b16 %v6220, %v6219
    %v6224 = vpack.c.b16 %v6222, %v6221
    %v6228 = vsel %vm136, %v6203, 0
    %6230 = vmatprep.subr.bf16.mxu0 0
    %6231 = vmatpush1.bf16.msra.mxu0 %v6223
    %6232 = vmatprep.subr.bf16.mxu0 0
    %6233 = vmatpush1.bf16.msra.mxu0 %v6224
    %6234 = vmatprep.subr.bf16.mxu0 0
    %6235 = vmatpush1.bf16.msra.mxu0 0
    %6236 = vmatprep.subr.bf16.mxu0 0
    %6237 = vmatpush1.bf16.msra.mxu0 0
    %6238 = vmatprep.subr.bf16.mxu0 0
    %6239 = vmatpush1.bf16.msra.mxu0 0
    %6240 = vmatprep.subr.bf16.mxu0 0
    %6241 = vmatpush1.bf16.msra.mxu0 0
    %6242 = vmatprep.subr.bf16.mxu0 0
    %6243 = vmatpush1.bf16.msra.mxu0 0
    %6244 = vmatprep.subr.bf16.mxu0 0
    %6245 = vmatpush1.bf16.msra.mxu0 0
    %6246 = vmatprep.subr.bf16.mxu0 0
    %6247 = vmatpush1.bf16.msra.mxu0 0
    %6248 = vmatprep.subr.bf16.mxu0 0
    %6249 = vmatpush1.bf16.msra.mxu0 0
    %6250 = vmatprep.subr.bf16.mxu0 0
    %6251 = vmatpush1.bf16.msra.mxu0 0
    %6252 = vmatprep.subr.bf16.mxu0 0
    %6253 = vmatpush1.bf16.msra.mxu0 0
    %6254 = vmatprep.subr.bf16.mxu0 0
    %6255 = vmatpush1.bf16.msra.mxu0 0
    %6256 = vmatprep.subr.bf16.mxu0 0
    %6257 = vmatpush1.bf16.msra.mxu0 0
    %6258 = vmatprep.subr.bf16.mxu0 0
    %6259 = vmatpush1.bf16.msra.mxu0 0
    %6260 = vmatprep.subr.bf16.mxu0 0
    %6261 = vmatpush1.bf16.msra.mxu0 0
    %6262 = vmatprep.mubr.bf16.mxu0 0
    %6263 = vmatmul.mubr.bf16.gmra.mrb[0].mxu0 %v6228
    %v6264 = vpop.f32.mrb[0].mxu0
    %v6265 = vadd.f32 %v6213, %v6264
    %v6266 = vpop.f32.mrb[0].mxu0
    %v6267 = vpop.f32.mrb[0].mxu0
    %v6268 = vadd.f32 %v6213, %v6267
    %v6269 = vpop.f32.mrb[0].mxu0
    %6270 = vdwg.mxu0
    %vm6271 = vcmask 392192
    %6272 = vst.msk [vmem:[#allocation9] sm:$0xff] %vm6271, %v6265
    %6273 = vst.msk [vmem:[#allocation9 + $0x8] sm:$0xff] %vm6271, %v6268
    // Predicated region
    $region102: #{tpu_custom_call.1} parent=1 // pred_check
      _
    $region103: #{tpu_custom_call.1} parent=1 // pred_check_branch
      %6275 = sbr.rel (0) target = $region105
    $region104: #{tpu_custom_call.1} parent=1 // pred_region
      %s6277 = ssub.s32 256, 256
      %6278 = vsyncadd [#allocation5], %s6277
      %s6279 = sshll.u32 [#allocation9], 4
      %s6280 = int_to_ptr.vmem [resolvable:$true] %s6279
      %6285 = dma.vmem_to_hbm [thread:$0]  %s6280, 256, %s22, [#allocation5], 128, 128, 8
    $region105: #{tpu_custom_call.1} parent=1 // pred_fallthru
      _
    // Predicated region
    $region106: #{tpu_custom_call.1} parent=1 // pred_check
      _
    $region107: #{tpu_custom_call.1} parent=1 // pred_check_branch
      %6287 = sbr.rel (0) target = $region109
    $region108: #{tpu_custom_call.1} parent=1 // pred_region
      %6288 = dma.done [#allocation5], 256
    $region109: #{tpu_custom_call.1} parent=1 // pred_fallthru
      _
    %6289 = vsyncpa [#allocation4], 1
    %6290 = vsyncpa [#allocation7], 1
    %6291 = vsyncpa [#allocation5], 1

</llo_original>
